<compile_context>
chip_gen: v6e
topology: v6e:2x2x1
jax: 0.10.0
libtpu: 0.0.40
codegen_flags: <defaults>
</compile_context>

<pallas_src>
import functools

import jax
import jax.numpy as jnp
from jax import lax
from jax.experimental import pallas as pl
from jax.experimental.pallas import tpu as pltpu

EPS = 1e-5  # torch.nn.InstanceNorm2d default eps


def _make_kernel(H, W, Cp, mxu_dtype):
    """Fused per-sample kernel: pad + conv3x3 + IN + ReLU + pad + conv3x3 + IN + x."""
    HW = H * W

    def reflect_pad_into(xp_ref, v):
        # v: (H, W, Cp) value.  Each row gets its reflected left/right columns
        # appended in-register, then only aligned full-row stores hit the scratch
        # (leading-dim offsets only; no packed-sublane-offset stores in bf16).
        v = v.astype(xp_ref.dtype)
        mid = jnp.concatenate([v[:, 1:2, :], v, v[:, W - 2:W - 1, :]], axis=1)
        xp_ref[1:H + 1, :, :] = mid                    # interior rows (+ L/R pad)
        xp_ref[0:1, :, :] = mid[1:2]                   # top row    <- row 1
        xp_ref[H + 1:H + 2, :, :] = mid[H - 2:H - 1]   # bottom row <- row H-2

    def conv3x3(xp_ref, w_ref):
        # 9 accumulating dots with K = Cp; each operand is one (HW, Cp) shifted
        # window of the padded scratch (16 vregs in bf16), kept well under the
        # vreg file.  f32 accumulation throughout.
        acc = None
        for k in range(9):
            dy, dx = divmod(k, 3)
            a = xp_ref[dy:dy + H, dx:dx + W, :].reshape(HW, Cp)
            d = jnp.dot(a, w_ref[k], preferred_element_type=jnp.float32)
            acc = d if acc is None else acc + d
        return acc

    def in_scale_shift(acc_ref, g, be):
        # Two-pass InstanceNorm statistics (biased variance) on the staged f32
        # conv output; sublane reductions run on VPU/XLU, leaving the MXU free.
        inv_hw = 1.0 / HW
        mean = jnp.sum(acc_ref[...], axis=0, keepdims=True) * inv_hw     # (1, Cp)
        c = acc_ref[...] - mean
        var = jnp.sum(c * c, axis=0, keepdims=True) * inv_hw
        scale = g * lax.rsqrt(var + EPS)                                 # (1, Cp)
        shift = be - mean * scale
        return scale, shift

    def kernel(x_ref, w1_ref, g1_ref, be1_ref, w2_ref, g2_ref, be2_ref,
               out_ref, xp_ref, acc_ref):
        # ---- stage 1: pad + conv1 + IN1 + ReLU (h never leaves VMEM) ----
        reflect_pad_into(xp_ref, x_ref[0])
        acc_ref[...] = conv3x3(xp_ref, w1_ref)
        scale, shift = in_scale_shift(acc_ref, g1_ref[...], be1_ref[...])
        h = jnp.maximum(acc_ref[...] * scale + shift, 0.0)               # (HW, Cp) f32
        # ---- stage 2: pad + conv2 + IN2 + residual add ----
        reflect_pad_into(xp_ref, h.reshape(H, W, Cp))
        acc_ref[...] = conv3x3(xp_ref, w2_ref)
        scale, shift = in_scale_shift(acc_ref, g2_ref[...], be2_ref[...])
        y = acc_ref[...] * scale + shift + x_ref[0].reshape(HW, Cp)      # residual (f32)
        out_ref[0] = y.reshape(H, W, Cp).astype(out_ref.dtype)

    return kernel


def residual_block(x_nchw, params, *, mxu_dtype=jnp.bfloat16):
    """Pallas implementation of ResidualBlock.forward (input/output NCHW)."""
    B, C, H, W = x_nchw.shape
    Cp = ((C + 127) // 128) * 128          # lane-align channels (dense MXU/VPU lanes)

    # TODO(synk): these transpose/pad/slice ops are separate HBM passes; keep the
    # surrounding network NHWC (and avoid Cp padding for tiny C) in production.
    x = jnp.transpose(x_nchw, (0, 2, 3, 1)).astype(jnp.float32)          # NHWC
    if Cp != C:
        x = jnp.pad(x, ((0, 0), (0, 0), (0, 0), (0, Cp - C)))

    def pack_w(w9):   # (9, Cin, Cout), index dy*3+dx  ->  (9, Cp, Cp) in mxu_dtype
        return jnp.pad(w9, ((0, 0), (0, Cp - C), (0, Cp - C))).astype(mxu_dtype)

    def pack_c(v):    # (1, C) -> (1, Cp) f32
        return jnp.pad(v.astype(jnp.float32), ((0, 0), (0, Cp - C)))

    # Conv biases b1/b2 cancel exactly under InstanceNorm's mean subtraction.
    w1 = pack_w(params["w1"]); w2 = pack_w(params["w2"])
    g1 = pack_c(params["g1"]); be1 = pack_c(params["be1"])
    g2 = pack_c(params["g2"]); be2 = pack_c(params["be2"])

    kernel = _make_kernel(H, W, Cp, mxu_dtype)

    # ---- VMEM budget (generation aware: v7x has only 64 MiB per TensorCore) ----
    w_item = jnp.dtype(mxu_dtype).itemsize
    img_bytes = H * W * Cp * 4
    w_bytes = 9 * Cp * Cp * w_item
    need = (2 * 2 * img_bytes                       # x / out blocks, double buffered
            + 2 * 2 * w_bytes                       # w1 / w2 slabs, double buffered
            + 8 * 2 * Cp * 4                        # gammas / betas
            + (H + 2) * (W + 2) * Cp * w_item       # padded-activation scratch
            + H * W * Cp * 4)                       # f32 conv-output scratch
    try:
        vmem_cap = int(pltpu.get_tpu_info().vmem_capacity_bytes)
    except Exception:
        vmem_cap = 64 * 2**20                       # conservative default (v7x/TC)
    vmem_limit = int(min(vmem_cap - 8 * 2**20, need + 32 * 2**20))

    cost = pl.CostEstimate(
        flops=int(B * 2 * 2 * H * W * 9 * Cp * Cp),
        transcendentals=int(B * 2 * Cp),
        bytes_accessed=int(2 * B * img_bytes + 2 * w_bytes + 8 * Cp * 4))

    # (pipeline_mode=pl.Buffered(1) on the constant-index weight specs would save
    # one slab buffer each; left at the default to keep the compile path simple.)
    out = pl.pallas_call(
        kernel,
        out_shape=jax.ShapeDtypeStruct((B, H, W, Cp), jnp.float32),
        grid=(B,),
        in_specs=[
            pl.BlockSpec((1, H, W, Cp), lambda i: (i, 0, 0, 0)),     # x
            pl.BlockSpec((9, Cp, Cp), lambda i: (0, 0, 0)),          # w1
            pl.BlockSpec((1, Cp), lambda i: (0, 0)),                 # gamma1
            pl.BlockSpec((1, Cp), lambda i: (0, 0)),                 # beta1
            pl.BlockSpec((9, Cp, Cp), lambda i: (0, 0, 0)),          # w2
            pl.BlockSpec((1, Cp), lambda i: (0, 0)),                 # gamma2
            pl.BlockSpec((1, Cp), lambda i: (0, 0)),                 # beta2
        ],
        out_specs=pl.BlockSpec((1, H, W, Cp), lambda i: (i, 0, 0, 0)),
        scratch_shapes=[pltpu.VMEM((H + 2, W + 2, Cp), mxu_dtype),   # padded activation
                        pltpu.VMEM((H * W, Cp), jnp.float32)],       # conv output staging
        compiler_params=pltpu.CompilerParams(
            dimension_semantics=("parallel",),
            vmem_limit_bytes=vmem_limit),
        cost_estimate=cost,
    )(x, w1, g1, be1, w2, g2, be2)

    out = out[..., :C]                                   # drop channel padding
    return jnp.transpose(out, (0, 3, 1, 2))              # NHWC -> NCHW


# ---------------- pure-JAX reference (for correctness check) ----------------
def _ref_stage(x, w9, b, g, be, *, relu=False, residual=None):
    C = x.shape[-1]
    xp = jnp.pad(x, ((0, 0), (1, 1), (1, 1), (0, 0)), mode="reflect")
    wh = w9.reshape(3, 3, C, C)  # HWIO
    y = lax.conv_general_dilated(
        xp, wh, window_strides=(1, 1), padding="VALID",
        dimension_numbers=("NHWC", "HWIO", "NHWC")) + b
    mean = y.mean(axis=(1, 2), keepdims=True)
    var = ((y - mean) ** 2).mean(axis=(1, 2), keepdims=True)
    y = (y - mean) / jnp.sqrt(var + EPS) * g + be
    if relu:
        y = jnp.maximum(y, 0.0)
    if residual is not None:
        y = y + residual
    return y


def residual_block_ref(x_nchw, params):
    x = jnp.transpose(x_nchw, (0, 2, 3, 1))
    h = _ref_stage(x, params["w1"], params["b1"], params["g1"], params["be1"],
                   relu=True)
    out = _ref_stage(h, params["w2"], params["b2"], params["g2"], params["be2"],
                     residual=x)
    return jnp.transpose(out, (0, 3, 1, 2))


def init_params(key, channels):
    ks = jax.random.split(key, 8)
    C = channels
    # conv weights stored as (9, Cin, Cout); index dy*3+dx matches torch weight[:, :, dy, dx].T
    w1 = 0.1 * jax.random.normal(ks[0], (9, C, C), jnp.float32)
    b1 = 0.1 * jax.random.normal(ks[1], (1, C), jnp.float32)
    g1 = 1.0 + 0.1 * jax.random.normal(ks[2], (1, C), jnp.float32)
    be1 = 0.1 * jax.random.normal(ks[3], (1, C), jnp.float32)
    w2 = 0.1 * jax.random.normal(ks[4], (9, C, C), jnp.float32)
    b2 = 0.1 * jax.random.normal(ks[5], (1, C), jnp.float32)
    g2 = 1.0 + 0.1 * jax.random.normal(ks[6], (1, C), jnp.float32)
    be2 = 0.1 * jax.random.normal(ks[7], (1, C), jnp.float32)
    return dict(w1=w1, b1=b1, g1=g1, be1=be1, w2=w2, b2=b2, g2=g2, be2=be2)


if __name__ == "__main__":
    B, C, H, W = 2, 4, 16, 16
    key = jax.random.PRNGKey(0)
    kx, kp = jax.random.split(key)
    x = jax.random.normal(kx, (B, C, H, W), jnp.float32)   # NCHW, like PyTorch
    params = init_params(kp, C)

    ref = residual_block_ref(x, params)

    # f32 MXU operands (tight-tolerance check of the kernel math)
    out_f32 = jax.jit(functools.partial(residual_block, mxu_dtype=jnp.float32))(x, params)
    out_f32 = jax.block_until_ready(out_f32)
    assert out_f32.shape == (B, C, H, W)
    assert jnp.allclose(out_f32, ref, rtol=5e-4, atol=5e-4), \
        f"f32 max abs diff {jnp.max(jnp.abs(out_f32 - ref))}"

    # default path: bf16 MXU operands + bf16 padded-activation scratch,
    # f32 accumulation and norm/ReLU/residual math -> loose tolerance vs f32 ref.
    out = jax.jit(residual_block)(x, params)
    out = jax.block_until_ready(out)
    assert out.shape == (B, C, H, W)
    assert jnp.allclose(out, ref, rtol=0.0, atol=0.2), \
        f"bf16 max abs diff {jnp.max(jnp.abs(out - ref))}"

    print("KERNEL_OK")
</pallas_src>

<mosaic_0001>
module attributes {stable_mosaic.version = 11 : i64} {
  func.func @kernel(%arg0: i32, %arg1: memref<1x16x16x128xf32, #tpu.memory_space<vmem>>, %arg2: memref<9x128x128xf32, #tpu.memory_space<vmem>>, %arg3: memref<1x128xf32, #tpu.memory_space<vmem>>, %arg4: memref<1x128xf32, #tpu.memory_space<vmem>>, %arg5: memref<9x128x128xf32, #tpu.memory_space<vmem>>, %arg6: memref<1x128xf32, #tpu.memory_space<vmem>>, %arg7: memref<1x128xf32, #tpu.memory_space<vmem>>, %arg8: memref<1x16x16x128xf32, #tpu.memory_space<vmem>>, %arg9: memref<18x18x128xf32, #tpu.memory_space<vmem>>, %arg10: memref<256x128xf32, #tpu.memory_space<vmem>>) attributes {dimension_semantics = [#tpu.dimension_semantics<parallel>], iteration_bounds = array<i64: 2>, scalar_prefetch = 0 : i64, scratch_operands = 2 : i64, tpu.core_type = #tpu.core_type<tc>, window_params = [{transform_indices = @transform_0, window_bounds = array<i64: 1, 16, 16, 128>}, {pipeline_mode = #tpu.pipeline_mode<synchronous>, transform_indices = @transform_1, window_bounds = array<i64: 9, 128, 128>}, {pipeline_mode = #tpu.pipeline_mode<synchronous>, transform_indices = @transform_2, window_bounds = array<i64: 1, 128>}, {pipeline_mode = #tpu.pipeline_mode<synchronous>, transform_indices = @transform_3, window_bounds = array<i64: 1, 128>}, {pipeline_mode = #tpu.pipeline_mode<synchronous>, transform_indices = @transform_4, window_bounds = array<i64: 9, 128, 128>}, {pipeline_mode = #tpu.pipeline_mode<synchronous>, transform_indices = @transform_5, window_bounds = array<i64: 1, 128>}, {pipeline_mode = #tpu.pipeline_mode<synchronous>, transform_indices = @transform_6, window_bounds = array<i64: 1, 128>}, {transform_indices = @transform_7, window_bounds = array<i64: 1, 16, 16, 128>}]} {
    %c0 = arith.constant 0 : index
    %c0_0 = arith.constant 0 : index
    %c0_1 = arith.constant 0 : index
    %c0_2 = arith.constant 0 : index
    %0 = vector.load %arg1[%c0, %c0_0, %c0_1, %c0_2] : memref<1x16x16x128xf32, #tpu.memory_space<vmem>>, vector<1x16x16x128xf32>
    %1 = vector.shape_cast %0 : vector<1x16x16x128xf32> to vector<16x16x128xf32>
    %2 = vector.extract_strided_slice %1 {offsets = [0, 1, 0], sizes = [16, 1, 128], strides = [1, 1, 1]} : vector<16x16x128xf32> to vector<16x1x128xf32>
    %3 = vector.extract_strided_slice %1 {offsets = [0, 14, 0], sizes = [16, 1, 128], strides = [1, 1, 1]} : vector<16x16x128xf32> to vector<16x1x128xf32>
    %4 = tpu.concatenate %2, %1, %3 in 1 : vector<16x1x128xf32>, vector<16x16x128xf32>, vector<16x1x128xf32> -> vector<16x18x128xf32>
    %c1 = arith.constant 1 : index
    %c0_3 = arith.constant 0 : index
    %c0_4 = arith.constant 0 : index
    %5 = vector.load %arg9[%c1, %c0_3, %c0_4] : memref<18x18x128xf32, #tpu.memory_space<vmem>>, vector<16x18x128xf32>
    tpu.vector_store %arg9[%c1, %c0_3, %c0_4], %4 {strides = array<i32>} : memref<18x18x128xf32, #tpu.memory_space<vmem>>, vector<16x18x128xf32>,
    %6 = vector.extract_strided_slice %4 {offsets = [1, 0, 0], sizes = [1, 18, 128], strides = [1, 1, 1]} : vector<16x18x128xf32> to vector<1x18x128xf32>
    %c0_5 = arith.constant 0 : index
    %c0_6 = arith.constant 0 : index
    %c0_7 = arith.constant 0 : index
    %7 = vector.load %arg9[%c0_5, %c0_6, %c0_7] : memref<18x18x128xf32, #tpu.memory_space<vmem>>, vector<1x18x128xf32>
    tpu.vector_store %arg9[%c0_5, %c0_6, %c0_7], %6 {strides = array<i32>} : memref<18x18x128xf32, #tpu.memory_space<vmem>>, vector<1x18x128xf32>,
    %8 = vector.extract_strided_slice %4 {offsets = [14, 0, 0], sizes = [1, 18, 128], strides = [1, 1, 1]} : vector<16x18x128xf32> to vector<1x18x128xf32>
    %c17 = arith.constant 17 : index
    %c0_8 = arith.constant 0 : index
    %c0_9 = arith.constant 0 : index
    %9 = vector.load %arg9[%c17, %c0_8, %c0_9] : memref<18x18x128xf32, #tpu.memory_space<vmem>>, vector<1x18x128xf32>
    tpu.vector_store %arg9[%c17, %c0_8, %c0_9], %8 {strides = array<i32>} : memref<18x18x128xf32, #tpu.memory_space<vmem>>, vector<1x18x128xf32>,
    %c0_10 = arith.constant 0 : index
    %c0_11 = arith.constant 0 : index
    %c0_12 = arith.constant 0 : index
    %10 = vector.load %arg9[%c0_10, %c0_11, %c0_12] : memref<18x18x128xf32, #tpu.memory_space<vmem>>, vector<16x16x128xf32>
    %11 = vector.shape_cast %10 : vector<16x16x128xf32> to vector<256x128xf32>
    %c0_13 = arith.constant 0 : index
    %c0_14 = arith.constant 0 : index
    %c0_15 = arith.constant 0 : index
    %12 = vector.load %arg2[%c0_13, %c0_14, %c0_15] : memref<9x128x128xf32, #tpu.memory_space<vmem>>, vector<1x128x128xf32>
    %13 = vector.shape_cast %12 : vector<1x128x128xf32> to vector<128x128xf32>
    %cst = arith.constant dense<0.000000e+00> : vector<256x128xf32>
    %14 = tpu.matmul %11, %13, %cst {dimension_numbers = #tpu.dot_dimension_numbers<[1], [0], [0], [1], [0, 0, 1, 1], [], []>} : vector<256x128xf32>, vector<128x128xf32>, vector<256x128xf32> -> vector<256x128xf32>
    %c0_16 = arith.constant 0 : index
    %c1_17 = arith.constant 1 : index
    %c0_18 = arith.constant 0 : index
    %15 = vector.load %arg9[%c0_16, %c1_17, %c0_18] : memref<18x18x128xf32, #tpu.memory_space<vmem>>, vector<16x16x128xf32>
    %16 = vector.shape_cast %15 : vector<16x16x128xf32> to vector<256x128xf32>
    %c1_19 = arith.constant 1 : index
    %c0_20 = arith.constant 0 : index
    %c0_21 = arith.constant 0 : index
    %17 = vector.load %arg2[%c1_19, %c0_20, %c0_21] : memref<9x128x128xf32, #tpu.memory_space<vmem>>, vector<1x128x128xf32>
    %18 = vector.shape_cast %17 : vector<1x128x128xf32> to vector<128x128xf32>
    %cst_22 = arith.constant dense<0.000000e+00> : vector<256x128xf32>
    %19 = tpu.matmul %16, %18, %cst_22 {dimension_numbers = #tpu.dot_dimension_numbers<[1], [0], [0], [1], [0, 0, 1, 1], [], []>} : vector<256x128xf32>, vector<128x128xf32>, vector<256x128xf32> -> vector<256x128xf32>
    %20 = arith.addf %14, %19 : vector<256x128xf32>
    %c0_23 = arith.constant 0 : index
    %c2 = arith.constant 2 : index
    %c0_24 = arith.constant 0 : index
    %21 = vector.load %arg9[%c0_23, %c2, %c0_24] : memref<18x18x128xf32, #tpu.memory_space<vmem>>, vector<16x16x128xf32>
    %22 = vector.shape_cast %21 : vector<16x16x128xf32> to vector<256x128xf32>
    %c2_25 = arith.constant 2 : index
    %c0_26 = arith.constant 0 : index
    %c0_27 = arith.constant 0 : index
    %23 = vector.load %arg2[%c2_25, %c0_26, %c0_27] : memref<9x128x128xf32, #tpu.memory_space<vmem>>, vector<1x128x128xf32>
    %24 = vector.shape_cast %23 : vector<1x128x128xf32> to vector<128x128xf32>
    %cst_28 = arith.constant dense<0.000000e+00> : vector<256x128xf32>
    %25 = tpu.matmul %22, %24, %cst_28 {dimension_numbers = #tpu.dot_dimension_numbers<[1], [0], [0], [1], [0, 0, 1, 1], [], []>} : vector<256x128xf32>, vector<128x128xf32>, vector<256x128xf32> -> vector<256x128xf32>
    %26 = arith.addf %20, %25 : vector<256x128xf32>
    %c1_29 = arith.constant 1 : index
    %c0_30 = arith.constant 0 : index
    %c0_31 = arith.constant 0 : index
    %27 = vector.load %arg9[%c1_29, %c0_30, %c0_31] : memref<18x18x128xf32, #tpu.memory_space<vmem>>, vector<16x16x128xf32>
    %28 = vector.shape_cast %27 : vector<16x16x128xf32> to vector<256x128xf32>
    %c3 = arith.constant 3 : index
    %c0_32 = arith.constant 0 : index
    %c0_33 = arith.constant 0 : index
    %29 = vector.load %arg2[%c3, %c0_32, %c0_33] : memref<9x128x128xf32, #tpu.memory_space<vmem>>, vector<1x128x128xf32>
    %30 = vector.shape_cast %29 : vector<1x128x128xf32> to vector<128x128xf32>
    %cst_34 = arith.constant dense<0.000000e+00> : vector<256x128xf32>
    %31 = tpu.matmul %28, %30, %cst_34 {dimension_numbers = #tpu.dot_dimension_numbers<[1], [0], [0], [1], [0, 0, 1, 1], [], []>} : vector<256x128xf32>, vector<128x128xf32>, vector<256x128xf32> -> vector<256x128xf32>
    %32 = arith.addf %26, %31 : vector<256x128xf32>
    %c1_35 = arith.constant 1 : index
    %c1_36 = arith.constant 1 : index
    %c0_37 = arith.constant 0 : index
    %33 = vector.load %arg9[%c1_35, %c1_36, %c0_37] : memref<18x18x128xf32, #tpu.memory_space<vmem>>, vector<16x16x128xf32>
    %34 = vector.shape_cast %33 : vector<16x16x128xf32> to vector<256x128xf32>
    %c4 = arith.constant 4 : index
    %c0_38 = arith.constant 0 : index
    %c0_39 = arith.constant 0 : index
    %35 = vector.load %arg2[%c4, %c0_38, %c0_39] : memref<9x128x128xf32, #tpu.memory_space<vmem>>, vector<1x128x128xf32>
    %36 = vector.shape_cast %35 : vector<1x128x128xf32> to vector<128x128xf32>
    %cst_40 = arith.constant dense<0.000000e+00> : vector<256x128xf32>
    %37 = tpu.matmul %34, %36, %cst_40 {dimension_numbers = #tpu.dot_dimension_numbers<[1], [0], [0], [1], [0, 0, 1, 1], [], []>} : vector<256x128xf32>, vector<128x128xf32>, vector<256x128xf32> -> vector<256x128xf32>
    %38 = arith.addf %32, %37 : vector<256x128xf32>
    %c1_41 = arith.constant 1 : index
    %c2_42 = arith.constant 2 : index
    %c0_43 = arith.constant 0 : index
    %39 = vector.load %arg9[%c1_41, %c2_42, %c0_43] : memref<18x18x128xf32, #tpu.memory_space<vmem>>, vector<16x16x128xf32>
    %40 = vector.shape_cast %39 : vector<16x16x128xf32> to vector<256x128xf32>
    %c5 = arith.constant 5 : index
    %c0_44 = arith.constant 0 : index
    %c0_45 = arith.constant 0 : index
    %41 = vector.load %arg2[%c5, %c0_44, %c0_45] : memref<9x128x128xf32, #tpu.memory_space<vmem>>, vector<1x128x128xf32>
    %42 = vector.shape_cast %41 : vector<1x128x128xf32> to vector<128x128xf32>
    %cst_46 = arith.constant dense<0.000000e+00> : vector<256x128xf32>
    %43 = tpu.matmul %40, %42, %cst_46 {dimension_numbers = #tpu.dot_dimension_numbers<[1], [0], [0], [1], [0, 0, 1, 1], [], []>} : vector<256x128xf32>, vector<128x128xf32>, vector<256x128xf32> -> vector<256x128xf32>
    %44 = arith.addf %38, %43 : vector<256x128xf32>
    %c2_47 = arith.constant 2 : index
    %c0_48 = arith.constant 0 : index
    %c0_49 = arith.constant 0 : index
    %45 = vector.load %arg9[%c2_47, %c0_48, %c0_49] : memref<18x18x128xf32, #tpu.memory_space<vmem>>, vector<16x16x128xf32>
    %46 = vector.shape_cast %45 : vector<16x16x128xf32> to vector<256x128xf32>
    %c6 = arith.constant 6 : index
    %c0_50 = arith.constant 0 : index
    %c0_51 = arith.constant 0 : index
    %47 = vector.load %arg2[%c6, %c0_50, %c0_51] : memref<9x128x128xf32, #tpu.memory_space<vmem>>, vector<1x128x128xf32>
    %48 = vector.shape_cast %47 : vector<1x128x128xf32> to vector<128x128xf32>
    %cst_52 = arith.constant dense<0.000000e+00> : vector<256x128xf32>
    %49 = tpu.matmul %46, %48, %cst_52 {dimension_numbers = #tpu.dot_dimension_numbers<[1], [0], [0], [1], [0, 0, 1, 1], [], []>} : vector<256x128xf32>, vector<128x128xf32>, vector<256x128xf32> -> vector<256x128xf32>
    %50 = arith.addf %44, %49 : vector<256x128xf32>
    %c2_53 = arith.constant 2 : index
    %c1_54 = arith.constant 1 : index
    %c0_55 = arith.constant 0 : index
    %51 = vector.load %arg9[%c2_53, %c1_54, %c0_55] : memref<18x18x128xf32, #tpu.memory_space<vmem>>, vector<16x16x128xf32>
    %52 = vector.shape_cast %51 : vector<16x16x128xf32> to vector<256x128xf32>
    %c7 = arith.constant 7 : index
    %c0_56 = arith.constant 0 : index
    %c0_57 = arith.constant 0 : index
    %53 = vector.load %arg2[%c7, %c0_56, %c0_57] : memref<9x128x128xf32, #tpu.memory_space<vmem>>, vector<1x128x128xf32>
    %54 = vector.shape_cast %53 : vector<1x128x128xf32> to vector<128x128xf32>
    %cst_58 = arith.constant dense<0.000000e+00> : vector<256x128xf32>
    %55 = tpu.matmul %52, %54, %cst_58 {dimension_numbers = #tpu.dot_dimension_numbers<[1], [0], [0], [1], [0, 0, 1, 1], [], []>} : vector<256x128xf32>, vector<128x128xf32>, vector<256x128xf32> -> vector<256x128xf32>
    %56 = arith.addf %50, %55 : vector<256x128xf32>
    %c2_59 = arith.constant 2 : index
    %c2_60 = arith.constant 2 : index
    %c0_61 = arith.constant 0 : index
    %57 = vector.load %arg9[%c2_59, %c2_60, %c0_61] : memref<18x18x128xf32, #tpu.memory_space<vmem>>, vector<16x16x128xf32>
    %58 = vector.shape_cast %57 : vector<16x16x128xf32> to vector<256x128xf32>
    %c8 = arith.constant 8 : index
    %c0_62 = arith.constant 0 : index
    %c0_63 = arith.constant 0 : index
    %59 = vector.load %arg2[%c8, %c0_62, %c0_63] : memref<9x128x128xf32, #tpu.memory_space<vmem>>, vector<1x128x128xf32>
    %60 = vector.shape_cast %59 : vector<1x128x128xf32> to vector<128x128xf32>
    %cst_64 = arith.constant dense<0.000000e+00> : vector<256x128xf32>
    %61 = tpu.matmul %58, %60, %cst_64 {dimension_numbers = #tpu.dot_dimension_numbers<[1], [0], [0], [1], [0, 0, 1, 1], [], []>} : vector<256x128xf32>, vector<128x128xf32>, vector<256x128xf32> -> vector<256x128xf32>
    %62 = arith.addf %56, %61 : vector<256x128xf32>
    %c0_65 = arith.constant 0 : index
    %c0_66 = arith.constant 0 : index
    %63 = vector.load %arg10[%c0_65, %c0_66] : memref<256x128xf32, #tpu.memory_space<vmem>>, vector<256x128xf32>
    tpu.vector_store %arg10[%c0_65, %c0_66], %62 {strides = array<i32>} : memref<256x128xf32, #tpu.memory_space<vmem>>, vector<256x128xf32>,
    %c0_67 = arith.constant 0 : index
    %c0_68 = arith.constant 0 : index
    %64 = vector.load %arg3[%c0_67, %c0_68] : memref<1x128xf32, #tpu.memory_space<vmem>>, vector<1x128xf32>
    %c0_69 = arith.constant 0 : index
    %c0_70 = arith.constant 0 : index
    %65 = vector.load %arg4[%c0_69, %c0_70] : memref<1x128xf32, #tpu.memory_space<vmem>>, vector<1x128xf32>
    %c0_71 = arith.constant 0 : index
    %c0_72 = arith.constant 0 : index
    %66 = vector.load %arg10[%c0_71, %c0_72] : memref<256x128xf32, #tpu.memory_space<vmem>>, vector<256x128xf32>
    %cst_73 = arith.constant dense<0.000000e+00> : vector<128xf32>
    %67 = vector.multi_reduction <add>, %66, %cst_73 [0] : vector<256x128xf32> to vector<128xf32>
    %68 = vector.shape_cast %67 : vector<128xf32> to vector<1x128xf32>
    %cst_74 = arith.constant 3.906250e-03 : f32
    %69 = vector.broadcast %cst_74 : f32 to vector<1x128xf32>
    %70 = arith.mulf %68, %69 : vector<1x128xf32>
    %c0_75 = arith.constant 0 : index
    %c0_76 = arith.constant 0 : index
    %71 = vector.load %arg10[%c0_75, %c0_76] : memref<256x128xf32, #tpu.memory_space<vmem>>, vector<256x128xf32>
    %72 = vector.broadcast %70 : vector<1x128xf32> to vector<256x128xf32>
    %73 = arith.subf %71, %72 : vector<256x128xf32>
    %74 = arith.mulf %73, %73 : vector<256x128xf32>
    %cst_77 = arith.constant dense<0.000000e+00> : vector<128xf32>
    %75 = vector.multi_reduction <add>, %74, %cst_77 [0] : vector<256x128xf32> to vector<128xf32>
    %76 = vector.shape_cast %75 : vector<128xf32> to vector<1x128xf32>
    %cst_78 = arith.constant 3.906250e-03 : f32
    %77 = vector.broadcast %cst_78 : f32 to vector<1x128xf32>
    %78 = arith.mulf %76, %77 : vector<1x128xf32>
    %cst_79 = arith.constant 9.99999974E-6 : f32
    %79 = vector.broadcast %cst_79 : f32 to vector<1x128xf32>
    %80 = arith.addf %78, %79 : vector<1x128xf32>
    %81 = math.rsqrt %80 : vector<1x128xf32>
    %82 = arith.mulf %64, %81 : vector<1x128xf32>
    %83 = arith.mulf %70, %82 : vector<1x128xf32>
    %84 = arith.subf %65, %83 : vector<1x128xf32>
    %c0_80 = arith.constant 0 : index
    %c0_81 = arith.constant 0 : index
    %85 = vector.load %arg10[%c0_80, %c0_81] : memref<256x128xf32, #tpu.memory_space<vmem>>, vector<256x128xf32>
    %86 = vector.broadcast %82 : vector<1x128xf32> to vector<256x128xf32>
    %87 = arith.mulf %85, %86 : vector<256x128xf32>
    %88 = vector.broadcast %84 : vector<1x128xf32> to vector<256x128xf32>
    %89 = arith.addf %87, %88 : vector<256x128xf32>
    %cst_82 = arith.constant 0.000000e+00 : f32
    %90 = vector.broadcast %cst_82 : f32 to vector<256x128xf32>
    %91 = arith.maximumf %89, %90 : vector<256x128xf32>
    %92 = vector.shape_cast %91 : vector<256x128xf32> to vector<16x16x128xf32>
    %93 = vector.extract_strided_slice %92 {offsets = [0, 1, 0], sizes = [16, 1, 128], strides = [1, 1, 1]} : vector<16x16x128xf32> to vector<16x1x128xf32>
    %94 = vector.extract_strided_slice %92 {offsets = [0, 14, 0], sizes = [16, 1, 128], strides = [1, 1, 1]} : vector<16x16x128xf32> to vector<16x1x128xf32>
    %95 = tpu.concatenate %93, %92, %94 in 1 : vector<16x1x128xf32>, vector<16x16x128xf32>, vector<16x1x128xf32> -> vector<16x18x128xf32>
    %c1_83 = arith.constant 1 : index
    %c0_84 = arith.constant 0 : index
    %c0_85 = arith.constant 0 : index
    %96 = vector.load %arg9[%c1_83, %c0_84, %c0_85] : memref<18x18x128xf32, #tpu.memory_space<vmem>>, vector<16x18x128xf32>
    tpu.vector_store %arg9[%c1_83, %c0_84, %c0_85], %95 {strides = array<i32>} : memref<18x18x128xf32, #tpu.memory_space<vmem>>, vector<16x18x128xf32>,
    %97 = vector.extract_strided_slice %95 {offsets = [1, 0, 0], sizes = [1, 18, 128], strides = [1, 1, 1]} : vector<16x18x128xf32> to vector<1x18x128xf32>
    %c0_86 = arith.constant 0 : index
    %c0_87 = arith.constant 0 : index
    %c0_88 = arith.constant 0 : index
    %98 = vector.load %arg9[%c0_86, %c0_87, %c0_88] : memref<18x18x128xf32, #tpu.memory_space<vmem>>, vector<1x18x128xf32>
    tpu.vector_store %arg9[%c0_86, %c0_87, %c0_88], %97 {strides = array<i32>} : memref<18x18x128xf32, #tpu.memory_space<vmem>>, vector<1x18x128xf32>,
    %99 = vector.extract_strided_slice %95 {offsets = [14, 0, 0], sizes = [1, 18, 128], strides = [1, 1, 1]} : vector<16x18x128xf32> to vector<1x18x128xf32>
    %c17_89 = arith.constant 17 : index
    %c0_90 = arith.constant 0 : index
    %c0_91 = arith.constant 0 : index
    %100 = vector.load %arg9[%c17_89, %c0_90, %c0_91] : memref<18x18x128xf32, #tpu.memory_space<vmem>>, vector<1x18x128xf32>
    tpu.vector_store %arg9[%c17_89, %c0_90, %c0_91], %99 {strides = array<i32>} : memref<18x18x128xf32, #tpu.memory_space<vmem>>, vector<1x18x128xf32>,
    %c0_92 = arith.constant 0 : index
    %c0_93 = arith.constant 0 : index
    %c0_94 = arith.constant 0 : index
    %101 = vector.load %arg9[%c0_92, %c0_93, %c0_94] : memref<18x18x128xf32, #tpu.memory_space<vmem>>, vector<16x16x128xf32>
    %102 = vector.shape_cast %101 : vector<16x16x128xf32> to vector<256x128xf32>
    %c0_95 = arith.constant 0 : index
    %c0_96 = arith.constant 0 : index
    %c0_97 = arith.constant 0 : index
    %103 = vector.load %arg5[%c0_95, %c0_96, %c0_97] : memref<9x128x128xf32, #tpu.memory_space<vmem>>, vector<1x128x128xf32>
    %104 = vector.shape_cast %103 : vector<1x128x128xf32> to vector<128x128xf32>
    %cst_98 = arith.constant dense<0.000000e+00> : vector<256x128xf32>
    %105 = tpu.matmul %102, %104, %cst_98 {dimension_numbers = #tpu.dot_dimension_numbers<[1], [0], [0], [1], [0, 0, 1, 1], [], []>} : vector<256x128xf32>, vector<128x128xf32>, vector<256x128xf32> -> vector<256x128xf32>
    %c0_99 = arith.constant 0 : index
    %c1_100 = arith.constant 1 : index
    %c0_101 = arith.constant 0 : index
    %106 = vector.load %arg9[%c0_99, %c1_100, %c0_101] : memref<18x18x128xf32, #tpu.memory_space<vmem>>, vector<16x16x128xf32>
    %107 = vector.shape_cast %106 : vector<16x16x128xf32> to vector<256x128xf32>
    %c1_102 = arith.constant 1 : index
    %c0_103 = arith.constant 0 : index
    %c0_104 = arith.constant 0 : index
    %108 = vector.load %arg5[%c1_102, %c0_103, %c0_104] : memref<9x128x128xf32, #tpu.memory_space<vmem>>, vector<1x128x128xf32>
    %109 = vector.shape_cast %108 : vector<1x128x128xf32> to vector<128x128xf32>
    %cst_105 = arith.constant dense<0.000000e+00> : vector<256x128xf32>
    %110 = tpu.matmul %107, %109, %cst_105 {dimension_numbers = #tpu.dot_dimension_numbers<[1], [0], [0], [1], [0, 0, 1, 1], [], []>} : vector<256x128xf32>, vector<128x128xf32>, vector<256x128xf32> -> vector<256x128xf32>
    %111 = arith.addf %105, %110 : vector<256x128xf32>
    %c0_106 = arith.constant 0 : index
    %c2_107 = arith.constant 2 : index
    %c0_108 = arith.constant 0 : index
    %112 = vector.load %arg9[%c0_106, %c2_107, %c0_108] : memref<18x18x128xf32, #tpu.memory_space<vmem>>, vector<16x16x128xf32>
    %113 = vector.shape_cast %112 : vector<16x16x128xf32> to vector<256x128xf32>
    %c2_109 = arith.constant 2 : index
    %c0_110 = arith.constant 0 : index
    %c0_111 = arith.constant 0 : index
    %114 = vector.load %arg5[%c2_109, %c0_110, %c0_111] : memref<9x128x128xf32, #tpu.memory_space<vmem>>, vector<1x128x128xf32>
    %115 = vector.shape_cast %114 : vector<1x128x128xf32> to vector<128x128xf32>
    %cst_112 = arith.constant dense<0.000000e+00> : vector<256x128xf32>
    %116 = tpu.matmul %113, %115, %cst_112 {dimension_numbers = #tpu.dot_dimension_numbers<[1], [0], [0], [1], [0, 0, 1, 1], [], []>} : vector<256x128xf32>, vector<128x128xf32>, vector<256x128xf32> -> vector<256x128xf32>
    %117 = arith.addf %111, %116 : vector<256x128xf32>
    %c1_113 = arith.constant 1 : index
    %c0_114 = arith.constant 0 : index
    %c0_115 = arith.constant 0 : index
    %118 = vector.load %arg9[%c1_113, %c0_114, %c0_115] : memref<18x18x128xf32, #tpu.memory_space<vmem>>, vector<16x16x128xf32>
    %119 = vector.shape_cast %118 : vector<16x16x128xf32> to vector<256x128xf32>
    %c3_116 = arith.constant 3 : index
    %c0_117 = arith.constant 0 : index
    %c0_118 = arith.constant 0 : index
    %120 = vector.load %arg5[%c3_116, %c0_117, %c0_118] : memref<9x128x128xf32, #tpu.memory_space<vmem>>, vector<1x128x128xf32>
    %121 = vector.shape_cast %120 : vector<1x128x128xf32> to vector<128x128xf32>
    %cst_119 = arith.constant dense<0.000000e+00> : vector<256x128xf32>
    %122 = tpu.matmul %119, %121, %cst_119 {dimension_numbers = #tpu.dot_dimension_numbers<[1], [0], [0], [1], [0, 0, 1, 1], [], []>} : vector<256x128xf32>, vector<128x128xf32>, vector<256x128xf32> -> vector<256x128xf32>
    %123 = arith.addf %117, %122 : vector<256x128xf32>
    %c1_120 = arith.constant 1 : index
    %c1_121 = arith.constant 1 : index
    %c0_122 = arith.constant 0 : index
    %124 = vector.load %arg9[%c1_120, %c1_121, %c0_122] : memref<18x18x128xf32, #tpu.memory_space<vmem>>, vector<16x16x128xf32>
    %125 = vector.shape_cast %124 : vector<16x16x128xf32> to vector<256x128xf32>
    %c4_123 = arith.constant 4 : index
    %c0_124 = arith.constant 0 : index
    %c0_125 = arith.constant 0 : index
    %126 = vector.load %arg5[%c4_123, %c0_124, %c0_125] : memref<9x128x128xf32, #tpu.memory_space<vmem>>, vector<1x128x128xf32>
    %127 = vector.shape_cast %126 : vector<1x128x128xf32> to vector<128x128xf32>
    %cst_126 = arith.constant dense<0.000000e+00> : vector<256x128xf32>
    %128 = tpu.matmul %125, %127, %cst_126 {dimension_numbers = #tpu.dot_dimension_numbers<[1], [0], [0], [1], [0, 0, 1, 1], [], []>} : vector<256x128xf32>, vector<128x128xf32>, vector<256x128xf32> -> vector<256x128xf32>
    %129 = arith.addf %123, %128 : vector<256x128xf32>
    %c1_127 = arith.constant 1 : index
    %c2_128 = arith.constant 2 : index
    %c0_129 = arith.constant 0 : index
    %130 = vector.load %arg9[%c1_127, %c2_128, %c0_129] : memref<18x18x128xf32, #tpu.memory_space<vmem>>, vector<16x16x128xf32>
    %131 = vector.shape_cast %130 : vector<16x16x128xf32> to vector<256x128xf32>
    %c5_130 = arith.constant 5 : index
    %c0_131 = arith.constant 0 : index
    %c0_132 = arith.constant 0 : index
    %132 = vector.load %arg5[%c5_130, %c0_131, %c0_132] : memref<9x128x128xf32, #tpu.memory_space<vmem>>, vector<1x128x128xf32>
    %133 = vector.shape_cast %132 : vector<1x128x128xf32> to vector<128x128xf32>
    %cst_133 = arith.constant dense<0.000000e+00> : vector<256x128xf32>
    %134 = tpu.matmul %131, %133, %cst_133 {dimension_numbers = #tpu.dot_dimension_numbers<[1], [0], [0], [1], [0, 0, 1, 1], [], []>} : vector<256x128xf32>, vector<128x128xf32>, vector<256x128xf32> -> vector<256x128xf32>
    %135 = arith.addf %129, %134 : vector<256x128xf32>
    %c2_134 = arith.constant 2 : index
    %c0_135 = arith.constant 0 : index
    %c0_136 = arith.constant 0 : index
    %136 = vector.load %arg9[%c2_134, %c0_135, %c0_136] : memref<18x18x128xf32, #tpu.memory_space<vmem>>, vector<16x16x128xf32>
    %137 = vector.shape_cast %136 : vector<16x16x128xf32> to vector<256x128xf32>
    %c6_137 = arith.constant 6 : index
    %c0_138 = arith.constant 0 : index
    %c0_139 = arith.constant 0 : index
    %138 = vector.load %arg5[%c6_137, %c0_138, %c0_139] : memref<9x128x128xf32, #tpu.memory_space<vmem>>, vector<1x128x128xf32>
    %139 = vector.shape_cast %138 : vector<1x128x128xf32> to vector<128x128xf32>
    %cst_140 = arith.constant dense<0.000000e+00> : vector<256x128xf32>
    %140 = tpu.matmul %137, %139, %cst_140 {dimension_numbers = #tpu.dot_dimension_numbers<[1], [0], [0], [1], [0, 0, 1, 1], [], []>} : vector<256x128xf32>, vector<128x128xf32>, vector<256x128xf32> -> vector<256x128xf32>
    %141 = arith.addf %135, %140 : vector<256x128xf32>
    %c2_141 = arith.constant 2 : index
    %c1_142 = arith.constant 1 : index
    %c0_143 = arith.constant 0 : index
    %142 = vector.load %arg9[%c2_141, %c1_142, %c0_143] : memref<18x18x128xf32, #tpu.memory_space<vmem>>, vector<16x16x128xf32>
    %143 = vector.shape_cast %142 : vector<16x16x128xf32> to vector<256x128xf32>
    %c7_144 = arith.constant 7 : index
    %c0_145 = arith.constant 0 : index
    %c0_146 = arith.constant 0 : index
    %144 = vector.load %arg5[%c7_144, %c0_145, %c0_146] : memref<9x128x128xf32, #tpu.memory_space<vmem>>, vector<1x128x128xf32>
    %145 = vector.shape_cast %144 : vector<1x128x128xf32> to vector<128x128xf32>
    %cst_147 = arith.constant dense<0.000000e+00> : vector<256x128xf32>
    %146 = tpu.matmul %143, %145, %cst_147 {dimension_numbers = #tpu.dot_dimension_numbers<[1], [0], [0], [1], [0, 0, 1, 1], [], []>} : vector<256x128xf32>, vector<128x128xf32>, vector<256x128xf32> -> vector<256x128xf32>
    %147 = arith.addf %141, %146 : vector<256x128xf32>
    %c2_148 = arith.constant 2 : index
    %c2_149 = arith.constant 2 : index
    %c0_150 = arith.constant 0 : index
    %148 = vector.load %arg9[%c2_148, %c2_149, %c0_150] : memref<18x18x128xf32, #tpu.memory_space<vmem>>, vector<16x16x128xf32>
    %149 = vector.shape_cast %148 : vector<16x16x128xf32> to vector<256x128xf32>
    %c8_151 = arith.constant 8 : index
    %c0_152 = arith.constant 0 : index
    %c0_153 = arith.constant 0 : index
    %150 = vector.load %arg5[%c8_151, %c0_152, %c0_153] : memref<9x128x128xf32, #tpu.memory_space<vmem>>, vector<1x128x128xf32>
    %151 = vector.shape_cast %150 : vector<1x128x128xf32> to vector<128x128xf32>
    %cst_154 = arith.constant dense<0.000000e+00> : vector<256x128xf32>
    %152 = tpu.matmul %149, %151, %cst_154 {dimension_numbers = #tpu.dot_dimension_numbers<[1], [0], [0], [1], [0, 0, 1, 1], [], []>} : vector<256x128xf32>, vector<128x128xf32>, vector<256x128xf32> -> vector<256x128xf32>
    %153 = arith.addf %147, %152 : vector<256x128xf32>
    %c0_155 = arith.constant 0 : index
    %c0_156 = arith.constant 0 : index
    %154 = vector.load %arg10[%c0_155, %c0_156] : memref<256x128xf32, #tpu.memory_space<vmem>>, vector<256x128xf32>
    tpu.vector_store %arg10[%c0_155, %c0_156], %153 {strides = array<i32>} : memref<256x128xf32, #tpu.memory_space<vmem>>, vector<256x128xf32>,
    %c0_157 = arith.constant 0 : index
    %c0_158 = arith.constant 0 : index
    %155 = vector.load %arg6[%c0_157, %c0_158] : memref<1x128xf32, #tpu.memory_space<vmem>>, vector<1x128xf32>
    %c0_159 = arith.constant 0 : index
    %c0_160 = arith.constant 0 : index
    %156 = vector.load %arg7[%c0_159, %c0_160] : memref<1x128xf32, #tpu.memory_space<vmem>>, vector<1x128xf32>
    %c0_161 = arith.constant 0 : index
    %c0_162 = arith.constant 0 : index
    %157 = vector.load %arg10[%c0_161, %c0_162] : memref<256x128xf32, #tpu.memory_space<vmem>>, vector<256x128xf32>
    %cst_163 = arith.constant dense<0.000000e+00> : vector<128xf32>
    %158 = vector.multi_reduction <add>, %157, %cst_163 [0] : vector<256x128xf32> to vector<128xf32>
    %159 = vector.shape_cast %158 : vector<128xf32> to vector<1x128xf32>
    %cst_164 = arith.constant 3.906250e-03 : f32
    %160 = vector.broadcast %cst_164 : f32 to vector<1x128xf32>
    %161 = arith.mulf %159, %160 : vector<1x128xf32>
    %c0_165 = arith.constant 0 : index
    %c0_166 = arith.constant 0 : index
    %162 = vector.load %arg10[%c0_165, %c0_166] : memref<256x128xf32, #tpu.memory_space<vmem>>, vector<256x128xf32>
    %163 = vector.broadcast %161 : vector<1x128xf32> to vector<256x128xf32>
    %164 = arith.subf %162, %163 : vector<256x128xf32>
    %165 = arith.mulf %164, %164 : vector<256x128xf32>
    %cst_167 = arith.constant dense<0.000000e+00> : vector<128xf32>
    %166 = vector.multi_reduction <add>, %165, %cst_167 [0] : vector<256x128xf32> to vector<128xf32>
    %167 = vector.shape_cast %166 : vector<128xf32> to vector<1x128xf32>
    %cst_168 = arith.constant 3.906250e-03 : f32
    %168 = vector.broadcast %cst_168 : f32 to vector<1x128xf32>
    %169 = arith.mulf %167, %168 : vector<1x128xf32>
    %cst_169 = arith.constant 9.99999974E-6 : f32
    %170 = vector.broadcast %cst_169 : f32 to vector<1x128xf32>
    %171 = arith.addf %169, %170 : vector<1x128xf32>
    %172 = math.rsqrt %171 : vector<1x128xf32>
    %173 = arith.mulf %155, %172 : vector<1x128xf32>
    %174 = arith.mulf %161, %173 : vector<1x128xf32>
    %175 = arith.subf %156, %174 : vector<1x128xf32>
    %c0_170 = arith.constant 0 : index
    %c0_171 = arith.constant 0 : index
    %176 = vector.load %arg10[%c0_170, %c0_171] : memref<256x128xf32, #tpu.memory_space<vmem>>, vector<256x128xf32>
    %177 = vector.broadcast %173 : vector<1x128xf32> to vector<256x128xf32>
    %178 = arith.mulf %176, %177 : vector<256x128xf32>
    %179 = vector.broadcast %175 : vector<1x128xf32> to vector<256x128xf32>
    %180 = arith.addf %178, %179 : vector<256x128xf32>
    %c0_172 = arith.constant 0 : index
    %c0_173 = arith.constant 0 : index
    %c0_174 = arith.constant 0 : index
    %c0_175 = arith.constant 0 : index
    %181 = vector.load %arg1[%c0_172, %c0_173, %c0_174, %c0_175] : memref<1x16x16x128xf32, #tpu.memory_space<vmem>>, vector<1x16x16x128xf32>
    %182 = vector.shape_cast %181 : vector<1x16x16x128xf32> to vector<16x16x128xf32>
    %183 = vector.shape_cast %182 : vector<16x16x128xf32> to vector<256x128xf32>
    %184 = arith.addf %180, %183 : vector<256x128xf32>
    %185 = vector.shape_cast %184 : vector<256x128xf32> to vector<16x16x128xf32>
    %c0_176 = arith.constant 0 : index
    %c0_177 = arith.constant 0 : index
    %c0_178 = arith.constant 0 : index
    %c0_179 = arith.constant 0 : index
    %186 = vector.load %arg8[%c0_176, %c0_177, %c0_178, %c0_179] : memref<1x16x16x128xf32, #tpu.memory_space<vmem>>, vector<1x16x16x128xf32>
    %187 = vector.shape_cast %186 : vector<1x16x16x128xf32> to vector<16x16x128xf32>
    %188 = vector.shape_cast %185 : vector<16x16x128xf32> to vector<1x16x16x128xf32>
    tpu.vector_store %arg8[%c0_176, %c0_177, %c0_178, %c0_179], %188 {strides = array<i32>} : memref<1x16x16x128xf32, #tpu.memory_space<vmem>>, vector<1x16x16x128xf32>,
    return
  }
  func.func @transform_0(%arg0: i32) -> (i32, i32, i32, i32) {
    %c0_i32 = arith.constant 0 : i32
    %c0_i32_0 = arith.constant 0 : i32
    %c0_i32_1 = arith.constant 0 : i32
    %c0_i32_2 = arith.constant 0 : i32
    return %arg0, %c0_i32, %c0_i32_0, %c0_i32_1 : i32, i32, i32, i32
  }
  func.func @transform_1(%arg0: i32) -> (i32, i32, i32) {
    %c0_i32 = arith.constant 0 : i32
    %c0_i32_0 = arith.constant 0 : i32
    %c0_i32_1 = arith.constant 0 : i32
    %c0_i32_2 = arith.constant 0 : i32
    return %c0_i32, %c0_i32_0, %c0_i32_1 : i32, i32, i32
  }
  func.func @transform_2(%arg0: i32) -> (i32, i32) {
    %c0_i32 = arith.constant 0 : i32
    %c0_i32_0 = arith.constant 0 : i32
    %c0_i32_1 = arith.constant 0 : i32
    return %c0_i32, %c0_i32_0 : i32, i32
  }
  func.func @transform_3(%arg0: i32) -> (i32, i32) {
    %c0_i32 = arith.constant 0 : i32
    %c0_i32_0 = arith.constant 0 : i32
    %c0_i32_1 = arith.constant 0 : i32
    return %c0_i32, %c0_i32_0 : i32, i32
  }
  func.func @transform_4(%arg0: i32) -> (i32, i32, i32) {
    %c0_i32 = arith.constant 0 : i32
    %c0_i32_0 = arith.constant 0 : i32
    %c0_i32_1 = arith.constant 0 : i32
    %c0_i32_2 = arith.constant 0 : i32
    return %c0_i32, %c0_i32_0, %c0_i32_1 : i32, i32, i32
  }
  func.func @transform_5(%arg0: i32) -> (i32, i32) {
    %c0_i32 = arith.constant 0 : i32
    %c0_i32_0 = arith.constant 0 : i32
    %c0_i32_1 = arith.constant 0 : i32
    return %c0_i32, %c0_i32_0 : i32, i32
  }
  func.func @transform_6(%arg0: i32) -> (i32, i32) {
    %c0_i32 = arith.constant 0 : i32
    %c0_i32_0 = arith.constant 0 : i32
    %c0_i32_1 = arith.constant 0 : i32
    return %c0_i32, %c0_i32_0 : i32, i32
  }
  func.func @transform_7(%arg0: i32) -> (i32, i32, i32, i32) {
    %c0_i32 = arith.constant 0 : i32
    %c0_i32_0 = arith.constant 0 : i32
    %c0_i32_1 = arith.constant 0 : i32
    %c0_i32_2 = arith.constant 0 : i32
    return %arg0, %c0_i32, %c0_i32_0, %c0_i32_1 : i32, i32, i32, i32
  }
}

</mosaic_0001>

<llo_original>
// kernel: residual_block.1
$region0: #{residual_block.1}
  #allocation0 [shape = 'u32[]', space=smem, size = 0x4, offset = 0x4, fixed_abs, tag = 'smem constant byte address 0x4 - core index']
  #allocation1 [shape = 'u32[144,128]{1,0:T(1,128)}', space=vmem, size = 0x12000, scoped, tag = 'internal scratch']
  #allocation2 [shape = 'f32[18,18,128]{2,1,0:T(8,128)}', space=vmem, size = 0x36000, scoped, tag = 'scratch operand']
  #allocation3 [shape = 'f32[256,128]{1,0:T(8,128)}', space=vmem, size = 0x20000, scoped, tag = 'scratch operand']
  %s0 = inlined_call_operand.vmem [shape: f32[2,16,16,128], index: 0, kind: input, shape index: {}]
  %s1 = inlined_call_operand.vmem [shape: f32[9,128,128], index: 1, kind: input, shape index: {}]
  %s2 = inlined_call_operand.vmem [shape: f32[1,128], index: 2, kind: input, shape index: {}]
  %s3 = inlined_call_operand.vmem [shape: f32[1,128], index: 3, kind: input, shape index: {}]
  %s4 = inlined_call_operand.vmem [shape: f32[9,128,128], index: 4, kind: input, shape index: {}]
  %s5 = inlined_call_operand.vmem [shape: f32[1,128], index: 5, kind: input, shape index: {}]
  %s6 = inlined_call_operand.vmem [shape: f32[1,128], index: 6, kind: input, shape index: {}]
  %s7 = inlined_call_operand.vmem [shape: f32[2,16,16,128], index: 7, kind: output, shape index: {}]
  %s8 = sld [smem:[#allocation0]]
  $region61: #{residual_block.1} parent=0
    _
  %s10 = ssub.s32 1, %s8
  %s11 = scalar_select 0, %s10, %s8
  loop: start=0, step=1, limit=4
  $region2: #{residual_block.1} parent=0 // loop_pre_header
    _
  $region3: #{residual_block.1} parent=0 // loop_header
    %s13 = sphi 0, %s17
    %p14 = scmp.ge.s32.totalorder %s13, 4
    %s23 = sphi 0, %s25
    %s26 = sphi 0, %s23
    %s27 = sphi 0, %s26
    %s43 = sphi 0, %s27
    %s47 = sphi 0, %s47
    %s49 = sphi 0, %s47
    %s50 = sphi 0, %s49
    %s64 = sphi 0, %s50
    %s68 = sphi 0, %s68
    %s70 = sphi 0, %s68
    %s71 = sphi 0, %s70
    %s85 = sphi 0, %s71
    %s89 = sphi 0, %s89
    %s91 = sphi 0, %s89
    %s92 = sphi 0, %s91
    %s106 = sphi 0, %s92
    %s110 = sphi 0, %s110
    %s112 = sphi 0, %s110
    %s113 = sphi 0, %s112
    %s127 = sphi 0, %s113
    %s131 = sphi 0, %s131
    %s133 = sphi 0, %s131
    %s134 = sphi 0, %s133
    %s148 = sphi 0, %s134
    %s152 = sphi 0, %s152
    %s154 = sphi 0, %s152
    %s155 = sphi 0, %s154
    %s169 = sphi 0, %s155
    %s175 = sphi 0, %s177
    %s178 = sphi 0, %s175
    %s179 = sphi 0, %s178
    %s195 = sphi 0, %s179
  $region4: #{residual_block.1} parent=0 // loop_header_branch
    %16 = sbr.rel (%p14) target = $region8
  $region5: #{residual_block.1} parent=0 // loop_body
    %s18 = ssub.s32 %s13, 1
    %s19 = ssub.s32 %s13, 2
    %s20 = sadd.s32 %s13, 1
    %s21 = ssub.s32 %s13, %s20
    %p22 = scmp.eq.s32.totalorder %s21, 0
    %s24 = sadd.s32 %s23, 1
    %s25 = scalar_select %p22, %s23, %s24
    %p28 = pneg %p22
    %p29 = scmp.eq.s32.totalorder %s13, 1
    %p30 = por %p28, %p29
    %p31 = scmp.ne.s32.totalorder %s23, %s26
    %p32 = scmp.eq.s32.totalorder %s13, 0
    %p33 = por %p31, %p32
    %p34 = scmp.ne.s32.totalorder %s23, %s26
    %p35 = scmp.eq.s32.totalorder %s18, 1
    %p36 = por %p34, %p35
    %p37 = scmp.ne.s32.totalorder %s26, %s27
    %p38 = scmp.eq.s32.totalorder %s18, 0
    %p39 = por %p37, %p38
    %p40 = scmp.ne.s32.totalorder %s26, %s27
    %p41 = scmp.eq.s32.totalorder %s19, 1
    %p42 = por %p40, %p41
    %p44 = scmp.ne.s32.totalorder %s27, %s43
    %p45 = scmp.eq.s32.totalorder %s19, 0
    %p46 = por %p44, %p45
    %s48 = sadd.s32 %s47, 1
    %p51 = scmp.eq.s32.totalorder %s13, 1
    %p52 = scmp.ne.s32.totalorder %s47, %s49
    %p53 = scmp.eq.s32.totalorder %s13, 0
    %p54 = por %p52, %p53
    %p55 = scmp.ne.s32.totalorder %s47, %s49
    %p56 = scmp.eq.s32.totalorder %s18, 1
    %p57 = por %p55, %p56
    %p58 = scmp.ne.s32.totalorder %s49, %s50
    %p59 = scmp.eq.s32.totalorder %s18, 0
    %p60 = por %p58, %p59
    %p61 = scmp.ne.s32.totalorder %s49, %s50
    %p62 = scmp.eq.s32.totalorder %s19, 1
    %p63 = por %p61, %p62
    %p65 = scmp.ne.s32.totalorder %s50, %s64
    %p66 = scmp.eq.s32.totalorder %s19, 0
    %p67 = por %p65, %p66
    %s69 = sadd.s32 %s68, 1
    %p72 = scmp.eq.s32.totalorder %s13, 1
    %p73 = scmp.ne.s32.totalorder %s68, %s70
    %p74 = scmp.eq.s32.totalorder %s13, 0
    %p75 = por %p73, %p74
    %p76 = scmp.ne.s32.totalorder %s68, %s70
    %p77 = scmp.eq.s32.totalorder %s18, 1
    %p78 = por %p76, %p77
    %p79 = scmp.ne.s32.totalorder %s70, %s71
    %p80 = scmp.eq.s32.totalorder %s18, 0
    %p81 = por %p79, %p80
    %p82 = scmp.ne.s32.totalorder %s70, %s71
    %p83 = scmp.eq.s32.totalorder %s19, 1
    %p84 = por %p82, %p83
    %p86 = scmp.ne.s32.totalorder %s71, %s85
    %p87 = scmp.eq.s32.totalorder %s19, 0
    %p88 = por %p86, %p87
    %s90 = sadd.s32 %s89, 1
    %p93 = scmp.eq.s32.totalorder %s13, 1
    %p94 = scmp.ne.s32.totalorder %s89, %s91
    %p95 = scmp.eq.s32.totalorder %s13, 0
    %p96 = por %p94, %p95
    %p97 = scmp.ne.s32.totalorder %s89, %s91
    %p98 = scmp.eq.s32.totalorder %s18, 1
    %p99 = por %p97, %p98
    %p100 = scmp.ne.s32.totalorder %s91, %s92
    %p101 = scmp.eq.s32.totalorder %s18, 0
    %p102 = por %p100, %p101
    %p103 = scmp.ne.s32.totalorder %s91, %s92
    %p104 = scmp.eq.s32.totalorder %s19, 1
    %p105 = por %p103, %p104
    %p107 = scmp.ne.s32.totalorder %s92, %s106
    %p108 = scmp.eq.s32.totalorder %s19, 0
    %p109 = por %p107, %p108
    %s111 = sadd.s32 %s110, 1
    %p114 = scmp.eq.s32.totalorder %s13, 1
    %p115 = scmp.ne.s32.totalorder %s110, %s112
    %p116 = scmp.eq.s32.totalorder %s13, 0
    %p117 = por %p115, %p116
    %p118 = scmp.ne.s32.totalorder %s110, %s112
    %p119 = scmp.eq.s32.totalorder %s18, 1
    %p120 = por %p118, %p119
    %p121 = scmp.ne.s32.totalorder %s112, %s113
    %p122 = scmp.eq.s32.totalorder %s18, 0
    %p123 = por %p121, %p122
    %p124 = scmp.ne.s32.totalorder %s112, %s113
    %p125 = scmp.eq.s32.totalorder %s19, 1
    %p126 = por %p124, %p125
    %p128 = scmp.ne.s32.totalorder %s113, %s127
    %p129 = scmp.eq.s32.totalorder %s19, 0
    %p130 = por %p128, %p129
    %s132 = sadd.s32 %s131, 1
    %p135 = scmp.eq.s32.totalorder %s13, 1
    %p136 = scmp.ne.s32.totalorder %s131, %s133
    %p137 = scmp.eq.s32.totalorder %s13, 0
    %p138 = por %p136, %p137
    %p139 = scmp.ne.s32.totalorder %s131, %s133
    %p140 = scmp.eq.s32.totalorder %s18, 1
    %p141 = por %p139, %p140
    %p142 = scmp.ne.s32.totalorder %s133, %s134
    %p143 = scmp.eq.s32.totalorder %s18, 0
    %p144 = por %p142, %p143
    %p145 = scmp.ne.s32.totalorder %s133, %s134
    %p146 = scmp.eq.s32.totalorder %s19, 1
    %p147 = por %p145, %p146
    %p149 = scmp.ne.s32.totalorder %s134, %s148
    %p150 = scmp.eq.s32.totalorder %s19, 0
    %p151 = por %p149, %p150
    %s153 = sadd.s32 %s152, 1
    %p156 = scmp.eq.s32.totalorder %s13, 1
    %p157 = scmp.ne.s32.totalorder %s152, %s154
    %p158 = scmp.eq.s32.totalorder %s13, 0
    %p159 = por %p157, %p158
    %p160 = scmp.ne.s32.totalorder %s152, %s154
    %p161 = scmp.eq.s32.totalorder %s18, 1
    %p162 = por %p160, %p161
    %p163 = scmp.ne.s32.totalorder %s154, %s155
    %p164 = scmp.eq.s32.totalorder %s18, 0
    %p165 = por %p163, %p164
    %p166 = scmp.ne.s32.totalorder %s154, %s155
    %p167 = scmp.eq.s32.totalorder %s19, 1
    %p168 = por %p166, %p167
    %p170 = scmp.ne.s32.totalorder %s155, %s169
    %p171 = scmp.eq.s32.totalorder %s19, 0
    %p172 = por %p170, %p171
    %s173 = ssub.s32 %s13, %s20
    %p174 = scmp.eq.s32.totalorder %s173, 0
    %s176 = sadd.s32 %s175, 1
    %s177 = scalar_select %p174, %s175, %s176
    %p180 = pneg %p174
    %p181 = scmp.eq.s32.totalorder %s13, 1
    %p182 = por %p180, %p181
    %p183 = scmp.ne.s32.totalorder %s175, %s178
    %p184 = scmp.eq.s32.totalorder %s13, 0
    %p185 = por %p183, %p184
    %p186 = scmp.ne.s32.totalorder %s175, %s178
    %p187 = scmp.eq.s32.totalorder %s18, 1
    %p188 = por %p186, %p187
    %p189 = scmp.ne.s32.totalorder %s178, %s179
    %p190 = scmp.eq.s32.totalorder %s18, 0
    %p191 = por %p189, %p190
    %p192 = scmp.ne.s32.totalorder %s178, %s179
    %p193 = scmp.eq.s32.totalorder %s19, 1
    %p194 = por %p192, %p193
    %p196 = scmp.ne.s32.totalorder %s179, %s195
    %p197 = scmp.eq.s32.totalorder %s19, 0
    %p198 = por %p196, %p197
    %p199 = scmp.le.s32.totalorder 1, %s13
    %p200 = scmp.lt.s32.totalorder %s13, 3
    %p201 = pnand %p199, %p200
    %p202 = pneg %p201
    // Predicated region
    $region9: #{residual_block.1} parent=5 // pred_check
      _
    $region10: #{residual_block.1} parent=5 // pred_check_branch
      %204 = sbr.rel (%p201) target = $region12
    $region11: #{residual_block.1} parent=5 // pred_region
      %s205 = ssub.s32 %s13, 1
      // Predicated region
      $region13: #{residual_block.1} parent=11 // pred_check
        %p206 = pneg %p60
      $region14: #{residual_block.1} parent=11 // pred_check_branch
        %208 = sbr.rel (%p206) target = $region16
      $region15: #{residual_block.1} parent=11 // pred_region
        _
      $region16: #{residual_block.1} parent=11 // pred_fallthru
        _
      // Predicated region
      $region17: #{residual_block.1} parent=11 // pred_check
        %p209 = pneg %p81
      $region18: #{residual_block.1} parent=11 // pred_check_branch
        %211 = sbr.rel (%p209) target = $region20
      $region19: #{residual_block.1} parent=11 // pred_region
        _
      $region20: #{residual_block.1} parent=11 // pred_fallthru
        _
      // Predicated region
      $region21: #{residual_block.1} parent=11 // pred_check
        %p212 = pneg %p102
      $region22: #{residual_block.1} parent=11 // pred_check_branch
        %214 = sbr.rel (%p212) target = $region24
      $region23: #{residual_block.1} parent=11 // pred_region
        _
      $region24: #{residual_block.1} parent=11 // pred_fallthru
        _
      // Predicated region
      $region25: #{residual_block.1} parent=11 // pred_check
        %p215 = pneg %p123
      $region26: #{residual_block.1} parent=11 // pred_check_branch
        %217 = sbr.rel (%p215) target = $region28
      $region27: #{residual_block.1} parent=11 // pred_region
        _
      $region28: #{residual_block.1} parent=11 // pred_fallthru
        _
      // Predicated region
      $region29: #{residual_block.1} parent=11 // pred_check
        %p218 = pneg %p144
      $region30: #{residual_block.1} parent=11 // pred_check_branch
        %220 = sbr.rel (%p218) target = $region32
      $region31: #{residual_block.1} parent=11 // pred_region
        _
      $region32: #{residual_block.1} parent=11 // pred_fallthru
        _
      // Predicated region
      $region33: #{residual_block.1} parent=11 // pred_check
        %p221 = pneg %p165
      $region34: #{residual_block.1} parent=11 // pred_check_branch
        %223 = sbr.rel (%p221) target = $region36
      $region35: #{residual_block.1} parent=11 // pred_region
        _
      $region36: #{residual_block.1} parent=11 // pred_fallthru
        _
    $region12: #{residual_block.1} parent=5 // pred_fallthru
      _
    %p224 = scmp.lt.s32.totalorder %s13, 2
    // Predicated region
    $region37: #{residual_block.1} parent=5 // pred_check
      %p225 = pneg %p224
    $region38: #{residual_block.1} parent=5 // pred_check_branch
      %227 = sbr.rel (%p225) target = $region40
    $region39: #{residual_block.1} parent=5 // pred_region
      // Predicated region
      $region41: #{residual_block.1} parent=39 // pred_check
        %p228 = pneg %p33
      $region42: #{residual_block.1} parent=39 // pred_check_branch
        %230 = sbr.rel (%p228) target = $region44
      $region43: #{residual_block.1} parent=39 // pred_region
        %p231 = scmp.lt.s32.totalorder %s13, 1
        %s232 = scalar_select %p231, %s13, 1
        %s233 = smul.addr %s232, 32
        %s234 = smul.addr %s233, 8
        %s235 = scalar_lea.vmem %s0, %s234
      $region44: #{residual_block.1} parent=39 // pred_fallthru
        _
    $region40: #{residual_block.1} parent=5 // pred_fallthru
      _
    %p236 = scmp.le.s32.totalorder 1, %s13
    %p237 = scmp.lt.s32.totalorder %s13, 3
    %p238 = pnand %p236, %p237
    %p239 = pneg %p238
    // Predicated region
    $region45: #{residual_block.1} parent=5 // pred_check
      _
    $region46: #{residual_block.1} parent=5 // pred_check_branch
      %241 = sbr.rel (%p238) target = $region48
    $region47: #{residual_block.1} parent=5 // pred_region
      %s242 = ssub.s32 %s13, 1
      %p243 = scmp.lt.s32.totalorder %s18, 1
      %s244 = scalar_select %p243, %s18, 1
      %s245 = smul.addr %s244, 32
      %s246 = smul.addr %s245, 8
      %s247 = scalar_lea.vmem %s0, %s246
      %p248 = pneg %p39
      %p249 = pneg %p36
      %p250 = pneg %p60
      %p251 = pneg %p57
      %p252 = pneg %p81
      %p253 = pneg %p78
      %p254 = pneg %p102
      %p255 = pneg %p99
      %p256 = pneg %p123
      %p257 = pneg %p120
      %p258 = pneg %p144
      %p259 = pneg %p141
      %p260 = pneg %p165
      %p261 = pneg %p162
      %p262 = pneg %p191
      %p263 = pneg %p188
      %p264 = scmp.lt.s32.totalorder %s18, 1
      %s265 = scalar_select %p264, %s18, 1
      %s266 = smul.addr %s265, 32
      %s267 = smul.addr %s266, 8
      %s268 = scalar_lea.vmem %s7, %s267
      %p269 = scmp.lt.s32.totalorder %s18, 1
      %s270 = scalar_select %p269, %s18, 1
      %s271 = smul.addr %s270, 32
      %s272 = smul.addr %s271, 8
      %s273 = scalar_lea.vmem %s0, %s272
      %p274 = scmp.lt.s32.totalorder %s18, 1
      %s275 = scalar_select %p274, %s18, 1
      %s276 = smul.addr %s275, 32
      %s277 = smul.addr %s276, 8
      %s278 = scalar_lea.vmem %s7, %s277
      %v279 = vld [vmem:[%s273] sm:$0xff]
      %v280 = vld [vmem:[%s273 + $0x8] sm:$0xff]
      %v281 = vld [vmem:[%s273 + $0x10] sm:$0xff]
      %v282 = vld [vmem:[%s273 + $0x18] sm:$0xff]
      %v283 = vld [vmem:[%s273 + $0x20] sm:$0xff]
      %v284 = vld [vmem:[%s273 + $0x28] sm:$0xff]
      %v285 = vld [vmem:[%s273 + $0x30] sm:$0xff]
      %v286 = vld [vmem:[%s273 + $0x38] sm:$0xff]
      %v287 = vld [vmem:[%s273 + $0x40] sm:$0xff]
      %v288 = vld [vmem:[%s273 + $0x48] sm:$0xff]
      %v289 = vld [vmem:[%s273 + $0x50] sm:$0xff]
      %v290 = vld [vmem:[%s273 + $0x58] sm:$0xff]
      %v291 = vld [vmem:[%s273 + $0x60] sm:$0xff]
      %v292 = vld [vmem:[%s273 + $0x68] sm:$0xff]
      %v293 = vld [vmem:[%s273 + $0x70] sm:$0xff]
      %v294 = vld [vmem:[%s273 + $0x78] sm:$0xff]
      %v295 = vld [vmem:[%s273 + $0x80] sm:$0xff]
      %v296 = vld [vmem:[%s273 + $0x88] sm:$0xff]
      %v297 = vld [vmem:[%s273 + $0x90] sm:$0xff]
      %v298 = vld [vmem:[%s273 + $0x98] sm:$0xff]
      %v299 = vld [vmem:[%s273 + $0xa0] sm:$0xff]
      %v300 = vld [vmem:[%s273 + $0xa8] sm:$0xff]
      %v301 = vld [vmem:[%s273 + $0xb0] sm:$0xff]
      %v302 = vld [vmem:[%s273 + $0xb8] sm:$0xff]
      %v303 = vld [vmem:[%s273 + $0xc0] sm:$0xff]
      %v304 = vld [vmem:[%s273 + $0xc8] sm:$0xff]
      %v305 = vld [vmem:[%s273 + $0xd0] sm:$0xff]
      %v306 = vld [vmem:[%s273 + $0xd8] sm:$0xff]
      %v307 = vld [vmem:[%s273 + $0xe0] sm:$0xff]
      %v308 = vld [vmem:[%s273 + $0xe8] sm:$0xff]
      %v309 = vld [vmem:[%s273 + $0xf0] sm:$0xff]
      %v310 = vld [vmem:[%s273 + $0xf8] sm:$0xff]
      %v327 = vrot.slane %v279, 1
      %v328 = vrot.slane %v281, 1
      %v329 = vrot.slane %v283, 1
      %v330 = vrot.slane %v285, 1
      %v331 = vrot.slane %v287, 1
      %v332 = vrot.slane %v289, 1
      %v333 = vrot.slane %v291, 1
      %v334 = vrot.slane %v293, 1
      %v335 = vrot.slane %v295, 1
      %v336 = vrot.slane %v297, 1
      %v337 = vrot.slane %v299, 1
      %v338 = vrot.slane %v301, 1
      %v339 = vrot.slane %v303, 1
      %v340 = vrot.slane %v305, 1
      %v341 = vrot.slane %v307, 1
      %v342 = vrot.slane %v309, 1
      %vm375 = vcmask 1040384
      %v376 = vrot.slane %v279, 7
      %v377 = vrot.slane %v280, 7
      %v378 = vsel %vm375, %v376, %v377
      %v379 = vrot.slane %v281, 7
      %v380 = vrot.slane %v282, 7
      %v381 = vsel %vm375, %v379, %v380
      %v382 = vrot.slane %v283, 7
      %v383 = vrot.slane %v284, 7
      %v384 = vsel %vm375, %v382, %v383
      %v385 = vrot.slane %v285, 7
      %v386 = vrot.slane %v286, 7
      %v387 = vsel %vm375, %v385, %v386
      %v388 = vrot.slane %v287, 7
      %v389 = vrot.slane %v288, 7
      %v390 = vsel %vm375, %v388, %v389
      %v391 = vrot.slane %v289, 7
      %v392 = vrot.slane %v290, 7
      %v393 = vsel %vm375, %v391, %v392
      %v394 = vrot.slane %v291, 7
      %v395 = vrot.slane %v292, 7
      %v396 = vsel %vm375, %v394, %v395
      %v397 = vrot.slane %v293, 7
      %v398 = vrot.slane %v294, 7
      %v399 = vsel %vm375, %v397, %v398
      %v400 = vrot.slane %v295, 7
      %v401 = vrot.slane %v296, 7
      %v402 = vsel %vm375, %v400, %v401
      %v403 = vrot.slane %v297, 7
      %v404 = vrot.slane %v298, 7
      %v405 = vsel %vm375, %v403, %v404
      %v406 = vrot.slane %v299, 7
      %v407 = vrot.slane %v300, 7
      %v408 = vsel %vm375, %v406, %v407
      %v409 = vrot.slane %v301, 7
      %v410 = vrot.slane %v302, 7
      %v411 = vsel %vm375, %v409, %v410
      %v412 = vrot.slane %v303, 7
      %v413 = vrot.slane %v304, 7
      %v414 = vsel %vm375, %v412, %v413
      %v415 = vrot.slane %v305, 7
      %v416 = vrot.slane %v306, 7
      %v417 = vsel %vm375, %v415, %v416
      %v418 = vrot.slane %v307, 7
      %v419 = vrot.slane %v308, 7
      %v420 = vsel %vm375, %v418, %v419
      %v421 = vrot.slane %v309, 7
      %v422 = vrot.slane %v310, 7
      %v423 = vsel %vm375, %v421, %v422
      %v472 = vrot.slane %v280, 5
      %v473 = vrot.slane %v282, 5
      %v474 = vrot.slane %v284, 5
      %v475 = vrot.slane %v286, 5
      %v476 = vrot.slane %v288, 5
      %v477 = vrot.slane %v290, 5
      %v478 = vrot.slane %v292, 5
      %v479 = vrot.slane %v294, 5
      %v480 = vrot.slane %v296, 5
      %v481 = vrot.slane %v298, 5
      %v482 = vrot.slane %v300, 5
      %v483 = vrot.slane %v302, 5
      %v484 = vrot.slane %v304, 5
      %v485 = vrot.slane %v306, 5
      %v486 = vrot.slane %v308, 5
      %v487 = vrot.slane %v310, 5
      %v504 = vsel %vm375, %v327, %v376
      %v505 = vsel %vm375, %v328, %v379
      %v506 = vsel %vm375, %v329, %v382
      %v507 = vsel %vm375, %v330, %v385
      %v508 = vsel %vm375, %v331, %v388
      %v509 = vsel %vm375, %v332, %v391
      %v510 = vsel %vm375, %v333, %v394
      %v511 = vsel %vm375, %v334, %v397
      %v512 = vsel %vm375, %v335, %v400
      %v513 = vsel %vm375, %v336, %v403
      %v514 = vsel %vm375, %v337, %v406
      %v515 = vsel %vm375, %v338, %v409
      %v516 = vsel %vm375, %v339, %v412
      %v517 = vsel %vm375, %v340, %v415
      %v518 = vsel %vm375, %v341, %v418
      %v519 = vsel %vm375, %v342, %v421
      %v520 = vsel %vm375, %v377, %v472
      %v521 = vsel %vm375, %v380, %v473
      %v522 = vsel %vm375, %v383, %v474
      %v523 = vsel %vm375, %v386, %v475
      %v524 = vsel %vm375, %v389, %v476
      %v525 = vsel %vm375, %v392, %v477
      %v526 = vsel %vm375, %v395, %v478
      %v527 = vsel %vm375, %v398, %v479
      %v528 = vsel %vm375, %v401, %v480
      %v529 = vsel %vm375, %v404, %v481
      %v530 = vsel %vm375, %v407, %v482
      %v531 = vsel %vm375, %v410, %v483
      %v532 = vsel %vm375, %v413, %v484
      %v533 = vsel %vm375, %v416, %v485
      %v534 = vsel %vm375, %v419, %v486
      %v535 = vsel %vm375, %v422, %v487
      %s536 = scalar_lea.vmem [#allocation2], 24
      %537 = vst [vmem:[%s536] sm:$0xff] %v504
      %538 = vst [vmem:[%s536 + $0x8] sm:$0xff] %v378
      %539 = vst [vmem:[%s536 + $0x10] sm:$0x3] %v520
      %540 = vst [vmem:[%s536 + $0x18] sm:$0xff] %v505
      %541 = vst [vmem:[%s536 + $0x20] sm:$0xff] %v381
      %542 = vst [vmem:[%s536 + $0x28] sm:$0x3] %v521
      %543 = vst [vmem:[%s536 + $0x30] sm:$0xff] %v506
      %544 = vst [vmem:[%s536 + $0x38] sm:$0xff] %v384
      %545 = vst [vmem:[%s536 + $0x40] sm:$0x3] %v522
      %546 = vst [vmem:[%s536 + $0x48] sm:$0xff] %v507
      %547 = vst [vmem:[%s536 + $0x50] sm:$0xff] %v387
      %548 = vst [vmem:[%s536 + $0x58] sm:$0x3] %v523
      %549 = vst [vmem:[%s536 + $0x60] sm:$0xff] %v508
      %550 = vst [vmem:[%s536 + $0x68] sm:$0xff] %v390
      %551 = vst [vmem:[%s536 + $0x70] sm:$0x3] %v524
      %552 = vst [vmem:[%s536 + $0x78] sm:$0xff] %v509
      %553 = vst [vmem:[%s536 + $0x80] sm:$0xff] %v393
      %554 = vst [vmem:[%s536 + $0x88] sm:$0x3] %v525
      %555 = vst [vmem:[%s536 + $0x90] sm:$0xff] %v510
      %556 = vst [vmem:[%s536 + $0x98] sm:$0xff] %v396
      %557 = vst [vmem:[%s536 + $0xa0] sm:$0x3] %v526
      %558 = vst [vmem:[%s536 + $0xa8] sm:$0xff] %v511
      %559 = vst [vmem:[%s536 + $0xb0] sm:$0xff] %v399
      %560 = vst [vmem:[%s536 + $0xb8] sm:$0x3] %v527
      %561 = vst [vmem:[%s536 + $0xc0] sm:$0xff] %v512
      %562 = vst [vmem:[%s536 + $0xc8] sm:$0xff] %v402
      %563 = vst [vmem:[%s536 + $0xd0] sm:$0x3] %v528
      %564 = vst [vmem:[%s536 + $0xd8] sm:$0xff] %v513
      %565 = vst [vmem:[%s536 + $0xe0] sm:$0xff] %v405
      %566 = vst [vmem:[%s536 + $0xe8] sm:$0x3] %v529
      %567 = vst [vmem:[%s536 + $0xf0] sm:$0xff] %v514
      %568 = vst [vmem:[%s536 + $0xf8] sm:$0xff] %v408
      %569 = vst [vmem:[%s536 + $0x100] sm:$0x3] %v530
      %570 = vst [vmem:[%s536 + $0x108] sm:$0xff] %v515
      %571 = vst [vmem:[%s536 + $0x110] sm:$0xff] %v411
      %572 = vst [vmem:[%s536 + $0x118] sm:$0x3] %v531
      %573 = vst [vmem:[%s536 + $0x120] sm:$0xff] %v516
      %574 = vst [vmem:[%s536 + $0x128] sm:$0xff] %v414
      %575 = vst [vmem:[%s536 + $0x130] sm:$0x3] %v532
      %576 = vst [vmem:[%s536 + $0x138] sm:$0xff] %v517
      %577 = vst [vmem:[%s536 + $0x140] sm:$0xff] %v417
      %578 = vst [vmem:[%s536 + $0x148] sm:$0x3] %v533
      %579 = vst [vmem:[%s536 + $0x150] sm:$0xff] %v518
      %580 = vst [vmem:[%s536 + $0x158] sm:$0xff] %v420
      %581 = vst [vmem:[%s536 + $0x160] sm:$0x3] %v534
      %582 = vst [vmem:[%s536 + $0x168] sm:$0xff] %v519
      %583 = vst [vmem:[%s536 + $0x170] sm:$0xff] %v423
      %584 = vst [vmem:[%s536 + $0x178] sm:$0x3] %v535
      %585 = vst [vmem:[#allocation2] sm:$0xff] %v505
      %586 = vst [vmem:[#allocation2 + $0x8] sm:$0xff] %v381
      %587 = vst [vmem:[#allocation2 + $0x10] sm:$0x3] %v521
      %s588 = scalar_lea.vmem [#allocation2], 408
      %589 = vst [vmem:[%s588] sm:$0xff] %v518
      %590 = vst [vmem:[%s588 + $0x8] sm:$0xff] %v420
      %591 = vst [vmem:[%s588 + $0x10] sm:$0x3] %v534
      %v592 = vld [vmem:[#allocation2] sm:$0xff]
      %v593 = vld [vmem:[#allocation2 + $0x8] sm:$0xff]
      %v594 = vld [vmem:[#allocation2 + $0x18] sm:$0xff]
      %v595 = vld [vmem:[#allocation2 + $0x20] sm:$0xff]
      %v596 = vld [vmem:[#allocation2 + $0x30] sm:$0xff]
      %v597 = vld [vmem:[#allocation2 + $0x38] sm:$0xff]
      %v598 = vld [vmem:[#allocation2 + $0x48] sm:$0xff]
      %v599 = vld [vmem:[#allocation2 + $0x50] sm:$0xff]
      %v600 = vld [vmem:[#allocation2 + $0x60] sm:$0xff]
      %v601 = vld [vmem:[#allocation2 + $0x68] sm:$0xff]
      %v602 = vld [vmem:[#allocation2 + $0x78] sm:$0xff]
      %v603 = vld [vmem:[#allocation2 + $0x80] sm:$0xff]
      %v604 = vld [vmem:[#allocation2 + $0x90] sm:$0xff]
      %v605 = vld [vmem:[#allocation2 + $0x98] sm:$0xff]
      %v606 = vld [vmem:[#allocation2 + $0xa8] sm:$0xff]
      %v607 = vld [vmem:[#allocation2 + $0xb0] sm:$0xff]
      %v608 = vld [vmem:[#allocation2 + $0xc0] sm:$0xff]
      %v609 = vld [vmem:[#allocation2 + $0xc8] sm:$0xff]
      %v610 = vld [vmem:[#allocation2 + $0xd8] sm:$0xff]
      %v611 = vld [vmem:[#allocation2 + $0xe0] sm:$0xff]
      %v612 = vld [vmem:[#allocation2 + $0xf0] sm:$0xff]
      %v613 = vld [vmem:[#allocation2 + $0xf8] sm:$0xff]
      %v614 = vld [vmem:[#allocation2 + $0x108] sm:$0xff]
      %v615 = vld [vmem:[#allocation2 + $0x110] sm:$0xff]
      %v616 = vld [vmem:[#allocation2 + $0x120] sm:$0xff]
      %v617 = vld [vmem:[#allocation2 + $0x128] sm:$0xff]
      %v618 = vld [vmem:[#allocation2 + $0x138] sm:$0xff]
      %v619 = vld [vmem:[#allocation2 + $0x140] sm:$0xff]
      %v620 = vld [vmem:[#allocation2 + $0x150] sm:$0xff]
      %v621 = vld [vmem:[#allocation2 + $0x158] sm:$0xff]
      %v622 = vld [vmem:[#allocation2 + $0x168] sm:$0xff]
      %v623 = vld [vmem:[#allocation2 + $0x170] sm:$0xff]
      %v624 = vld [vmem:[%s1] sm:$0xff]
      %v625 = vld [vmem:[%s1 + $0x8] sm:$0xff]
      %v626 = vld [vmem:[%s1 + $0x10] sm:$0xff]
      %v627 = vld [vmem:[%s1 + $0x18] sm:$0xff]
      %v628 = vld [vmem:[%s1 + $0x20] sm:$0xff]
      %v629 = vld [vmem:[%s1 + $0x28] sm:$0xff]
      %v630 = vld [vmem:[%s1 + $0x30] sm:$0xff]
      %v631 = vld [vmem:[%s1 + $0x38] sm:$0xff]
      %v632 = vld [vmem:[%s1 + $0x40] sm:$0xff]
      %v633 = vld [vmem:[%s1 + $0x48] sm:$0xff]
      %v634 = vld [vmem:[%s1 + $0x50] sm:$0xff]
      %v635 = vld [vmem:[%s1 + $0x58] sm:$0xff]
      %v636 = vld [vmem:[%s1 + $0x60] sm:$0xff]
      %v637 = vld [vmem:[%s1 + $0x68] sm:$0xff]
      %v638 = vld [vmem:[%s1 + $0x70] sm:$0xff]
      %v639 = vld [vmem:[%s1 + $0x78] sm:$0xff]
      %v640 = vld [vmem:[#allocation2 + $0x1] sm:$0xff]
      %v641 = vld [vmem:[#allocation2 + $0x9] sm:$0xff]
      %v642 = vld [vmem:[#allocation2 + $0x19] sm:$0xff]
      %v643 = vld [vmem:[#allocation2 + $0x21] sm:$0xff]
      %v644 = vld [vmem:[#allocation2 + $0x31] sm:$0xff]
      %v645 = vld [vmem:[#allocation2 + $0x39] sm:$0xff]
      %v646 = vld [vmem:[#allocation2 + $0x49] sm:$0xff]
      %v647 = vld [vmem:[#allocation2 + $0x51] sm:$0xff]
      %v648 = vld [vmem:[#allocation2 + $0x61] sm:$0xff]
      %v649 = vld [vmem:[#allocation2 + $0x69] sm:$0xff]
      %v650 = vld [vmem:[#allocation2 + $0x79] sm:$0xff]
      %v651 = vld [vmem:[#allocation2 + $0x81] sm:$0xff]
      %v652 = vld [vmem:[#allocation2 + $0x91] sm:$0xff]
      %v653 = vld [vmem:[#allocation2 + $0x99] sm:$0xff]
      %v654 = vld [vmem:[#allocation2 + $0xa9] sm:$0xff]
      %v655 = vld [vmem:[#allocation2 + $0xb1] sm:$0xff]
      %v656 = vld [vmem:[#allocation2 + $0xc1] sm:$0xff]
      %v657 = vld [vmem:[#allocation2 + $0xc9] sm:$0xff]
      %v658 = vld [vmem:[#allocation2 + $0xd9] sm:$0xff]
      %v659 = vld [vmem:[#allocation2 + $0xe1] sm:$0xff]
      %v660 = vld [vmem:[#allocation2 + $0xf1] sm:$0xff]
      %v661 = vld [vmem:[#allocation2 + $0xf9] sm:$0xff]
      %v662 = vld [vmem:[#allocation2 + $0x109] sm:$0xff]
      %v663 = vld [vmem:[#allocation2 + $0x111] sm:$0xff]
      %v664 = vld [vmem:[#allocation2 + $0x121] sm:$0xff]
      %v665 = vld [vmem:[#allocation2 + $0x129] sm:$0xff]
      %v666 = vld [vmem:[#allocation2 + $0x139] sm:$0xff]
      %v667 = vld [vmem:[#allocation2 + $0x141] sm:$0xff]
      %v668 = vld [vmem:[#allocation2 + $0x151] sm:$0xff]
      %v669 = vld [vmem:[#allocation2 + $0x159] sm:$0xff]
      %v670 = vld [vmem:[#allocation2 + $0x169] sm:$0xff]
      %v671 = vld [vmem:[#allocation2 + $0x171] sm:$0xff]
      %s672 = scalar_lea.vmem %s1, 128
      %v673 = vld [vmem:[%s672] sm:$0xff]
      %v674 = vld [vmem:[%s672 + $0x8] sm:$0xff]
      %v675 = vld [vmem:[%s672 + $0x10] sm:$0xff]
      %v676 = vld [vmem:[%s672 + $0x18] sm:$0xff]
      %v677 = vld [vmem:[%s672 + $0x20] sm:$0xff]
      %v678 = vld [vmem:[%s672 + $0x28] sm:$0xff]
      %v679 = vld [vmem:[%s672 + $0x30] sm:$0xff]
      %v680 = vld [vmem:[%s672 + $0x38] sm:$0xff]
      %v681 = vld [vmem:[%s672 + $0x40] sm:$0xff]
      %v682 = vld [vmem:[%s672 + $0x48] sm:$0xff]
      %v683 = vld [vmem:[%s672 + $0x50] sm:$0xff]
      %v684 = vld [vmem:[%s672 + $0x58] sm:$0xff]
      %v685 = vld [vmem:[%s672 + $0x60] sm:$0xff]
      %v686 = vld [vmem:[%s672 + $0x68] sm:$0xff]
      %v687 = vld [vmem:[%s672 + $0x70] sm:$0xff]
      %v688 = vld [vmem:[%s672 + $0x78] sm:$0xff]
      %689 = vmatprep.subr.mxu0 0.0
      %690 = vmatpush1.msra.mxu0 %v688
      %691 = vmatprep.subr.mxu0 0.0
      %692 = vmatpush1.msra.mxu0 %v687
      %693 = vmatprep.subr.mxu0 0.0
      %694 = vmatpush1.msra.mxu0 %v686
      %695 = vmatprep.subr.mxu0 0.0
      %696 = vmatpush1.msra.mxu0 %v685
      %697 = vmatprep.subr.mxu0 0.0
      %698 = vmatpush1.msra.mxu0 %v684
      %699 = vmatprep.subr.mxu0 0.0
      %700 = vmatpush1.msra.mxu0 %v683
      %701 = vmatprep.subr.mxu0 0.0
      %702 = vmatpush1.msra.mxu0 %v682
      %703 = vmatprep.subr.mxu0 0.0
      %704 = vmatpush1.msra.mxu0 %v681
      %705 = vmatprep.subr.mxu0 0.0
      %706 = vmatpush1.msra.mxu0 %v680
      %707 = vmatprep.subr.mxu0 0.0
      %708 = vmatpush1.msra.mxu0 %v679
      %709 = vmatprep.subr.mxu0 0.0
      %710 = vmatpush1.msra.mxu0 %v678
      %711 = vmatprep.subr.mxu0 0.0
      %712 = vmatpush1.msra.mxu0 %v677
      %713 = vmatprep.subr.mxu0 0.0
      %714 = vmatpush1.msra.mxu0 %v676
      %715 = vmatprep.subr.mxu0 0.0
      %716 = vmatpush1.msra.mxu0 %v675
      %717 = vmatprep.subr.mxu0 0.0
      %718 = vmatpush1.msra.mxu0 %v674
      %719 = vmatprep.subr.mxu0 0.0
      %720 = vmatpush1.msra.mxu0 %v673
      %721 = vmatprep.subr.mxu0 0.0
      %722 = vmatpush2.msra.mxu0 0.0
      %723 = vmatprep.subr.mxu0 0.0
      %724 = vmatpush2.msra.mxu0 0.0
      %725 = vmatprep.subr.mxu0 0.0
      %726 = vmatpush2.msra.mxu0 0.0
      %727 = vmatprep.subr.mxu0 0.0
      %728 = vmatpush2.msra.mxu0 0.0
      %729 = vmatprep.subr.mxu0 0.0
      %730 = vmatpush2.msra.mxu0 0.0
      %731 = vmatprep.subr.mxu0 0.0
      %732 = vmatpush2.msra.mxu0 0.0
      %733 = vmatprep.subr.mxu0 0.0
      %734 = vmatpush2.msra.mxu0 0.0
      %735 = vmatprep.subr.mxu0 0.0
      %736 = vmatpush2.msra.mxu0 0.0
      %737 = vmatprep.subr.mxu0 0.0
      %738 = vmatpush2.msra.mxu0 0.0
      %739 = vmatprep.subr.mxu0 0.0
      %740 = vmatpush2.msra.mxu0 0.0
      %741 = vmatprep.subr.mxu0 0.0
      %742 = vmatpush2.msra.mxu0 0.0
      %743 = vmatprep.subr.mxu0 0.0
      %744 = vmatpush2.msra.mxu0 0.0
      %745 = vmatprep.subr.mxu0 0.0
      %746 = vmatpush2.msra.mxu0 0.0
      %747 = vmatprep.subr.mxu0 0.0
      %748 = vmatpush2.msra.mxu0 0.0
      %749 = vmatprep.subr.mxu0 0.0
      %750 = vmatpush2.msra.mxu0 0.0
      %751 = vmatprep.subr.mxu0 0.0
      %752 = vmatpush2.msra.mxu0 0.0
      %753 = vmatprep.mubr.f32.mxu0 0.0
      %754 = vmatmul.mubr.f32.gmra.mxu0 %v640
      %v755 = vpop.f32.mrf.mxu0
      %v756 = vadd.f32 0.0, %v755
      %v757 = vpop.f32.mrf.mxu0
      %758 = vmatprep.mubr.f32.mxu0 0.0
      %759 = vmatmul.mubr.f32.gmra.mxu0 %v641
      %v760 = vpop.f32.mrf.mxu0
      %v761 = vadd.f32 0.0, %v760
      %v762 = vpop.f32.mrf.mxu0
      %763 = vmatprep.mubr.f32.mxu0 0.0
      %764 = vmatmul.mubr.f32.gmra.mxu0 %v642
      %v765 = vpop.f32.mrf.mxu0
      %v766 = vadd.f32 0.0, %v765
      %v767 = vpop.f32.mrf.mxu0
      %768 = vmatprep.mubr.f32.mxu0 0.0
      %769 = vmatmul.mubr.f32.gmra.mxu0 %v643
      %v770 = vpop.f32.mrf.mxu0
      %v771 = vadd.f32 0.0, %v770
      %v772 = vpop.f32.mrf.mxu0
      %773 = vmatprep.mubr.f32.mxu0 0.0
      %774 = vmatmul.mubr.f32.gmra.mxu0 %v644
      %v775 = vpop.f32.mrf.mxu0
      %v776 = vadd.f32 0.0, %v775
      %v777 = vpop.f32.mrf.mxu0
      %778 = vmatprep.mubr.f32.mxu0 0.0
      %779 = vmatmul.mubr.f32.gmra.mxu0 %v645
      %v780 = vpop.f32.mrf.mxu0
      %v781 = vadd.f32 0.0, %v780
      %v782 = vpop.f32.mrf.mxu0
      %783 = vmatprep.mubr.f32.mxu0 0.0
      %784 = vmatmul.mubr.f32.gmra.mxu0 %v646
      %v785 = vpop.f32.mrf.mxu0
      %v786 = vadd.f32 0.0, %v785
      %v787 = vpop.f32.mrf.mxu0
      %788 = vmatprep.mubr.f32.mxu0 0.0
      %789 = vmatmul.mubr.f32.gmra.mxu0 %v647
      %v790 = vpop.f32.mrf.mxu0
      %v791 = vadd.f32 0.0, %v790
      %v792 = vpop.f32.mrf.mxu0
      %793 = vmatprep.mubr.f32.mxu0 0.0
      %794 = vmatmul.mubr.f32.gmra.mxu0 %v648
      %v795 = vpop.f32.mrf.mxu0
      %v796 = vadd.f32 0.0, %v795
      %v797 = vpop.f32.mrf.mxu0
      %798 = vmatprep.mubr.f32.mxu0 0.0
      %799 = vmatmul.mubr.f32.gmra.mxu0 %v649
      %v800 = vpop.f32.mrf.mxu0
      %v801 = vadd.f32 0.0, %v800
      %v802 = vpop.f32.mrf.mxu0
      %803 = vmatprep.mubr.f32.mxu0 0.0
      %804 = vmatmul.mubr.f32.gmra.mxu0 %v650
      %v805 = vpop.f32.mrf.mxu0
      %v806 = vadd.f32 0.0, %v805
      %v807 = vpop.f32.mrf.mxu0
      %808 = vmatprep.mubr.f32.mxu0 0.0
      %809 = vmatmul.mubr.f32.gmra.mxu0 %v651
      %v810 = vpop.f32.mrf.mxu0
      %v811 = vadd.f32 0.0, %v810
      %v812 = vpop.f32.mrf.mxu0
      %813 = vmatprep.mubr.f32.mxu0 0.0
      %814 = vmatmul.mubr.f32.gmra.mxu0 %v652
      %v815 = vpop.f32.mrf.mxu0
      %v816 = vadd.f32 0.0, %v815
      %v817 = vpop.f32.mrf.mxu0
      %818 = vmatprep.mubr.f32.mxu0 0.0
      %819 = vmatmul.mubr.f32.gmra.mxu0 %v653
      %v820 = vpop.f32.mrf.mxu0
      %v821 = vadd.f32 0.0, %v820
      %v822 = vpop.f32.mrf.mxu0
      %823 = vmatprep.mubr.f32.mxu0 0.0
      %824 = vmatmul.mubr.f32.gmra.mxu0 %v654
      %v825 = vpop.f32.mrf.mxu0
      %v826 = vadd.f32 0.0, %v825
      %v827 = vpop.f32.mrf.mxu0
      %828 = vmatprep.mubr.f32.mxu0 0.0
      %829 = vmatmul.mubr.f32.gmra.mxu0 %v655
      %v830 = vpop.f32.mrf.mxu0
      %v831 = vadd.f32 0.0, %v830
      %v832 = vpop.f32.mrf.mxu0
      %833 = vmatprep.mubr.f32.mxu0 0.0
      %834 = vmatmul.mubr.f32.gmra.mxu0 %v656
      %v835 = vpop.f32.mrf.mxu0
      %v836 = vadd.f32 0.0, %v835
      %v837 = vpop.f32.mrf.mxu0
      %838 = vmatprep.mubr.f32.mxu0 0.0
      %839 = vmatmul.mubr.f32.gmra.mxu0 %v657
      %v840 = vpop.f32.mrf.mxu0
      %v841 = vadd.f32 0.0, %v840
      %v842 = vpop.f32.mrf.mxu0
      %843 = vmatprep.mubr.f32.mxu0 0.0
      %844 = vmatmul.mubr.f32.gmra.mxu0 %v658
      %v845 = vpop.f32.mrf.mxu0
      %v846 = vadd.f32 0.0, %v845
      %v847 = vpop.f32.mrf.mxu0
      %848 = vmatprep.mubr.f32.mxu0 0.0
      %849 = vmatmul.mubr.f32.gmra.mxu0 %v659
      %v850 = vpop.f32.mrf.mxu0
      %v851 = vadd.f32 0.0, %v850
      %v852 = vpop.f32.mrf.mxu0
      %853 = vmatprep.mubr.f32.mxu0 0.0
      %854 = vmatmul.mubr.f32.gmra.mxu0 %v660
      %v855 = vpop.f32.mrf.mxu0
      %v856 = vadd.f32 0.0, %v855
      %v857 = vpop.f32.mrf.mxu0
      %858 = vmatprep.mubr.f32.mxu0 0.0
      %859 = vmatmul.mubr.f32.gmra.mxu0 %v661
      %v860 = vpop.f32.mrf.mxu0
      %v861 = vadd.f32 0.0, %v860
      %v862 = vpop.f32.mrf.mxu0
      %863 = vmatprep.mubr.f32.mxu0 0.0
      %864 = vmatmul.mubr.f32.gmra.mxu0 %v662
      %v865 = vpop.f32.mrf.mxu0
      %v866 = vadd.f32 0.0, %v865
      %v867 = vpop.f32.mrf.mxu0
      %868 = vmatprep.mubr.f32.mxu0 0.0
      %869 = vmatmul.mubr.f32.gmra.mxu0 %v663
      %v870 = vpop.f32.mrf.mxu0
      %v871 = vadd.f32 0.0, %v870
      %v872 = vpop.f32.mrf.mxu0
      %873 = vmatprep.mubr.f32.mxu0 0.0
      %874 = vmatmul.mubr.f32.gmra.mxu0 %v664
      %v875 = vpop.f32.mrf.mxu0
      %v876 = vadd.f32 0.0, %v875
      %v877 = vpop.f32.mrf.mxu0
      %878 = vmatprep.mubr.f32.mxu0 0.0
      %879 = vmatmul.mubr.f32.gmra.mxu0 %v665
      %v880 = vpop.f32.mrf.mxu0
      %v881 = vadd.f32 0.0, %v880
      %v882 = vpop.f32.mrf.mxu0
      %883 = vmatprep.mubr.f32.mxu0 0.0
      %884 = vmatmul.mubr.f32.gmra.mxu0 %v666
      %v885 = vpop.f32.mrf.mxu0
      %v886 = vadd.f32 0.0, %v885
      %v887 = vpop.f32.mrf.mxu0
      %888 = vmatprep.mubr.f32.mxu0 0.0
      %889 = vmatmul.mubr.f32.gmra.mxu0 %v667
      %v890 = vpop.f32.mrf.mxu0
      %v891 = vadd.f32 0.0, %v890
      %v892 = vpop.f32.mrf.mxu0
      %893 = vmatprep.mubr.f32.mxu0 0.0
      %894 = vmatmul.mubr.f32.gmra.mxu0 %v668
      %v895 = vpop.f32.mrf.mxu0
      %v896 = vadd.f32 0.0, %v895
      %v897 = vpop.f32.mrf.mxu0
      %898 = vmatprep.mubr.f32.mxu0 0.0
      %899 = vmatmul.mubr.f32.gmra.mxu0 %v669
      %v900 = vpop.f32.mrf.mxu0
      %v901 = vadd.f32 0.0, %v900
      %v902 = vpop.f32.mrf.mxu0
      %903 = vmatprep.mubr.f32.mxu0 0.0
      %904 = vmatmul.mubr.f32.gmra.mxu0 %v670
      %v905 = vpop.f32.mrf.mxu0
      %v906 = vadd.f32 0.0, %v905
      %v907 = vpop.f32.mrf.mxu0
      %908 = vmatprep.mubr.f32.mxu0 0.0
      %909 = vmatmul.mubr.f32.gmra.mxu0 %v671
      %v910 = vpop.f32.mrf.mxu0
      %v911 = vadd.f32 0.0, %v910
      %v912 = vpop.f32.mrf.mxu0
      %913 = vdwg.mxu0
      %914 = vmatprep.subr.mxu0 0.0
      %915 = vmatpush1.msra.mxu0 %v639
      %916 = vmatprep.subr.mxu0 0.0
      %917 = vmatpush1.msra.mxu0 %v638
      %918 = vmatprep.subr.mxu0 0.0
      %919 = vmatpush1.msra.mxu0 %v637
      %920 = vmatprep.subr.mxu0 0.0
      %921 = vmatpush1.msra.mxu0 %v636
      %922 = vmatprep.subr.mxu0 0.0
      %923 = vmatpush1.msra.mxu0 %v635
      %924 = vmatprep.subr.mxu0 0.0
      %925 = vmatpush1.msra.mxu0 %v634
      %926 = vmatprep.subr.mxu0 0.0
      %927 = vmatpush1.msra.mxu0 %v633
      %928 = vmatprep.subr.mxu0 0.0
      %929 = vmatpush1.msra.mxu0 %v632
      %930 = vmatprep.subr.mxu0 0.0
      %931 = vmatpush1.msra.mxu0 %v631
      %932 = vmatprep.subr.mxu0 0.0
      %933 = vmatpush1.msra.mxu0 %v630
      %934 = vmatprep.subr.mxu0 0.0
      %935 = vmatpush1.msra.mxu0 %v629
      %936 = vmatprep.subr.mxu0 0.0
      %937 = vmatpush1.msra.mxu0 %v628
      %938 = vmatprep.subr.mxu0 0.0
      %939 = vmatpush1.msra.mxu0 %v627
      %940 = vmatprep.subr.mxu0 0.0
      %941 = vmatpush1.msra.mxu0 %v626
      %942 = vmatprep.subr.mxu0 0.0
      %943 = vmatpush1.msra.mxu0 %v625
      %944 = vmatprep.subr.mxu0 0.0
      %945 = vmatpush1.msra.mxu0 %v624
      %946 = vmatprep.subr.mxu0 0.0
      %947 = vmatpush2.msra.mxu0 0.0
      %948 = vmatprep.subr.mxu0 0.0
      %949 = vmatpush2.msra.mxu0 0.0
      %950 = vmatprep.subr.mxu0 0.0
      %951 = vmatpush2.msra.mxu0 0.0
      %952 = vmatprep.subr.mxu0 0.0
      %953 = vmatpush2.msra.mxu0 0.0
      %954 = vmatprep.subr.mxu0 0.0
      %955 = vmatpush2.msra.mxu0 0.0
      %956 = vmatprep.subr.mxu0 0.0
      %957 = vmatpush2.msra.mxu0 0.0
      %958 = vmatprep.subr.mxu0 0.0
      %959 = vmatpush2.msra.mxu0 0.0
      %960 = vmatprep.subr.mxu0 0.0
      %961 = vmatpush2.msra.mxu0 0.0
      %962 = vmatprep.subr.mxu0 0.0
      %963 = vmatpush2.msra.mxu0 0.0
      %964 = vmatprep.subr.mxu0 0.0
      %965 = vmatpush2.msra.mxu0 0.0
      %966 = vmatprep.subr.mxu0 0.0
      %967 = vmatpush2.msra.mxu0 0.0
      %968 = vmatprep.subr.mxu0 0.0
      %969 = vmatpush2.msra.mxu0 0.0
      %970 = vmatprep.subr.mxu0 0.0
      %971 = vmatpush2.msra.mxu0 0.0
      %972 = vmatprep.subr.mxu0 0.0
      %973 = vmatpush2.msra.mxu0 0.0
      %974 = vmatprep.subr.mxu0 0.0
      %975 = vmatpush2.msra.mxu0 0.0
      %976 = vmatprep.subr.mxu0 0.0
      %977 = vmatpush2.msra.mxu0 0.0
      %978 = vmatprep.mubr.f32.mxu0 0.0
      %979 = vmatmul.mubr.f32.gmra.mxu0 %v592
      %v980 = vpop.f32.mrf.mxu0
      %v981 = vadd.f32 %v756, %v980
      %v982 = vpop.f32.mrf.mxu0
      %983 = vmatprep.mubr.f32.mxu0 0.0
      %984 = vmatmul.mubr.f32.gmra.mxu0 %v593
      %v985 = vpop.f32.mrf.mxu0
      %v986 = vadd.f32 %v761, %v985
      %v987 = vpop.f32.mrf.mxu0
      %988 = vmatprep.mubr.f32.mxu0 0.0
      %989 = vmatmul.mubr.f32.gmra.mxu0 %v594
      %v990 = vpop.f32.mrf.mxu0
      %v991 = vadd.f32 %v766, %v990
      %v992 = vpop.f32.mrf.mxu0
      %993 = vmatprep.mubr.f32.mxu0 0.0
      %994 = vmatmul.mubr.f32.gmra.mxu0 %v595
      %v995 = vpop.f32.mrf.mxu0
      %v996 = vadd.f32 %v771, %v995
      %v997 = vpop.f32.mrf.mxu0
      %998 = vmatprep.mubr.f32.mxu0 0.0
      %999 = vmatmul.mubr.f32.gmra.mxu0 %v596
      %v1000 = vpop.f32.mrf.mxu0
      %v1001 = vadd.f32 %v776, %v1000
      %v1002 = vpop.f32.mrf.mxu0
      %1003 = vmatprep.mubr.f32.mxu0 0.0
      %1004 = vmatmul.mubr.f32.gmra.mxu0 %v597
      %v1005 = vpop.f32.mrf.mxu0
      %v1006 = vadd.f32 %v781, %v1005
      %v1007 = vpop.f32.mrf.mxu0
      %1008 = vmatprep.mubr.f32.mxu0 0.0
      %1009 = vmatmul.mubr.f32.gmra.mxu0 %v598
      %v1010 = vpop.f32.mrf.mxu0
      %v1011 = vadd.f32 %v786, %v1010
      %v1012 = vpop.f32.mrf.mxu0
      %1013 = vmatprep.mubr.f32.mxu0 0.0
      %1014 = vmatmul.mubr.f32.gmra.mxu0 %v599
      %v1015 = vpop.f32.mrf.mxu0
      %v1016 = vadd.f32 %v791, %v1015
      %v1017 = vpop.f32.mrf.mxu0
      %1018 = vmatprep.mubr.f32.mxu0 0.0
      %1019 = vmatmul.mubr.f32.gmra.mxu0 %v600
      %v1020 = vpop.f32.mrf.mxu0
      %v1021 = vadd.f32 %v796, %v1020
      %v1022 = vpop.f32.mrf.mxu0
      %1023 = vmatprep.mubr.f32.mxu0 0.0
      %1024 = vmatmul.mubr.f32.gmra.mxu0 %v601
      %v1025 = vpop.f32.mrf.mxu0
      %v1026 = vadd.f32 %v801, %v1025
      %v1027 = vpop.f32.mrf.mxu0
      %1028 = vmatprep.mubr.f32.mxu0 0.0
      %1029 = vmatmul.mubr.f32.gmra.mxu0 %v602
      %v1030 = vpop.f32.mrf.mxu0
      %v1031 = vadd.f32 %v806, %v1030
      %v1032 = vpop.f32.mrf.mxu0
      %1033 = vmatprep.mubr.f32.mxu0 0.0
      %1034 = vmatmul.mubr.f32.gmra.mxu0 %v603
      %v1035 = vpop.f32.mrf.mxu0
      %v1036 = vadd.f32 %v811, %v1035
      %v1037 = vpop.f32.mrf.mxu0
      %1038 = vmatprep.mubr.f32.mxu0 0.0
      %1039 = vmatmul.mubr.f32.gmra.mxu0 %v604
      %v1040 = vpop.f32.mrf.mxu0
      %v1041 = vadd.f32 %v816, %v1040
      %v1042 = vpop.f32.mrf.mxu0
      %1043 = vmatprep.mubr.f32.mxu0 0.0
      %1044 = vmatmul.mubr.f32.gmra.mxu0 %v605
      %v1045 = vpop.f32.mrf.mxu0
      %v1046 = vadd.f32 %v821, %v1045
      %v1047 = vpop.f32.mrf.mxu0
      %1048 = vmatprep.mubr.f32.mxu0 0.0
      %1049 = vmatmul.mubr.f32.gmra.mxu0 %v606
      %v1050 = vpop.f32.mrf.mxu0
      %v1051 = vadd.f32 %v826, %v1050
      %v1052 = vpop.f32.mrf.mxu0
      %1053 = vmatprep.mubr.f32.mxu0 0.0
      %1054 = vmatmul.mubr.f32.gmra.mxu0 %v607
      %v1055 = vpop.f32.mrf.mxu0
      %v1056 = vadd.f32 %v831, %v1055
      %v1057 = vpop.f32.mrf.mxu0
      %1058 = vmatprep.mubr.f32.mxu0 0.0
      %1059 = vmatmul.mubr.f32.gmra.mxu0 %v608
      %v1060 = vpop.f32.mrf.mxu0
      %v1061 = vadd.f32 %v836, %v1060
      %v1062 = vpop.f32.mrf.mxu0
      %1063 = vmatprep.mubr.f32.mxu0 0.0
      %1064 = vmatmul.mubr.f32.gmra.mxu0 %v609
      %v1065 = vpop.f32.mrf.mxu0
      %v1066 = vadd.f32 %v841, %v1065
      %v1067 = vpop.f32.mrf.mxu0
      %1068 = vmatprep.mubr.f32.mxu0 0.0
      %1069 = vmatmul.mubr.f32.gmra.mxu0 %v610
      %v1070 = vpop.f32.mrf.mxu0
      %v1071 = vadd.f32 %v846, %v1070
      %v1072 = vpop.f32.mrf.mxu0
      %1073 = vmatprep.mubr.f32.mxu0 0.0
      %1074 = vmatmul.mubr.f32.gmra.mxu0 %v611
      %v1075 = vpop.f32.mrf.mxu0
      %v1076 = vadd.f32 %v851, %v1075
      %v1077 = vpop.f32.mrf.mxu0
      %1078 = vmatprep.mubr.f32.mxu0 0.0
      %1079 = vmatmul.mubr.f32.gmra.mxu0 %v612
      %v1080 = vpop.f32.mrf.mxu0
      %v1081 = vadd.f32 %v856, %v1080
      %v1082 = vpop.f32.mrf.mxu0
      %1083 = vmatprep.mubr.f32.mxu0 0.0
      %1084 = vmatmul.mubr.f32.gmra.mxu0 %v613
      %v1085 = vpop.f32.mrf.mxu0
      %v1086 = vadd.f32 %v861, %v1085
      %v1087 = vpop.f32.mrf.mxu0
      %1088 = vmatprep.mubr.f32.mxu0 0.0
      %1089 = vmatmul.mubr.f32.gmra.mxu0 %v614
      %v1090 = vpop.f32.mrf.mxu0
      %v1091 = vadd.f32 %v866, %v1090
      %v1092 = vpop.f32.mrf.mxu0
      %1093 = vmatprep.mubr.f32.mxu0 0.0
      %1094 = vmatmul.mubr.f32.gmra.mxu0 %v615
      %v1095 = vpop.f32.mrf.mxu0
      %v1096 = vadd.f32 %v871, %v1095
      %v1097 = vpop.f32.mrf.mxu0
      %1098 = vmatprep.mubr.f32.mxu0 0.0
      %1099 = vmatmul.mubr.f32.gmra.mxu0 %v616
      %v1100 = vpop.f32.mrf.mxu0
      %v1101 = vadd.f32 %v876, %v1100
      %v1102 = vpop.f32.mrf.mxu0
      %1103 = vmatprep.mubr.f32.mxu0 0.0
      %1104 = vmatmul.mubr.f32.gmra.mxu0 %v617
      %v1105 = vpop.f32.mrf.mxu0
      %v1106 = vadd.f32 %v881, %v1105
      %v1107 = vpop.f32.mrf.mxu0
      %1108 = vmatprep.mubr.f32.mxu0 0.0
      %1109 = vmatmul.mubr.f32.gmra.mxu0 %v618
      %v1110 = vpop.f32.mrf.mxu0
      %v1111 = vadd.f32 %v886, %v1110
      %v1112 = vpop.f32.mrf.mxu0
      %1113 = vmatprep.mubr.f32.mxu0 0.0
      %1114 = vmatmul.mubr.f32.gmra.mxu0 %v619
      %v1115 = vpop.f32.mrf.mxu0
      %v1116 = vadd.f32 %v891, %v1115
      %v1117 = vpop.f32.mrf.mxu0
      %1118 = vmatprep.mubr.f32.mxu0 0.0
      %1119 = vmatmul.mubr.f32.gmra.mxu0 %v620
      %v1120 = vpop.f32.mrf.mxu0
      %v1121 = vadd.f32 %v896, %v1120
      %v1122 = vpop.f32.mrf.mxu0
      %1123 = vmatprep.mubr.f32.mxu0 0.0
      %1124 = vmatmul.mubr.f32.gmra.mxu0 %v621
      %v1125 = vpop.f32.mrf.mxu0
      %v1126 = vadd.f32 %v901, %v1125
      %v1127 = vpop.f32.mrf.mxu0
      %1128 = vmatprep.mubr.f32.mxu0 0.0
      %1129 = vmatmul.mubr.f32.gmra.mxu0 %v622
      %v1130 = vpop.f32.mrf.mxu0
      %v1131 = vadd.f32 %v906, %v1130
      %v1132 = vpop.f32.mrf.mxu0
      %1133 = vmatprep.mubr.f32.mxu0 0.0
      %1134 = vmatmul.mubr.f32.gmra.mxu0 %v623
      %v1135 = vpop.f32.mrf.mxu0
      %v1136 = vadd.f32 %v911, %v1135
      %v1137 = vpop.f32.mrf.mxu0
      %1138 = vdwg.mxu0
      %v1139 = vld [vmem:[#allocation2 + $0x2] sm:$0xff]
      %v1140 = vld [vmem:[#allocation2 + $0xa] sm:$0xff]
      %v1141 = vld [vmem:[#allocation2 + $0x1a] sm:$0xff]
      %v1142 = vld [vmem:[#allocation2 + $0x22] sm:$0xff]
      %v1143 = vld [vmem:[#allocation2 + $0x32] sm:$0xff]
      %v1144 = vld [vmem:[#allocation2 + $0x3a] sm:$0xff]
      %v1145 = vld [vmem:[#allocation2 + $0x4a] sm:$0xff]
      %v1146 = vld [vmem:[#allocation2 + $0x52] sm:$0xff]
      %v1147 = vld [vmem:[#allocation2 + $0x62] sm:$0xff]
      %v1148 = vld [vmem:[#allocation2 + $0x6a] sm:$0xff]
      %v1149 = vld [vmem:[#allocation2 + $0x7a] sm:$0xff]
      %v1150 = vld [vmem:[#allocation2 + $0x82] sm:$0xff]
      %v1151 = vld [vmem:[#allocation2 + $0x92] sm:$0xff]
      %v1152 = vld [vmem:[#allocation2 + $0x9a] sm:$0xff]
      %v1153 = vld [vmem:[#allocation2 + $0xaa] sm:$0xff]
      %v1154 = vld [vmem:[#allocation2 + $0xb2] sm:$0xff]
      %v1155 = vld [vmem:[#allocation2 + $0xc2] sm:$0xff]
      %v1156 = vld [vmem:[#allocation2 + $0xca] sm:$0xff]
      %v1157 = vld [vmem:[#allocation2 + $0xda] sm:$0xff]
      %v1158 = vld [vmem:[#allocation2 + $0xe2] sm:$0xff]
      %v1159 = vld [vmem:[#allocation2 + $0xf2] sm:$0xff]
      %v1160 = vld [vmem:[#allocation2 + $0xfa] sm:$0xff]
      %v1161 = vld [vmem:[#allocation2 + $0x10a] sm:$0xff]
      %v1162 = vld [vmem:[#allocation2 + $0x112] sm:$0xff]
      %v1163 = vld [vmem:[#allocation2 + $0x122] sm:$0xff]
      %v1164 = vld [vmem:[#allocation2 + $0x12a] sm:$0xff]
      %v1165 = vld [vmem:[#allocation2 + $0x13a] sm:$0xff]
      %v1166 = vld [vmem:[#allocation2 + $0x142] sm:$0xff]
      %v1167 = vld [vmem:[#allocation2 + $0x152] sm:$0xff]
      %v1168 = vld [vmem:[#allocation2 + $0x15a] sm:$0xff]
      %v1169 = vld [vmem:[#allocation2 + $0x16a] sm:$0xff]
      %v1170 = vld [vmem:[#allocation2 + $0x172] sm:$0xff]
      %s1171 = scalar_lea.vmem %s1, 256
      %v1172 = vld [vmem:[%s1171] sm:$0xff]
      %v1173 = vld [vmem:[%s1171 + $0x8] sm:$0xff]
      %v1174 = vld [vmem:[%s1171 + $0x10] sm:$0xff]
      %v1175 = vld [vmem:[%s1171 + $0x18] sm:$0xff]
      %v1176 = vld [vmem:[%s1171 + $0x20] sm:$0xff]
      %v1177 = vld [vmem:[%s1171 + $0x28] sm:$0xff]
      %v1178 = vld [vmem:[%s1171 + $0x30] sm:$0xff]
      %v1179 = vld [vmem:[%s1171 + $0x38] sm:$0xff]
      %v1180 = vld [vmem:[%s1171 + $0x40] sm:$0xff]
      %v1181 = vld [vmem:[%s1171 + $0x48] sm:$0xff]
      %v1182 = vld [vmem:[%s1171 + $0x50] sm:$0xff]
      %v1183 = vld [vmem:[%s1171 + $0x58] sm:$0xff]
      %v1184 = vld [vmem:[%s1171 + $0x60] sm:$0xff]
      %v1185 = vld [vmem:[%s1171 + $0x68] sm:$0xff]
      %v1186 = vld [vmem:[%s1171 + $0x70] sm:$0xff]
      %v1187 = vld [vmem:[%s1171 + $0x78] sm:$0xff]
      %1188 = vmatprep.subr.mxu0 0.0
      %1189 = vmatpush1.msra.mxu0 %v1187
      %1190 = vmatprep.subr.mxu0 0.0
      %1191 = vmatpush1.msra.mxu0 %v1186
      %1192 = vmatprep.subr.mxu0 0.0
      %1193 = vmatpush1.msra.mxu0 %v1185
      %1194 = vmatprep.subr.mxu0 0.0
      %1195 = vmatpush1.msra.mxu0 %v1184
      %1196 = vmatprep.subr.mxu0 0.0
      %1197 = vmatpush1.msra.mxu0 %v1183
      %1198 = vmatprep.subr.mxu0 0.0
      %1199 = vmatpush1.msra.mxu0 %v1182
      %1200 = vmatprep.subr.mxu0 0.0
      %1201 = vmatpush1.msra.mxu0 %v1181
      %1202 = vmatprep.subr.mxu0 0.0
      %1203 = vmatpush1.msra.mxu0 %v1180
      %1204 = vmatprep.subr.mxu0 0.0
      %1205 = vmatpush1.msra.mxu0 %v1179
      %1206 = vmatprep.subr.mxu0 0.0
      %1207 = vmatpush1.msra.mxu0 %v1178
      %1208 = vmatprep.subr.mxu0 0.0
      %1209 = vmatpush1.msra.mxu0 %v1177
      %1210 = vmatprep.subr.mxu0 0.0
      %1211 = vmatpush1.msra.mxu0 %v1176
      %1212 = vmatprep.subr.mxu0 0.0
      %1213 = vmatpush1.msra.mxu0 %v1175
      %1214 = vmatprep.subr.mxu0 0.0
      %1215 = vmatpush1.msra.mxu0 %v1174
      %1216 = vmatprep.subr.mxu0 0.0
      %1217 = vmatpush1.msra.mxu0 %v1173
      %1218 = vmatprep.subr.mxu0 0.0
      %1219 = vmatpush1.msra.mxu0 %v1172
      %1220 = vmatprep.subr.mxu0 0.0
      %1221 = vmatpush2.msra.mxu0 0.0
      %1222 = vmatprep.subr.mxu0 0.0
      %1223 = vmatpush2.msra.mxu0 0.0
      %1224 = vmatprep.subr.mxu0 0.0
      %1225 = vmatpush2.msra.mxu0 0.0
      %1226 = vmatprep.subr.mxu0 0.0
      %1227 = vmatpush2.msra.mxu0 0.0
      %1228 = vmatprep.subr.mxu0 0.0
      %1229 = vmatpush2.msra.mxu0 0.0
      %1230 = vmatprep.subr.mxu0 0.0
      %1231 = vmatpush2.msra.mxu0 0.0
      %1232 = vmatprep.subr.mxu0 0.0
      %1233 = vmatpush2.msra.mxu0 0.0
      %1234 = vmatprep.subr.mxu0 0.0
      %1235 = vmatpush2.msra.mxu0 0.0
      %1236 = vmatprep.subr.mxu0 0.0
      %1237 = vmatpush2.msra.mxu0 0.0
      %1238 = vmatprep.subr.mxu0 0.0
      %1239 = vmatpush2.msra.mxu0 0.0
      %1240 = vmatprep.subr.mxu0 0.0
      %1241 = vmatpush2.msra.mxu0 0.0
      %1242 = vmatprep.subr.mxu0 0.0
      %1243 = vmatpush2.msra.mxu0 0.0
      %1244 = vmatprep.subr.mxu0 0.0
      %1245 = vmatpush2.msra.mxu0 0.0
      %1246 = vmatprep.subr.mxu0 0.0
      %1247 = vmatpush2.msra.mxu0 0.0
      %1248 = vmatprep.subr.mxu0 0.0
      %1249 = vmatpush2.msra.mxu0 0.0
      %1250 = vmatprep.subr.mxu0 0.0
      %1251 = vmatpush2.msra.mxu0 0.0
      %1252 = vmatprep.mubr.f32.mxu0 0.0
      %1253 = vmatmul.mubr.f32.gmra.mxu0 %v1139
      %v1254 = vpop.f32.mrf.mxu0
      %v1255 = vadd.f32 0.0, %v1254
      %v1256 = vpop.f32.mrf.mxu0
      %1257 = vmatprep.mubr.f32.mxu0 0.0
      %1258 = vmatmul.mubr.f32.gmra.mxu0 %v1140
      %v1259 = vpop.f32.mrf.mxu0
      %v1260 = vadd.f32 0.0, %v1259
      %v1261 = vpop.f32.mrf.mxu0
      %1262 = vmatprep.mubr.f32.mxu0 0.0
      %1263 = vmatmul.mubr.f32.gmra.mxu0 %v1141
      %v1264 = vpop.f32.mrf.mxu0
      %v1265 = vadd.f32 0.0, %v1264
      %v1266 = vpop.f32.mrf.mxu0
      %1267 = vmatprep.mubr.f32.mxu0 0.0
      %1268 = vmatmul.mubr.f32.gmra.mxu0 %v1142
      %v1269 = vpop.f32.mrf.mxu0
      %v1270 = vadd.f32 0.0, %v1269
      %v1271 = vpop.f32.mrf.mxu0
      %1272 = vmatprep.mubr.f32.mxu0 0.0
      %1273 = vmatmul.mubr.f32.gmra.mxu0 %v1143
      %v1274 = vpop.f32.mrf.mxu0
      %v1275 = vadd.f32 0.0, %v1274
      %v1276 = vpop.f32.mrf.mxu0
      %1277 = vmatprep.mubr.f32.mxu0 0.0
      %1278 = vmatmul.mubr.f32.gmra.mxu0 %v1144
      %v1279 = vpop.f32.mrf.mxu0
      %v1280 = vadd.f32 0.0, %v1279
      %v1281 = vpop.f32.mrf.mxu0
      %1282 = vmatprep.mubr.f32.mxu0 0.0
      %1283 = vmatmul.mubr.f32.gmra.mxu0 %v1145
      %v1284 = vpop.f32.mrf.mxu0
      %v1285 = vadd.f32 0.0, %v1284
      %v1286 = vpop.f32.mrf.mxu0
      %1287 = vmatprep.mubr.f32.mxu0 0.0
      %1288 = vmatmul.mubr.f32.gmra.mxu0 %v1146
      %v1289 = vpop.f32.mrf.mxu0
      %v1290 = vadd.f32 0.0, %v1289
      %v1291 = vpop.f32.mrf.mxu0
      %1292 = vmatprep.mubr.f32.mxu0 0.0
      %1293 = vmatmul.mubr.f32.gmra.mxu0 %v1147
      %v1294 = vpop.f32.mrf.mxu0
      %v1295 = vadd.f32 0.0, %v1294
      %v1296 = vpop.f32.mrf.mxu0
      %1297 = vmatprep.mubr.f32.mxu0 0.0
      %1298 = vmatmul.mubr.f32.gmra.mxu0 %v1148
      %v1299 = vpop.f32.mrf.mxu0
      %v1300 = vadd.f32 0.0, %v1299
      %v1301 = vpop.f32.mrf.mxu0
      %1302 = vmatprep.mubr.f32.mxu0 0.0
      %1303 = vmatmul.mubr.f32.gmra.mxu0 %v1149
      %v1304 = vpop.f32.mrf.mxu0
      %v1305 = vadd.f32 0.0, %v1304
      %v1306 = vpop.f32.mrf.mxu0
      %1307 = vmatprep.mubr.f32.mxu0 0.0
      %1308 = vmatmul.mubr.f32.gmra.mxu0 %v1150
      %v1309 = vpop.f32.mrf.mxu0
      %v1310 = vadd.f32 0.0, %v1309
      %v1311 = vpop.f32.mrf.mxu0
      %1312 = vmatprep.mubr.f32.mxu0 0.0
      %1313 = vmatmul.mubr.f32.gmra.mxu0 %v1151
      %v1314 = vpop.f32.mrf.mxu0
      %v1315 = vadd.f32 0.0, %v1314
      %v1316 = vpop.f32.mrf.mxu0
      %1317 = vmatprep.mubr.f32.mxu0 0.0
      %1318 = vmatmul.mubr.f32.gmra.mxu0 %v1152
      %v1319 = vpop.f32.mrf.mxu0
      %v1320 = vadd.f32 0.0, %v1319
      %v1321 = vpop.f32.mrf.mxu0
      %1322 = vmatprep.mubr.f32.mxu0 0.0
      %1323 = vmatmul.mubr.f32.gmra.mxu0 %v1153
      %v1324 = vpop.f32.mrf.mxu0
      %v1325 = vadd.f32 0.0, %v1324
      %v1326 = vpop.f32.mrf.mxu0
      %1327 = vmatprep.mubr.f32.mxu0 0.0
      %1328 = vmatmul.mubr.f32.gmra.mxu0 %v1154
      %v1329 = vpop.f32.mrf.mxu0
      %v1330 = vadd.f32 0.0, %v1329
      %v1331 = vpop.f32.mrf.mxu0
      %1332 = vmatprep.mubr.f32.mxu0 0.0
      %1333 = vmatmul.mubr.f32.gmra.mxu0 %v1155
      %v1334 = vpop.f32.mrf.mxu0
      %v1335 = vadd.f32 0.0, %v1334
      %v1336 = vpop.f32.mrf.mxu0
      %1337 = vmatprep.mubr.f32.mxu0 0.0
      %1338 = vmatmul.mubr.f32.gmra.mxu0 %v1156
      %v1339 = vpop.f32.mrf.mxu0
      %v1340 = vadd.f32 0.0, %v1339
      %v1341 = vpop.f32.mrf.mxu0
      %1342 = vmatprep.mubr.f32.mxu0 0.0
      %1343 = vmatmul.mubr.f32.gmra.mxu0 %v1157
      %v1344 = vpop.f32.mrf.mxu0
      %v1345 = vadd.f32 0.0, %v1344
      %v1346 = vpop.f32.mrf.mxu0
      %1347 = vmatprep.mubr.f32.mxu0 0.0
      %1348 = vmatmul.mubr.f32.gmra.mxu0 %v1158
      %v1349 = vpop.f32.mrf.mxu0
      %v1350 = vadd.f32 0.0, %v1349
      %v1351 = vpop.f32.mrf.mxu0
      %1352 = vmatprep.mubr.f32.mxu0 0.0
      %1353 = vmatmul.mubr.f32.gmra.mxu0 %v1159
      %v1354 = vpop.f32.mrf.mxu0
      %v1355 = vadd.f32 0.0, %v1354
      %v1356 = vpop.f32.mrf.mxu0
      %1357 = vmatprep.mubr.f32.mxu0 0.0
      %1358 = vmatmul.mubr.f32.gmra.mxu0 %v1160
      %v1359 = vpop.f32.mrf.mxu0
      %v1360 = vadd.f32 0.0, %v1359
      %v1361 = vpop.f32.mrf.mxu0
      %1362 = vmatprep.mubr.f32.mxu0 0.0
      %1363 = vmatmul.mubr.f32.gmra.mxu0 %v1161
      %v1364 = vpop.f32.mrf.mxu0
      %v1365 = vadd.f32 0.0, %v1364
      %v1366 = vpop.f32.mrf.mxu0
      %1367 = vmatprep.mubr.f32.mxu0 0.0
      %1368 = vmatmul.mubr.f32.gmra.mxu0 %v1162
      %v1369 = vpop.f32.mrf.mxu0
      %v1370 = vadd.f32 0.0, %v1369
      %v1371 = vpop.f32.mrf.mxu0
      %1372 = vmatprep.mubr.f32.mxu0 0.0
      %1373 = vmatmul.mubr.f32.gmra.mxu0 %v1163
      %v1374 = vpop.f32.mrf.mxu0
      %v1375 = vadd.f32 0.0, %v1374
      %v1376 = vpop.f32.mrf.mxu0
      %1377 = vmatprep.mubr.f32.mxu0 0.0
      %1378 = vmatmul.mubr.f32.gmra.mxu0 %v1164
      %v1379 = vpop.f32.mrf.mxu0
      %v1380 = vadd.f32 0.0, %v1379
      %v1381 = vpop.f32.mrf.mxu0
      %1382 = vmatprep.mubr.f32.mxu0 0.0
      %1383 = vmatmul.mubr.f32.gmra.mxu0 %v1165
      %v1384 = vpop.f32.mrf.mxu0
      %v1385 = vadd.f32 0.0, %v1384
      %v1386 = vpop.f32.mrf.mxu0
      %1387 = vmatprep.mubr.f32.mxu0 0.0
      %1388 = vmatmul.mubr.f32.gmra.mxu0 %v1166
      %v1389 = vpop.f32.mrf.mxu0
      %v1390 = vadd.f32 0.0, %v1389
      %v1391 = vpop.f32.mrf.mxu0
      %1392 = vmatprep.mubr.f32.mxu0 0.0
      %1393 = vmatmul.mubr.f32.gmra.mxu0 %v1167
      %v1394 = vpop.f32.mrf.mxu0
      %v1395 = vadd.f32 0.0, %v1394
      %v1396 = vpop.f32.mrf.mxu0
      %1397 = vmatprep.mubr.f32.mxu0 0.0
      %1398 = vmatmul.mubr.f32.gmra.mxu0 %v1168
      %v1399 = vpop.f32.mrf.mxu0
      %v1400 = vadd.f32 0.0, %v1399
      %v1401 = vpop.f32.mrf.mxu0
      %1402 = vmatprep.mubr.f32.mxu0 0.0
      %1403 = vmatmul.mubr.f32.gmra.mxu0 %v1169
      %v1404 = vpop.f32.mrf.mxu0
      %v1405 = vadd.f32 0.0, %v1404
      %v1406 = vpop.f32.mrf.mxu0
      %1407 = vmatprep.mubr.f32.mxu0 0.0
      %1408 = vmatmul.mubr.f32.gmra.mxu0 %v1170
      %v1409 = vpop.f32.mrf.mxu0
      %v1410 = vadd.f32 0.0, %v1409
      %v1411 = vpop.f32.mrf.mxu0
      %1412 = vdwg.mxu0
      %v1413 = vadd.f32 %v981, %v1255
      %v1414 = vadd.f32 %v986, %v1260
      %v1415 = vadd.f32 %v991, %v1265
      %v1416 = vadd.f32 %v996, %v1270
      %v1417 = vadd.f32 %v1001, %v1275
      %v1418 = vadd.f32 %v1006, %v1280
      %v1419 = vadd.f32 %v1011, %v1285
      %v1420 = vadd.f32 %v1016, %v1290
      %v1421 = vadd.f32 %v1021, %v1295
      %v1422 = vadd.f32 %v1026, %v1300
      %v1423 = vadd.f32 %v1031, %v1305
      %v1424 = vadd.f32 %v1036, %v1310
      %v1425 = vadd.f32 %v1041, %v1315
      %v1426 = vadd.f32 %v1046, %v1320
      %v1427 = vadd.f32 %v1051, %v1325
      %v1428 = vadd.f32 %v1056, %v1330
      %v1429 = vadd.f32 %v1061, %v1335
      %v1430 = vadd.f32 %v1066, %v1340
      %v1431 = vadd.f32 %v1071, %v1345
      %v1432 = vadd.f32 %v1076, %v1350
      %v1433 = vadd.f32 %v1081, %v1355
      %v1434 = vadd.f32 %v1086, %v1360
      %v1435 = vadd.f32 %v1091, %v1365
      %v1436 = vadd.f32 %v1096, %v1370
      %v1437 = vadd.f32 %v1101, %v1375
      %v1438 = vadd.f32 %v1106, %v1380
      %v1439 = vadd.f32 %v1111, %v1385
      %v1440 = vadd.f32 %v1116, %v1390
      %v1441 = vadd.f32 %v1121, %v1395
      %v1442 = vadd.f32 %v1126, %v1400
      %v1443 = vadd.f32 %v1131, %v1405
      %v1444 = vadd.f32 %v1136, %v1410
      %v1445 = vld [vmem:[%s536] sm:$0xff]
      %v1446 = vld [vmem:[%s536 + $0x8] sm:$0xff]
      %v1447 = vld [vmem:[%s536 + $0x18] sm:$0xff]
      %v1448 = vld [vmem:[%s536 + $0x20] sm:$0xff]
      %v1449 = vld [vmem:[%s536 + $0x30] sm:$0xff]
      %v1450 = vld [vmem:[%s536 + $0x38] sm:$0xff]
      %v1451 = vld [vmem:[%s536 + $0x48] sm:$0xff]
      %v1452 = vld [vmem:[%s536 + $0x50] sm:$0xff]
      %v1453 = vld [vmem:[%s536 + $0x60] sm:$0xff]
      %v1454 = vld [vmem:[%s536 + $0x68] sm:$0xff]
      %v1455 = vld [vmem:[%s536 + $0x78] sm:$0xff]
      %v1456 = vld [vmem:[%s536 + $0x80] sm:$0xff]
      %v1457 = vld [vmem:[%s536 + $0x90] sm:$0xff]
      %v1458 = vld [vmem:[%s536 + $0x98] sm:$0xff]
      %v1459 = vld [vmem:[%s536 + $0xa8] sm:$0xff]
      %v1460 = vld [vmem:[%s536 + $0xb0] sm:$0xff]
      %v1461 = vld [vmem:[%s536 + $0xc0] sm:$0xff]
      %v1462 = vld [vmem:[%s536 + $0xc8] sm:$0xff]
      %v1463 = vld [vmem:[%s536 + $0xd8] sm:$0xff]
      %v1464 = vld [vmem:[%s536 + $0xe0] sm:$0xff]
      %v1465 = vld [vmem:[%s536 + $0xf0] sm:$0xff]
      %v1466 = vld [vmem:[%s536 + $0xf8] sm:$0xff]
      %v1467 = vld [vmem:[%s536 + $0x108] sm:$0xff]
      %v1468 = vld [vmem:[%s536 + $0x110] sm:$0xff]
      %v1469 = vld [vmem:[%s536 + $0x120] sm:$0xff]
      %v1470 = vld [vmem:[%s536 + $0x128] sm:$0xff]
      %v1471 = vld [vmem:[%s536 + $0x138] sm:$0xff]
      %v1472 = vld [vmem:[%s536 + $0x140] sm:$0xff]
      %v1473 = vld [vmem:[%s536 + $0x150] sm:$0xff]
      %v1474 = vld [vmem:[%s536 + $0x158] sm:$0xff]
      %v1475 = vld [vmem:[%s536 + $0x168] sm:$0xff]
      %v1476 = vld [vmem:[%s536 + $0x170] sm:$0xff]
      %s1477 = scalar_lea.vmem %s1, 384
      %v1478 = vld [vmem:[%s1477] sm:$0xff]
      %v1479 = vld [vmem:[%s1477 + $0x8] sm:$0xff]
      %v1480 = vld [vmem:[%s1477 + $0x10] sm:$0xff]
      %v1481 = vld [vmem:[%s1477 + $0x18] sm:$0xff]
      %v1482 = vld [vmem:[%s1477 + $0x20] sm:$0xff]
      %v1483 = vld [vmem:[%s1477 + $0x28] sm:$0xff]
      %v1484 = vld [vmem:[%s1477 + $0x30] sm:$0xff]
      %v1485 = vld [vmem:[%s1477 + $0x38] sm:$0xff]
      %v1486 = vld [vmem:[%s1477 + $0x40] sm:$0xff]
      %v1487 = vld [vmem:[%s1477 + $0x48] sm:$0xff]
      %v1488 = vld [vmem:[%s1477 + $0x50] sm:$0xff]
      %v1489 = vld [vmem:[%s1477 + $0x58] sm:$0xff]
      %v1490 = vld [vmem:[%s1477 + $0x60] sm:$0xff]
      %v1491 = vld [vmem:[%s1477 + $0x68] sm:$0xff]
      %v1492 = vld [vmem:[%s1477 + $0x70] sm:$0xff]
      %v1493 = vld [vmem:[%s1477 + $0x78] sm:$0xff]
      %1494 = vmatprep.subr.mxu0 0.0
      %1495 = vmatpush1.msra.mxu0 %v1493
      %1496 = vmatprep.subr.mxu0 0.0
      %1497 = vmatpush1.msra.mxu0 %v1492
      %1498 = vmatprep.subr.mxu0 0.0
      %1499 = vmatpush1.msra.mxu0 %v1491
      %1500 = vmatprep.subr.mxu0 0.0
      %1501 = vmatpush1.msra.mxu0 %v1490
      %1502 = vmatprep.subr.mxu0 0.0
      %1503 = vmatpush1.msra.mxu0 %v1489
      %1504 = vmatprep.subr.mxu0 0.0
      %1505 = vmatpush1.msra.mxu0 %v1488
      %1506 = vmatprep.subr.mxu0 0.0
      %1507 = vmatpush1.msra.mxu0 %v1487
      %1508 = vmatprep.subr.mxu0 0.0
      %1509 = vmatpush1.msra.mxu0 %v1486
      %1510 = vmatprep.subr.mxu0 0.0
      %1511 = vmatpush1.msra.mxu0 %v1485
      %1512 = vmatprep.subr.mxu0 0.0
      %1513 = vmatpush1.msra.mxu0 %v1484
      %1514 = vmatprep.subr.mxu0 0.0
      %1515 = vmatpush1.msra.mxu0 %v1483
      %1516 = vmatprep.subr.mxu0 0.0
      %1517 = vmatpush1.msra.mxu0 %v1482
      %1518 = vmatprep.subr.mxu0 0.0
      %1519 = vmatpush1.msra.mxu0 %v1481
      %1520 = vmatprep.subr.mxu0 0.0
      %1521 = vmatpush1.msra.mxu0 %v1480
      %1522 = vmatprep.subr.mxu0 0.0
      %1523 = vmatpush1.msra.mxu0 %v1479
      %1524 = vmatprep.subr.mxu0 0.0
      %1525 = vmatpush1.msra.mxu0 %v1478
      %1526 = vmatprep.subr.mxu0 0.0
      %1527 = vmatpush2.msra.mxu0 0.0
      %1528 = vmatprep.subr.mxu0 0.0
      %1529 = vmatpush2.msra.mxu0 0.0
      %1530 = vmatprep.subr.mxu0 0.0
      %1531 = vmatpush2.msra.mxu0 0.0
      %1532 = vmatprep.subr.mxu0 0.0
      %1533 = vmatpush2.msra.mxu0 0.0
      %1534 = vmatprep.subr.mxu0 0.0
      %1535 = vmatpush2.msra.mxu0 0.0
      %1536 = vmatprep.subr.mxu0 0.0
      %1537 = vmatpush2.msra.mxu0 0.0
      %1538 = vmatprep.subr.mxu0 0.0
      %1539 = vmatpush2.msra.mxu0 0.0
      %1540 = vmatprep.subr.mxu0 0.0
      %1541 = vmatpush2.msra.mxu0 0.0
      %1542 = vmatprep.subr.mxu0 0.0
      %1543 = vmatpush2.msra.mxu0 0.0
      %1544 = vmatprep.subr.mxu0 0.0
      %1545 = vmatpush2.msra.mxu0 0.0
      %1546 = vmatprep.subr.mxu0 0.0
      %1547 = vmatpush2.msra.mxu0 0.0
      %1548 = vmatprep.subr.mxu0 0.0
      %1549 = vmatpush2.msra.mxu0 0.0
      %1550 = vmatprep.subr.mxu0 0.0
      %1551 = vmatpush2.msra.mxu0 0.0
      %1552 = vmatprep.subr.mxu0 0.0
      %1553 = vmatpush2.msra.mxu0 0.0
      %1554 = vmatprep.subr.mxu0 0.0
      %1555 = vmatpush2.msra.mxu0 0.0
      %1556 = vmatprep.subr.mxu0 0.0
      %1557 = vmatpush2.msra.mxu0 0.0
      %1558 = vmatprep.mubr.f32.mxu0 0.0
      %1559 = vmatmul.mubr.f32.gmra.mxu0 %v1445
      %v1560 = vpop.f32.mrf.mxu0
      %v1561 = vadd.f32 0.0, %v1560
      %v1562 = vpop.f32.mrf.mxu0
      %1563 = vmatprep.mubr.f32.mxu0 0.0
      %1564 = vmatmul.mubr.f32.gmra.mxu0 %v1446
      %v1565 = vpop.f32.mrf.mxu0
      %v1566 = vadd.f32 0.0, %v1565
      %v1567 = vpop.f32.mrf.mxu0
      %1568 = vmatprep.mubr.f32.mxu0 0.0
      %1569 = vmatmul.mubr.f32.gmra.mxu0 %v1447
      %v1570 = vpop.f32.mrf.mxu0
      %v1571 = vadd.f32 0.0, %v1570
      %v1572 = vpop.f32.mrf.mxu0
      %1573 = vmatprep.mubr.f32.mxu0 0.0
      %1574 = vmatmul.mubr.f32.gmra.mxu0 %v1448
      %v1575 = vpop.f32.mrf.mxu0
      %v1576 = vadd.f32 0.0, %v1575
      %v1577 = vpop.f32.mrf.mxu0
      %1578 = vmatprep.mubr.f32.mxu0 0.0
      %1579 = vmatmul.mubr.f32.gmra.mxu0 %v1449
      %v1580 = vpop.f32.mrf.mxu0
      %v1581 = vadd.f32 0.0, %v1580
      %v1582 = vpop.f32.mrf.mxu0
      %1583 = vmatprep.mubr.f32.mxu0 0.0
      %1584 = vmatmul.mubr.f32.gmra.mxu0 %v1450
      %v1585 = vpop.f32.mrf.mxu0
      %v1586 = vadd.f32 0.0, %v1585
      %v1587 = vpop.f32.mrf.mxu0
      %1588 = vmatprep.mubr.f32.mxu0 0.0
      %1589 = vmatmul.mubr.f32.gmra.mxu0 %v1451
      %v1590 = vpop.f32.mrf.mxu0
      %v1591 = vadd.f32 0.0, %v1590
      %v1592 = vpop.f32.mrf.mxu0
      %1593 = vmatprep.mubr.f32.mxu0 0.0
      %1594 = vmatmul.mubr.f32.gmra.mxu0 %v1452
      %v1595 = vpop.f32.mrf.mxu0
      %v1596 = vadd.f32 0.0, %v1595
      %v1597 = vpop.f32.mrf.mxu0
      %1598 = vmatprep.mubr.f32.mxu0 0.0
      %1599 = vmatmul.mubr.f32.gmra.mxu0 %v1453
      %v1600 = vpop.f32.mrf.mxu0
      %v1601 = vadd.f32 0.0, %v1600
      %v1602 = vpop.f32.mrf.mxu0
      %1603 = vmatprep.mubr.f32.mxu0 0.0
      %1604 = vmatmul.mubr.f32.gmra.mxu0 %v1454
      %v1605 = vpop.f32.mrf.mxu0
      %v1606 = vadd.f32 0.0, %v1605
      %v1607 = vpop.f32.mrf.mxu0
      %1608 = vmatprep.mubr.f32.mxu0 0.0
      %1609 = vmatmul.mubr.f32.gmra.mxu0 %v1455
      %v1610 = vpop.f32.mrf.mxu0
      %v1611 = vadd.f32 0.0, %v1610
      %v1612 = vpop.f32.mrf.mxu0
      %1613 = vmatprep.mubr.f32.mxu0 0.0
      %1614 = vmatmul.mubr.f32.gmra.mxu0 %v1456
      %v1615 = vpop.f32.mrf.mxu0
      %v1616 = vadd.f32 0.0, %v1615
      %v1617 = vpop.f32.mrf.mxu0
      %1618 = vmatprep.mubr.f32.mxu0 0.0
      %1619 = vmatmul.mubr.f32.gmra.mxu0 %v1457
      %v1620 = vpop.f32.mrf.mxu0
      %v1621 = vadd.f32 0.0, %v1620
      %v1622 = vpop.f32.mrf.mxu0
      %1623 = vmatprep.mubr.f32.mxu0 0.0
      %1624 = vmatmul.mubr.f32.gmra.mxu0 %v1458
      %v1625 = vpop.f32.mrf.mxu0
      %v1626 = vadd.f32 0.0, %v1625
      %v1627 = vpop.f32.mrf.mxu0
      %1628 = vmatprep.mubr.f32.mxu0 0.0
      %1629 = vmatmul.mubr.f32.gmra.mxu0 %v1459
      %v1630 = vpop.f32.mrf.mxu0
      %v1631 = vadd.f32 0.0, %v1630
      %v1632 = vpop.f32.mrf.mxu0
      %1633 = vmatprep.mubr.f32.mxu0 0.0
      %1634 = vmatmul.mubr.f32.gmra.mxu0 %v1460
      %v1635 = vpop.f32.mrf.mxu0
      %v1636 = vadd.f32 0.0, %v1635
      %v1637 = vpop.f32.mrf.mxu0
      %1638 = vmatprep.mubr.f32.mxu0 0.0
      %1639 = vmatmul.mubr.f32.gmra.mxu0 %v1461
      %v1640 = vpop.f32.mrf.mxu0
      %v1641 = vadd.f32 0.0, %v1640
      %v1642 = vpop.f32.mrf.mxu0
      %1643 = vmatprep.mubr.f32.mxu0 0.0
      %1644 = vmatmul.mubr.f32.gmra.mxu0 %v1462
      %v1645 = vpop.f32.mrf.mxu0
      %v1646 = vadd.f32 0.0, %v1645
      %v1647 = vpop.f32.mrf.mxu0
      %1648 = vmatprep.mubr.f32.mxu0 0.0
      %1649 = vmatmul.mubr.f32.gmra.mxu0 %v1463
      %v1650 = vpop.f32.mrf.mxu0
      %v1651 = vadd.f32 0.0, %v1650
      %v1652 = vpop.f32.mrf.mxu0
      %1653 = vmatprep.mubr.f32.mxu0 0.0
      %1654 = vmatmul.mubr.f32.gmra.mxu0 %v1464
      %v1655 = vpop.f32.mrf.mxu0
      %v1656 = vadd.f32 0.0, %v1655
      %v1657 = vpop.f32.mrf.mxu0
      %1658 = vmatprep.mubr.f32.mxu0 0.0
      %1659 = vmatmul.mubr.f32.gmra.mxu0 %v1465
      %v1660 = vpop.f32.mrf.mxu0
      %v1661 = vadd.f32 0.0, %v1660
      %v1662 = vpop.f32.mrf.mxu0
      %1663 = vmatprep.mubr.f32.mxu0 0.0
      %1664 = vmatmul.mubr.f32.gmra.mxu0 %v1466
      %v1665 = vpop.f32.mrf.mxu0
      %v1666 = vadd.f32 0.0, %v1665
      %v1667 = vpop.f32.mrf.mxu0
      %1668 = vmatprep.mubr.f32.mxu0 0.0
      %1669 = vmatmul.mubr.f32.gmra.mxu0 %v1467
      %v1670 = vpop.f32.mrf.mxu0
      %v1671 = vadd.f32 0.0, %v1670
      %v1672 = vpop.f32.mrf.mxu0
      %1673 = vmatprep.mubr.f32.mxu0 0.0
      %1674 = vmatmul.mubr.f32.gmra.mxu0 %v1468
      %v1675 = vpop.f32.mrf.mxu0
      %v1676 = vadd.f32 0.0, %v1675
      %v1677 = vpop.f32.mrf.mxu0
      %1678 = vmatprep.mubr.f32.mxu0 0.0
      %1679 = vmatmul.mubr.f32.gmra.mxu0 %v1469
      %v1680 = vpop.f32.mrf.mxu0
      %v1681 = vadd.f32 0.0, %v1680
      %v1682 = vpop.f32.mrf.mxu0
      %1683 = vmatprep.mubr.f32.mxu0 0.0
      %1684 = vmatmul.mubr.f32.gmra.mxu0 %v1470
      %v1685 = vpop.f32.mrf.mxu0
      %v1686 = vadd.f32 0.0, %v1685
      %v1687 = vpop.f32.mrf.mxu0
      %1688 = vmatprep.mubr.f32.mxu0 0.0
      %1689 = vmatmul.mubr.f32.gmra.mxu0 %v1471
      %v1690 = vpop.f32.mrf.mxu0
      %v1691 = vadd.f32 0.0, %v1690
      %v1692 = vpop.f32.mrf.mxu0
      %1693 = vmatprep.mubr.f32.mxu0 0.0
      %1694 = vmatmul.mubr.f32.gmra.mxu0 %v1472
      %v1695 = vpop.f32.mrf.mxu0
      %v1696 = vadd.f32 0.0, %v1695
      %v1697 = vpop.f32.mrf.mxu0
      %1698 = vmatprep.mubr.f32.mxu0 0.0
      %1699 = vmatmul.mubr.f32.gmra.mxu0 %v1473
      %v1700 = vpop.f32.mrf.mxu0
      %v1701 = vadd.f32 0.0, %v1700
      %v1702 = vpop.f32.mrf.mxu0
      %1703 = vmatprep.mubr.f32.mxu0 0.0
      %1704 = vmatmul.mubr.f32.gmra.mxu0 %v1474
      %v1705 = vpop.f32.mrf.mxu0
      %v1706 = vadd.f32 0.0, %v1705
      %v1707 = vpop.f32.mrf.mxu0
      %1708 = vmatprep.mubr.f32.mxu0 0.0
      %1709 = vmatmul.mubr.f32.gmra.mxu0 %v1475
      %v1710 = vpop.f32.mrf.mxu0
      %v1711 = vadd.f32 0.0, %v1710
      %v1712 = vpop.f32.mrf.mxu0
      %1713 = vmatprep.mubr.f32.mxu0 0.0
      %1714 = vmatmul.mubr.f32.gmra.mxu0 %v1476
      %v1715 = vpop.f32.mrf.mxu0
      %v1716 = vadd.f32 0.0, %v1715
      %v1717 = vpop.f32.mrf.mxu0
      %1718 = vdwg.mxu0
      %v1719 = vadd.f32 %v1413, %v1561
      %v1720 = vadd.f32 %v1414, %v1566
      %v1721 = vadd.f32 %v1415, %v1571
      %v1722 = vadd.f32 %v1416, %v1576
      %v1723 = vadd.f32 %v1417, %v1581
      %v1724 = vadd.f32 %v1418, %v1586
      %v1725 = vadd.f32 %v1419, %v1591
      %v1726 = vadd.f32 %v1420, %v1596
      %v1727 = vadd.f32 %v1421, %v1601
      %v1728 = vadd.f32 %v1422, %v1606
      %v1729 = vadd.f32 %v1423, %v1611
      %v1730 = vadd.f32 %v1424, %v1616
      %v1731 = vadd.f32 %v1425, %v1621
      %v1732 = vadd.f32 %v1426, %v1626
      %v1733 = vadd.f32 %v1427, %v1631
      %v1734 = vadd.f32 %v1428, %v1636
      %v1735 = vadd.f32 %v1429, %v1641
      %v1736 = vadd.f32 %v1430, %v1646
      %v1737 = vadd.f32 %v1431, %v1651
      %v1738 = vadd.f32 %v1432, %v1656
      %v1739 = vadd.f32 %v1433, %v1661
      %v1740 = vadd.f32 %v1434, %v1666
      %v1741 = vadd.f32 %v1435, %v1671
      %v1742 = vadd.f32 %v1436, %v1676
      %v1743 = vadd.f32 %v1437, %v1681
      %v1744 = vadd.f32 %v1438, %v1686
      %v1745 = vadd.f32 %v1439, %v1691
      %v1746 = vadd.f32 %v1440, %v1696
      %v1747 = vadd.f32 %v1441, %v1701
      %v1748 = vadd.f32 %v1442, %v1706
      %v1749 = vadd.f32 %v1443, %v1711
      %v1750 = vadd.f32 %v1444, %v1716
      %v1751 = vld [vmem:[%s536 + $0x1] sm:$0xff]
      %v1752 = vld [vmem:[%s536 + $0x9] sm:$0xff]
      %v1753 = vld [vmem:[%s536 + $0x19] sm:$0xff]
      %v1754 = vld [vmem:[%s536 + $0x21] sm:$0xff]
      %v1755 = vld [vmem:[%s536 + $0x31] sm:$0xff]
      %v1756 = vld [vmem:[%s536 + $0x39] sm:$0xff]
      %v1757 = vld [vmem:[%s536 + $0x49] sm:$0xff]
      %v1758 = vld [vmem:[%s536 + $0x51] sm:$0xff]
      %v1759 = vld [vmem:[%s536 + $0x61] sm:$0xff]
      %v1760 = vld [vmem:[%s536 + $0x69] sm:$0xff]
      %v1761 = vld [vmem:[%s536 + $0x79] sm:$0xff]
      %v1762 = vld [vmem:[%s536 + $0x81] sm:$0xff]
      %v1763 = vld [vmem:[%s536 + $0x91] sm:$0xff]
      %v1764 = vld [vmem:[%s536 + $0x99] sm:$0xff]
      %v1765 = vld [vmem:[%s536 + $0xa9] sm:$0xff]
      %v1766 = vld [vmem:[%s536 + $0xb1] sm:$0xff]
      %v1767 = vld [vmem:[%s536 + $0xc1] sm:$0xff]
      %v1768 = vld [vmem:[%s536 + $0xc9] sm:$0xff]
      %v1769 = vld [vmem:[%s536 + $0xd9] sm:$0xff]
      %v1770 = vld [vmem:[%s536 + $0xe1] sm:$0xff]
      %v1771 = vld [vmem:[%s536 + $0xf1] sm:$0xff]
      %v1772 = vld [vmem:[%s536 + $0xf9] sm:$0xff]
      %v1773 = vld [vmem:[%s536 + $0x109] sm:$0xff]
      %v1774 = vld [vmem:[%s536 + $0x111] sm:$0xff]
      %v1775 = vld [vmem:[%s536 + $0x121] sm:$0xff]
      %v1776 = vld [vmem:[%s536 + $0x129] sm:$0xff]
      %v1777 = vld [vmem:[%s536 + $0x139] sm:$0xff]
      %v1778 = vld [vmem:[%s536 + $0x141] sm:$0xff]
      %v1779 = vld [vmem:[%s536 + $0x151] sm:$0xff]
      %v1780 = vld [vmem:[%s536 + $0x159] sm:$0xff]
      %v1781 = vld [vmem:[%s536 + $0x169] sm:$0xff]
      %v1782 = vld [vmem:[%s536 + $0x171] sm:$0xff]
      %s1783 = scalar_lea.vmem %s1, 512
      %v1784 = vld [vmem:[%s1783] sm:$0xff]
      %v1785 = vld [vmem:[%s1783 + $0x8] sm:$0xff]
      %v1786 = vld [vmem:[%s1783 + $0x10] sm:$0xff]
      %v1787 = vld [vmem:[%s1783 + $0x18] sm:$0xff]
      %v1788 = vld [vmem:[%s1783 + $0x20] sm:$0xff]
      %v1789 = vld [vmem:[%s1783 + $0x28] sm:$0xff]
      %v1790 = vld [vmem:[%s1783 + $0x30] sm:$0xff]
      %v1791 = vld [vmem:[%s1783 + $0x38] sm:$0xff]
      %v1792 = vld [vmem:[%s1783 + $0x40] sm:$0xff]
      %v1793 = vld [vmem:[%s1783 + $0x48] sm:$0xff]
      %v1794 = vld [vmem:[%s1783 + $0x50] sm:$0xff]
      %v1795 = vld [vmem:[%s1783 + $0x58] sm:$0xff]
      %v1796 = vld [vmem:[%s1783 + $0x60] sm:$0xff]
      %v1797 = vld [vmem:[%s1783 + $0x68] sm:$0xff]
      %v1798 = vld [vmem:[%s1783 + $0x70] sm:$0xff]
      %v1799 = vld [vmem:[%s1783 + $0x78] sm:$0xff]
      %1800 = vmatprep.subr.mxu0 0.0
      %1801 = vmatpush1.msra.mxu0 %v1799
      %1802 = vmatprep.subr.mxu0 0.0
      %1803 = vmatpush1.msra.mxu0 %v1798
      %1804 = vmatprep.subr.mxu0 0.0
      %1805 = vmatpush1.msra.mxu0 %v1797
      %1806 = vmatprep.subr.mxu0 0.0
      %1807 = vmatpush1.msra.mxu0 %v1796
      %1808 = vmatprep.subr.mxu0 0.0
      %1809 = vmatpush1.msra.mxu0 %v1795
      %1810 = vmatprep.subr.mxu0 0.0
      %1811 = vmatpush1.msra.mxu0 %v1794
      %1812 = vmatprep.subr.mxu0 0.0
      %1813 = vmatpush1.msra.mxu0 %v1793
      %1814 = vmatprep.subr.mxu0 0.0
      %1815 = vmatpush1.msra.mxu0 %v1792
      %1816 = vmatprep.subr.mxu0 0.0
      %1817 = vmatpush1.msra.mxu0 %v1791
      %1818 = vmatprep.subr.mxu0 0.0
      %1819 = vmatpush1.msra.mxu0 %v1790
      %1820 = vmatprep.subr.mxu0 0.0
      %1821 = vmatpush1.msra.mxu0 %v1789
      %1822 = vmatprep.subr.mxu0 0.0
      %1823 = vmatpush1.msra.mxu0 %v1788
      %1824 = vmatprep.subr.mxu0 0.0
      %1825 = vmatpush1.msra.mxu0 %v1787
      %1826 = vmatprep.subr.mxu0 0.0
      %1827 = vmatpush1.msra.mxu0 %v1786
      %1828 = vmatprep.subr.mxu0 0.0
      %1829 = vmatpush1.msra.mxu0 %v1785
      %1830 = vmatprep.subr.mxu0 0.0
      %1831 = vmatpush1.msra.mxu0 %v1784
      %1832 = vmatprep.subr.mxu0 0.0
      %1833 = vmatpush2.msra.mxu0 0.0
      %1834 = vmatprep.subr.mxu0 0.0
      %1835 = vmatpush2.msra.mxu0 0.0
      %1836 = vmatprep.subr.mxu0 0.0
      %1837 = vmatpush2.msra.mxu0 0.0
      %1838 = vmatprep.subr.mxu0 0.0
      %1839 = vmatpush2.msra.mxu0 0.0
      %1840 = vmatprep.subr.mxu0 0.0
      %1841 = vmatpush2.msra.mxu0 0.0
      %1842 = vmatprep.subr.mxu0 0.0
      %1843 = vmatpush2.msra.mxu0 0.0
      %1844 = vmatprep.subr.mxu0 0.0
      %1845 = vmatpush2.msra.mxu0 0.0
      %1846 = vmatprep.subr.mxu0 0.0
      %1847 = vmatpush2.msra.mxu0 0.0
      %1848 = vmatprep.subr.mxu0 0.0
      %1849 = vmatpush2.msra.mxu0 0.0
      %1850 = vmatprep.subr.mxu0 0.0
      %1851 = vmatpush2.msra.mxu0 0.0
      %1852 = vmatprep.subr.mxu0 0.0
      %1853 = vmatpush2.msra.mxu0 0.0
      %1854 = vmatprep.subr.mxu0 0.0
      %1855 = vmatpush2.msra.mxu0 0.0
      %1856 = vmatprep.subr.mxu0 0.0
      %1857 = vmatpush2.msra.mxu0 0.0
      %1858 = vmatprep.subr.mxu0 0.0
      %1859 = vmatpush2.msra.mxu0 0.0
      %1860 = vmatprep.subr.mxu0 0.0
      %1861 = vmatpush2.msra.mxu0 0.0
      %1862 = vmatprep.subr.mxu0 0.0
      %1863 = vmatpush2.msra.mxu0 0.0
      %1864 = vmatprep.mubr.f32.mxu0 0.0
      %1865 = vmatmul.mubr.f32.gmra.mxu0 %v1751
      %v1866 = vpop.f32.mrf.mxu0
      %v1867 = vadd.f32 0.0, %v1866
      %v1868 = vpop.f32.mrf.mxu0
      %1869 = vmatprep.mubr.f32.mxu0 0.0
      %1870 = vmatmul.mubr.f32.gmra.mxu0 %v1752
      %v1871 = vpop.f32.mrf.mxu0
      %v1872 = vadd.f32 0.0, %v1871
      %v1873 = vpop.f32.mrf.mxu0
      %1874 = vmatprep.mubr.f32.mxu0 0.0
      %1875 = vmatmul.mubr.f32.gmra.mxu0 %v1753
      %v1876 = vpop.f32.mrf.mxu0
      %v1877 = vadd.f32 0.0, %v1876
      %v1878 = vpop.f32.mrf.mxu0
      %1879 = vmatprep.mubr.f32.mxu0 0.0
      %1880 = vmatmul.mubr.f32.gmra.mxu0 %v1754
      %v1881 = vpop.f32.mrf.mxu0
      %v1882 = vadd.f32 0.0, %v1881
      %v1883 = vpop.f32.mrf.mxu0
      %1884 = vmatprep.mubr.f32.mxu0 0.0
      %1885 = vmatmul.mubr.f32.gmra.mxu0 %v1755
      %v1886 = vpop.f32.mrf.mxu0
      %v1887 = vadd.f32 0.0, %v1886
      %v1888 = vpop.f32.mrf.mxu0
      %1889 = vmatprep.mubr.f32.mxu0 0.0
      %1890 = vmatmul.mubr.f32.gmra.mxu0 %v1756
      %v1891 = vpop.f32.mrf.mxu0
      %v1892 = vadd.f32 0.0, %v1891
      %v1893 = vpop.f32.mrf.mxu0
      %1894 = vmatprep.mubr.f32.mxu0 0.0
      %1895 = vmatmul.mubr.f32.gmra.mxu0 %v1757
      %v1896 = vpop.f32.mrf.mxu0
      %v1897 = vadd.f32 0.0, %v1896
      %v1898 = vpop.f32.mrf.mxu0
      %1899 = vmatprep.mubr.f32.mxu0 0.0
      %1900 = vmatmul.mubr.f32.gmra.mxu0 %v1758
      %v1901 = vpop.f32.mrf.mxu0
      %v1902 = vadd.f32 0.0, %v1901
      %v1903 = vpop.f32.mrf.mxu0
      %1904 = vmatprep.mubr.f32.mxu0 0.0
      %1905 = vmatmul.mubr.f32.gmra.mxu0 %v1759
      %v1906 = vpop.f32.mrf.mxu0
      %v1907 = vadd.f32 0.0, %v1906
      %v1908 = vpop.f32.mrf.mxu0
      %1909 = vmatprep.mubr.f32.mxu0 0.0
      %1910 = vmatmul.mubr.f32.gmra.mxu0 %v1760
      %v1911 = vpop.f32.mrf.mxu0
      %v1912 = vadd.f32 0.0, %v1911
      %v1913 = vpop.f32.mrf.mxu0
      %1914 = vmatprep.mubr.f32.mxu0 0.0
      %1915 = vmatmul.mubr.f32.gmra.mxu0 %v1761
      %v1916 = vpop.f32.mrf.mxu0
      %v1917 = vadd.f32 0.0, %v1916
      %v1918 = vpop.f32.mrf.mxu0
      %1919 = vmatprep.mubr.f32.mxu0 0.0
      %1920 = vmatmul.mubr.f32.gmra.mxu0 %v1762
      %v1921 = vpop.f32.mrf.mxu0
      %v1922 = vadd.f32 0.0, %v1921
      %v1923 = vpop.f32.mrf.mxu0
      %1924 = vmatprep.mubr.f32.mxu0 0.0
      %1925 = vmatmul.mubr.f32.gmra.mxu0 %v1763
      %v1926 = vpop.f32.mrf.mxu0
      %v1927 = vadd.f32 0.0, %v1926
      %v1928 = vpop.f32.mrf.mxu0
      %1929 = vmatprep.mubr.f32.mxu0 0.0
      %1930 = vmatmul.mubr.f32.gmra.mxu0 %v1764
      %v1931 = vpop.f32.mrf.mxu0
      %v1932 = vadd.f32 0.0, %v1931
      %v1933 = vpop.f32.mrf.mxu0
      %1934 = vmatprep.mubr.f32.mxu0 0.0
      %1935 = vmatmul.mubr.f32.gmra.mxu0 %v1765
      %v1936 = vpop.f32.mrf.mxu0
      %v1937 = vadd.f32 0.0, %v1936
      %v1938 = vpop.f32.mrf.mxu0
      %1939 = vmatprep.mubr.f32.mxu0 0.0
      %1940 = vmatmul.mubr.f32.gmra.mxu0 %v1766
      %v1941 = vpop.f32.mrf.mxu0
      %v1942 = vadd.f32 0.0, %v1941
      %v1943 = vpop.f32.mrf.mxu0
      %1944 = vmatprep.mubr.f32.mxu0 0.0
      %1945 = vmatmul.mubr.f32.gmra.mxu0 %v1767
      %v1946 = vpop.f32.mrf.mxu0
      %v1947 = vadd.f32 0.0, %v1946
      %v1948 = vpop.f32.mrf.mxu0
      %1949 = vmatprep.mubr.f32.mxu0 0.0
      %1950 = vmatmul.mubr.f32.gmra.mxu0 %v1768
      %v1951 = vpop.f32.mrf.mxu0
      %v1952 = vadd.f32 0.0, %v1951
      %v1953 = vpop.f32.mrf.mxu0
      %1954 = vmatprep.mubr.f32.mxu0 0.0
      %1955 = vmatmul.mubr.f32.gmra.mxu0 %v1769
      %v1956 = vpop.f32.mrf.mxu0
      %v1957 = vadd.f32 0.0, %v1956
      %v1958 = vpop.f32.mrf.mxu0
      %1959 = vmatprep.mubr.f32.mxu0 0.0
      %1960 = vmatmul.mubr.f32.gmra.mxu0 %v1770
      %v1961 = vpop.f32.mrf.mxu0
      %v1962 = vadd.f32 0.0, %v1961
      %v1963 = vpop.f32.mrf.mxu0
      %1964 = vmatprep.mubr.f32.mxu0 0.0
      %1965 = vmatmul.mubr.f32.gmra.mxu0 %v1771
      %v1966 = vpop.f32.mrf.mxu0
      %v1967 = vadd.f32 0.0, %v1966
      %v1968 = vpop.f32.mrf.mxu0
      %1969 = vmatprep.mubr.f32.mxu0 0.0
      %1970 = vmatmul.mubr.f32.gmra.mxu0 %v1772
      %v1971 = vpop.f32.mrf.mxu0
      %v1972 = vadd.f32 0.0, %v1971
      %v1973 = vpop.f32.mrf.mxu0
      %1974 = vmatprep.mubr.f32.mxu0 0.0
      %1975 = vmatmul.mubr.f32.gmra.mxu0 %v1773
      %v1976 = vpop.f32.mrf.mxu0
      %v1977 = vadd.f32 0.0, %v1976
      %v1978 = vpop.f32.mrf.mxu0
      %1979 = vmatprep.mubr.f32.mxu0 0.0
      %1980 = vmatmul.mubr.f32.gmra.mxu0 %v1774
      %v1981 = vpop.f32.mrf.mxu0
      %v1982 = vadd.f32 0.0, %v1981
      %v1983 = vpop.f32.mrf.mxu0
      %1984 = vmatprep.mubr.f32.mxu0 0.0
      %1985 = vmatmul.mubr.f32.gmra.mxu0 %v1775
      %v1986 = vpop.f32.mrf.mxu0
      %v1987 = vadd.f32 0.0, %v1986
      %v1988 = vpop.f32.mrf.mxu0
      %1989 = vmatprep.mubr.f32.mxu0 0.0
      %1990 = vmatmul.mubr.f32.gmra.mxu0 %v1776
      %v1991 = vpop.f32.mrf.mxu0
      %v1992 = vadd.f32 0.0, %v1991
      %v1993 = vpop.f32.mrf.mxu0
      %1994 = vmatprep.mubr.f32.mxu0 0.0
      %1995 = vmatmul.mubr.f32.gmra.mxu0 %v1777
      %v1996 = vpop.f32.mrf.mxu0
      %v1997 = vadd.f32 0.0, %v1996
      %v1998 = vpop.f32.mrf.mxu0
      %1999 = vmatprep.mubr.f32.mxu0 0.0
      %2000 = vmatmul.mubr.f32.gmra.mxu0 %v1778
      %v2001 = vpop.f32.mrf.mxu0
      %v2002 = vadd.f32 0.0, %v2001
      %v2003 = vpop.f32.mrf.mxu0
      %2004 = vmatprep.mubr.f32.mxu0 0.0
      %2005 = vmatmul.mubr.f32.gmra.mxu0 %v1779
      %v2006 = vpop.f32.mrf.mxu0
      %v2007 = vadd.f32 0.0, %v2006
      %v2008 = vpop.f32.mrf.mxu0
      %2009 = vmatprep.mubr.f32.mxu0 0.0
      %2010 = vmatmul.mubr.f32.gmra.mxu0 %v1780
      %v2011 = vpop.f32.mrf.mxu0
      %v2012 = vadd.f32 0.0, %v2011
      %v2013 = vpop.f32.mrf.mxu0
      %2014 = vmatprep.mubr.f32.mxu0 0.0
      %2015 = vmatmul.mubr.f32.gmra.mxu0 %v1781
      %v2016 = vpop.f32.mrf.mxu0
      %v2017 = vadd.f32 0.0, %v2016
      %v2018 = vpop.f32.mrf.mxu0
      %2019 = vmatprep.mubr.f32.mxu0 0.0
      %2020 = vmatmul.mubr.f32.gmra.mxu0 %v1782
      %v2021 = vpop.f32.mrf.mxu0
      %v2022 = vadd.f32 0.0, %v2021
      %v2023 = vpop.f32.mrf.mxu0
      %2024 = vdwg.mxu0
      %v2025 = vadd.f32 %v1719, %v1867
      %v2026 = vadd.f32 %v1720, %v1872
      %v2027 = vadd.f32 %v1721, %v1877
      %v2028 = vadd.f32 %v1722, %v1882
      %v2029 = vadd.f32 %v1723, %v1887
      %v2030 = vadd.f32 %v1724, %v1892
      %v2031 = vadd.f32 %v1725, %v1897
      %v2032 = vadd.f32 %v1726, %v1902
      %v2033 = vadd.f32 %v1727, %v1907
      %v2034 = vadd.f32 %v1728, %v1912
      %v2035 = vadd.f32 %v1729, %v1917
      %v2036 = vadd.f32 %v1730, %v1922
      %v2037 = vadd.f32 %v1731, %v1927
      %v2038 = vadd.f32 %v1732, %v1932
      %v2039 = vadd.f32 %v1733, %v1937
      %v2040 = vadd.f32 %v1734, %v1942
      %v2041 = vadd.f32 %v1735, %v1947
      %v2042 = vadd.f32 %v1736, %v1952
      %v2043 = vadd.f32 %v1737, %v1957
      %v2044 = vadd.f32 %v1738, %v1962
      %v2045 = vadd.f32 %v1739, %v1967
      %v2046 = vadd.f32 %v1740, %v1972
      %v2047 = vadd.f32 %v1741, %v1977
      %v2048 = vadd.f32 %v1742, %v1982
      %v2049 = vadd.f32 %v1743, %v1987
      %v2050 = vadd.f32 %v1744, %v1992
      %v2051 = vadd.f32 %v1745, %v1997
      %v2052 = vadd.f32 %v1746, %v2002
      %v2053 = vadd.f32 %v1747, %v2007
      %v2054 = vadd.f32 %v1748, %v2012
      %v2055 = vadd.f32 %v1749, %v2017
      %v2056 = vadd.f32 %v1750, %v2022
      %v2057 = vld [vmem:[%s536 + $0x2] sm:$0xff]
      %v2058 = vld [vmem:[%s536 + $0xa] sm:$0xff]
      %v2059 = vld [vmem:[%s536 + $0x1a] sm:$0xff]
      %v2060 = vld [vmem:[%s536 + $0x22] sm:$0xff]
      %v2061 = vld [vmem:[%s536 + $0x32] sm:$0xff]
      %v2062 = vld [vmem:[%s536 + $0x3a] sm:$0xff]
      %v2063 = vld [vmem:[%s536 + $0x4a] sm:$0xff]
      %v2064 = vld [vmem:[%s536 + $0x52] sm:$0xff]
      %v2065 = vld [vmem:[%s536 + $0x62] sm:$0xff]
      %v2066 = vld [vmem:[%s536 + $0x6a] sm:$0xff]
      %v2067 = vld [vmem:[%s536 + $0x7a] sm:$0xff]
      %v2068 = vld [vmem:[%s536 + $0x82] sm:$0xff]
      %v2069 = vld [vmem:[%s536 + $0x92] sm:$0xff]
      %v2070 = vld [vmem:[%s536 + $0x9a] sm:$0xff]
      %v2071 = vld [vmem:[%s536 + $0xaa] sm:$0xff]
      %v2072 = vld [vmem:[%s536 + $0xb2] sm:$0xff]
      %v2073 = vld [vmem:[%s536 + $0xc2] sm:$0xff]
      %v2074 = vld [vmem:[%s536 + $0xca] sm:$0xff]
      %v2075 = vld [vmem:[%s536 + $0xda] sm:$0xff]
      %v2076 = vld [vmem:[%s536 + $0xe2] sm:$0xff]
      %v2077 = vld [vmem:[%s536 + $0xf2] sm:$0xff]
      %v2078 = vld [vmem:[%s536 + $0xfa] sm:$0xff]
      %v2079 = vld [vmem:[%s536 + $0x10a] sm:$0xff]
      %v2080 = vld [vmem:[%s536 + $0x112] sm:$0xff]
      %v2081 = vld [vmem:[%s536 + $0x122] sm:$0xff]
      %v2082 = vld [vmem:[%s536 + $0x12a] sm:$0xff]
      %v2083 = vld [vmem:[%s536 + $0x13a] sm:$0xff]
      %v2084 = vld [vmem:[%s536 + $0x142] sm:$0xff]
      %v2085 = vld [vmem:[%s536 + $0x152] sm:$0xff]
      %v2086 = vld [vmem:[%s536 + $0x15a] sm:$0xff]
      %v2087 = vld [vmem:[%s536 + $0x16a] sm:$0xff]
      %v2088 = vld [vmem:[%s536 + $0x172] sm:$0xff]
      %s2089 = scalar_lea.vmem %s1, 640
      %v2090 = vld [vmem:[%s2089] sm:$0xff]
      %v2091 = vld [vmem:[%s2089 + $0x8] sm:$0xff]
      %v2092 = vld [vmem:[%s2089 + $0x10] sm:$0xff]
      %v2093 = vld [vmem:[%s2089 + $0x18] sm:$0xff]
      %v2094 = vld [vmem:[%s2089 + $0x20] sm:$0xff]
      %v2095 = vld [vmem:[%s2089 + $0x28] sm:$0xff]
      %v2096 = vld [vmem:[%s2089 + $0x30] sm:$0xff]
      %v2097 = vld [vmem:[%s2089 + $0x38] sm:$0xff]
      %v2098 = vld [vmem:[%s2089 + $0x40] sm:$0xff]
      %v2099 = vld [vmem:[%s2089 + $0x48] sm:$0xff]
      %v2100 = vld [vmem:[%s2089 + $0x50] sm:$0xff]
      %v2101 = vld [vmem:[%s2089 + $0x58] sm:$0xff]
      %v2102 = vld [vmem:[%s2089 + $0x60] sm:$0xff]
      %v2103 = vld [vmem:[%s2089 + $0x68] sm:$0xff]
      %v2104 = vld [vmem:[%s2089 + $0x70] sm:$0xff]
      %v2105 = vld [vmem:[%s2089 + $0x78] sm:$0xff]
      %2106 = vmatprep.subr.mxu0 0.0
      %2107 = vmatpush1.msra.mxu0 %v2105
      %2108 = vmatprep.subr.mxu0 0.0
      %2109 = vmatpush1.msra.mxu0 %v2104
      %2110 = vmatprep.subr.mxu0 0.0
      %2111 = vmatpush1.msra.mxu0 %v2103
      %2112 = vmatprep.subr.mxu0 0.0
      %2113 = vmatpush1.msra.mxu0 %v2102
      %2114 = vmatprep.subr.mxu0 0.0
      %2115 = vmatpush1.msra.mxu0 %v2101
      %2116 = vmatprep.subr.mxu0 0.0
      %2117 = vmatpush1.msra.mxu0 %v2100
      %2118 = vmatprep.subr.mxu0 0.0
      %2119 = vmatpush1.msra.mxu0 %v2099
      %2120 = vmatprep.subr.mxu0 0.0
      %2121 = vmatpush1.msra.mxu0 %v2098
      %2122 = vmatprep.subr.mxu0 0.0
      %2123 = vmatpush1.msra.mxu0 %v2097
      %2124 = vmatprep.subr.mxu0 0.0
      %2125 = vmatpush1.msra.mxu0 %v2096
      %2126 = vmatprep.subr.mxu0 0.0
      %2127 = vmatpush1.msra.mxu0 %v2095
      %2128 = vmatprep.subr.mxu0 0.0
      %2129 = vmatpush1.msra.mxu0 %v2094
      %2130 = vmatprep.subr.mxu0 0.0
      %2131 = vmatpush1.msra.mxu0 %v2093
      %2132 = vmatprep.subr.mxu0 0.0
      %2133 = vmatpush1.msra.mxu0 %v2092
      %2134 = vmatprep.subr.mxu0 0.0
      %2135 = vmatpush1.msra.mxu0 %v2091
      %2136 = vmatprep.subr.mxu0 0.0
      %2137 = vmatpush1.msra.mxu0 %v2090
      %2138 = vmatprep.subr.mxu0 0.0
      %2139 = vmatpush2.msra.mxu0 0.0
      %2140 = vmatprep.subr.mxu0 0.0
      %2141 = vmatpush2.msra.mxu0 0.0
      %2142 = vmatprep.subr.mxu0 0.0
      %2143 = vmatpush2.msra.mxu0 0.0
      %2144 = vmatprep.subr.mxu0 0.0
      %2145 = vmatpush2.msra.mxu0 0.0
      %2146 = vmatprep.subr.mxu0 0.0
      %2147 = vmatpush2.msra.mxu0 0.0
      %2148 = vmatprep.subr.mxu0 0.0
      %2149 = vmatpush2.msra.mxu0 0.0
      %2150 = vmatprep.subr.mxu0 0.0
      %2151 = vmatpush2.msra.mxu0 0.0
      %2152 = vmatprep.subr.mxu0 0.0
      %2153 = vmatpush2.msra.mxu0 0.0
      %2154 = vmatprep.subr.mxu0 0.0
      %2155 = vmatpush2.msra.mxu0 0.0
      %2156 = vmatprep.subr.mxu0 0.0
      %2157 = vmatpush2.msra.mxu0 0.0
      %2158 = vmatprep.subr.mxu0 0.0
      %2159 = vmatpush2.msra.mxu0 0.0
      %2160 = vmatprep.subr.mxu0 0.0
      %2161 = vmatpush2.msra.mxu0 0.0
      %2162 = vmatprep.subr.mxu0 0.0
      %2163 = vmatpush2.msra.mxu0 0.0
      %2164 = vmatprep.subr.mxu0 0.0
      %2165 = vmatpush2.msra.mxu0 0.0
      %2166 = vmatprep.subr.mxu0 0.0
      %2167 = vmatpush2.msra.mxu0 0.0
      %2168 = vmatprep.subr.mxu0 0.0
      %2169 = vmatpush2.msra.mxu0 0.0
      %2170 = vmatprep.mubr.f32.mxu0 0.0
      %2171 = vmatmul.mubr.f32.gmra.mxu0 %v2057
      %v2172 = vpop.f32.mrf.mxu0
      %v2173 = vadd.f32 0.0, %v2172
      %v2174 = vpop.f32.mrf.mxu0
      %2175 = vmatprep.mubr.f32.mxu0 0.0
      %2176 = vmatmul.mubr.f32.gmra.mxu0 %v2058
      %v2177 = vpop.f32.mrf.mxu0
      %v2178 = vadd.f32 0.0, %v2177
      %v2179 = vpop.f32.mrf.mxu0
      %2180 = vmatprep.mubr.f32.mxu0 0.0
      %2181 = vmatmul.mubr.f32.gmra.mxu0 %v2059
      %v2182 = vpop.f32.mrf.mxu0
      %v2183 = vadd.f32 0.0, %v2182
      %v2184 = vpop.f32.mrf.mxu0
      %2185 = vmatprep.mubr.f32.mxu0 0.0
      %2186 = vmatmul.mubr.f32.gmra.mxu0 %v2060
      %v2187 = vpop.f32.mrf.mxu0
      %v2188 = vadd.f32 0.0, %v2187
      %v2189 = vpop.f32.mrf.mxu0
      %2190 = vmatprep.mubr.f32.mxu0 0.0
      %2191 = vmatmul.mubr.f32.gmra.mxu0 %v2061
      %v2192 = vpop.f32.mrf.mxu0
      %v2193 = vadd.f32 0.0, %v2192
      %v2194 = vpop.f32.mrf.mxu0
      %2195 = vmatprep.mubr.f32.mxu0 0.0
      %2196 = vmatmul.mubr.f32.gmra.mxu0 %v2062
      %v2197 = vpop.f32.mrf.mxu0
      %v2198 = vadd.f32 0.0, %v2197
      %v2199 = vpop.f32.mrf.mxu0
      %2200 = vmatprep.mubr.f32.mxu0 0.0
      %2201 = vmatmul.mubr.f32.gmra.mxu0 %v2063
      %v2202 = vpop.f32.mrf.mxu0
      %v2203 = vadd.f32 0.0, %v2202
      %v2204 = vpop.f32.mrf.mxu0
      %2205 = vmatprep.mubr.f32.mxu0 0.0
      %2206 = vmatmul.mubr.f32.gmra.mxu0 %v2064
      %v2207 = vpop.f32.mrf.mxu0
      %v2208 = vadd.f32 0.0, %v2207
      %v2209 = vpop.f32.mrf.mxu0
      %2210 = vmatprep.mubr.f32.mxu0 0.0
      %2211 = vmatmul.mubr.f32.gmra.mxu0 %v2065
      %v2212 = vpop.f32.mrf.mxu0
      %v2213 = vadd.f32 0.0, %v2212
      %v2214 = vpop.f32.mrf.mxu0
      %2215 = vmatprep.mubr.f32.mxu0 0.0
      %2216 = vmatmul.mubr.f32.gmra.mxu0 %v2066
      %v2217 = vpop.f32.mrf.mxu0
      %v2218 = vadd.f32 0.0, %v2217
      %v2219 = vpop.f32.mrf.mxu0
      %2220 = vmatprep.mubr.f32.mxu0 0.0
      %2221 = vmatmul.mubr.f32.gmra.mxu0 %v2067
      %v2222 = vpop.f32.mrf.mxu0
      %v2223 = vadd.f32 0.0, %v2222
      %v2224 = vpop.f32.mrf.mxu0
      %2225 = vmatprep.mubr.f32.mxu0 0.0
      %2226 = vmatmul.mubr.f32.gmra.mxu0 %v2068
      %v2227 = vpop.f32.mrf.mxu0
      %v2228 = vadd.f32 0.0, %v2227
      %v2229 = vpop.f32.mrf.mxu0
      %2230 = vmatprep.mubr.f32.mxu0 0.0
      %2231 = vmatmul.mubr.f32.gmra.mxu0 %v2069
      %v2232 = vpop.f32.mrf.mxu0
      %v2233 = vadd.f32 0.0, %v2232
      %v2234 = vpop.f32.mrf.mxu0
      %2235 = vmatprep.mubr.f32.mxu0 0.0
      %2236 = vmatmul.mubr.f32.gmra.mxu0 %v2070
      %v2237 = vpop.f32.mrf.mxu0
      %v2238 = vadd.f32 0.0, %v2237
      %v2239 = vpop.f32.mrf.mxu0
      %2240 = vmatprep.mubr.f32.mxu0 0.0
      %2241 = vmatmul.mubr.f32.gmra.mxu0 %v2071
      %v2242 = vpop.f32.mrf.mxu0
      %v2243 = vadd.f32 0.0, %v2242
      %v2244 = vpop.f32.mrf.mxu0
      %2245 = vmatprep.mubr.f32.mxu0 0.0
      %2246 = vmatmul.mubr.f32.gmra.mxu0 %v2072
      %v2247 = vpop.f32.mrf.mxu0
      %v2248 = vadd.f32 0.0, %v2247
      %v2249 = vpop.f32.mrf.mxu0
      %2250 = vmatprep.mubr.f32.mxu0 0.0
      %2251 = vmatmul.mubr.f32.gmra.mxu0 %v2073
      %v2252 = vpop.f32.mrf.mxu0
      %v2253 = vadd.f32 0.0, %v2252
      %v2254 = vpop.f32.mrf.mxu0
      %2255 = vmatprep.mubr.f32.mxu0 0.0
      %2256 = vmatmul.mubr.f32.gmra.mxu0 %v2074
      %v2257 = vpop.f32.mrf.mxu0
      %v2258 = vadd.f32 0.0, %v2257
      %v2259 = vpop.f32.mrf.mxu0
      %2260 = vmatprep.mubr.f32.mxu0 0.0
      %2261 = vmatmul.mubr.f32.gmra.mxu0 %v2075
      %v2262 = vpop.f32.mrf.mxu0
      %v2263 = vadd.f32 0.0, %v2262
      %v2264 = vpop.f32.mrf.mxu0
      %2265 = vmatprep.mubr.f32.mxu0 0.0
      %2266 = vmatmul.mubr.f32.gmra.mxu0 %v2076
      %v2267 = vpop.f32.mrf.mxu0
      %v2268 = vadd.f32 0.0, %v2267
      %v2269 = vpop.f32.mrf.mxu0
      %2270 = vmatprep.mubr.f32.mxu0 0.0
      %2271 = vmatmul.mubr.f32.gmra.mxu0 %v2077
      %v2272 = vpop.f32.mrf.mxu0
      %v2273 = vadd.f32 0.0, %v2272
      %v2274 = vpop.f32.mrf.mxu0
      %2275 = vmatprep.mubr.f32.mxu0 0.0
      %2276 = vmatmul.mubr.f32.gmra.mxu0 %v2078
      %v2277 = vpop.f32.mrf.mxu0
      %v2278 = vadd.f32 0.0, %v2277
      %v2279 = vpop.f32.mrf.mxu0
      %2280 = vmatprep.mubr.f32.mxu0 0.0
      %2281 = vmatmul.mubr.f32.gmra.mxu0 %v2079
      %v2282 = vpop.f32.mrf.mxu0
      %v2283 = vadd.f32 0.0, %v2282
      %v2284 = vpop.f32.mrf.mxu0
      %2285 = vmatprep.mubr.f32.mxu0 0.0
      %2286 = vmatmul.mubr.f32.gmra.mxu0 %v2080
      %v2287 = vpop.f32.mrf.mxu0
      %v2288 = vadd.f32 0.0, %v2287
      %v2289 = vpop.f32.mrf.mxu0
      %2290 = vmatprep.mubr.f32.mxu0 0.0
      %2291 = vmatmul.mubr.f32.gmra.mxu0 %v2081
      %v2292 = vpop.f32.mrf.mxu0
      %v2293 = vadd.f32 0.0, %v2292
      %v2294 = vpop.f32.mrf.mxu0
      %2295 = vmatprep.mubr.f32.mxu0 0.0
      %2296 = vmatmul.mubr.f32.gmra.mxu0 %v2082
      %v2297 = vpop.f32.mrf.mxu0
      %v2298 = vadd.f32 0.0, %v2297
      %v2299 = vpop.f32.mrf.mxu0
      %2300 = vmatprep.mubr.f32.mxu0 0.0
      %2301 = vmatmul.mubr.f32.gmra.mxu0 %v2083
      %v2302 = vpop.f32.mrf.mxu0
      %v2303 = vadd.f32 0.0, %v2302
      %v2304 = vpop.f32.mrf.mxu0
      %2305 = vmatprep.mubr.f32.mxu0 0.0
      %2306 = vmatmul.mubr.f32.gmra.mxu0 %v2084
      %v2307 = vpop.f32.mrf.mxu0
      %v2308 = vadd.f32 0.0, %v2307
      %v2309 = vpop.f32.mrf.mxu0
      %2310 = vmatprep.mubr.f32.mxu0 0.0
      %2311 = vmatmul.mubr.f32.gmra.mxu0 %v2085
      %v2312 = vpop.f32.mrf.mxu0
      %v2313 = vadd.f32 0.0, %v2312
      %v2314 = vpop.f32.mrf.mxu0
      %2315 = vmatprep.mubr.f32.mxu0 0.0
      %2316 = vmatmul.mubr.f32.gmra.mxu0 %v2086
      %v2317 = vpop.f32.mrf.mxu0
      %v2318 = vadd.f32 0.0, %v2317
      %v2319 = vpop.f32.mrf.mxu0
      %2320 = vmatprep.mubr.f32.mxu0 0.0
      %2321 = vmatmul.mubr.f32.gmra.mxu0 %v2087
      %v2322 = vpop.f32.mrf.mxu0
      %v2323 = vadd.f32 0.0, %v2322
      %v2324 = vpop.f32.mrf.mxu0
      %2325 = vmatprep.mubr.f32.mxu0 0.0
      %2326 = vmatmul.mubr.f32.gmra.mxu0 %v2088
      %v2327 = vpop.f32.mrf.mxu0
      %v2328 = vadd.f32 0.0, %v2327
      %v2329 = vpop.f32.mrf.mxu0
      %2330 = vdwg.mxu0
      %v2331 = vadd.f32 %v2025, %v2173
      %v2332 = vadd.f32 %v2026, %v2178
      %v2333 = vadd.f32 %v2027, %v2183
      %v2334 = vadd.f32 %v2028, %v2188
      %v2335 = vadd.f32 %v2029, %v2193
      %v2336 = vadd.f32 %v2030, %v2198
      %v2337 = vadd.f32 %v2031, %v2203
      %v2338 = vadd.f32 %v2032, %v2208
      %v2339 = vadd.f32 %v2033, %v2213
      %v2340 = vadd.f32 %v2034, %v2218
      %v2341 = vadd.f32 %v2035, %v2223
      %v2342 = vadd.f32 %v2036, %v2228
      %v2343 = vadd.f32 %v2037, %v2233
      %v2344 = vadd.f32 %v2038, %v2238
      %v2345 = vadd.f32 %v2039, %v2243
      %v2346 = vadd.f32 %v2040, %v2248
      %v2347 = vadd.f32 %v2041, %v2253
      %v2348 = vadd.f32 %v2042, %v2258
      %v2349 = vadd.f32 %v2043, %v2263
      %v2350 = vadd.f32 %v2044, %v2268
      %v2351 = vadd.f32 %v2045, %v2273
      %v2352 = vadd.f32 %v2046, %v2278
      %v2353 = vadd.f32 %v2047, %v2283
      %v2354 = vadd.f32 %v2048, %v2288
      %v2355 = vadd.f32 %v2049, %v2293
      %v2356 = vadd.f32 %v2050, %v2298
      %v2357 = vadd.f32 %v2051, %v2303
      %v2358 = vadd.f32 %v2052, %v2308
      %v2359 = vadd.f32 %v2053, %v2313
      %v2360 = vadd.f32 %v2054, %v2318
      %v2361 = vadd.f32 %v2055, %v2323
      %v2362 = vadd.f32 %v2056, %v2328
      %s2363 = scalar_lea.vmem [#allocation2], 48
      %v2364 = vld [vmem:[%s2363] sm:$0xff]
      %v2365 = vld [vmem:[%s2363 + $0x8] sm:$0xff]
      %v2366 = vld [vmem:[%s2363 + $0x18] sm:$0xff]
      %v2367 = vld [vmem:[%s2363 + $0x20] sm:$0xff]
      %v2368 = vld [vmem:[%s2363 + $0x30] sm:$0xff]
      %v2369 = vld [vmem:[%s2363 + $0x38] sm:$0xff]
      %v2370 = vld [vmem:[%s2363 + $0x48] sm:$0xff]
      %v2371 = vld [vmem:[%s2363 + $0x50] sm:$0xff]
      %v2372 = vld [vmem:[%s2363 + $0x60] sm:$0xff]
      %v2373 = vld [vmem:[%s2363 + $0x68] sm:$0xff]
      %v2374 = vld [vmem:[%s2363 + $0x78] sm:$0xff]
      %v2375 = vld [vmem:[%s2363 + $0x80] sm:$0xff]
      %v2376 = vld [vmem:[%s2363 + $0x90] sm:$0xff]
      %v2377 = vld [vmem:[%s2363 + $0x98] sm:$0xff]
      %v2378 = vld [vmem:[%s2363 + $0xa8] sm:$0xff]
      %v2379 = vld [vmem:[%s2363 + $0xb0] sm:$0xff]
      %v2380 = vld [vmem:[%s2363 + $0xc0] sm:$0xff]
      %v2381 = vld [vmem:[%s2363 + $0xc8] sm:$0xff]
      %v2382 = vld [vmem:[%s2363 + $0xd8] sm:$0xff]
      %v2383 = vld [vmem:[%s2363 + $0xe0] sm:$0xff]
      %v2384 = vld [vmem:[%s2363 + $0xf0] sm:$0xff]
      %v2385 = vld [vmem:[%s2363 + $0xf8] sm:$0xff]
      %v2386 = vld [vmem:[%s2363 + $0x108] sm:$0xff]
      %v2387 = vld [vmem:[%s2363 + $0x110] sm:$0xff]
      %v2388 = vld [vmem:[%s2363 + $0x120] sm:$0xff]
      %v2389 = vld [vmem:[%s2363 + $0x128] sm:$0xff]
      %v2390 = vld [vmem:[%s2363 + $0x138] sm:$0xff]
      %v2391 = vld [vmem:[%s2363 + $0x140] sm:$0xff]
      %v2392 = vld [vmem:[%s2363 + $0x150] sm:$0xff]
      %v2393 = vld [vmem:[%s2363 + $0x158] sm:$0xff]
      %v2394 = vld [vmem:[%s2363 + $0x168] sm:$0xff]
      %v2395 = vld [vmem:[%s2363 + $0x170] sm:$0xff]
      %s2396 = scalar_lea.vmem %s1, 768
      %v2397 = vld [vmem:[%s2396] sm:$0xff]
      %v2398 = vld [vmem:[%s2396 + $0x8] sm:$0xff]
      %v2399 = vld [vmem:[%s2396 + $0x10] sm:$0xff]
      %v2400 = vld [vmem:[%s2396 + $0x18] sm:$0xff]
      %v2401 = vld [vmem:[%s2396 + $0x20] sm:$0xff]
      %v2402 = vld [vmem:[%s2396 + $0x28] sm:$0xff]
      %v2403 = vld [vmem:[%s2396 + $0x30] sm:$0xff]
      %v2404 = vld [vmem:[%s2396 + $0x38] sm:$0xff]
      %v2405 = vld [vmem:[%s2396 + $0x40] sm:$0xff]
      %v2406 = vld [vmem:[%s2396 + $0x48] sm:$0xff]
      %v2407 = vld [vmem:[%s2396 + $0x50] sm:$0xff]
      %v2408 = vld [vmem:[%s2396 + $0x58] sm:$0xff]
      %v2409 = vld [vmem:[%s2396 + $0x60] sm:$0xff]
      %v2410 = vld [vmem:[%s2396 + $0x68] sm:$0xff]
      %v2411 = vld [vmem:[%s2396 + $0x70] sm:$0xff]
      %v2412 = vld [vmem:[%s2396 + $0x78] sm:$0xff]
      %2413 = vmatprep.subr.mxu0 0.0
      %2414 = vmatpush1.msra.mxu0 %v2412
      %2415 = vmatprep.subr.mxu0 0.0
      %2416 = vmatpush1.msra.mxu0 %v2411
      %2417 = vmatprep.subr.mxu0 0.0
      %2418 = vmatpush1.msra.mxu0 %v2410
      %2419 = vmatprep.subr.mxu0 0.0
      %2420 = vmatpush1.msra.mxu0 %v2409
      %2421 = vmatprep.subr.mxu0 0.0
      %2422 = vmatpush1.msra.mxu0 %v2408
      %2423 = vmatprep.subr.mxu0 0.0
      %2424 = vmatpush1.msra.mxu0 %v2407
      %2425 = vmatprep.subr.mxu0 0.0
      %2426 = vmatpush1.msra.mxu0 %v2406
      %2427 = vmatprep.subr.mxu0 0.0
      %2428 = vmatpush1.msra.mxu0 %v2405
      %2429 = vmatprep.subr.mxu0 0.0
      %2430 = vmatpush1.msra.mxu0 %v2404
      %2431 = vmatprep.subr.mxu0 0.0
      %2432 = vmatpush1.msra.mxu0 %v2403
      %2433 = vmatprep.subr.mxu0 0.0
      %2434 = vmatpush1.msra.mxu0 %v2402
      %2435 = vmatprep.subr.mxu0 0.0
      %2436 = vmatpush1.msra.mxu0 %v2401
      %2437 = vmatprep.subr.mxu0 0.0
      %2438 = vmatpush1.msra.mxu0 %v2400
      %2439 = vmatprep.subr.mxu0 0.0
      %2440 = vmatpush1.msra.mxu0 %v2399
      %2441 = vmatprep.subr.mxu0 0.0
      %2442 = vmatpush1.msra.mxu0 %v2398
      %2443 = vmatprep.subr.mxu0 0.0
      %2444 = vmatpush1.msra.mxu0 %v2397
      %2445 = vmatprep.subr.mxu0 0.0
      %2446 = vmatpush2.msra.mxu0 0.0
      %2447 = vmatprep.subr.mxu0 0.0
      %2448 = vmatpush2.msra.mxu0 0.0
      %2449 = vmatprep.subr.mxu0 0.0
      %2450 = vmatpush2.msra.mxu0 0.0
      %2451 = vmatprep.subr.mxu0 0.0
      %2452 = vmatpush2.msra.mxu0 0.0
      %2453 = vmatprep.subr.mxu0 0.0
      %2454 = vmatpush2.msra.mxu0 0.0
      %2455 = vmatprep.subr.mxu0 0.0
      %2456 = vmatpush2.msra.mxu0 0.0
      %2457 = vmatprep.subr.mxu0 0.0
      %2458 = vmatpush2.msra.mxu0 0.0
      %2459 = vmatprep.subr.mxu0 0.0
      %2460 = vmatpush2.msra.mxu0 0.0
      %2461 = vmatprep.subr.mxu0 0.0
      %2462 = vmatpush2.msra.mxu0 0.0
      %2463 = vmatprep.subr.mxu0 0.0
      %2464 = vmatpush2.msra.mxu0 0.0
      %2465 = vmatprep.subr.mxu0 0.0
      %2466 = vmatpush2.msra.mxu0 0.0
      %2467 = vmatprep.subr.mxu0 0.0
      %2468 = vmatpush2.msra.mxu0 0.0
      %2469 = vmatprep.subr.mxu0 0.0
      %2470 = vmatpush2.msra.mxu0 0.0
      %2471 = vmatprep.subr.mxu0 0.0
      %2472 = vmatpush2.msra.mxu0 0.0
      %2473 = vmatprep.subr.mxu0 0.0
      %2474 = vmatpush2.msra.mxu0 0.0
      %2475 = vmatprep.subr.mxu0 0.0
      %2476 = vmatpush2.msra.mxu0 0.0
      %2477 = vmatprep.mubr.f32.mxu0 0.0
      %2478 = vmatmul.mubr.f32.gmra.mxu0 %v2364
      %v2479 = vpop.f32.mrf.mxu0
      %v2480 = vadd.f32 0.0, %v2479
      %v2481 = vpop.f32.mrf.mxu0
      %2482 = vmatprep.mubr.f32.mxu0 0.0
      %2483 = vmatmul.mubr.f32.gmra.mxu0 %v2365
      %v2484 = vpop.f32.mrf.mxu0
      %v2485 = vadd.f32 0.0, %v2484
      %v2486 = vpop.f32.mrf.mxu0
      %2487 = vmatprep.mubr.f32.mxu0 0.0
      %2488 = vmatmul.mubr.f32.gmra.mxu0 %v2366
      %v2489 = vpop.f32.mrf.mxu0
      %v2490 = vadd.f32 0.0, %v2489
      %v2491 = vpop.f32.mrf.mxu0
      %2492 = vmatprep.mubr.f32.mxu0 0.0
      %2493 = vmatmul.mubr.f32.gmra.mxu0 %v2367
      %v2494 = vpop.f32.mrf.mxu0
      %v2495 = vadd.f32 0.0, %v2494
      %v2496 = vpop.f32.mrf.mxu0
      %2497 = vmatprep.mubr.f32.mxu0 0.0
      %2498 = vmatmul.mubr.f32.gmra.mxu0 %v2368
      %v2499 = vpop.f32.mrf.mxu0
      %v2500 = vadd.f32 0.0, %v2499
      %v2501 = vpop.f32.mrf.mxu0
      %2502 = vmatprep.mubr.f32.mxu0 0.0
      %2503 = vmatmul.mubr.f32.gmra.mxu0 %v2369
      %v2504 = vpop.f32.mrf.mxu0
      %v2505 = vadd.f32 0.0, %v2504
      %v2506 = vpop.f32.mrf.mxu0
      %2507 = vmatprep.mubr.f32.mxu0 0.0
      %2508 = vmatmul.mubr.f32.gmra.mxu0 %v2370
      %v2509 = vpop.f32.mrf.mxu0
      %v2510 = vadd.f32 0.0, %v2509
      %v2511 = vpop.f32.mrf.mxu0
      %2512 = vmatprep.mubr.f32.mxu0 0.0
      %2513 = vmatmul.mubr.f32.gmra.mxu0 %v2371
      %v2514 = vpop.f32.mrf.mxu0
      %v2515 = vadd.f32 0.0, %v2514
      %v2516 = vpop.f32.mrf.mxu0
      %2517 = vmatprep.mubr.f32.mxu0 0.0
      %2518 = vmatmul.mubr.f32.gmra.mxu0 %v2372
      %v2519 = vpop.f32.mrf.mxu0
      %v2520 = vadd.f32 0.0, %v2519
      %v2521 = vpop.f32.mrf.mxu0
      %2522 = vmatprep.mubr.f32.mxu0 0.0
      %2523 = vmatmul.mubr.f32.gmra.mxu0 %v2373
      %v2524 = vpop.f32.mrf.mxu0
      %v2525 = vadd.f32 0.0, %v2524
      %v2526 = vpop.f32.mrf.mxu0
      %2527 = vmatprep.mubr.f32.mxu0 0.0
      %2528 = vmatmul.mubr.f32.gmra.mxu0 %v2374
      %v2529 = vpop.f32.mrf.mxu0
      %v2530 = vadd.f32 0.0, %v2529
      %v2531 = vpop.f32.mrf.mxu0
      %2532 = vmatprep.mubr.f32.mxu0 0.0
      %2533 = vmatmul.mubr.f32.gmra.mxu0 %v2375
      %v2534 = vpop.f32.mrf.mxu0
      %v2535 = vadd.f32 0.0, %v2534
      %v2536 = vpop.f32.mrf.mxu0
      %2537 = vmatprep.mubr.f32.mxu0 0.0
      %2538 = vmatmul.mubr.f32.gmra.mxu0 %v2376
      %v2539 = vpop.f32.mrf.mxu0
      %v2540 = vadd.f32 0.0, %v2539
      %v2541 = vpop.f32.mrf.mxu0
      %2542 = vmatprep.mubr.f32.mxu0 0.0
      %2543 = vmatmul.mubr.f32.gmra.mxu0 %v2377
      %v2544 = vpop.f32.mrf.mxu0
      %v2545 = vadd.f32 0.0, %v2544
      %v2546 = vpop.f32.mrf.mxu0
      %2547 = vmatprep.mubr.f32.mxu0 0.0
      %2548 = vmatmul.mubr.f32.gmra.mxu0 %v2378
      %v2549 = vpop.f32.mrf.mxu0
      %v2550 = vadd.f32 0.0, %v2549
      %v2551 = vpop.f32.mrf.mxu0
      %2552 = vmatprep.mubr.f32.mxu0 0.0
      %2553 = vmatmul.mubr.f32.gmra.mxu0 %v2379
      %v2554 = vpop.f32.mrf.mxu0
      %v2555 = vadd.f32 0.0, %v2554
      %v2556 = vpop.f32.mrf.mxu0
      %2557 = vmatprep.mubr.f32.mxu0 0.0
      %2558 = vmatmul.mubr.f32.gmra.mxu0 %v2380
      %v2559 = vpop.f32.mrf.mxu0
      %v2560 = vadd.f32 0.0, %v2559
      %v2561 = vpop.f32.mrf.mxu0
      %2562 = vmatprep.mubr.f32.mxu0 0.0
      %2563 = vmatmul.mubr.f32.gmra.mxu0 %v2381
      %v2564 = vpop.f32.mrf.mxu0
      %v2565 = vadd.f32 0.0, %v2564
      %v2566 = vpop.f32.mrf.mxu0
      %2567 = vmatprep.mubr.f32.mxu0 0.0
      %2568 = vmatmul.mubr.f32.gmra.mxu0 %v2382
      %v2569 = vpop.f32.mrf.mxu0
      %v2570 = vadd.f32 0.0, %v2569
      %v2571 = vpop.f32.mrf.mxu0
      %2572 = vmatprep.mubr.f32.mxu0 0.0
      %2573 = vmatmul.mubr.f32.gmra.mxu0 %v2383
      %v2574 = vpop.f32.mrf.mxu0
      %v2575 = vadd.f32 0.0, %v2574
      %v2576 = vpop.f32.mrf.mxu0
      %2577 = vmatprep.mubr.f32.mxu0 0.0
      %2578 = vmatmul.mubr.f32.gmra.mxu0 %v2384
      %v2579 = vpop.f32.mrf.mxu0
      %v2580 = vadd.f32 0.0, %v2579
      %v2581 = vpop.f32.mrf.mxu0
      %2582 = vmatprep.mubr.f32.mxu0 0.0
      %2583 = vmatmul.mubr.f32.gmra.mxu0 %v2385
      %v2584 = vpop.f32.mrf.mxu0
      %v2585 = vadd.f32 0.0, %v2584
      %v2586 = vpop.f32.mrf.mxu0
      %2587 = vmatprep.mubr.f32.mxu0 0.0
      %2588 = vmatmul.mubr.f32.gmra.mxu0 %v2386
      %v2589 = vpop.f32.mrf.mxu0
      %v2590 = vadd.f32 0.0, %v2589
      %v2591 = vpop.f32.mrf.mxu0
      %2592 = vmatprep.mubr.f32.mxu0 0.0
      %2593 = vmatmul.mubr.f32.gmra.mxu0 %v2387
      %v2594 = vpop.f32.mrf.mxu0
      %v2595 = vadd.f32 0.0, %v2594
      %v2596 = vpop.f32.mrf.mxu0
      %2597 = vmatprep.mubr.f32.mxu0 0.0
      %2598 = vmatmul.mubr.f32.gmra.mxu0 %v2388
      %v2599 = vpop.f32.mrf.mxu0
      %v2600 = vadd.f32 0.0, %v2599
      %v2601 = vpop.f32.mrf.mxu0
      %2602 = vmatprep.mubr.f32.mxu0 0.0
      %2603 = vmatmul.mubr.f32.gmra.mxu0 %v2389
      %v2604 = vpop.f32.mrf.mxu0
      %v2605 = vadd.f32 0.0, %v2604
      %v2606 = vpop.f32.mrf.mxu0
      %2607 = vmatprep.mubr.f32.mxu0 0.0
      %2608 = vmatmul.mubr.f32.gmra.mxu0 %v2390
      %v2609 = vpop.f32.mrf.mxu0
      %v2610 = vadd.f32 0.0, %v2609
      %v2611 = vpop.f32.mrf.mxu0
      %2612 = vmatprep.mubr.f32.mxu0 0.0
      %2613 = vmatmul.mubr.f32.gmra.mxu0 %v2391
      %v2614 = vpop.f32.mrf.mxu0
      %v2615 = vadd.f32 0.0, %v2614
      %v2616 = vpop.f32.mrf.mxu0
      %2617 = vmatprep.mubr.f32.mxu0 0.0
      %2618 = vmatmul.mubr.f32.gmra.mxu0 %v2392
      %v2619 = vpop.f32.mrf.mxu0
      %v2620 = vadd.f32 0.0, %v2619
      %v2621 = vpop.f32.mrf.mxu0
      %2622 = vmatprep.mubr.f32.mxu0 0.0
      %2623 = vmatmul.mubr.f32.gmra.mxu0 %v2393
      %v2624 = vpop.f32.mrf.mxu0
      %v2625 = vadd.f32 0.0, %v2624
      %v2626 = vpop.f32.mrf.mxu0
      %2627 = vmatprep.mubr.f32.mxu0 0.0
      %2628 = vmatmul.mubr.f32.gmra.mxu0 %v2394
      %v2629 = vpop.f32.mrf.mxu0
      %v2630 = vadd.f32 0.0, %v2629
      %v2631 = vpop.f32.mrf.mxu0
      %2632 = vmatprep.mubr.f32.mxu0 0.0
      %2633 = vmatmul.mubr.f32.gmra.mxu0 %v2395
      %v2634 = vpop.f32.mrf.mxu0
      %v2635 = vadd.f32 0.0, %v2634
      %v2636 = vpop.f32.mrf.mxu0
      %2637 = vdwg.mxu0
      %v2638 = vadd.f32 %v2331, %v2480
      %v2639 = vadd.f32 %v2332, %v2485
      %v2640 = vadd.f32 %v2333, %v2490
      %v2641 = vadd.f32 %v2334, %v2495
      %v2642 = vadd.f32 %v2335, %v2500
      %v2643 = vadd.f32 %v2336, %v2505
      %v2644 = vadd.f32 %v2337, %v2510
      %v2645 = vadd.f32 %v2338, %v2515
      %v2646 = vadd.f32 %v2339, %v2520
      %v2647 = vadd.f32 %v2340, %v2525
      %v2648 = vadd.f32 %v2341, %v2530
      %v2649 = vadd.f32 %v2342, %v2535
      %v2650 = vadd.f32 %v2343, %v2540
      %v2651 = vadd.f32 %v2344, %v2545
      %v2652 = vadd.f32 %v2345, %v2550
      %v2653 = vadd.f32 %v2346, %v2555
      %v2654 = vadd.f32 %v2347, %v2560
      %v2655 = vadd.f32 %v2348, %v2565
      %v2656 = vadd.f32 %v2349, %v2570
      %v2657 = vadd.f32 %v2350, %v2575
      %v2658 = vadd.f32 %v2351, %v2580
      %v2659 = vadd.f32 %v2352, %v2585
      %v2660 = vadd.f32 %v2353, %v2590
      %v2661 = vadd.f32 %v2354, %v2595
      %v2662 = vadd.f32 %v2355, %v2600
      %v2663 = vadd.f32 %v2356, %v2605
      %v2664 = vadd.f32 %v2357, %v2610
      %v2665 = vadd.f32 %v2358, %v2615
      %v2666 = vadd.f32 %v2359, %v2620
      %v2667 = vadd.f32 %v2360, %v2625
      %v2668 = vadd.f32 %v2361, %v2630
      %v2669 = vadd.f32 %v2362, %v2635
      %v2670 = vld [vmem:[%s2363 + $0x1] sm:$0xff]
      %v2671 = vld [vmem:[%s2363 + $0x9] sm:$0xff]
      %v2672 = vld [vmem:[%s2363 + $0x19] sm:$0xff]
      %v2673 = vld [vmem:[%s2363 + $0x21] sm:$0xff]
      %v2674 = vld [vmem:[%s2363 + $0x31] sm:$0xff]
      %v2675 = vld [vmem:[%s2363 + $0x39] sm:$0xff]
      %v2676 = vld [vmem:[%s2363 + $0x49] sm:$0xff]
      %v2677 = vld [vmem:[%s2363 + $0x51] sm:$0xff]
      %v2678 = vld [vmem:[%s2363 + $0x61] sm:$0xff]
      %v2679 = vld [vmem:[%s2363 + $0x69] sm:$0xff]
      %v2680 = vld [vmem:[%s2363 + $0x79] sm:$0xff]
      %v2681 = vld [vmem:[%s2363 + $0x81] sm:$0xff]
      %v2682 = vld [vmem:[%s2363 + $0x91] sm:$0xff]
      %v2683 = vld [vmem:[%s2363 + $0x99] sm:$0xff]
      %v2684 = vld [vmem:[%s2363 + $0xa9] sm:$0xff]
      %v2685 = vld [vmem:[%s2363 + $0xb1] sm:$0xff]
      %v2686 = vld [vmem:[%s2363 + $0xc1] sm:$0xff]
      %v2687 = vld [vmem:[%s2363 + $0xc9] sm:$0xff]
      %v2688 = vld [vmem:[%s2363 + $0xd9] sm:$0xff]
      %v2689 = vld [vmem:[%s2363 + $0xe1] sm:$0xff]
      %v2690 = vld [vmem:[%s2363 + $0xf1] sm:$0xff]
      %v2691 = vld [vmem:[%s2363 + $0xf9] sm:$0xff]
      %v2692 = vld [vmem:[%s2363 + $0x109] sm:$0xff]
      %v2693 = vld [vmem:[%s2363 + $0x111] sm:$0xff]
      %v2694 = vld [vmem:[%s2363 + $0x121] sm:$0xff]
      %v2695 = vld [vmem:[%s2363 + $0x129] sm:$0xff]
      %v2696 = vld [vmem:[%s2363 + $0x139] sm:$0xff]
      %v2697 = vld [vmem:[%s2363 + $0x141] sm:$0xff]
      %v2698 = vld [vmem:[%s2363 + $0x151] sm:$0xff]
      %v2699 = vld [vmem:[%s2363 + $0x159] sm:$0xff]
      %v2700 = vld [vmem:[%s2363 + $0x169] sm:$0xff]
      %v2701 = vld [vmem:[%s2363 + $0x171] sm:$0xff]
      %s2702 = scalar_lea.vmem %s1, 896
      %v2703 = vld [vmem:[%s2702] sm:$0xff]
      %v2704 = vld [vmem:[%s2702 + $0x8] sm:$0xff]
      %v2705 = vld [vmem:[%s2702 + $0x10] sm:$0xff]
      %v2706 = vld [vmem:[%s2702 + $0x18] sm:$0xff]
      %v2707 = vld [vmem:[%s2702 + $0x20] sm:$0xff]
      %v2708 = vld [vmem:[%s2702 + $0x28] sm:$0xff]
      %v2709 = vld [vmem:[%s2702 + $0x30] sm:$0xff]
      %v2710 = vld [vmem:[%s2702 + $0x38] sm:$0xff]
      %v2711 = vld [vmem:[%s2702 + $0x40] sm:$0xff]
      %v2712 = vld [vmem:[%s2702 + $0x48] sm:$0xff]
      %v2713 = vld [vmem:[%s2702 + $0x50] sm:$0xff]
      %v2714 = vld [vmem:[%s2702 + $0x58] sm:$0xff]
      %v2715 = vld [vmem:[%s2702 + $0x60] sm:$0xff]
      %v2716 = vld [vmem:[%s2702 + $0x68] sm:$0xff]
      %v2717 = vld [vmem:[%s2702 + $0x70] sm:$0xff]
      %v2718 = vld [vmem:[%s2702 + $0x78] sm:$0xff]
      %2719 = vmatprep.subr.mxu0 0.0
      %2720 = vmatpush1.msra.mxu0 %v2718
      %2721 = vmatprep.subr.mxu0 0.0
      %2722 = vmatpush1.msra.mxu0 %v2717
      %2723 = vmatprep.subr.mxu0 0.0
      %2724 = vmatpush1.msra.mxu0 %v2716
      %2725 = vmatprep.subr.mxu0 0.0
      %2726 = vmatpush1.msra.mxu0 %v2715
      %2727 = vmatprep.subr.mxu0 0.0
      %2728 = vmatpush1.msra.mxu0 %v2714
      %2729 = vmatprep.subr.mxu0 0.0
      %2730 = vmatpush1.msra.mxu0 %v2713
      %2731 = vmatprep.subr.mxu0 0.0
      %2732 = vmatpush1.msra.mxu0 %v2712
      %2733 = vmatprep.subr.mxu0 0.0
      %2734 = vmatpush1.msra.mxu0 %v2711
      %2735 = vmatprep.subr.mxu0 0.0
      %2736 = vmatpush1.msra.mxu0 %v2710
      %2737 = vmatprep.subr.mxu0 0.0
      %2738 = vmatpush1.msra.mxu0 %v2709
      %2739 = vmatprep.subr.mxu0 0.0
      %2740 = vmatpush1.msra.mxu0 %v2708
      %2741 = vmatprep.subr.mxu0 0.0
      %2742 = vmatpush1.msra.mxu0 %v2707
      %2743 = vmatprep.subr.mxu0 0.0
      %2744 = vmatpush1.msra.mxu0 %v2706
      %2745 = vmatprep.subr.mxu0 0.0
      %2746 = vmatpush1.msra.mxu0 %v2705
      %2747 = vmatprep.subr.mxu0 0.0
      %2748 = vmatpush1.msra.mxu0 %v2704
      %2749 = vmatprep.subr.mxu0 0.0
      %2750 = vmatpush1.msra.mxu0 %v2703
      %2751 = vmatprep.subr.mxu0 0.0
      %2752 = vmatpush2.msra.mxu0 0.0
      %2753 = vmatprep.subr.mxu0 0.0
      %2754 = vmatpush2.msra.mxu0 0.0
      %2755 = vmatprep.subr.mxu0 0.0
      %2756 = vmatpush2.msra.mxu0 0.0
      %2757 = vmatprep.subr.mxu0 0.0
      %2758 = vmatpush2.msra.mxu0 0.0
      %2759 = vmatprep.subr.mxu0 0.0
      %2760 = vmatpush2.msra.mxu0 0.0
      %2761 = vmatprep.subr.mxu0 0.0
      %2762 = vmatpush2.msra.mxu0 0.0
      %2763 = vmatprep.subr.mxu0 0.0
      %2764 = vmatpush2.msra.mxu0 0.0
      %2765 = vmatprep.subr.mxu0 0.0
      %2766 = vmatpush2.msra.mxu0 0.0
      %2767 = vmatprep.subr.mxu0 0.0
      %2768 = vmatpush2.msra.mxu0 0.0
      %2769 = vmatprep.subr.mxu0 0.0
      %2770 = vmatpush2.msra.mxu0 0.0
      %2771 = vmatprep.subr.mxu0 0.0
      %2772 = vmatpush2.msra.mxu0 0.0
      %2773 = vmatprep.subr.mxu0 0.0
      %2774 = vmatpush2.msra.mxu0 0.0
      %2775 = vmatprep.subr.mxu0 0.0
      %2776 = vmatpush2.msra.mxu0 0.0
      %2777 = vmatprep.subr.mxu0 0.0
      %2778 = vmatpush2.msra.mxu0 0.0
      %2779 = vmatprep.subr.mxu0 0.0
      %2780 = vmatpush2.msra.mxu0 0.0
      %2781 = vmatprep.subr.mxu0 0.0
      %2782 = vmatpush2.msra.mxu0 0.0
      %2783 = vmatprep.mubr.f32.mxu0 0.0
      %2784 = vmatmul.mubr.f32.gmra.mxu0 %v2670
      %v2785 = vpop.f32.mrf.mxu0
      %v2786 = vadd.f32 0.0, %v2785
      %v2787 = vpop.f32.mrf.mxu0
      %2788 = vmatprep.mubr.f32.mxu0 0.0
      %2789 = vmatmul.mubr.f32.gmra.mxu0 %v2671
      %v2790 = vpop.f32.mrf.mxu0
      %v2791 = vadd.f32 0.0, %v2790
      %v2792 = vpop.f32.mrf.mxu0
      %2793 = vmatprep.mubr.f32.mxu0 0.0
      %2794 = vmatmul.mubr.f32.gmra.mxu0 %v2672
      %v2795 = vpop.f32.mrf.mxu0
      %v2796 = vadd.f32 0.0, %v2795
      %v2797 = vpop.f32.mrf.mxu0
      %2798 = vmatprep.mubr.f32.mxu0 0.0
      %2799 = vmatmul.mubr.f32.gmra.mxu0 %v2673
      %v2800 = vpop.f32.mrf.mxu0
      %v2801 = vadd.f32 0.0, %v2800
      %v2802 = vpop.f32.mrf.mxu0
      %2803 = vmatprep.mubr.f32.mxu0 0.0
      %2804 = vmatmul.mubr.f32.gmra.mxu0 %v2674
      %v2805 = vpop.f32.mrf.mxu0
      %v2806 = vadd.f32 0.0, %v2805
      %v2807 = vpop.f32.mrf.mxu0
      %2808 = vmatprep.mubr.f32.mxu0 0.0
      %2809 = vmatmul.mubr.f32.gmra.mxu0 %v2675
      %v2810 = vpop.f32.mrf.mxu0
      %v2811 = vadd.f32 0.0, %v2810
      %v2812 = vpop.f32.mrf.mxu0
      %2813 = vmatprep.mubr.f32.mxu0 0.0
      %2814 = vmatmul.mubr.f32.gmra.mxu0 %v2676
      %v2815 = vpop.f32.mrf.mxu0
      %v2816 = vadd.f32 0.0, %v2815
      %v2817 = vpop.f32.mrf.mxu0
      %2818 = vmatprep.mubr.f32.mxu0 0.0
      %2819 = vmatmul.mubr.f32.gmra.mxu0 %v2677
      %v2820 = vpop.f32.mrf.mxu0
      %v2821 = vadd.f32 0.0, %v2820
      %v2822 = vpop.f32.mrf.mxu0
      %2823 = vmatprep.mubr.f32.mxu0 0.0
      %2824 = vmatmul.mubr.f32.gmra.mxu0 %v2678
      %v2825 = vpop.f32.mrf.mxu0
      %v2826 = vadd.f32 0.0, %v2825
      %v2827 = vpop.f32.mrf.mxu0
      %2828 = vmatprep.mubr.f32.mxu0 0.0
      %2829 = vmatmul.mubr.f32.gmra.mxu0 %v2679
      %v2830 = vpop.f32.mrf.mxu0
      %v2831 = vadd.f32 0.0, %v2830
      %v2832 = vpop.f32.mrf.mxu0
      %2833 = vmatprep.mubr.f32.mxu0 0.0
      %2834 = vmatmul.mubr.f32.gmra.mxu0 %v2680
      %v2835 = vpop.f32.mrf.mxu0
      %v2836 = vadd.f32 0.0, %v2835
      %v2837 = vpop.f32.mrf.mxu0
      %2838 = vmatprep.mubr.f32.mxu0 0.0
      %2839 = vmatmul.mubr.f32.gmra.mxu0 %v2681
      %v2840 = vpop.f32.mrf.mxu0
      %v2841 = vadd.f32 0.0, %v2840
      %v2842 = vpop.f32.mrf.mxu0
      %2843 = vmatprep.mubr.f32.mxu0 0.0
      %2844 = vmatmul.mubr.f32.gmra.mxu0 %v2682
      %v2845 = vpop.f32.mrf.mxu0
      %v2846 = vadd.f32 0.0, %v2845
      %v2847 = vpop.f32.mrf.mxu0
      %2848 = vmatprep.mubr.f32.mxu0 0.0
      %2849 = vmatmul.mubr.f32.gmra.mxu0 %v2683
      %v2850 = vpop.f32.mrf.mxu0
      %v2851 = vadd.f32 0.0, %v2850
      %v2852 = vpop.f32.mrf.mxu0
      %2853 = vmatprep.mubr.f32.mxu0 0.0
      %2854 = vmatmul.mubr.f32.gmra.mxu0 %v2684
      %v2855 = vpop.f32.mrf.mxu0
      %v2856 = vadd.f32 0.0, %v2855
      %v2857 = vpop.f32.mrf.mxu0
      %2858 = vmatprep.mubr.f32.mxu0 0.0
      %2859 = vmatmul.mubr.f32.gmra.mxu0 %v2685
      %v2860 = vpop.f32.mrf.mxu0
      %v2861 = vadd.f32 0.0, %v2860
      %v2862 = vpop.f32.mrf.mxu0
      %2863 = vmatprep.mubr.f32.mxu0 0.0
      %2864 = vmatmul.mubr.f32.gmra.mxu0 %v2686
      %v2865 = vpop.f32.mrf.mxu0
      %v2866 = vadd.f32 0.0, %v2865
      %v2867 = vpop.f32.mrf.mxu0
      %2868 = vmatprep.mubr.f32.mxu0 0.0
      %2869 = vmatmul.mubr.f32.gmra.mxu0 %v2687
      %v2870 = vpop.f32.mrf.mxu0
      %v2871 = vadd.f32 0.0, %v2870
      %v2872 = vpop.f32.mrf.mxu0
      %2873 = vmatprep.mubr.f32.mxu0 0.0
      %2874 = vmatmul.mubr.f32.gmra.mxu0 %v2688
      %v2875 = vpop.f32.mrf.mxu0
      %v2876 = vadd.f32 0.0, %v2875
      %v2877 = vpop.f32.mrf.mxu0
      %2878 = vmatprep.mubr.f32.mxu0 0.0
      %2879 = vmatmul.mubr.f32.gmra.mxu0 %v2689
      %v2880 = vpop.f32.mrf.mxu0
      %v2881 = vadd.f32 0.0, %v2880
      %v2882 = vpop.f32.mrf.mxu0
      %2883 = vmatprep.mubr.f32.mxu0 0.0
      %2884 = vmatmul.mubr.f32.gmra.mxu0 %v2690
      %v2885 = vpop.f32.mrf.mxu0
      %v2886 = vadd.f32 0.0, %v2885
      %v2887 = vpop.f32.mrf.mxu0
      %2888 = vmatprep.mubr.f32.mxu0 0.0
      %2889 = vmatmul.mubr.f32.gmra.mxu0 %v2691
      %v2890 = vpop.f32.mrf.mxu0
      %v2891 = vadd.f32 0.0, %v2890
      %v2892 = vpop.f32.mrf.mxu0
      %2893 = vmatprep.mubr.f32.mxu0 0.0
      %2894 = vmatmul.mubr.f32.gmra.mxu0 %v2692
      %v2895 = vpop.f32.mrf.mxu0
      %v2896 = vadd.f32 0.0, %v2895
      %v2897 = vpop.f32.mrf.mxu0
      %2898 = vmatprep.mubr.f32.mxu0 0.0
      %2899 = vmatmul.mubr.f32.gmra.mxu0 %v2693
      %v2900 = vpop.f32.mrf.mxu0
      %v2901 = vadd.f32 0.0, %v2900
      %v2902 = vpop.f32.mrf.mxu0
      %2903 = vmatprep.mubr.f32.mxu0 0.0
      %2904 = vmatmul.mubr.f32.gmra.mxu0 %v2694
      %v2905 = vpop.f32.mrf.mxu0
      %v2906 = vadd.f32 0.0, %v2905
      %v2907 = vpop.f32.mrf.mxu0
      %2908 = vmatprep.mubr.f32.mxu0 0.0
      %2909 = vmatmul.mubr.f32.gmra.mxu0 %v2695
      %v2910 = vpop.f32.mrf.mxu0
      %v2911 = vadd.f32 0.0, %v2910
      %v2912 = vpop.f32.mrf.mxu0
      %2913 = vmatprep.mubr.f32.mxu0 0.0
      %2914 = vmatmul.mubr.f32.gmra.mxu0 %v2696
      %v2915 = vpop.f32.mrf.mxu0
      %v2916 = vadd.f32 0.0, %v2915
      %v2917 = vpop.f32.mrf.mxu0
      %2918 = vmatprep.mubr.f32.mxu0 0.0
      %2919 = vmatmul.mubr.f32.gmra.mxu0 %v2697
      %v2920 = vpop.f32.mrf.mxu0
      %v2921 = vadd.f32 0.0, %v2920
      %v2922 = vpop.f32.mrf.mxu0
      %2923 = vmatprep.mubr.f32.mxu0 0.0
      %2924 = vmatmul.mubr.f32.gmra.mxu0 %v2698
      %v2925 = vpop.f32.mrf.mxu0
      %v2926 = vadd.f32 0.0, %v2925
      %v2927 = vpop.f32.mrf.mxu0
      %2928 = vmatprep.mubr.f32.mxu0 0.0
      %2929 = vmatmul.mubr.f32.gmra.mxu0 %v2699
      %v2930 = vpop.f32.mrf.mxu0
      %v2931 = vadd.f32 0.0, %v2930
      %v2932 = vpop.f32.mrf.mxu0
      %2933 = vmatprep.mubr.f32.mxu0 0.0
      %2934 = vmatmul.mubr.f32.gmra.mxu0 %v2700
      %v2935 = vpop.f32.mrf.mxu0
      %v2936 = vadd.f32 0.0, %v2935
      %v2937 = vpop.f32.mrf.mxu0
      %2938 = vmatprep.mubr.f32.mxu0 0.0
      %2939 = vmatmul.mubr.f32.gmra.mxu0 %v2701
      %v2940 = vpop.f32.mrf.mxu0
      %v2941 = vadd.f32 0.0, %v2940
      %v2942 = vpop.f32.mrf.mxu0
      %2943 = vdwg.mxu0
      %v2944 = vadd.f32 %v2638, %v2786
      %v2945 = vadd.f32 %v2639, %v2791
      %v2946 = vadd.f32 %v2640, %v2796
      %v2947 = vadd.f32 %v2641, %v2801
      %v2948 = vadd.f32 %v2642, %v2806
      %v2949 = vadd.f32 %v2643, %v2811
      %v2950 = vadd.f32 %v2644, %v2816
      %v2951 = vadd.f32 %v2645, %v2821
      %v2952 = vadd.f32 %v2646, %v2826
      %v2953 = vadd.f32 %v2647, %v2831
      %v2954 = vadd.f32 %v2648, %v2836
      %v2955 = vadd.f32 %v2649, %v2841
      %v2956 = vadd.f32 %v2650, %v2846
      %v2957 = vadd.f32 %v2651, %v2851
      %v2958 = vadd.f32 %v2652, %v2856
      %v2959 = vadd.f32 %v2653, %v2861
      %v2960 = vadd.f32 %v2654, %v2866
      %v2961 = vadd.f32 %v2655, %v2871
      %v2962 = vadd.f32 %v2656, %v2876
      %v2963 = vadd.f32 %v2657, %v2881
      %v2964 = vadd.f32 %v2658, %v2886
      %v2965 = vadd.f32 %v2659, %v2891
      %v2966 = vadd.f32 %v2660, %v2896
      %v2967 = vadd.f32 %v2661, %v2901
      %v2968 = vadd.f32 %v2662, %v2906
      %v2969 = vadd.f32 %v2663, %v2911
      %v2970 = vadd.f32 %v2664, %v2916
      %v2971 = vadd.f32 %v2665, %v2921
      %v2972 = vadd.f32 %v2666, %v2926
      %v2973 = vadd.f32 %v2667, %v2931
      %v2974 = vadd.f32 %v2668, %v2936
      %v2975 = vadd.f32 %v2669, %v2941
      %v2976 = vld [vmem:[%s2363 + $0x2] sm:$0xff]
      %v2977 = vld [vmem:[%s2363 + $0xa] sm:$0xff]
      %v2978 = vld [vmem:[%s2363 + $0x1a] sm:$0xff]
      %v2979 = vld [vmem:[%s2363 + $0x22] sm:$0xff]
      %v2980 = vld [vmem:[%s2363 + $0x32] sm:$0xff]
      %v2981 = vld [vmem:[%s2363 + $0x3a] sm:$0xff]
      %v2982 = vld [vmem:[%s2363 + $0x4a] sm:$0xff]
      %v2983 = vld [vmem:[%s2363 + $0x52] sm:$0xff]
      %v2984 = vld [vmem:[%s2363 + $0x62] sm:$0xff]
      %v2985 = vld [vmem:[%s2363 + $0x6a] sm:$0xff]
      %v2986 = vld [vmem:[%s2363 + $0x7a] sm:$0xff]
      %v2987 = vld [vmem:[%s2363 + $0x82] sm:$0xff]
      %v2988 = vld [vmem:[%s2363 + $0x92] sm:$0xff]
      %v2989 = vld [vmem:[%s2363 + $0x9a] sm:$0xff]
      %v2990 = vld [vmem:[%s2363 + $0xaa] sm:$0xff]
      %v2991 = vld [vmem:[%s2363 + $0xb2] sm:$0xff]
      %v2992 = vld [vmem:[%s2363 + $0xc2] sm:$0xff]
      %v2993 = vld [vmem:[%s2363 + $0xca] sm:$0xff]
      %v2994 = vld [vmem:[%s2363 + $0xda] sm:$0xff]
      %v2995 = vld [vmem:[%s2363 + $0xe2] sm:$0xff]
      %v2996 = vld [vmem:[%s2363 + $0xf2] sm:$0xff]
      %v2997 = vld [vmem:[%s2363 + $0xfa] sm:$0xff]
      %v2998 = vld [vmem:[%s2363 + $0x10a] sm:$0xff]
      %v2999 = vld [vmem:[%s2363 + $0x112] sm:$0xff]
      %v3000 = vld [vmem:[%s2363 + $0x122] sm:$0xff]
      %v3001 = vld [vmem:[%s2363 + $0x12a] sm:$0xff]
      %v3002 = vld [vmem:[%s2363 + $0x13a] sm:$0xff]
      %v3003 = vld [vmem:[%s2363 + $0x142] sm:$0xff]
      %v3004 = vld [vmem:[%s2363 + $0x152] sm:$0xff]
      %v3005 = vld [vmem:[%s2363 + $0x15a] sm:$0xff]
      %v3006 = vld [vmem:[%s2363 + $0x16a] sm:$0xff]
      %v3007 = vld [vmem:[%s2363 + $0x172] sm:$0xff]
      %s3008 = scalar_lea.vmem %s1, 1024
      %v3009 = vld [vmem:[%s3008] sm:$0xff]
      %v3010 = vld [vmem:[%s3008 + $0x8] sm:$0xff]
      %v3011 = vld [vmem:[%s3008 + $0x10] sm:$0xff]
      %v3012 = vld [vmem:[%s3008 + $0x18] sm:$0xff]
      %v3013 = vld [vmem:[%s3008 + $0x20] sm:$0xff]
      %v3014 = vld [vmem:[%s3008 + $0x28] sm:$0xff]
      %v3015 = vld [vmem:[%s3008 + $0x30] sm:$0xff]
      %v3016 = vld [vmem:[%s3008 + $0x38] sm:$0xff]
      %v3017 = vld [vmem:[%s3008 + $0x40] sm:$0xff]
      %v3018 = vld [vmem:[%s3008 + $0x48] sm:$0xff]
      %v3019 = vld [vmem:[%s3008 + $0x50] sm:$0xff]
      %v3020 = vld [vmem:[%s3008 + $0x58] sm:$0xff]
      %v3021 = vld [vmem:[%s3008 + $0x60] sm:$0xff]
      %v3022 = vld [vmem:[%s3008 + $0x68] sm:$0xff]
      %v3023 = vld [vmem:[%s3008 + $0x70] sm:$0xff]
      %v3024 = vld [vmem:[%s3008 + $0x78] sm:$0xff]
      %3025 = vmatprep.subr.mxu0 0.0
      %3026 = vmatpush1.msra.mxu0 %v3024
      %3027 = vmatprep.subr.mxu0 0.0
      %3028 = vmatpush1.msra.mxu0 %v3023
      %3029 = vmatprep.subr.mxu0 0.0
      %3030 = vmatpush1.msra.mxu0 %v3022
      %3031 = vmatprep.subr.mxu0 0.0
      %3032 = vmatpush1.msra.mxu0 %v3021
      %3033 = vmatprep.subr.mxu0 0.0
      %3034 = vmatpush1.msra.mxu0 %v3020
      %3035 = vmatprep.subr.mxu0 0.0
      %3036 = vmatpush1.msra.mxu0 %v3019
      %3037 = vmatprep.subr.mxu0 0.0
      %3038 = vmatpush1.msra.mxu0 %v3018
      %3039 = vmatprep.subr.mxu0 0.0
      %3040 = vmatpush1.msra.mxu0 %v3017
      %3041 = vmatprep.subr.mxu0 0.0
      %3042 = vmatpush1.msra.mxu0 %v3016
      %3043 = vmatprep.subr.mxu0 0.0
      %3044 = vmatpush1.msra.mxu0 %v3015
      %3045 = vmatprep.subr.mxu0 0.0
      %3046 = vmatpush1.msra.mxu0 %v3014
      %3047 = vmatprep.subr.mxu0 0.0
      %3048 = vmatpush1.msra.mxu0 %v3013
      %3049 = vmatprep.subr.mxu0 0.0
      %3050 = vmatpush1.msra.mxu0 %v3012
      %3051 = vmatprep.subr.mxu0 0.0
      %3052 = vmatpush1.msra.mxu0 %v3011
      %3053 = vmatprep.subr.mxu0 0.0
      %3054 = vmatpush1.msra.mxu0 %v3010
      %3055 = vmatprep.subr.mxu0 0.0
      %3056 = vmatpush1.msra.mxu0 %v3009
      %3057 = vmatprep.subr.mxu0 0.0
      %3058 = vmatpush2.msra.mxu0 0.0
      %3059 = vmatprep.subr.mxu0 0.0
      %3060 = vmatpush2.msra.mxu0 0.0
      %3061 = vmatprep.subr.mxu0 0.0
      %3062 = vmatpush2.msra.mxu0 0.0
      %3063 = vmatprep.subr.mxu0 0.0
      %3064 = vmatpush2.msra.mxu0 0.0
      %3065 = vmatprep.subr.mxu0 0.0
      %3066 = vmatpush2.msra.mxu0 0.0
      %3067 = vmatprep.subr.mxu0 0.0
      %3068 = vmatpush2.msra.mxu0 0.0
      %3069 = vmatprep.subr.mxu0 0.0
      %3070 = vmatpush2.msra.mxu0 0.0
      %3071 = vmatprep.subr.mxu0 0.0
      %3072 = vmatpush2.msra.mxu0 0.0
      %3073 = vmatprep.subr.mxu0 0.0
      %3074 = vmatpush2.msra.mxu0 0.0
      %3075 = vmatprep.subr.mxu0 0.0
      %3076 = vmatpush2.msra.mxu0 0.0
      %3077 = vmatprep.subr.mxu0 0.0
      %3078 = vmatpush2.msra.mxu0 0.0
      %3079 = vmatprep.subr.mxu0 0.0
      %3080 = vmatpush2.msra.mxu0 0.0
      %3081 = vmatprep.subr.mxu0 0.0
      %3082 = vmatpush2.msra.mxu0 0.0
      %3083 = vmatprep.subr.mxu0 0.0
      %3084 = vmatpush2.msra.mxu0 0.0
      %3085 = vmatprep.subr.mxu0 0.0
      %3086 = vmatpush2.msra.mxu0 0.0
      %3087 = vmatprep.subr.mxu0 0.0
      %3088 = vmatpush2.msra.mxu0 0.0
      %3089 = vmatprep.mubr.f32.mxu0 0.0
      %3090 = vmatmul.mubr.f32.gmra.mxu0 %v2976
      %v3091 = vpop.f32.mrf.mxu0
      %v3092 = vadd.f32 0.0, %v3091
      %v3093 = vpop.f32.mrf.mxu0
      %3094 = vmatprep.mubr.f32.mxu0 0.0
      %3095 = vmatmul.mubr.f32.gmra.mxu0 %v2977
      %v3096 = vpop.f32.mrf.mxu0
      %v3097 = vadd.f32 0.0, %v3096
      %v3098 = vpop.f32.mrf.mxu0
      %3099 = vmatprep.mubr.f32.mxu0 0.0
      %3100 = vmatmul.mubr.f32.gmra.mxu0 %v2978
      %v3101 = vpop.f32.mrf.mxu0
      %v3102 = vadd.f32 0.0, %v3101
      %v3103 = vpop.f32.mrf.mxu0
      %3104 = vmatprep.mubr.f32.mxu0 0.0
      %3105 = vmatmul.mubr.f32.gmra.mxu0 %v2979
      %v3106 = vpop.f32.mrf.mxu0
      %v3107 = vadd.f32 0.0, %v3106
      %v3108 = vpop.f32.mrf.mxu0
      %3109 = vmatprep.mubr.f32.mxu0 0.0
      %3110 = vmatmul.mubr.f32.gmra.mxu0 %v2980
      %v3111 = vpop.f32.mrf.mxu0
      %v3112 = vadd.f32 0.0, %v3111
      %v3113 = vpop.f32.mrf.mxu0
      %3114 = vmatprep.mubr.f32.mxu0 0.0
      %3115 = vmatmul.mubr.f32.gmra.mxu0 %v2981
      %v3116 = vpop.f32.mrf.mxu0
      %v3117 = vadd.f32 0.0, %v3116
      %v3118 = vpop.f32.mrf.mxu0
      %3119 = vmatprep.mubr.f32.mxu0 0.0
      %3120 = vmatmul.mubr.f32.gmra.mxu0 %v2982
      %v3121 = vpop.f32.mrf.mxu0
      %v3122 = vadd.f32 0.0, %v3121
      %v3123 = vpop.f32.mrf.mxu0
      %3124 = vmatprep.mubr.f32.mxu0 0.0
      %3125 = vmatmul.mubr.f32.gmra.mxu0 %v2983
      %v3126 = vpop.f32.mrf.mxu0
      %v3127 = vadd.f32 0.0, %v3126
      %v3128 = vpop.f32.mrf.mxu0
      %3129 = vmatprep.mubr.f32.mxu0 0.0
      %3130 = vmatmul.mubr.f32.gmra.mxu0 %v2984
      %v3131 = vpop.f32.mrf.mxu0
      %v3132 = vadd.f32 0.0, %v3131
      %v3133 = vpop.f32.mrf.mxu0
      %3134 = vmatprep.mubr.f32.mxu0 0.0
      %3135 = vmatmul.mubr.f32.gmra.mxu0 %v2985
      %v3136 = vpop.f32.mrf.mxu0
      %v3137 = vadd.f32 0.0, %v3136
      %v3138 = vpop.f32.mrf.mxu0
      %3139 = vmatprep.mubr.f32.mxu0 0.0
      %3140 = vmatmul.mubr.f32.gmra.mxu0 %v2986
      %v3141 = vpop.f32.mrf.mxu0
      %v3142 = vadd.f32 0.0, %v3141
      %v3143 = vpop.f32.mrf.mxu0
      %3144 = vmatprep.mubr.f32.mxu0 0.0
      %3145 = vmatmul.mubr.f32.gmra.mxu0 %v2987
      %v3146 = vpop.f32.mrf.mxu0
      %v3147 = vadd.f32 0.0, %v3146
      %v3148 = vpop.f32.mrf.mxu0
      %3149 = vmatprep.mubr.f32.mxu0 0.0
      %3150 = vmatmul.mubr.f32.gmra.mxu0 %v2988
      %v3151 = vpop.f32.mrf.mxu0
      %v3152 = vadd.f32 0.0, %v3151
      %v3153 = vpop.f32.mrf.mxu0
      %3154 = vmatprep.mubr.f32.mxu0 0.0
      %3155 = vmatmul.mubr.f32.gmra.mxu0 %v2989
      %v3156 = vpop.f32.mrf.mxu0
      %v3157 = vadd.f32 0.0, %v3156
      %v3158 = vpop.f32.mrf.mxu0
      %3159 = vmatprep.mubr.f32.mxu0 0.0
      %3160 = vmatmul.mubr.f32.gmra.mxu0 %v2990
      %v3161 = vpop.f32.mrf.mxu0
      %v3162 = vadd.f32 0.0, %v3161
      %v3163 = vpop.f32.mrf.mxu0
      %3164 = vmatprep.mubr.f32.mxu0 0.0
      %3165 = vmatmul.mubr.f32.gmra.mxu0 %v2991
      %v3166 = vpop.f32.mrf.mxu0
      %v3167 = vadd.f32 0.0, %v3166
      %v3168 = vpop.f32.mrf.mxu0
      %3169 = vmatprep.mubr.f32.mxu0 0.0
      %3170 = vmatmul.mubr.f32.gmra.mxu0 %v2992
      %v3171 = vpop.f32.mrf.mxu0
      %v3172 = vadd.f32 0.0, %v3171
      %v3173 = vpop.f32.mrf.mxu0
      %3174 = vmatprep.mubr.f32.mxu0 0.0
      %3175 = vmatmul.mubr.f32.gmra.mxu0 %v2993
      %v3176 = vpop.f32.mrf.mxu0
      %v3177 = vadd.f32 0.0, %v3176
      %v3178 = vpop.f32.mrf.mxu0
      %3179 = vmatprep.mubr.f32.mxu0 0.0
      %3180 = vmatmul.mubr.f32.gmra.mxu0 %v2994
      %v3181 = vpop.f32.mrf.mxu0
      %v3182 = vadd.f32 0.0, %v3181
      %v3183 = vpop.f32.mrf.mxu0
      %3184 = vmatprep.mubr.f32.mxu0 0.0
      %3185 = vmatmul.mubr.f32.gmra.mxu0 %v2995
      %v3186 = vpop.f32.mrf.mxu0
      %v3187 = vadd.f32 0.0, %v3186
      %v3188 = vpop.f32.mrf.mxu0
      %3189 = vmatprep.mubr.f32.mxu0 0.0
      %3190 = vmatmul.mubr.f32.gmra.mxu0 %v2996
      %v3191 = vpop.f32.mrf.mxu0
      %v3192 = vadd.f32 0.0, %v3191
      %v3193 = vpop.f32.mrf.mxu0
      %3194 = vmatprep.mubr.f32.mxu0 0.0
      %3195 = vmatmul.mubr.f32.gmra.mxu0 %v2997
      %v3196 = vpop.f32.mrf.mxu0
      %v3197 = vadd.f32 0.0, %v3196
      %v3198 = vpop.f32.mrf.mxu0
      %3199 = vmatprep.mubr.f32.mxu0 0.0
      %3200 = vmatmul.mubr.f32.gmra.mxu0 %v2998
      %v3201 = vpop.f32.mrf.mxu0
      %v3202 = vadd.f32 0.0, %v3201
      %v3203 = vpop.f32.mrf.mxu0
      %3204 = vmatprep.mubr.f32.mxu0 0.0
      %3205 = vmatmul.mubr.f32.gmra.mxu0 %v2999
      %v3206 = vpop.f32.mrf.mxu0
      %v3207 = vadd.f32 0.0, %v3206
      %v3208 = vpop.f32.mrf.mxu0
      %3209 = vmatprep.mubr.f32.mxu0 0.0
      %3210 = vmatmul.mubr.f32.gmra.mxu0 %v3000
      %v3211 = vpop.f32.mrf.mxu0
      %v3212 = vadd.f32 0.0, %v3211
      %v3213 = vpop.f32.mrf.mxu0
      %3214 = vmatprep.mubr.f32.mxu0 0.0
      %3215 = vmatmul.mubr.f32.gmra.mxu0 %v3001
      %v3216 = vpop.f32.mrf.mxu0
      %v3217 = vadd.f32 0.0, %v3216
      %v3218 = vpop.f32.mrf.mxu0
      %3219 = vmatprep.mubr.f32.mxu0 0.0
      %3220 = vmatmul.mubr.f32.gmra.mxu0 %v3002
      %v3221 = vpop.f32.mrf.mxu0
      %v3222 = vadd.f32 0.0, %v3221
      %v3223 = vpop.f32.mrf.mxu0
      %3224 = vmatprep.mubr.f32.mxu0 0.0
      %3225 = vmatmul.mubr.f32.gmra.mxu0 %v3003
      %v3226 = vpop.f32.mrf.mxu0
      %v3227 = vadd.f32 0.0, %v3226
      %v3228 = vpop.f32.mrf.mxu0
      %3229 = vmatprep.mubr.f32.mxu0 0.0
      %3230 = vmatmul.mubr.f32.gmra.mxu0 %v3004
      %v3231 = vpop.f32.mrf.mxu0
      %v3232 = vadd.f32 0.0, %v3231
      %v3233 = vpop.f32.mrf.mxu0
      %3234 = vmatprep.mubr.f32.mxu0 0.0
      %3235 = vmatmul.mubr.f32.gmra.mxu0 %v3005
      %v3236 = vpop.f32.mrf.mxu0
      %v3237 = vadd.f32 0.0, %v3236
      %v3238 = vpop.f32.mrf.mxu0
      %3239 = vmatprep.mubr.f32.mxu0 0.0
      %3240 = vmatmul.mubr.f32.gmra.mxu0 %v3006
      %v3241 = vpop.f32.mrf.mxu0
      %v3242 = vadd.f32 0.0, %v3241
      %v3243 = vpop.f32.mrf.mxu0
      %3244 = vmatprep.mubr.f32.mxu0 0.0
      %3245 = vmatmul.mubr.f32.gmra.mxu0 %v3007
      %v3246 = vpop.f32.mrf.mxu0
      %v3247 = vadd.f32 0.0, %v3246
      %v3248 = vpop.f32.mrf.mxu0
      %3249 = vdwg.mxu0
      %v3250 = vadd.f32 %v2944, %v3092
      %v3251 = vadd.f32 %v2945, %v3097
      %v3252 = vadd.f32 %v2946, %v3102
      %v3253 = vadd.f32 %v2947, %v3107
      %v3254 = vadd.f32 %v2948, %v3112
      %v3255 = vadd.f32 %v2949, %v3117
      %v3256 = vadd.f32 %v2950, %v3122
      %v3257 = vadd.f32 %v2951, %v3127
      %v3258 = vadd.f32 %v2952, %v3132
      %v3259 = vadd.f32 %v2953, %v3137
      %v3260 = vadd.f32 %v2954, %v3142
      %v3261 = vadd.f32 %v2955, %v3147
      %v3262 = vadd.f32 %v2956, %v3152
      %v3263 = vadd.f32 %v2957, %v3157
      %v3264 = vadd.f32 %v2958, %v3162
      %v3265 = vadd.f32 %v2959, %v3167
      %v3266 = vadd.f32 %v2960, %v3172
      %v3267 = vadd.f32 %v2961, %v3177
      %v3268 = vadd.f32 %v2962, %v3182
      %v3269 = vadd.f32 %v2963, %v3187
      %v3270 = vadd.f32 %v2964, %v3192
      %v3271 = vadd.f32 %v2965, %v3197
      %v3272 = vadd.f32 %v2966, %v3202
      %v3273 = vadd.f32 %v2967, %v3207
      %v3274 = vadd.f32 %v2968, %v3212
      %v3275 = vadd.f32 %v2969, %v3217
      %v3276 = vadd.f32 %v2970, %v3222
      %v3277 = vadd.f32 %v2971, %v3227
      %v3278 = vadd.f32 %v2972, %v3232
      %v3279 = vadd.f32 %v2973, %v3237
      %v3280 = vadd.f32 %v2974, %v3242
      %v3281 = vadd.f32 %v2975, %v3247
      %3282 = vst [vmem:[#allocation3] sm:$0xff] %v3250
      %3283 = vst [vmem:[#allocation3 + $0x8] sm:$0xff] %v3251
      %3284 = vst [vmem:[#allocation3 + $0x10] sm:$0xff] %v3252
      %3285 = vst [vmem:[#allocation3 + $0x18] sm:$0xff] %v3253
      %3286 = vst [vmem:[#allocation3 + $0x20] sm:$0xff] %v3254
      %3287 = vst [vmem:[#allocation3 + $0x28] sm:$0xff] %v3255
      %3288 = vst [vmem:[#allocation3 + $0x30] sm:$0xff] %v3256
      %3289 = vst [vmem:[#allocation3 + $0x38] sm:$0xff] %v3257
      %3290 = vst [vmem:[#allocation3 + $0x40] sm:$0xff] %v3258
      %3291 = vst [vmem:[#allocation3 + $0x48] sm:$0xff] %v3259
      %3292 = vst [vmem:[#allocation3 + $0x50] sm:$0xff] %v3260
      %3293 = vst [vmem:[#allocation3 + $0x58] sm:$0xff] %v3261
      %3294 = vst [vmem:[#allocation3 + $0x60] sm:$0xff] %v3262
      %3295 = vst [vmem:[#allocation3 + $0x68] sm:$0xff] %v3263
      %3296 = vst [vmem:[#allocation3 + $0x70] sm:$0xff] %v3264
      %3297 = vst [vmem:[#allocation3 + $0x78] sm:$0xff] %v3265
      %3298 = vst [vmem:[#allocation3 + $0x80] sm:$0xff] %v3266
      %3299 = vst [vmem:[#allocation3 + $0x88] sm:$0xff] %v3267
      %3300 = vst [vmem:[#allocation3 + $0x90] sm:$0xff] %v3268
      %3301 = vst [vmem:[#allocation3 + $0x98] sm:$0xff] %v3269
      %3302 = vst [vmem:[#allocation3 + $0xa0] sm:$0xff] %v3270
      %3303 = vst [vmem:[#allocation3 + $0xa8] sm:$0xff] %v3271
      %3304 = vst [vmem:[#allocation3 + $0xb0] sm:$0xff] %v3272
      %3305 = vst [vmem:[#allocation3 + $0xb8] sm:$0xff] %v3273
      %3306 = vst [vmem:[#allocation3 + $0xc0] sm:$0xff] %v3274
      %3307 = vst [vmem:[#allocation3 + $0xc8] sm:$0xff] %v3275
      %3308 = vst [vmem:[#allocation3 + $0xd0] sm:$0xff] %v3276
      %3309 = vst [vmem:[#allocation3 + $0xd8] sm:$0xff] %v3277
      %3310 = vst [vmem:[#allocation3 + $0xe0] sm:$0xff] %v3278
      %3311 = vst [vmem:[#allocation3 + $0xe8] sm:$0xff] %v3279
      %3312 = vst [vmem:[#allocation3 + $0xf0] sm:$0xff] %v3280
      %3313 = vst [vmem:[#allocation3 + $0xf8] sm:$0xff] %v3281
      %v3314 = vld [vmem:[%s2] sm:$0x1]
      %v3315 = vld [vmem:[%s3] sm:$0x1]
      %v3316 = vld [vmem:[#allocation3] sm:$0xff]
      %v3317 = vld [vmem:[#allocation3 + $0x8] sm:$0xff]
      %v3318 = vld [vmem:[#allocation3 + $0x10] sm:$0xff]
      %v3319 = vld [vmem:[#allocation3 + $0x18] sm:$0xff]
      %v3320 = vld [vmem:[#allocation3 + $0x20] sm:$0xff]
      %v3321 = vld [vmem:[#allocation3 + $0x28] sm:$0xff]
      %v3322 = vld [vmem:[#allocation3 + $0x30] sm:$0xff]
      %v3323 = vld [vmem:[#allocation3 + $0x38] sm:$0xff]
      %v3324 = vld [vmem:[#allocation3 + $0x40] sm:$0xff]
      %v3325 = vld [vmem:[#allocation3 + $0x48] sm:$0xff]
      %v3326 = vld [vmem:[#allocation3 + $0x50] sm:$0xff]
      %v3327 = vld [vmem:[#allocation3 + $0x58] sm:$0xff]
      %v3328 = vld [vmem:[#allocation3 + $0x60] sm:$0xff]
      %v3329 = vld [vmem:[#allocation3 + $0x68] sm:$0xff]
      %v3330 = vld [vmem:[#allocation3 + $0x70] sm:$0xff]
      %v3331 = vld [vmem:[#allocation3 + $0x78] sm:$0xff]
      %v3332 = vld [vmem:[#allocation3 + $0x80] sm:$0xff]
      %v3333 = vld [vmem:[#allocation3 + $0x88] sm:$0xff]
      %v3334 = vld [vmem:[#allocation3 + $0x90] sm:$0xff]
      %v3335 = vld [vmem:[#allocation3 + $0x98] sm:$0xff]
      %v3336 = vld [vmem:[#allocation3 + $0xa0] sm:$0xff]
      %v3337 = vld [vmem:[#allocation3 + $0xa8] sm:$0xff]
      %v3338 = vld [vmem:[#allocation3 + $0xb0] sm:$0xff]
      %v3339 = vld [vmem:[#allocation3 + $0xb8] sm:$0xff]
      %v3340 = vld [vmem:[#allocation3 + $0xc0] sm:$0xff]
      %v3341 = vld [vmem:[#allocation3 + $0xc8] sm:$0xff]
      %v3342 = vld [vmem:[#allocation3 + $0xd0] sm:$0xff]
      %v3343 = vld [vmem:[#allocation3 + $0xd8] sm:$0xff]
      %v3344 = vld [vmem:[#allocation3 + $0xe0] sm:$0xff]
      %v3345 = vld [vmem:[#allocation3 + $0xe8] sm:$0xff]
      %v3346 = vld [vmem:[#allocation3 + $0xf0] sm:$0xff]
      %v3347 = vld [vmem:[#allocation3 + $0xf8] sm:$0xff]
      %v3348 = vadd.f32 %v3316, %v3317
      %v3349 = vadd.f32 %v3348, %v3318
      %v3350 = vadd.f32 %v3349, %v3319
      %v3351 = vadd.f32 %v3350, %v3320
      %v3352 = vadd.f32 %v3351, %v3321
      %v3353 = vadd.f32 %v3352, %v3322
      %v3354 = vadd.f32 %v3353, %v3323
      %v3355 = vadd.f32 %v3354, %v3324
      %v3356 = vadd.f32 %v3355, %v3325
      %v3357 = vadd.f32 %v3356, %v3326
      %v3358 = vadd.f32 %v3357, %v3327
      %v3359 = vadd.f32 %v3358, %v3328
      %v3360 = vadd.f32 %v3359, %v3329
      %v3361 = vadd.f32 %v3360, %v3330
      %v3362 = vadd.f32 %v3361, %v3331
      %v3363 = vadd.f32 %v3362, %v3332
      %v3364 = vadd.f32 %v3363, %v3333
      %v3365 = vadd.f32 %v3364, %v3334
      %v3366 = vadd.f32 %v3365, %v3335
      %v3367 = vadd.f32 %v3366, %v3336
      %v3368 = vadd.f32 %v3367, %v3337
      %v3369 = vadd.f32 %v3368, %v3338
      %v3370 = vadd.f32 %v3369, %v3339
      %v3371 = vadd.f32 %v3370, %v3340
      %v3372 = vadd.f32 %v3371, %v3341
      %v3373 = vadd.f32 %v3372, %v3342
      %v3374 = vadd.f32 %v3373, %v3343
      %v3375 = vadd.f32 %v3374, %v3344
      %v3376 = vadd.f32 %v3375, %v3345
      %v3377 = vadd.f32 %v3376, %v3346
      %v3378 = vadd.f32 %v3377, %v3347
      %v3379 = vrot.slane %v3378, 4
      %v3380 = vadd.f32 %v3378, %v3379
      %v3381 = vrot.slane %v3380, 2
      %v3382 = vadd.f32 %v3380, %v3381
      %v3383 = vrot.slane %v3382, 1
      %v3384 = vadd.f32 %v3382, %v3383
      %v3385 = vmul.f32 %v3384, 0.00390625
      %v3386 = vsub.f32 %v3316, %v3385
      %v3387 = vsub.f32 %v3317, %v3385
      %v3388 = vsub.f32 %v3318, %v3385
      %v3389 = vsub.f32 %v3319, %v3385
      %v3390 = vsub.f32 %v3320, %v3385
      %v3391 = vsub.f32 %v3321, %v3385
      %v3392 = vsub.f32 %v3322, %v3385
      %v3393 = vsub.f32 %v3323, %v3385
      %v3394 = vsub.f32 %v3324, %v3385
      %v3395 = vsub.f32 %v3325, %v3385
      %v3396 = vsub.f32 %v3326, %v3385
      %v3397 = vsub.f32 %v3327, %v3385
      %v3398 = vsub.f32 %v3328, %v3385
      %v3399 = vsub.f32 %v3329, %v3385
      %v3400 = vsub.f32 %v3330, %v3385
      %v3401 = vsub.f32 %v3331, %v3385
      %v3402 = vsub.f32 %v3332, %v3385
      %v3403 = vsub.f32 %v3333, %v3385
      %v3404 = vsub.f32 %v3334, %v3385
      %v3405 = vsub.f32 %v3335, %v3385
      %v3406 = vsub.f32 %v3336, %v3385
      %v3407 = vsub.f32 %v3337, %v3385
      %v3408 = vsub.f32 %v3338, %v3385
      %v3409 = vsub.f32 %v3339, %v3385
      %v3410 = vsub.f32 %v3340, %v3385
      %v3411 = vsub.f32 %v3341, %v3385
      %v3412 = vsub.f32 %v3342, %v3385
      %v3413 = vsub.f32 %v3343, %v3385
      %v3414 = vsub.f32 %v3344, %v3385
      %v3415 = vsub.f32 %v3345, %v3385
      %v3416 = vsub.f32 %v3346, %v3385
      %v3417 = vsub.f32 %v3347, %v3385
      %v3418 = vmul.f32 %v3386, %v3386
      %v3419 = vmul.f32 %v3387, %v3387
      %v3420 = vmul.f32 %v3388, %v3388
      %v3421 = vmul.f32 %v3389, %v3389
      %v3422 = vmul.f32 %v3390, %v3390
      %v3423 = vmul.f32 %v3391, %v3391
      %v3424 = vmul.f32 %v3392, %v3392
      %v3425 = vmul.f32 %v3393, %v3393
      %v3426 = vmul.f32 %v3394, %v3394
      %v3427 = vmul.f32 %v3395, %v3395
      %v3428 = vmul.f32 %v3396, %v3396
      %v3429 = vmul.f32 %v3397, %v3397
      %v3430 = vmul.f32 %v3398, %v3398
      %v3431 = vmul.f32 %v3399, %v3399
      %v3432 = vmul.f32 %v3400, %v3400
      %v3433 = vmul.f32 %v3401, %v3401
      %v3434 = vmul.f32 %v3402, %v3402
      %v3435 = vmul.f32 %v3403, %v3403
      %v3436 = vmul.f32 %v3404, %v3404
      %v3437 = vmul.f32 %v3405, %v3405
      %v3438 = vmul.f32 %v3406, %v3406
      %v3439 = vmul.f32 %v3407, %v3407
      %v3440 = vmul.f32 %v3408, %v3408
      %v3441 = vmul.f32 %v3409, %v3409
      %v3442 = vmul.f32 %v3410, %v3410
      %v3443 = vmul.f32 %v3411, %v3411
      %v3444 = vmul.f32 %v3412, %v3412
      %v3445 = vmul.f32 %v3413, %v3413
      %v3446 = vmul.f32 %v3414, %v3414
      %v3447 = vmul.f32 %v3415, %v3415
      %v3448 = vmul.f32 %v3416, %v3416
      %v3449 = vmul.f32 %v3417, %v3417
      %v3450 = vadd.f32 %v3418, %v3419
      %v3451 = vadd.f32 %v3450, %v3420
      %v3452 = vadd.f32 %v3451, %v3421
      %v3453 = vadd.f32 %v3452, %v3422
      %v3454 = vadd.f32 %v3453, %v3423
      %v3455 = vadd.f32 %v3454, %v3424
      %v3456 = vadd.f32 %v3455, %v3425
      %v3457 = vadd.f32 %v3456, %v3426
      %v3458 = vadd.f32 %v3457, %v3427
      %v3459 = vadd.f32 %v3458, %v3428
      %v3460 = vadd.f32 %v3459, %v3429
      %v3461 = vadd.f32 %v3460, %v3430
      %v3462 = vadd.f32 %v3461, %v3431
      %v3463 = vadd.f32 %v3462, %v3432
      %v3464 = vadd.f32 %v3463, %v3433
      %v3465 = vadd.f32 %v3464, %v3434
      %v3466 = vadd.f32 %v3465, %v3435
      %v3467 = vadd.f32 %v3466, %v3436
      %v3468 = vadd.f32 %v3467, %v3437
      %v3469 = vadd.f32 %v3468, %v3438
      %v3470 = vadd.f32 %v3469, %v3439
      %v3471 = vadd.f32 %v3470, %v3440
      %v3472 = vadd.f32 %v3471, %v3441
      %v3473 = vadd.f32 %v3472, %v3442
      %v3474 = vadd.f32 %v3473, %v3443
      %v3475 = vadd.f32 %v3474, %v3444
      %v3476 = vadd.f32 %v3475, %v3445
      %v3477 = vadd.f32 %v3476, %v3446
      %v3478 = vadd.f32 %v3477, %v3447
      %v3479 = vadd.f32 %v3478, %v3448
      %v3480 = vadd.f32 %v3479, %v3449
      %v3481 = vrot.slane %v3480, 4
      %v3482 = vadd.f32 %v3480, %v3481
      %v3483 = vrot.slane %v3482, 2
      %v3484 = vadd.f32 %v3482, %v3483
      %v3485 = vrot.slane %v3484, 1
      %v3486 = vadd.f32 %v3484, %v3485
      %v3487 = vmul.f32 %v3486, 0.00390625
      %v3488 = vadd.f32 %v3487, 1e-05
      %v3489 = vrsqrt.pop %v3488
      %v3490 = vmul.f32 %v3314, %v3489
      %v3491 = vmul.f32 %v3385, %v3490
      %v3492 = vsub.f32 %v3315, %v3491
      %v3494 = vlaneseq
      %v3495 = vshrl.u32 %v3494, 7
      %v3496 = vsub.s32 0, %v3495
      %v3497 = vrot.slane %v3490, %v3496
      %v3499 = vmul.f32 %v3316, %v3497
      %v3500 = vmul.f32 %v3317, %v3497
      %v3501 = vmul.f32 %v3318, %v3497
      %v3502 = vmul.f32 %v3319, %v3497
      %v3503 = vmul.f32 %v3320, %v3497
      %v3504 = vmul.f32 %v3321, %v3497
      %v3505 = vmul.f32 %v3322, %v3497
      %v3506 = vmul.f32 %v3323, %v3497
      %v3507 = vmul.f32 %v3324, %v3497
      %v3508 = vmul.f32 %v3325, %v3497
      %v3509 = vmul.f32 %v3326, %v3497
      %v3510 = vmul.f32 %v3327, %v3497
      %v3511 = vmul.f32 %v3328, %v3497
      %v3512 = vmul.f32 %v3329, %v3497
      %v3513 = vmul.f32 %v3330, %v3497
      %v3514 = vmul.f32 %v3331, %v3497
      %v3515 = vmul.f32 %v3332, %v3497
      %v3516 = vmul.f32 %v3333, %v3497
      %v3517 = vmul.f32 %v3334, %v3497
      %v3518 = vmul.f32 %v3335, %v3497
      %v3519 = vmul.f32 %v3336, %v3497
      %v3520 = vmul.f32 %v3337, %v3497
      %v3521 = vmul.f32 %v3338, %v3497
      %v3522 = vmul.f32 %v3339, %v3497
      %v3523 = vmul.f32 %v3340, %v3497
      %v3524 = vmul.f32 %v3341, %v3497
      %v3525 = vmul.f32 %v3342, %v3497
      %v3526 = vmul.f32 %v3343, %v3497
      %v3527 = vmul.f32 %v3344, %v3497
      %v3528 = vmul.f32 %v3345, %v3497
      %v3529 = vmul.f32 %v3346, %v3497
      %v3530 = vmul.f32 %v3347, %v3497
      %v3532 = vlaneseq
      %v3533 = vshrl.u32 %v3532, 7
      %v3534 = vsub.s32 0, %v3533
      %v3535 = vrot.slane %v3492, %v3534
      %v3537 = vadd.f32 %v3499, %v3535
      %v3538 = vadd.f32 %v3500, %v3535
      %v3539 = vadd.f32 %v3501, %v3535
      %v3540 = vadd.f32 %v3502, %v3535
      %v3541 = vadd.f32 %v3503, %v3535
      %v3542 = vadd.f32 %v3504, %v3535
      %v3543 = vadd.f32 %v3505, %v3535
      %v3544 = vadd.f32 %v3506, %v3535
      %v3545 = vadd.f32 %v3507, %v3535
      %v3546 = vadd.f32 %v3508, %v3535
      %v3547 = vadd.f32 %v3509, %v3535
      %v3548 = vadd.f32 %v3510, %v3535
      %v3549 = vadd.f32 %v3511, %v3535
      %v3550 = vadd.f32 %v3512, %v3535
      %v3551 = vadd.f32 %v3513, %v3535
      %v3552 = vadd.f32 %v3514, %v3535
      %v3553 = vadd.f32 %v3515, %v3535
      %v3554 = vadd.f32 %v3516, %v3535
      %v3555 = vadd.f32 %v3517, %v3535
      %v3556 = vadd.f32 %v3518, %v3535
      %v3557 = vadd.f32 %v3519, %v3535
      %v3558 = vadd.f32 %v3520, %v3535
      %v3559 = vadd.f32 %v3521, %v3535
      %v3560 = vadd.f32 %v3522, %v3535
      %v3561 = vadd.f32 %v3523, %v3535
      %v3562 = vadd.f32 %v3524, %v3535
      %v3563 = vadd.f32 %v3525, %v3535
      %v3564 = vadd.f32 %v3526, %v3535
      %v3565 = vadd.f32 %v3527, %v3535
      %v3566 = vadd.f32 %v3528, %v3535
      %v3567 = vadd.f32 %v3529, %v3535
      %v3568 = vadd.f32 %v3530, %v3535
      %v3569 = vmax.f32 %v3537, 0.0
      %v3570 = vmax.f32 %v3538, 0.0
      %v3571 = vmax.f32 %v3539, 0.0
      %v3572 = vmax.f32 %v3540, 0.0
      %v3573 = vmax.f32 %v3541, 0.0
      %v3574 = vmax.f32 %v3542, 0.0
      %v3575 = vmax.f32 %v3543, 0.0
      %v3576 = vmax.f32 %v3544, 0.0
      %v3577 = vmax.f32 %v3545, 0.0
      %v3578 = vmax.f32 %v3546, 0.0
      %v3579 = vmax.f32 %v3547, 0.0
      %v3580 = vmax.f32 %v3548, 0.0
      %v3581 = vmax.f32 %v3549, 0.0
      %v3582 = vmax.f32 %v3550, 0.0
      %v3583 = vmax.f32 %v3551, 0.0
      %v3584 = vmax.f32 %v3552, 0.0
      %v3585 = vmax.f32 %v3553, 0.0
      %v3586 = vmax.f32 %v3554, 0.0
      %v3587 = vmax.f32 %v3555, 0.0
      %v3588 = vmax.f32 %v3556, 0.0
      %v3589 = vmax.f32 %v3557, 0.0
      %v3590 = vmax.f32 %v3558, 0.0
      %v3591 = vmax.f32 %v3559, 0.0
      %v3592 = vmax.f32 %v3560, 0.0
      %v3593 = vmax.f32 %v3561, 0.0
      %v3594 = vmax.f32 %v3562, 0.0
      %v3595 = vmax.f32 %v3563, 0.0
      %v3596 = vmax.f32 %v3564, 0.0
      %v3597 = vmax.f32 %v3565, 0.0
      %v3598 = vmax.f32 %v3566, 0.0
      %v3599 = vmax.f32 %v3567, 0.0
      %v3600 = vmax.f32 %v3568, 0.0
      %v3617 = vrot.slane %v3569, 1
      %v3618 = vrot.slane %v3571, 1
      %v3619 = vrot.slane %v3573, 1
      %v3620 = vrot.slane %v3575, 1
      %v3621 = vrot.slane %v3577, 1
      %v3622 = vrot.slane %v3579, 1
      %v3623 = vrot.slane %v3581, 1
      %v3624 = vrot.slane %v3583, 1
      %v3625 = vrot.slane %v3585, 1
      %v3626 = vrot.slane %v3587, 1
      %v3627 = vrot.slane %v3589, 1
      %v3628 = vrot.slane %v3591, 1
      %v3629 = vrot.slane %v3593, 1
      %v3630 = vrot.slane %v3595, 1
      %v3631 = vrot.slane %v3597, 1
      %v3632 = vrot.slane %v3599, 1
      %v3665 = vrot.slane %v3569, 7
      %v3666 = vrot.slane %v3570, 7
      %v3667 = vsel %vm375, %v3665, %v3666
      %v3668 = vrot.slane %v3571, 7
      %v3669 = vrot.slane %v3572, 7
      %v3670 = vsel %vm375, %v3668, %v3669
      %v3671 = vrot.slane %v3573, 7
      %v3672 = vrot.slane %v3574, 7
      %v3673 = vsel %vm375, %v3671, %v3672
      %v3674 = vrot.slane %v3575, 7
      %v3675 = vrot.slane %v3576, 7
      %v3676 = vsel %vm375, %v3674, %v3675
      %v3677 = vrot.slane %v3577, 7
      %v3678 = vrot.slane %v3578, 7
      %v3679 = vsel %vm375, %v3677, %v3678
      %v3680 = vrot.slane %v3579, 7
      %v3681 = vrot.slane %v3580, 7
      %v3682 = vsel %vm375, %v3680, %v3681
      %v3683 = vrot.slane %v3581, 7
      %v3684 = vrot.slane %v3582, 7
      %v3685 = vsel %vm375, %v3683, %v3684
      %v3686 = vrot.slane %v3583, 7
      %v3687 = vrot.slane %v3584, 7
      %v3688 = vsel %vm375, %v3686, %v3687
      %v3689 = vrot.slane %v3585, 7
      %v3690 = vrot.slane %v3586, 7
      %v3691 = vsel %vm375, %v3689, %v3690
      %v3692 = vrot.slane %v3587, 7
      %v3693 = vrot.slane %v3588, 7
      %v3694 = vsel %vm375, %v3692, %v3693
      %v3695 = vrot.slane %v3589, 7
      %v3696 = vrot.slane %v3590, 7
      %v3697 = vsel %vm375, %v3695, %v3696
      %v3698 = vrot.slane %v3591, 7
      %v3699 = vrot.slane %v3592, 7
      %v3700 = vsel %vm375, %v3698, %v3699
      %v3701 = vrot.slane %v3593, 7
      %v3702 = vrot.slane %v3594, 7
      %v3703 = vsel %vm375, %v3701, %v3702
      %v3704 = vrot.slane %v3595, 7
      %v3705 = vrot.slane %v3596, 7
      %v3706 = vsel %vm375, %v3704, %v3705
      %v3707 = vrot.slane %v3597, 7
      %v3708 = vrot.slane %v3598, 7
      %v3709 = vsel %vm375, %v3707, %v3708
      %v3710 = vrot.slane %v3599, 7
      %v3711 = vrot.slane %v3600, 7
      %v3712 = vsel %vm375, %v3710, %v3711
      %v3761 = vrot.slane %v3570, 5
      %v3762 = vrot.slane %v3572, 5
      %v3763 = vrot.slane %v3574, 5
      %v3764 = vrot.slane %v3576, 5
      %v3765 = vrot.slane %v3578, 5
      %v3766 = vrot.slane %v3580, 5
      %v3767 = vrot.slane %v3582, 5
      %v3768 = vrot.slane %v3584, 5
      %v3769 = vrot.slane %v3586, 5
      %v3770 = vrot.slane %v3588, 5
      %v3771 = vrot.slane %v3590, 5
      %v3772 = vrot.slane %v3592, 5
      %v3773 = vrot.slane %v3594, 5
      %v3774 = vrot.slane %v3596, 5
      %v3775 = vrot.slane %v3598, 5
      %v3776 = vrot.slane %v3600, 5
      %v3793 = vsel %vm375, %v3617, %v3665
      %v3794 = vsel %vm375, %v3618, %v3668
      %v3795 = vsel %vm375, %v3619, %v3671
      %v3796 = vsel %vm375, %v3620, %v3674
      %v3797 = vsel %vm375, %v3621, %v3677
      %v3798 = vsel %vm375, %v3622, %v3680
      %v3799 = vsel %vm375, %v3623, %v3683
      %v3800 = vsel %vm375, %v3624, %v3686
      %v3801 = vsel %vm375, %v3625, %v3689
      %v3802 = vsel %vm375, %v3626, %v3692
      %v3803 = vsel %vm375, %v3627, %v3695
      %v3804 = vsel %vm375, %v3628, %v3698
      %v3805 = vsel %vm375, %v3629, %v3701
      %v3806 = vsel %vm375, %v3630, %v3704
      %v3807 = vsel %vm375, %v3631, %v3707
      %v3808 = vsel %vm375, %v3632, %v3710
      %v3809 = vsel %vm375, %v3666, %v3761
      %v3810 = vsel %vm375, %v3669, %v3762
      %v3811 = vsel %vm375, %v3672, %v3763
      %v3812 = vsel %vm375, %v3675, %v3764
      %v3813 = vsel %vm375, %v3678, %v3765
      %v3814 = vsel %vm375, %v3681, %v3766
      %v3815 = vsel %vm375, %v3684, %v3767
      %v3816 = vsel %vm375, %v3687, %v3768
      %v3817 = vsel %vm375, %v3690, %v3769
      %v3818 = vsel %vm375, %v3693, %v3770
      %v3819 = vsel %vm375, %v3696, %v3771
      %v3820 = vsel %vm375, %v3699, %v3772
      %v3821 = vsel %vm375, %v3702, %v3773
      %v3822 = vsel %vm375, %v3705, %v3774
      %v3823 = vsel %vm375, %v3708, %v3775
      %v3824 = vsel %vm375, %v3711, %v3776
      %3825 = vst [vmem:[%s536] sm:$0xff] %v3793
      %3826 = vst [vmem:[%s536 + $0x8] sm:$0xff] %v3667
      %3827 = vst [vmem:[%s536 + $0x10] sm:$0x3] %v3809
      %3828 = vst [vmem:[%s536 + $0x18] sm:$0xff] %v3794
      %3829 = vst [vmem:[%s536 + $0x20] sm:$0xff] %v3670
      %3830 = vst [vmem:[%s536 + $0x28] sm:$0x3] %v3810
      %3831 = vst [vmem:[%s536 + $0x30] sm:$0xff] %v3795
      %3832 = vst [vmem:[%s536 + $0x38] sm:$0xff] %v3673
      %3833 = vst [vmem:[%s536 + $0x40] sm:$0x3] %v3811
      %3834 = vst [vmem:[%s536 + $0x48] sm:$0xff] %v3796
      %3835 = vst [vmem:[%s536 + $0x50] sm:$0xff] %v3676
      %3836 = vst [vmem:[%s536 + $0x58] sm:$0x3] %v3812
      %3837 = vst [vmem:[%s536 + $0x60] sm:$0xff] %v3797
      %3838 = vst [vmem:[%s536 + $0x68] sm:$0xff] %v3679
      %3839 = vst [vmem:[%s536 + $0x70] sm:$0x3] %v3813
      %3840 = vst [vmem:[%s536 + $0x78] sm:$0xff] %v3798
      %3841 = vst [vmem:[%s536 + $0x80] sm:$0xff] %v3682
      %3842 = vst [vmem:[%s536 + $0x88] sm:$0x3] %v3814
      %3843 = vst [vmem:[%s536 + $0x90] sm:$0xff] %v3799
      %3844 = vst [vmem:[%s536 + $0x98] sm:$0xff] %v3685
      %3845 = vst [vmem:[%s536 + $0xa0] sm:$0x3] %v3815
      %3846 = vst [vmem:[%s536 + $0xa8] sm:$0xff] %v3800
      %3847 = vst [vmem:[%s536 + $0xb0] sm:$0xff] %v3688
      %3848 = vst [vmem:[%s536 + $0xb8] sm:$0x3] %v3816
      %3849 = vst [vmem:[%s536 + $0xc0] sm:$0xff] %v3801
      %3850 = vst [vmem:[%s536 + $0xc8] sm:$0xff] %v3691
      %3851 = vst [vmem:[%s536 + $0xd0] sm:$0x3] %v3817
      %3852 = vst [vmem:[%s536 + $0xd8] sm:$0xff] %v3802
      %3853 = vst [vmem:[%s536 + $0xe0] sm:$0xff] %v3694
      %3854 = vst [vmem:[%s536 + $0xe8] sm:$0x3] %v3818
      %3855 = vst [vmem:[%s536 + $0xf0] sm:$0xff] %v3803
      %3856 = vst [vmem:[%s536 + $0xf8] sm:$0xff] %v3697
      %3857 = vst [vmem:[%s536 + $0x100] sm:$0x3] %v3819
      %3858 = vst [vmem:[%s536 + $0x108] sm:$0xff] %v3804
      %3859 = vst [vmem:[%s536 + $0x110] sm:$0xff] %v3700
      %3860 = vst [vmem:[%s536 + $0x118] sm:$0x3] %v3820
      %3861 = vst [vmem:[%s536 + $0x120] sm:$0xff] %v3805
      %3862 = vst [vmem:[%s536 + $0x128] sm:$0xff] %v3703
      %3863 = vst [vmem:[%s536 + $0x130] sm:$0x3] %v3821
      %3864 = vst [vmem:[%s536 + $0x138] sm:$0xff] %v3806
      %3865 = vst [vmem:[%s536 + $0x140] sm:$0xff] %v3706
      %3866 = vst [vmem:[%s536 + $0x148] sm:$0x3] %v3822
      %3867 = vst [vmem:[%s536 + $0x150] sm:$0xff] %v3807
      %3868 = vst [vmem:[%s536 + $0x158] sm:$0xff] %v3709
      %3869 = vst [vmem:[%s536 + $0x160] sm:$0x3] %v3823
      %3870 = vst [vmem:[%s536 + $0x168] sm:$0xff] %v3808
      %3871 = vst [vmem:[%s536 + $0x170] sm:$0xff] %v3712
      %3872 = vst [vmem:[%s536 + $0x178] sm:$0x3] %v3824
      %3873 = vst [vmem:[#allocation2] sm:$0xff] %v3794
      %3874 = vst [vmem:[#allocation2 + $0x8] sm:$0xff] %v3670
      %3875 = vst [vmem:[#allocation2 + $0x10] sm:$0x3] %v3810
      %3876 = vst [vmem:[%s588] sm:$0xff] %v3807
      %3877 = vst [vmem:[%s588 + $0x8] sm:$0xff] %v3709
      %3878 = vst [vmem:[%s588 + $0x10] sm:$0x3] %v3823
      %v3879 = vld [vmem:[#allocation2] sm:$0xff]
      %v3880 = vld [vmem:[#allocation2 + $0x8] sm:$0xff]
      %v3881 = vld [vmem:[#allocation2 + $0x18] sm:$0xff]
      %v3882 = vld [vmem:[#allocation2 + $0x20] sm:$0xff]
      %v3883 = vld [vmem:[#allocation2 + $0x30] sm:$0xff]
      %v3884 = vld [vmem:[#allocation2 + $0x38] sm:$0xff]
      %v3885 = vld [vmem:[#allocation2 + $0x48] sm:$0xff]
      %v3886 = vld [vmem:[#allocation2 + $0x50] sm:$0xff]
      %v3887 = vld [vmem:[#allocation2 + $0x60] sm:$0xff]
      %v3888 = vld [vmem:[#allocation2 + $0x68] sm:$0xff]
      %v3889 = vld [vmem:[#allocation2 + $0x78] sm:$0xff]
      %v3890 = vld [vmem:[#allocation2 + $0x80] sm:$0xff]
      %v3891 = vld [vmem:[#allocation2 + $0x90] sm:$0xff]
      %v3892 = vld [vmem:[#allocation2 + $0x98] sm:$0xff]
      %v3893 = vld [vmem:[#allocation2 + $0xa8] sm:$0xff]
      %v3894 = vld [vmem:[#allocation2 + $0xb0] sm:$0xff]
      %v3895 = vld [vmem:[#allocation2 + $0xc0] sm:$0xff]
      %v3896 = vld [vmem:[#allocation2 + $0xc8] sm:$0xff]
      %v3897 = vld [vmem:[#allocation2 + $0xd8] sm:$0xff]
      %v3898 = vld [vmem:[#allocation2 + $0xe0] sm:$0xff]
      %v3899 = vld [vmem:[#allocation2 + $0xf0] sm:$0xff]
      %v3900 = vld [vmem:[#allocation2 + $0xf8] sm:$0xff]
      %v3901 = vld [vmem:[#allocation2 + $0x108] sm:$0xff]
      %v3902 = vld [vmem:[#allocation2 + $0x110] sm:$0xff]
      %v3903 = vld [vmem:[#allocation2 + $0x120] sm:$0xff]
      %v3904 = vld [vmem:[#allocation2 + $0x128] sm:$0xff]
      %v3905 = vld [vmem:[#allocation2 + $0x138] sm:$0xff]
      %v3906 = vld [vmem:[#allocation2 + $0x140] sm:$0xff]
      %v3907 = vld [vmem:[#allocation2 + $0x150] sm:$0xff]
      %v3908 = vld [vmem:[#allocation2 + $0x158] sm:$0xff]
      %v3909 = vld [vmem:[#allocation2 + $0x168] sm:$0xff]
      %v3910 = vld [vmem:[#allocation2 + $0x170] sm:$0xff]
      %v3911 = vld [vmem:[%s4] sm:$0xff]
      %v3912 = vld [vmem:[%s4 + $0x8] sm:$0xff]
      %v3913 = vld [vmem:[%s4 + $0x10] sm:$0xff]
      %v3914 = vld [vmem:[%s4 + $0x18] sm:$0xff]
      %v3915 = vld [vmem:[%s4 + $0x20] sm:$0xff]
      %v3916 = vld [vmem:[%s4 + $0x28] sm:$0xff]
      %v3917 = vld [vmem:[%s4 + $0x30] sm:$0xff]
      %v3918 = vld [vmem:[%s4 + $0x38] sm:$0xff]
      %v3919 = vld [vmem:[%s4 + $0x40] sm:$0xff]
      %v3920 = vld [vmem:[%s4 + $0x48] sm:$0xff]
      %v3921 = vld [vmem:[%s4 + $0x50] sm:$0xff]
      %v3922 = vld [vmem:[%s4 + $0x58] sm:$0xff]
      %v3923 = vld [vmem:[%s4 + $0x60] sm:$0xff]
      %v3924 = vld [vmem:[%s4 + $0x68] sm:$0xff]
      %v3925 = vld [vmem:[%s4 + $0x70] sm:$0xff]
      %v3926 = vld [vmem:[%s4 + $0x78] sm:$0xff]
      %v3927 = vld [vmem:[#allocation2 + $0x1] sm:$0xff]
      %v3928 = vld [vmem:[#allocation2 + $0x9] sm:$0xff]
      %v3929 = vld [vmem:[#allocation2 + $0x19] sm:$0xff]
      %v3930 = vld [vmem:[#allocation2 + $0x21] sm:$0xff]
      %v3931 = vld [vmem:[#allocation2 + $0x31] sm:$0xff]
      %v3932 = vld [vmem:[#allocation2 + $0x39] sm:$0xff]
      %v3933 = vld [vmem:[#allocation2 + $0x49] sm:$0xff]
      %v3934 = vld [vmem:[#allocation2 + $0x51] sm:$0xff]
      %v3935 = vld [vmem:[#allocation2 + $0x61] sm:$0xff]
      %v3936 = vld [vmem:[#allocation2 + $0x69] sm:$0xff]
      %v3937 = vld [vmem:[#allocation2 + $0x79] sm:$0xff]
      %v3938 = vld [vmem:[#allocation2 + $0x81] sm:$0xff]
      %v3939 = vld [vmem:[#allocation2 + $0x91] sm:$0xff]
      %v3940 = vld [vmem:[#allocation2 + $0x99] sm:$0xff]
      %v3941 = vld [vmem:[#allocation2 + $0xa9] sm:$0xff]
      %v3942 = vld [vmem:[#allocation2 + $0xb1] sm:$0xff]
      %v3943 = vld [vmem:[#allocation2 + $0xc1] sm:$0xff]
      %v3944 = vld [vmem:[#allocation2 + $0xc9] sm:$0xff]
      %v3945 = vld [vmem:[#allocation2 + $0xd9] sm:$0xff]
      %v3946 = vld [vmem:[#allocation2 + $0xe1] sm:$0xff]
      %v3947 = vld [vmem:[#allocation2 + $0xf1] sm:$0xff]
      %v3948 = vld [vmem:[#allocation2 + $0xf9] sm:$0xff]
      %v3949 = vld [vmem:[#allocation2 + $0x109] sm:$0xff]
      %v3950 = vld [vmem:[#allocation2 + $0x111] sm:$0xff]
      %v3951 = vld [vmem:[#allocation2 + $0x121] sm:$0xff]
      %v3952 = vld [vmem:[#allocation2 + $0x129] sm:$0xff]
      %v3953 = vld [vmem:[#allocation2 + $0x139] sm:$0xff]
      %v3954 = vld [vmem:[#allocation2 + $0x141] sm:$0xff]
      %v3955 = vld [vmem:[#allocation2 + $0x151] sm:$0xff]
      %v3956 = vld [vmem:[#allocation2 + $0x159] sm:$0xff]
      %v3957 = vld [vmem:[#allocation2 + $0x169] sm:$0xff]
      %v3958 = vld [vmem:[#allocation2 + $0x171] sm:$0xff]
      %s3959 = scalar_lea.vmem %s4, 128
      %v3960 = vld [vmem:[%s3959] sm:$0xff]
      %v3961 = vld [vmem:[%s3959 + $0x8] sm:$0xff]
      %v3962 = vld [vmem:[%s3959 + $0x10] sm:$0xff]
      %v3963 = vld [vmem:[%s3959 + $0x18] sm:$0xff]
      %v3964 = vld [vmem:[%s3959 + $0x20] sm:$0xff]
      %v3965 = vld [vmem:[%s3959 + $0x28] sm:$0xff]
      %v3966 = vld [vmem:[%s3959 + $0x30] sm:$0xff]
      %v3967 = vld [vmem:[%s3959 + $0x38] sm:$0xff]
      %v3968 = vld [vmem:[%s3959 + $0x40] sm:$0xff]
      %v3969 = vld [vmem:[%s3959 + $0x48] sm:$0xff]
      %v3970 = vld [vmem:[%s3959 + $0x50] sm:$0xff]
      %v3971 = vld [vmem:[%s3959 + $0x58] sm:$0xff]
      %v3972 = vld [vmem:[%s3959 + $0x60] sm:$0xff]
      %v3973 = vld [vmem:[%s3959 + $0x68] sm:$0xff]
      %v3974 = vld [vmem:[%s3959 + $0x70] sm:$0xff]
      %v3975 = vld [vmem:[%s3959 + $0x78] sm:$0xff]
      %3976 = vmatprep.subr.mxu0 0.0
      %3977 = vmatpush1.msra.mxu0 %v3975
      %3978 = vmatprep.subr.mxu0 0.0
      %3979 = vmatpush1.msra.mxu0 %v3974
      %3980 = vmatprep.subr.mxu0 0.0
      %3981 = vmatpush1.msra.mxu0 %v3973
      %3982 = vmatprep.subr.mxu0 0.0
      %3983 = vmatpush1.msra.mxu0 %v3972
      %3984 = vmatprep.subr.mxu0 0.0
      %3985 = vmatpush1.msra.mxu0 %v3971
      %3986 = vmatprep.subr.mxu0 0.0
      %3987 = vmatpush1.msra.mxu0 %v3970
      %3988 = vmatprep.subr.mxu0 0.0
      %3989 = vmatpush1.msra.mxu0 %v3969
      %3990 = vmatprep.subr.mxu0 0.0
      %3991 = vmatpush1.msra.mxu0 %v3968
      %3992 = vmatprep.subr.mxu0 0.0
      %3993 = vmatpush1.msra.mxu0 %v3967
      %3994 = vmatprep.subr.mxu0 0.0
      %3995 = vmatpush1.msra.mxu0 %v3966
      %3996 = vmatprep.subr.mxu0 0.0
      %3997 = vmatpush1.msra.mxu0 %v3965
      %3998 = vmatprep.subr.mxu0 0.0
      %3999 = vmatpush1.msra.mxu0 %v3964
      %4000 = vmatprep.subr.mxu0 0.0
      %4001 = vmatpush1.msra.mxu0 %v3963
      %4002 = vmatprep.subr.mxu0 0.0
      %4003 = vmatpush1.msra.mxu0 %v3962
      %4004 = vmatprep.subr.mxu0 0.0
      %4005 = vmatpush1.msra.mxu0 %v3961
      %4006 = vmatprep.subr.mxu0 0.0
      %4007 = vmatpush1.msra.mxu0 %v3960
      %4008 = vmatprep.subr.mxu0 0.0
      %4009 = vmatpush2.msra.mxu0 0.0
      %4010 = vmatprep.subr.mxu0 0.0
      %4011 = vmatpush2.msra.mxu0 0.0
      %4012 = vmatprep.subr.mxu0 0.0
      %4013 = vmatpush2.msra.mxu0 0.0
      %4014 = vmatprep.subr.mxu0 0.0
      %4015 = vmatpush2.msra.mxu0 0.0
      %4016 = vmatprep.subr.mxu0 0.0
      %4017 = vmatpush2.msra.mxu0 0.0
      %4018 = vmatprep.subr.mxu0 0.0
      %4019 = vmatpush2.msra.mxu0 0.0
      %4020 = vmatprep.subr.mxu0 0.0
      %4021 = vmatpush2.msra.mxu0 0.0
      %4022 = vmatprep.subr.mxu0 0.0
      %4023 = vmatpush2.msra.mxu0 0.0
      %4024 = vmatprep.subr.mxu0 0.0
      %4025 = vmatpush2.msra.mxu0 0.0
      %4026 = vmatprep.subr.mxu0 0.0
      %4027 = vmatpush2.msra.mxu0 0.0
      %4028 = vmatprep.subr.mxu0 0.0
      %4029 = vmatpush2.msra.mxu0 0.0
      %4030 = vmatprep.subr.mxu0 0.0
      %4031 = vmatpush2.msra.mxu0 0.0
      %4032 = vmatprep.subr.mxu0 0.0
      %4033 = vmatpush2.msra.mxu0 0.0
      %4034 = vmatprep.subr.mxu0 0.0
      %4035 = vmatpush2.msra.mxu0 0.0
      %4036 = vmatprep.subr.mxu0 0.0
      %4037 = vmatpush2.msra.mxu0 0.0
      %4038 = vmatprep.subr.mxu0 0.0
      %4039 = vmatpush2.msra.mxu0 0.0
      %4040 = vmatprep.mubr.f32.mxu0 0.0
      %4041 = vmatmul.mubr.f32.gmra.mxu0 %v3927
      %v4042 = vpop.f32.mrf.mxu0
      %v4043 = vadd.f32 0.0, %v4042
      %v4044 = vpop.f32.mrf.mxu0
      %4045 = vmatprep.mubr.f32.mxu0 0.0
      %4046 = vmatmul.mubr.f32.gmra.mxu0 %v3928
      %v4047 = vpop.f32.mrf.mxu0
      %v4048 = vadd.f32 0.0, %v4047
      %v4049 = vpop.f32.mrf.mxu0
      %4050 = vmatprep.mubr.f32.mxu0 0.0
      %4051 = vmatmul.mubr.f32.gmra.mxu0 %v3929
      %v4052 = vpop.f32.mrf.mxu0
      %v4053 = vadd.f32 0.0, %v4052
      %v4054 = vpop.f32.mrf.mxu0
      %4055 = vmatprep.mubr.f32.mxu0 0.0
      %4056 = vmatmul.mubr.f32.gmra.mxu0 %v3930
      %v4057 = vpop.f32.mrf.mxu0
      %v4058 = vadd.f32 0.0, %v4057
      %v4059 = vpop.f32.mrf.mxu0
      %4060 = vmatprep.mubr.f32.mxu0 0.0
      %4061 = vmatmul.mubr.f32.gmra.mxu0 %v3931
      %v4062 = vpop.f32.mrf.mxu0
      %v4063 = vadd.f32 0.0, %v4062
      %v4064 = vpop.f32.mrf.mxu0
      %4065 = vmatprep.mubr.f32.mxu0 0.0
      %4066 = vmatmul.mubr.f32.gmra.mxu0 %v3932
      %v4067 = vpop.f32.mrf.mxu0
      %v4068 = vadd.f32 0.0, %v4067
      %v4069 = vpop.f32.mrf.mxu0
      %4070 = vmatprep.mubr.f32.mxu0 0.0
      %4071 = vmatmul.mubr.f32.gmra.mxu0 %v3933
      %v4072 = vpop.f32.mrf.mxu0
      %v4073 = vadd.f32 0.0, %v4072
      %v4074 = vpop.f32.mrf.mxu0
      %4075 = vmatprep.mubr.f32.mxu0 0.0
      %4076 = vmatmul.mubr.f32.gmra.mxu0 %v3934
      %v4077 = vpop.f32.mrf.mxu0
      %v4078 = vadd.f32 0.0, %v4077
      %v4079 = vpop.f32.mrf.mxu0
      %4080 = vmatprep.mubr.f32.mxu0 0.0
      %4081 = vmatmul.mubr.f32.gmra.mxu0 %v3935
      %v4082 = vpop.f32.mrf.mxu0
      %v4083 = vadd.f32 0.0, %v4082
      %v4084 = vpop.f32.mrf.mxu0
      %4085 = vmatprep.mubr.f32.mxu0 0.0
      %4086 = vmatmul.mubr.f32.gmra.mxu0 %v3936
      %v4087 = vpop.f32.mrf.mxu0
      %v4088 = vadd.f32 0.0, %v4087
      %v4089 = vpop.f32.mrf.mxu0
      %4090 = vmatprep.mubr.f32.mxu0 0.0
      %4091 = vmatmul.mubr.f32.gmra.mxu0 %v3937
      %v4092 = vpop.f32.mrf.mxu0
      %v4093 = vadd.f32 0.0, %v4092
      %v4094 = vpop.f32.mrf.mxu0
      %4095 = vmatprep.mubr.f32.mxu0 0.0
      %4096 = vmatmul.mubr.f32.gmra.mxu0 %v3938
      %v4097 = vpop.f32.mrf.mxu0
      %v4098 = vadd.f32 0.0, %v4097
      %v4099 = vpop.f32.mrf.mxu0
      %4100 = vmatprep.mubr.f32.mxu0 0.0
      %4101 = vmatmul.mubr.f32.gmra.mxu0 %v3939
      %v4102 = vpop.f32.mrf.mxu0
      %v4103 = vadd.f32 0.0, %v4102
      %v4104 = vpop.f32.mrf.mxu0
      %4105 = vmatprep.mubr.f32.mxu0 0.0
      %4106 = vmatmul.mubr.f32.gmra.mxu0 %v3940
      %v4107 = vpop.f32.mrf.mxu0
      %v4108 = vadd.f32 0.0, %v4107
      %v4109 = vpop.f32.mrf.mxu0
      %4110 = vmatprep.mubr.f32.mxu0 0.0
      %4111 = vmatmul.mubr.f32.gmra.mxu0 %v3941
      %v4112 = vpop.f32.mrf.mxu0
      %v4113 = vadd.f32 0.0, %v4112
      %v4114 = vpop.f32.mrf.mxu0
      %4115 = vmatprep.mubr.f32.mxu0 0.0
      %4116 = vmatmul.mubr.f32.gmra.mxu0 %v3942
      %v4117 = vpop.f32.mrf.mxu0
      %v4118 = vadd.f32 0.0, %v4117
      %v4119 = vpop.f32.mrf.mxu0
      %4120 = vmatprep.mubr.f32.mxu0 0.0
      %4121 = vmatmul.mubr.f32.gmra.mxu0 %v3943
      %v4122 = vpop.f32.mrf.mxu0
      %v4123 = vadd.f32 0.0, %v4122
      %v4124 = vpop.f32.mrf.mxu0
      %4125 = vmatprep.mubr.f32.mxu0 0.0
      %4126 = vmatmul.mubr.f32.gmra.mxu0 %v3944
      %v4127 = vpop.f32.mrf.mxu0
      %v4128 = vadd.f32 0.0, %v4127
      %v4129 = vpop.f32.mrf.mxu0
      %4130 = vmatprep.mubr.f32.mxu0 0.0
      %4131 = vmatmul.mubr.f32.gmra.mxu0 %v3945
      %v4132 = vpop.f32.mrf.mxu0
      %v4133 = vadd.f32 0.0, %v4132
      %v4134 = vpop.f32.mrf.mxu0
      %4135 = vmatprep.mubr.f32.mxu0 0.0
      %4136 = vmatmul.mubr.f32.gmra.mxu0 %v3946
      %v4137 = vpop.f32.mrf.mxu0
      %v4138 = vadd.f32 0.0, %v4137
      %v4139 = vpop.f32.mrf.mxu0
      %4140 = vmatprep.mubr.f32.mxu0 0.0
      %4141 = vmatmul.mubr.f32.gmra.mxu0 %v3947
      %v4142 = vpop.f32.mrf.mxu0
      %v4143 = vadd.f32 0.0, %v4142
      %v4144 = vpop.f32.mrf.mxu0
      %4145 = vmatprep.mubr.f32.mxu0 0.0
      %4146 = vmatmul.mubr.f32.gmra.mxu0 %v3948
      %v4147 = vpop.f32.mrf.mxu0
      %v4148 = vadd.f32 0.0, %v4147
      %v4149 = vpop.f32.mrf.mxu0
      %4150 = vmatprep.mubr.f32.mxu0 0.0
      %4151 = vmatmul.mubr.f32.gmra.mxu0 %v3949
      %v4152 = vpop.f32.mrf.mxu0
      %v4153 = vadd.f32 0.0, %v4152
      %v4154 = vpop.f32.mrf.mxu0
      %4155 = vmatprep.mubr.f32.mxu0 0.0
      %4156 = vmatmul.mubr.f32.gmra.mxu0 %v3950
      %v4157 = vpop.f32.mrf.mxu0
      %v4158 = vadd.f32 0.0, %v4157
      %v4159 = vpop.f32.mrf.mxu0
      %4160 = vmatprep.mubr.f32.mxu0 0.0
      %4161 = vmatmul.mubr.f32.gmra.mxu0 %v3951
      %v4162 = vpop.f32.mrf.mxu0
      %v4163 = vadd.f32 0.0, %v4162
      %v4164 = vpop.f32.mrf.mxu0
      %4165 = vmatprep.mubr.f32.mxu0 0.0
      %4166 = vmatmul.mubr.f32.gmra.mxu0 %v3952
      %v4167 = vpop.f32.mrf.mxu0
      %v4168 = vadd.f32 0.0, %v4167
      %v4169 = vpop.f32.mrf.mxu0
      %4170 = vmatprep.mubr.f32.mxu0 0.0
      %4171 = vmatmul.mubr.f32.gmra.mxu0 %v3953
      %v4172 = vpop.f32.mrf.mxu0
      %v4173 = vadd.f32 0.0, %v4172
      %v4174 = vpop.f32.mrf.mxu0
      %4175 = vmatprep.mubr.f32.mxu0 0.0
      %4176 = vmatmul.mubr.f32.gmra.mxu0 %v3954
      %v4177 = vpop.f32.mrf.mxu0
      %v4178 = vadd.f32 0.0, %v4177
      %v4179 = vpop.f32.mrf.mxu0
      %4180 = vmatprep.mubr.f32.mxu0 0.0
      %4181 = vmatmul.mubr.f32.gmra.mxu0 %v3955
      %v4182 = vpop.f32.mrf.mxu0
      %v4183 = vadd.f32 0.0, %v4182
      %v4184 = vpop.f32.mrf.mxu0
      %4185 = vmatprep.mubr.f32.mxu0 0.0
      %4186 = vmatmul.mubr.f32.gmra.mxu0 %v3956
      %v4187 = vpop.f32.mrf.mxu0
      %v4188 = vadd.f32 0.0, %v4187
      %v4189 = vpop.f32.mrf.mxu0
      %4190 = vmatprep.mubr.f32.mxu0 0.0
      %4191 = vmatmul.mubr.f32.gmra.mxu0 %v3957
      %v4192 = vpop.f32.mrf.mxu0
      %v4193 = vadd.f32 0.0, %v4192
      %v4194 = vpop.f32.mrf.mxu0
      %4195 = vmatprep.mubr.f32.mxu0 0.0
      %4196 = vmatmul.mubr.f32.gmra.mxu0 %v3958
      %v4197 = vpop.f32.mrf.mxu0
      %v4198 = vadd.f32 0.0, %v4197
      %v4199 = vpop.f32.mrf.mxu0
      %4200 = vdwg.mxu0
      %4201 = vmatprep.subr.mxu0 0.0
      %4202 = vmatpush1.msra.mxu0 %v3926
      %4203 = vmatprep.subr.mxu0 0.0
      %4204 = vmatpush1.msra.mxu0 %v3925
      %4205 = vmatprep.subr.mxu0 0.0
      %4206 = vmatpush1.msra.mxu0 %v3924
      %4207 = vmatprep.subr.mxu0 0.0
      %4208 = vmatpush1.msra.mxu0 %v3923
      %4209 = vmatprep.subr.mxu0 0.0
      %4210 = vmatpush1.msra.mxu0 %v3922
      %4211 = vmatprep.subr.mxu0 0.0
      %4212 = vmatpush1.msra.mxu0 %v3921
      %4213 = vmatprep.subr.mxu0 0.0
      %4214 = vmatpush1.msra.mxu0 %v3920
      %4215 = vmatprep.subr.mxu0 0.0
      %4216 = vmatpush1.msra.mxu0 %v3919
      %4217 = vmatprep.subr.mxu0 0.0
      %4218 = vmatpush1.msra.mxu0 %v3918
      %4219 = vmatprep.subr.mxu0 0.0
      %4220 = vmatpush1.msra.mxu0 %v3917
      %4221 = vmatprep.subr.mxu0 0.0
      %4222 = vmatpush1.msra.mxu0 %v3916
      %4223 = vmatprep.subr.mxu0 0.0
      %4224 = vmatpush1.msra.mxu0 %v3915
      %4225 = vmatprep.subr.mxu0 0.0
      %4226 = vmatpush1.msra.mxu0 %v3914
      %4227 = vmatprep.subr.mxu0 0.0
      %4228 = vmatpush1.msra.mxu0 %v3913
      %4229 = vmatprep.subr.mxu0 0.0
      %4230 = vmatpush1.msra.mxu0 %v3912
      %4231 = vmatprep.subr.mxu0 0.0
      %4232 = vmatpush1.msra.mxu0 %v3911
      %4233 = vmatprep.subr.mxu0 0.0
      %4234 = vmatpush2.msra.mxu0 0.0
      %4235 = vmatprep.subr.mxu0 0.0
      %4236 = vmatpush2.msra.mxu0 0.0
      %4237 = vmatprep.subr.mxu0 0.0
      %4238 = vmatpush2.msra.mxu0 0.0
      %4239 = vmatprep.subr.mxu0 0.0
      %4240 = vmatpush2.msra.mxu0 0.0
      %4241 = vmatprep.subr.mxu0 0.0
      %4242 = vmatpush2.msra.mxu0 0.0
      %4243 = vmatprep.subr.mxu0 0.0
      %4244 = vmatpush2.msra.mxu0 0.0
      %4245 = vmatprep.subr.mxu0 0.0
      %4246 = vmatpush2.msra.mxu0 0.0
      %4247 = vmatprep.subr.mxu0 0.0
      %4248 = vmatpush2.msra.mxu0 0.0
      %4249 = vmatprep.subr.mxu0 0.0
      %4250 = vmatpush2.msra.mxu0 0.0
      %4251 = vmatprep.subr.mxu0 0.0
      %4252 = vmatpush2.msra.mxu0 0.0
      %4253 = vmatprep.subr.mxu0 0.0
      %4254 = vmatpush2.msra.mxu0 0.0
      %4255 = vmatprep.subr.mxu0 0.0
      %4256 = vmatpush2.msra.mxu0 0.0
      %4257 = vmatprep.subr.mxu0 0.0
      %4258 = vmatpush2.msra.mxu0 0.0
      %4259 = vmatprep.subr.mxu0 0.0
      %4260 = vmatpush2.msra.mxu0 0.0
      %4261 = vmatprep.subr.mxu0 0.0
      %4262 = vmatpush2.msra.mxu0 0.0
      %4263 = vmatprep.subr.mxu0 0.0
      %4264 = vmatpush2.msra.mxu0 0.0
      %4265 = vmatprep.mubr.f32.mxu0 0.0
      %4266 = vmatmul.mubr.f32.gmra.mxu0 %v3879
      %v4267 = vpop.f32.mrf.mxu0
      %v4268 = vadd.f32 %v4043, %v4267
      %v4269 = vpop.f32.mrf.mxu0
      %4270 = vmatprep.mubr.f32.mxu0 0.0
      %4271 = vmatmul.mubr.f32.gmra.mxu0 %v3880
      %v4272 = vpop.f32.mrf.mxu0
      %v4273 = vadd.f32 %v4048, %v4272
      %v4274 = vpop.f32.mrf.mxu0
      %4275 = vmatprep.mubr.f32.mxu0 0.0
      %4276 = vmatmul.mubr.f32.gmra.mxu0 %v3881
      %v4277 = vpop.f32.mrf.mxu0
      %v4278 = vadd.f32 %v4053, %v4277
      %v4279 = vpop.f32.mrf.mxu0
      %4280 = vmatprep.mubr.f32.mxu0 0.0
      %4281 = vmatmul.mubr.f32.gmra.mxu0 %v3882
      %v4282 = vpop.f32.mrf.mxu0
      %v4283 = vadd.f32 %v4058, %v4282
      %v4284 = vpop.f32.mrf.mxu0
      %4285 = vmatprep.mubr.f32.mxu0 0.0
      %4286 = vmatmul.mubr.f32.gmra.mxu0 %v3883
      %v4287 = vpop.f32.mrf.mxu0
      %v4288 = vadd.f32 %v4063, %v4287
      %v4289 = vpop.f32.mrf.mxu0
      %4290 = vmatprep.mubr.f32.mxu0 0.0
      %4291 = vmatmul.mubr.f32.gmra.mxu0 %v3884
      %v4292 = vpop.f32.mrf.mxu0
      %v4293 = vadd.f32 %v4068, %v4292
      %v4294 = vpop.f32.mrf.mxu0
      %4295 = vmatprep.mubr.f32.mxu0 0.0
      %4296 = vmatmul.mubr.f32.gmra.mxu0 %v3885
      %v4297 = vpop.f32.mrf.mxu0
      %v4298 = vadd.f32 %v4073, %v4297
      %v4299 = vpop.f32.mrf.mxu0
      %4300 = vmatprep.mubr.f32.mxu0 0.0
      %4301 = vmatmul.mubr.f32.gmra.mxu0 %v3886
      %v4302 = vpop.f32.mrf.mxu0
      %v4303 = vadd.f32 %v4078, %v4302
      %v4304 = vpop.f32.mrf.mxu0
      %4305 = vmatprep.mubr.f32.mxu0 0.0
      %4306 = vmatmul.mubr.f32.gmra.mxu0 %v3887
      %v4307 = vpop.f32.mrf.mxu0
      %v4308 = vadd.f32 %v4083, %v4307
      %v4309 = vpop.f32.mrf.mxu0
      %4310 = vmatprep.mubr.f32.mxu0 0.0
      %4311 = vmatmul.mubr.f32.gmra.mxu0 %v3888
      %v4312 = vpop.f32.mrf.mxu0
      %v4313 = vadd.f32 %v4088, %v4312
      %v4314 = vpop.f32.mrf.mxu0
      %4315 = vmatprep.mubr.f32.mxu0 0.0
      %4316 = vmatmul.mubr.f32.gmra.mxu0 %v3889
      %v4317 = vpop.f32.mrf.mxu0
      %v4318 = vadd.f32 %v4093, %v4317
      %v4319 = vpop.f32.mrf.mxu0
      %4320 = vmatprep.mubr.f32.mxu0 0.0
      %4321 = vmatmul.mubr.f32.gmra.mxu0 %v3890
      %v4322 = vpop.f32.mrf.mxu0
      %v4323 = vadd.f32 %v4098, %v4322
      %v4324 = vpop.f32.mrf.mxu0
      %4325 = vmatprep.mubr.f32.mxu0 0.0
      %4326 = vmatmul.mubr.f32.gmra.mxu0 %v3891
      %v4327 = vpop.f32.mrf.mxu0
      %v4328 = vadd.f32 %v4103, %v4327
      %v4329 = vpop.f32.mrf.mxu0
      %4330 = vmatprep.mubr.f32.mxu0 0.0
      %4331 = vmatmul.mubr.f32.gmra.mxu0 %v3892
      %v4332 = vpop.f32.mrf.mxu0
      %v4333 = vadd.f32 %v4108, %v4332
      %v4334 = vpop.f32.mrf.mxu0
      %4335 = vmatprep.mubr.f32.mxu0 0.0
      %4336 = vmatmul.mubr.f32.gmra.mxu0 %v3893
      %v4337 = vpop.f32.mrf.mxu0
      %v4338 = vadd.f32 %v4113, %v4337
      %v4339 = vpop.f32.mrf.mxu0
      %4340 = vmatprep.mubr.f32.mxu0 0.0
      %4341 = vmatmul.mubr.f32.gmra.mxu0 %v3894
      %v4342 = vpop.f32.mrf.mxu0
      %v4343 = vadd.f32 %v4118, %v4342
      %v4344 = vpop.f32.mrf.mxu0
      %4345 = vmatprep.mubr.f32.mxu0 0.0
      %4346 = vmatmul.mubr.f32.gmra.mxu0 %v3895
      %v4347 = vpop.f32.mrf.mxu0
      %v4348 = vadd.f32 %v4123, %v4347
      %v4349 = vpop.f32.mrf.mxu0
      %4350 = vmatprep.mubr.f32.mxu0 0.0
      %4351 = vmatmul.mubr.f32.gmra.mxu0 %v3896
      %v4352 = vpop.f32.mrf.mxu0
      %v4353 = vadd.f32 %v4128, %v4352
      %v4354 = vpop.f32.mrf.mxu0
      %4355 = vmatprep.mubr.f32.mxu0 0.0
      %4356 = vmatmul.mubr.f32.gmra.mxu0 %v3897
      %v4357 = vpop.f32.mrf.mxu0
      %v4358 = vadd.f32 %v4133, %v4357
      %v4359 = vpop.f32.mrf.mxu0
      %4360 = vmatprep.mubr.f32.mxu0 0.0
      %4361 = vmatmul.mubr.f32.gmra.mxu0 %v3898
      %v4362 = vpop.f32.mrf.mxu0
      %v4363 = vadd.f32 %v4138, %v4362
      %v4364 = vpop.f32.mrf.mxu0
      %4365 = vmatprep.mubr.f32.mxu0 0.0
      %4366 = vmatmul.mubr.f32.gmra.mxu0 %v3899
      %v4367 = vpop.f32.mrf.mxu0
      %v4368 = vadd.f32 %v4143, %v4367
      %v4369 = vpop.f32.mrf.mxu0
      %4370 = vmatprep.mubr.f32.mxu0 0.0
      %4371 = vmatmul.mubr.f32.gmra.mxu0 %v3900
      %v4372 = vpop.f32.mrf.mxu0
      %v4373 = vadd.f32 %v4148, %v4372
      %v4374 = vpop.f32.mrf.mxu0
      %4375 = vmatprep.mubr.f32.mxu0 0.0
      %4376 = vmatmul.mubr.f32.gmra.mxu0 %v3901
      %v4377 = vpop.f32.mrf.mxu0
      %v4378 = vadd.f32 %v4153, %v4377
      %v4379 = vpop.f32.mrf.mxu0
      %4380 = vmatprep.mubr.f32.mxu0 0.0
      %4381 = vmatmul.mubr.f32.gmra.mxu0 %v3902
      %v4382 = vpop.f32.mrf.mxu0
      %v4383 = vadd.f32 %v4158, %v4382
      %v4384 = vpop.f32.mrf.mxu0
      %4385 = vmatprep.mubr.f32.mxu0 0.0
      %4386 = vmatmul.mubr.f32.gmra.mxu0 %v3903
      %v4387 = vpop.f32.mrf.mxu0
      %v4388 = vadd.f32 %v4163, %v4387
      %v4389 = vpop.f32.mrf.mxu0
      %4390 = vmatprep.mubr.f32.mxu0 0.0
      %4391 = vmatmul.mubr.f32.gmra.mxu0 %v3904
      %v4392 = vpop.f32.mrf.mxu0
      %v4393 = vadd.f32 %v4168, %v4392
      %v4394 = vpop.f32.mrf.mxu0
      %4395 = vmatprep.mubr.f32.mxu0 0.0
      %4396 = vmatmul.mubr.f32.gmra.mxu0 %v3905
      %v4397 = vpop.f32.mrf.mxu0
      %v4398 = vadd.f32 %v4173, %v4397
      %v4399 = vpop.f32.mrf.mxu0
      %4400 = vmatprep.mubr.f32.mxu0 0.0
      %4401 = vmatmul.mubr.f32.gmra.mxu0 %v3906
      %v4402 = vpop.f32.mrf.mxu0
      %v4403 = vadd.f32 %v4178, %v4402
      %v4404 = vpop.f32.mrf.mxu0
      %4405 = vmatprep.mubr.f32.mxu0 0.0
      %4406 = vmatmul.mubr.f32.gmra.mxu0 %v3907
      %v4407 = vpop.f32.mrf.mxu0
      %v4408 = vadd.f32 %v4183, %v4407
      %v4409 = vpop.f32.mrf.mxu0
      %4410 = vmatprep.mubr.f32.mxu0 0.0
      %4411 = vmatmul.mubr.f32.gmra.mxu0 %v3908
      %v4412 = vpop.f32.mrf.mxu0
      %v4413 = vadd.f32 %v4188, %v4412
      %v4414 = vpop.f32.mrf.mxu0
      %4415 = vmatprep.mubr.f32.mxu0 0.0
      %4416 = vmatmul.mubr.f32.gmra.mxu0 %v3909
      %v4417 = vpop.f32.mrf.mxu0
      %v4418 = vadd.f32 %v4193, %v4417
      %v4419 = vpop.f32.mrf.mxu0
      %4420 = vmatprep.mubr.f32.mxu0 0.0
      %4421 = vmatmul.mubr.f32.gmra.mxu0 %v3910
      %v4422 = vpop.f32.mrf.mxu0
      %v4423 = vadd.f32 %v4198, %v4422
      %v4424 = vpop.f32.mrf.mxu0
      %4425 = vdwg.mxu0
      %v4426 = vld [vmem:[#allocation2 + $0x2] sm:$0xff]
      %v4427 = vld [vmem:[#allocation2 + $0xa] sm:$0xff]
      %v4428 = vld [vmem:[#allocation2 + $0x1a] sm:$0xff]
      %v4429 = vld [vmem:[#allocation2 + $0x22] sm:$0xff]
      %v4430 = vld [vmem:[#allocation2 + $0x32] sm:$0xff]
      %v4431 = vld [vmem:[#allocation2 + $0x3a] sm:$0xff]
      %v4432 = vld [vmem:[#allocation2 + $0x4a] sm:$0xff]
      %v4433 = vld [vmem:[#allocation2 + $0x52] sm:$0xff]
      %v4434 = vld [vmem:[#allocation2 + $0x62] sm:$0xff]
      %v4435 = vld [vmem:[#allocation2 + $0x6a] sm:$0xff]
      %v4436 = vld [vmem:[#allocation2 + $0x7a] sm:$0xff]
      %v4437 = vld [vmem:[#allocation2 + $0x82] sm:$0xff]
      %v4438 = vld [vmem:[#allocation2 + $0x92] sm:$0xff]
      %v4439 = vld [vmem:[#allocation2 + $0x9a] sm:$0xff]
      %v4440 = vld [vmem:[#allocation2 + $0xaa] sm:$0xff]
      %v4441 = vld [vmem:[#allocation2 + $0xb2] sm:$0xff]
      %v4442 = vld [vmem:[#allocation2 + $0xc2] sm:$0xff]
      %v4443 = vld [vmem:[#allocation2 + $0xca] sm:$0xff]
      %v4444 = vld [vmem:[#allocation2 + $0xda] sm:$0xff]
      %v4445 = vld [vmem:[#allocation2 + $0xe2] sm:$0xff]
      %v4446 = vld [vmem:[#allocation2 + $0xf2] sm:$0xff]
      %v4447 = vld [vmem:[#allocation2 + $0xfa] sm:$0xff]
      %v4448 = vld [vmem:[#allocation2 + $0x10a] sm:$0xff]
      %v4449 = vld [vmem:[#allocation2 + $0x112] sm:$0xff]
      %v4450 = vld [vmem:[#allocation2 + $0x122] sm:$0xff]
      %v4451 = vld [vmem:[#allocation2 + $0x12a] sm:$0xff]
      %v4452 = vld [vmem:[#allocation2 + $0x13a] sm:$0xff]
      %v4453 = vld [vmem:[#allocation2 + $0x142] sm:$0xff]
      %v4454 = vld [vmem:[#allocation2 + $0x152] sm:$0xff]
      %v4455 = vld [vmem:[#allocation2 + $0x15a] sm:$0xff]
      %v4456 = vld [vmem:[#allocation2 + $0x16a] sm:$0xff]
      %v4457 = vld [vmem:[#allocation2 + $0x172] sm:$0xff]
      %s4458 = scalar_lea.vmem %s4, 256
      %v4459 = vld [vmem:[%s4458] sm:$0xff]
      %v4460 = vld [vmem:[%s4458 + $0x8] sm:$0xff]
      %v4461 = vld [vmem:[%s4458 + $0x10] sm:$0xff]
      %v4462 = vld [vmem:[%s4458 + $0x18] sm:$0xff]
      %v4463 = vld [vmem:[%s4458 + $0x20] sm:$0xff]
      %v4464 = vld [vmem:[%s4458 + $0x28] sm:$0xff]
      %v4465 = vld [vmem:[%s4458 + $0x30] sm:$0xff]
      %v4466 = vld [vmem:[%s4458 + $0x38] sm:$0xff]
      %v4467 = vld [vmem:[%s4458 + $0x40] sm:$0xff]
      %v4468 = vld [vmem:[%s4458 + $0x48] sm:$0xff]
      %v4469 = vld [vmem:[%s4458 + $0x50] sm:$0xff]
      %v4470 = vld [vmem:[%s4458 + $0x58] sm:$0xff]
      %v4471 = vld [vmem:[%s4458 + $0x60] sm:$0xff]
      %v4472 = vld [vmem:[%s4458 + $0x68] sm:$0xff]
      %v4473 = vld [vmem:[%s4458 + $0x70] sm:$0xff]
      %v4474 = vld [vmem:[%s4458 + $0x78] sm:$0xff]
      %4475 = vmatprep.subr.mxu0 0.0
      %4476 = vmatpush1.msra.mxu0 %v4474
      %4477 = vmatprep.subr.mxu0 0.0
      %4478 = vmatpush1.msra.mxu0 %v4473
      %4479 = vmatprep.subr.mxu0 0.0
      %4480 = vmatpush1.msra.mxu0 %v4472
      %4481 = vmatprep.subr.mxu0 0.0
      %4482 = vmatpush1.msra.mxu0 %v4471
      %4483 = vmatprep.subr.mxu0 0.0
      %4484 = vmatpush1.msra.mxu0 %v4470
      %4485 = vmatprep.subr.mxu0 0.0
      %4486 = vmatpush1.msra.mxu0 %v4469
      %4487 = vmatprep.subr.mxu0 0.0
      %4488 = vmatpush1.msra.mxu0 %v4468
      %4489 = vmatprep.subr.mxu0 0.0
      %4490 = vmatpush1.msra.mxu0 %v4467
      %4491 = vmatprep.subr.mxu0 0.0
      %4492 = vmatpush1.msra.mxu0 %v4466
      %4493 = vmatprep.subr.mxu0 0.0
      %4494 = vmatpush1.msra.mxu0 %v4465
      %4495 = vmatprep.subr.mxu0 0.0
      %4496 = vmatpush1.msra.mxu0 %v4464
      %4497 = vmatprep.subr.mxu0 0.0
      %4498 = vmatpush1.msra.mxu0 %v4463
      %4499 = vmatprep.subr.mxu0 0.0
      %4500 = vmatpush1.msra.mxu0 %v4462
      %4501 = vmatprep.subr.mxu0 0.0
      %4502 = vmatpush1.msra.mxu0 %v4461
      %4503 = vmatprep.subr.mxu0 0.0
      %4504 = vmatpush1.msra.mxu0 %v4460
      %4505 = vmatprep.subr.mxu0 0.0
      %4506 = vmatpush1.msra.mxu0 %v4459
      %4507 = vmatprep.subr.mxu0 0.0
      %4508 = vmatpush2.msra.mxu0 0.0
      %4509 = vmatprep.subr.mxu0 0.0
      %4510 = vmatpush2.msra.mxu0 0.0
      %4511 = vmatprep.subr.mxu0 0.0
      %4512 = vmatpush2.msra.mxu0 0.0
      %4513 = vmatprep.subr.mxu0 0.0
      %4514 = vmatpush2.msra.mxu0 0.0
      %4515 = vmatprep.subr.mxu0 0.0
      %4516 = vmatpush2.msra.mxu0 0.0
      %4517 = vmatprep.subr.mxu0 0.0
      %4518 = vmatpush2.msra.mxu0 0.0
      %4519 = vmatprep.subr.mxu0 0.0
      %4520 = vmatpush2.msra.mxu0 0.0
      %4521 = vmatprep.subr.mxu0 0.0
      %4522 = vmatpush2.msra.mxu0 0.0
      %4523 = vmatprep.subr.mxu0 0.0
      %4524 = vmatpush2.msra.mxu0 0.0
      %4525 = vmatprep.subr.mxu0 0.0
      %4526 = vmatpush2.msra.mxu0 0.0
      %4527 = vmatprep.subr.mxu0 0.0
      %4528 = vmatpush2.msra.mxu0 0.0
      %4529 = vmatprep.subr.mxu0 0.0
      %4530 = vmatpush2.msra.mxu0 0.0
      %4531 = vmatprep.subr.mxu0 0.0
      %4532 = vmatpush2.msra.mxu0 0.0
      %4533 = vmatprep.subr.mxu0 0.0
      %4534 = vmatpush2.msra.mxu0 0.0
      %4535 = vmatprep.subr.mxu0 0.0
      %4536 = vmatpush2.msra.mxu0 0.0
      %4537 = vmatprep.subr.mxu0 0.0
      %4538 = vmatpush2.msra.mxu0 0.0
      %4539 = vmatprep.mubr.f32.mxu0 0.0
      %4540 = vmatmul.mubr.f32.gmra.mxu0 %v4426
      %v4541 = vpop.f32.mrf.mxu0
      %v4542 = vadd.f32 0.0, %v4541
      %v4543 = vpop.f32.mrf.mxu0
      %4544 = vmatprep.mubr.f32.mxu0 0.0
      %4545 = vmatmul.mubr.f32.gmra.mxu0 %v4427
      %v4546 = vpop.f32.mrf.mxu0
      %v4547 = vadd.f32 0.0, %v4546
      %v4548 = vpop.f32.mrf.mxu0
      %4549 = vmatprep.mubr.f32.mxu0 0.0
      %4550 = vmatmul.mubr.f32.gmra.mxu0 %v4428
      %v4551 = vpop.f32.mrf.mxu0
      %v4552 = vadd.f32 0.0, %v4551
      %v4553 = vpop.f32.mrf.mxu0
      %4554 = vmatprep.mubr.f32.mxu0 0.0
      %4555 = vmatmul.mubr.f32.gmra.mxu0 %v4429
      %v4556 = vpop.f32.mrf.mxu0
      %v4557 = vadd.f32 0.0, %v4556
      %v4558 = vpop.f32.mrf.mxu0
      %4559 = vmatprep.mubr.f32.mxu0 0.0
      %4560 = vmatmul.mubr.f32.gmra.mxu0 %v4430
      %v4561 = vpop.f32.mrf.mxu0
      %v4562 = vadd.f32 0.0, %v4561
      %v4563 = vpop.f32.mrf.mxu0
      %4564 = vmatprep.mubr.f32.mxu0 0.0
      %4565 = vmatmul.mubr.f32.gmra.mxu0 %v4431
      %v4566 = vpop.f32.mrf.mxu0
      %v4567 = vadd.f32 0.0, %v4566
      %v4568 = vpop.f32.mrf.mxu0
      %4569 = vmatprep.mubr.f32.mxu0 0.0
      %4570 = vmatmul.mubr.f32.gmra.mxu0 %v4432
      %v4571 = vpop.f32.mrf.mxu0
      %v4572 = vadd.f32 0.0, %v4571
      %v4573 = vpop.f32.mrf.mxu0
      %4574 = vmatprep.mubr.f32.mxu0 0.0
      %4575 = vmatmul.mubr.f32.gmra.mxu0 %v4433
      %v4576 = vpop.f32.mrf.mxu0
      %v4577 = vadd.f32 0.0, %v4576
      %v4578 = vpop.f32.mrf.mxu0
      %4579 = vmatprep.mubr.f32.mxu0 0.0
      %4580 = vmatmul.mubr.f32.gmra.mxu0 %v4434
      %v4581 = vpop.f32.mrf.mxu0
      %v4582 = vadd.f32 0.0, %v4581
      %v4583 = vpop.f32.mrf.mxu0
      %4584 = vmatprep.mubr.f32.mxu0 0.0
      %4585 = vmatmul.mubr.f32.gmra.mxu0 %v4435
      %v4586 = vpop.f32.mrf.mxu0
      %v4587 = vadd.f32 0.0, %v4586
      %v4588 = vpop.f32.mrf.mxu0
      %4589 = vmatprep.mubr.f32.mxu0 0.0
      %4590 = vmatmul.mubr.f32.gmra.mxu0 %v4436
      %v4591 = vpop.f32.mrf.mxu0
      %v4592 = vadd.f32 0.0, %v4591
      %v4593 = vpop.f32.mrf.mxu0
      %4594 = vmatprep.mubr.f32.mxu0 0.0
      %4595 = vmatmul.mubr.f32.gmra.mxu0 %v4437
      %v4596 = vpop.f32.mrf.mxu0
      %v4597 = vadd.f32 0.0, %v4596
      %v4598 = vpop.f32.mrf.mxu0
      %4599 = vmatprep.mubr.f32.mxu0 0.0
      %4600 = vmatmul.mubr.f32.gmra.mxu0 %v4438
      %v4601 = vpop.f32.mrf.mxu0
      %v4602 = vadd.f32 0.0, %v4601
      %v4603 = vpop.f32.mrf.mxu0
      %4604 = vmatprep.mubr.f32.mxu0 0.0
      %4605 = vmatmul.mubr.f32.gmra.mxu0 %v4439
      %v4606 = vpop.f32.mrf.mxu0
      %v4607 = vadd.f32 0.0, %v4606
      %v4608 = vpop.f32.mrf.mxu0
      %4609 = vmatprep.mubr.f32.mxu0 0.0
      %4610 = vmatmul.mubr.f32.gmra.mxu0 %v4440
      %v4611 = vpop.f32.mrf.mxu0
      %v4612 = vadd.f32 0.0, %v4611
      %v4613 = vpop.f32.mrf.mxu0
      %4614 = vmatprep.mubr.f32.mxu0 0.0
      %4615 = vmatmul.mubr.f32.gmra.mxu0 %v4441
      %v4616 = vpop.f32.mrf.mxu0
      %v4617 = vadd.f32 0.0, %v4616
      %v4618 = vpop.f32.mrf.mxu0
      %4619 = vmatprep.mubr.f32.mxu0 0.0
      %4620 = vmatmul.mubr.f32.gmra.mxu0 %v4442
      %v4621 = vpop.f32.mrf.mxu0
      %v4622 = vadd.f32 0.0, %v4621
      %v4623 = vpop.f32.mrf.mxu0
      %4624 = vmatprep.mubr.f32.mxu0 0.0
      %4625 = vmatmul.mubr.f32.gmra.mxu0 %v4443
      %v4626 = vpop.f32.mrf.mxu0
      %v4627 = vadd.f32 0.0, %v4626
      %v4628 = vpop.f32.mrf.mxu0
      %4629 = vmatprep.mubr.f32.mxu0 0.0
      %4630 = vmatmul.mubr.f32.gmra.mxu0 %v4444
      %v4631 = vpop.f32.mrf.mxu0
      %v4632 = vadd.f32 0.0, %v4631
      %v4633 = vpop.f32.mrf.mxu0
      %4634 = vmatprep.mubr.f32.mxu0 0.0
      %4635 = vmatmul.mubr.f32.gmra.mxu0 %v4445
      %v4636 = vpop.f32.mrf.mxu0
      %v4637 = vadd.f32 0.0, %v4636
      %v4638 = vpop.f32.mrf.mxu0
      %4639 = vmatprep.mubr.f32.mxu0 0.0
      %4640 = vmatmul.mubr.f32.gmra.mxu0 %v4446
      %v4641 = vpop.f32.mrf.mxu0
      %v4642 = vadd.f32 0.0, %v4641
      %v4643 = vpop.f32.mrf.mxu0
      %4644 = vmatprep.mubr.f32.mxu0 0.0
      %4645 = vmatmul.mubr.f32.gmra.mxu0 %v4447
      %v4646 = vpop.f32.mrf.mxu0
      %v4647 = vadd.f32 0.0, %v4646
      %v4648 = vpop.f32.mrf.mxu0
      %4649 = vmatprep.mubr.f32.mxu0 0.0
      %4650 = vmatmul.mubr.f32.gmra.mxu0 %v4448
      %v4651 = vpop.f32.mrf.mxu0
      %v4652 = vadd.f32 0.0, %v4651
      %v4653 = vpop.f32.mrf.mxu0
      %4654 = vmatprep.mubr.f32.mxu0 0.0
      %4655 = vmatmul.mubr.f32.gmra.mxu0 %v4449
      %v4656 = vpop.f32.mrf.mxu0
      %v4657 = vadd.f32 0.0, %v4656
      %v4658 = vpop.f32.mrf.mxu0
      %4659 = vmatprep.mubr.f32.mxu0 0.0
      %4660 = vmatmul.mubr.f32.gmra.mxu0 %v4450
      %v4661 = vpop.f32.mrf.mxu0
      %v4662 = vadd.f32 0.0, %v4661
      %v4663 = vpop.f32.mrf.mxu0
      %4664 = vmatprep.mubr.f32.mxu0 0.0
      %4665 = vmatmul.mubr.f32.gmra.mxu0 %v4451
      %v4666 = vpop.f32.mrf.mxu0
      %v4667 = vadd.f32 0.0, %v4666
      %v4668 = vpop.f32.mrf.mxu0
      %4669 = vmatprep.mubr.f32.mxu0 0.0
      %4670 = vmatmul.mubr.f32.gmra.mxu0 %v4452
      %v4671 = vpop.f32.mrf.mxu0
      %v4672 = vadd.f32 0.0, %v4671
      %v4673 = vpop.f32.mrf.mxu0
      %4674 = vmatprep.mubr.f32.mxu0 0.0
      %4675 = vmatmul.mubr.f32.gmra.mxu0 %v4453
      %v4676 = vpop.f32.mrf.mxu0
      %v4677 = vadd.f32 0.0, %v4676
      %v4678 = vpop.f32.mrf.mxu0
      %4679 = vmatprep.mubr.f32.mxu0 0.0
      %4680 = vmatmul.mubr.f32.gmra.mxu0 %v4454
      %v4681 = vpop.f32.mrf.mxu0
      %v4682 = vadd.f32 0.0, %v4681
      %v4683 = vpop.f32.mrf.mxu0
      %4684 = vmatprep.mubr.f32.mxu0 0.0
      %4685 = vmatmul.mubr.f32.gmra.mxu0 %v4455
      %v4686 = vpop.f32.mrf.mxu0
      %v4687 = vadd.f32 0.0, %v4686
      %v4688 = vpop.f32.mrf.mxu0
      %4689 = vmatprep.mubr.f32.mxu0 0.0
      %4690 = vmatmul.mubr.f32.gmra.mxu0 %v4456
      %v4691 = vpop.f32.mrf.mxu0
      %v4692 = vadd.f32 0.0, %v4691
      %v4693 = vpop.f32.mrf.mxu0
      %4694 = vmatprep.mubr.f32.mxu0 0.0
      %4695 = vmatmul.mubr.f32.gmra.mxu0 %v4457
      %v4696 = vpop.f32.mrf.mxu0
      %v4697 = vadd.f32 0.0, %v4696
      %v4698 = vpop.f32.mrf.mxu0
      %4699 = vdwg.mxu0
      %v4700 = vadd.f32 %v4268, %v4542
      %v4701 = vadd.f32 %v4273, %v4547
      %v4702 = vadd.f32 %v4278, %v4552
      %v4703 = vadd.f32 %v4283, %v4557
      %v4704 = vadd.f32 %v4288, %v4562
      %v4705 = vadd.f32 %v4293, %v4567
      %v4706 = vadd.f32 %v4298, %v4572
      %v4707 = vadd.f32 %v4303, %v4577
      %v4708 = vadd.f32 %v4308, %v4582
      %v4709 = vadd.f32 %v4313, %v4587
      %v4710 = vadd.f32 %v4318, %v4592
      %v4711 = vadd.f32 %v4323, %v4597
      %v4712 = vadd.f32 %v4328, %v4602
      %v4713 = vadd.f32 %v4333, %v4607
      %v4714 = vadd.f32 %v4338, %v4612
      %v4715 = vadd.f32 %v4343, %v4617
      %v4716 = vadd.f32 %v4348, %v4622
      %v4717 = vadd.f32 %v4353, %v4627
      %v4718 = vadd.f32 %v4358, %v4632
      %v4719 = vadd.f32 %v4363, %v4637
      %v4720 = vadd.f32 %v4368, %v4642
      %v4721 = vadd.f32 %v4373, %v4647
      %v4722 = vadd.f32 %v4378, %v4652
      %v4723 = vadd.f32 %v4383, %v4657
      %v4724 = vadd.f32 %v4388, %v4662
      %v4725 = vadd.f32 %v4393, %v4667
      %v4726 = vadd.f32 %v4398, %v4672
      %v4727 = vadd.f32 %v4403, %v4677
      %v4728 = vadd.f32 %v4408, %v4682
      %v4729 = vadd.f32 %v4413, %v4687
      %v4730 = vadd.f32 %v4418, %v4692
      %v4731 = vadd.f32 %v4423, %v4697
      %v4732 = vld [vmem:[%s536] sm:$0xff]
      %v4733 = vld [vmem:[%s536 + $0x8] sm:$0xff]
      %v4734 = vld [vmem:[%s536 + $0x18] sm:$0xff]
      %v4735 = vld [vmem:[%s536 + $0x20] sm:$0xff]
      %v4736 = vld [vmem:[%s536 + $0x30] sm:$0xff]
      %v4737 = vld [vmem:[%s536 + $0x38] sm:$0xff]
      %v4738 = vld [vmem:[%s536 + $0x48] sm:$0xff]
      %v4739 = vld [vmem:[%s536 + $0x50] sm:$0xff]
      %v4740 = vld [vmem:[%s536 + $0x60] sm:$0xff]
      %v4741 = vld [vmem:[%s536 + $0x68] sm:$0xff]
      %v4742 = vld [vmem:[%s536 + $0x78] sm:$0xff]
      %v4743 = vld [vmem:[%s536 + $0x80] sm:$0xff]
      %v4744 = vld [vmem:[%s536 + $0x90] sm:$0xff]
      %v4745 = vld [vmem:[%s536 + $0x98] sm:$0xff]
      %v4746 = vld [vmem:[%s536 + $0xa8] sm:$0xff]
      %v4747 = vld [vmem:[%s536 + $0xb0] sm:$0xff]
      %v4748 = vld [vmem:[%s536 + $0xc0] sm:$0xff]
      %v4749 = vld [vmem:[%s536 + $0xc8] sm:$0xff]
      %v4750 = vld [vmem:[%s536 + $0xd8] sm:$0xff]
      %v4751 = vld [vmem:[%s536 + $0xe0] sm:$0xff]
      %v4752 = vld [vmem:[%s536 + $0xf0] sm:$0xff]
      %v4753 = vld [vmem:[%s536 + $0xf8] sm:$0xff]
      %v4754 = vld [vmem:[%s536 + $0x108] sm:$0xff]
      %v4755 = vld [vmem:[%s536 + $0x110] sm:$0xff]
      %v4756 = vld [vmem:[%s536 + $0x120] sm:$0xff]
      %v4757 = vld [vmem:[%s536 + $0x128] sm:$0xff]
      %v4758 = vld [vmem:[%s536 + $0x138] sm:$0xff]
      %v4759 = vld [vmem:[%s536 + $0x140] sm:$0xff]
      %v4760 = vld [vmem:[%s536 + $0x150] sm:$0xff]
      %v4761 = vld [vmem:[%s536 + $0x158] sm:$0xff]
      %v4762 = vld [vmem:[%s536 + $0x168] sm:$0xff]
      %v4763 = vld [vmem:[%s536 + $0x170] sm:$0xff]
      %s4764 = scalar_lea.vmem %s4, 384
      %v4765 = vld [vmem:[%s4764] sm:$0xff]
      %v4766 = vld [vmem:[%s4764 + $0x8] sm:$0xff]
      %v4767 = vld [vmem:[%s4764 + $0x10] sm:$0xff]
      %v4768 = vld [vmem:[%s4764 + $0x18] sm:$0xff]
      %v4769 = vld [vmem:[%s4764 + $0x20] sm:$0xff]
      %v4770 = vld [vmem:[%s4764 + $0x28] sm:$0xff]
      %v4771 = vld [vmem:[%s4764 + $0x30] sm:$0xff]
      %v4772 = vld [vmem:[%s4764 + $0x38] sm:$0xff]
      %v4773 = vld [vmem:[%s4764 + $0x40] sm:$0xff]
      %v4774 = vld [vmem:[%s4764 + $0x48] sm:$0xff]
      %v4775 = vld [vmem:[%s4764 + $0x50] sm:$0xff]
      %v4776 = vld [vmem:[%s4764 + $0x58] sm:$0xff]
      %v4777 = vld [vmem:[%s4764 + $0x60] sm:$0xff]
      %v4778 = vld [vmem:[%s4764 + $0x68] sm:$0xff]
      %v4779 = vld [vmem:[%s4764 + $0x70] sm:$0xff]
      %v4780 = vld [vmem:[%s4764 + $0x78] sm:$0xff]
      %4781 = vmatprep.subr.mxu0 0.0
      %4782 = vmatpush1.msra.mxu0 %v4780
      %4783 = vmatprep.subr.mxu0 0.0
      %4784 = vmatpush1.msra.mxu0 %v4779
      %4785 = vmatprep.subr.mxu0 0.0
      %4786 = vmatpush1.msra.mxu0 %v4778
      %4787 = vmatprep.subr.mxu0 0.0
      %4788 = vmatpush1.msra.mxu0 %v4777
      %4789 = vmatprep.subr.mxu0 0.0
      %4790 = vmatpush1.msra.mxu0 %v4776
      %4791 = vmatprep.subr.mxu0 0.0
      %4792 = vmatpush1.msra.mxu0 %v4775
      %4793 = vmatprep.subr.mxu0 0.0
      %4794 = vmatpush1.msra.mxu0 %v4774
      %4795 = vmatprep.subr.mxu0 0.0
      %4796 = vmatpush1.msra.mxu0 %v4773
      %4797 = vmatprep.subr.mxu0 0.0
      %4798 = vmatpush1.msra.mxu0 %v4772
      %4799 = vmatprep.subr.mxu0 0.0
      %4800 = vmatpush1.msra.mxu0 %v4771
      %4801 = vmatprep.subr.mxu0 0.0
      %4802 = vmatpush1.msra.mxu0 %v4770
      %4803 = vmatprep.subr.mxu0 0.0
      %4804 = vmatpush1.msra.mxu0 %v4769
      %4805 = vmatprep.subr.mxu0 0.0
      %4806 = vmatpush1.msra.mxu0 %v4768
      %4807 = vmatprep.subr.mxu0 0.0
      %4808 = vmatpush1.msra.mxu0 %v4767
      %4809 = vmatprep.subr.mxu0 0.0
      %4810 = vmatpush1.msra.mxu0 %v4766
      %4811 = vmatprep.subr.mxu0 0.0
      %4812 = vmatpush1.msra.mxu0 %v4765
      %4813 = vmatprep.subr.mxu0 0.0
      %4814 = vmatpush2.msra.mxu0 0.0
      %4815 = vmatprep.subr.mxu0 0.0
      %4816 = vmatpush2.msra.mxu0 0.0
      %4817 = vmatprep.subr.mxu0 0.0
      %4818 = vmatpush2.msra.mxu0 0.0
      %4819 = vmatprep.subr.mxu0 0.0
      %4820 = vmatpush2.msra.mxu0 0.0
      %4821 = vmatprep.subr.mxu0 0.0
      %4822 = vmatpush2.msra.mxu0 0.0
      %4823 = vmatprep.subr.mxu0 0.0
      %4824 = vmatpush2.msra.mxu0 0.0
      %4825 = vmatprep.subr.mxu0 0.0
      %4826 = vmatpush2.msra.mxu0 0.0
      %4827 = vmatprep.subr.mxu0 0.0
      %4828 = vmatpush2.msra.mxu0 0.0
      %4829 = vmatprep.subr.mxu0 0.0
      %4830 = vmatpush2.msra.mxu0 0.0
      %4831 = vmatprep.subr.mxu0 0.0
      %4832 = vmatpush2.msra.mxu0 0.0
      %4833 = vmatprep.subr.mxu0 0.0
      %4834 = vmatpush2.msra.mxu0 0.0
      %4835 = vmatprep.subr.mxu0 0.0
      %4836 = vmatpush2.msra.mxu0 0.0
      %4837 = vmatprep.subr.mxu0 0.0
      %4838 = vmatpush2.msra.mxu0 0.0
      %4839 = vmatprep.subr.mxu0 0.0
      %4840 = vmatpush2.msra.mxu0 0.0
      %4841 = vmatprep.subr.mxu0 0.0
      %4842 = vmatpush2.msra.mxu0 0.0
      %4843 = vmatprep.subr.mxu0 0.0
      %4844 = vmatpush2.msra.mxu0 0.0
      %4845 = vmatprep.mubr.f32.mxu0 0.0
      %4846 = vmatmul.mubr.f32.gmra.mxu0 %v4732
      %v4847 = vpop.f32.mrf.mxu0
      %v4848 = vadd.f32 0.0, %v4847
      %v4849 = vpop.f32.mrf.mxu0
      %4850 = vmatprep.mubr.f32.mxu0 0.0
      %4851 = vmatmul.mubr.f32.gmra.mxu0 %v4733
      %v4852 = vpop.f32.mrf.mxu0
      %v4853 = vadd.f32 0.0, %v4852
      %v4854 = vpop.f32.mrf.mxu0
      %4855 = vmatprep.mubr.f32.mxu0 0.0
      %4856 = vmatmul.mubr.f32.gmra.mxu0 %v4734
      %v4857 = vpop.f32.mrf.mxu0
      %v4858 = vadd.f32 0.0, %v4857
      %v4859 = vpop.f32.mrf.mxu0
      %4860 = vmatprep.mubr.f32.mxu0 0.0
      %4861 = vmatmul.mubr.f32.gmra.mxu0 %v4735
      %v4862 = vpop.f32.mrf.mxu0
      %v4863 = vadd.f32 0.0, %v4862
      %v4864 = vpop.f32.mrf.mxu0
      %4865 = vmatprep.mubr.f32.mxu0 0.0
      %4866 = vmatmul.mubr.f32.gmra.mxu0 %v4736
      %v4867 = vpop.f32.mrf.mxu0
      %v4868 = vadd.f32 0.0, %v4867
      %v4869 = vpop.f32.mrf.mxu0
      %4870 = vmatprep.mubr.f32.mxu0 0.0
      %4871 = vmatmul.mubr.f32.gmra.mxu0 %v4737
      %v4872 = vpop.f32.mrf.mxu0
      %v4873 = vadd.f32 0.0, %v4872
      %v4874 = vpop.f32.mrf.mxu0
      %4875 = vmatprep.mubr.f32.mxu0 0.0
      %4876 = vmatmul.mubr.f32.gmra.mxu0 %v4738
      %v4877 = vpop.f32.mrf.mxu0
      %v4878 = vadd.f32 0.0, %v4877
      %v4879 = vpop.f32.mrf.mxu0
      %4880 = vmatprep.mubr.f32.mxu0 0.0
      %4881 = vmatmul.mubr.f32.gmra.mxu0 %v4739
      %v4882 = vpop.f32.mrf.mxu0
      %v4883 = vadd.f32 0.0, %v4882
      %v4884 = vpop.f32.mrf.mxu0
      %4885 = vmatprep.mubr.f32.mxu0 0.0
      %4886 = vmatmul.mubr.f32.gmra.mxu0 %v4740
      %v4887 = vpop.f32.mrf.mxu0
      %v4888 = vadd.f32 0.0, %v4887
      %v4889 = vpop.f32.mrf.mxu0
      %4890 = vmatprep.mubr.f32.mxu0 0.0
      %4891 = vmatmul.mubr.f32.gmra.mxu0 %v4741
      %v4892 = vpop.f32.mrf.mxu0
      %v4893 = vadd.f32 0.0, %v4892
      %v4894 = vpop.f32.mrf.mxu0
      %4895 = vmatprep.mubr.f32.mxu0 0.0
      %4896 = vmatmul.mubr.f32.gmra.mxu0 %v4742
      %v4897 = vpop.f32.mrf.mxu0
      %v4898 = vadd.f32 0.0, %v4897
      %v4899 = vpop.f32.mrf.mxu0
      %4900 = vmatprep.mubr.f32.mxu0 0.0
      %4901 = vmatmul.mubr.f32.gmra.mxu0 %v4743
      %v4902 = vpop.f32.mrf.mxu0
      %v4903 = vadd.f32 0.0, %v4902
      %v4904 = vpop.f32.mrf.mxu0
      %4905 = vmatprep.mubr.f32.mxu0 0.0
      %4906 = vmatmul.mubr.f32.gmra.mxu0 %v4744
      %v4907 = vpop.f32.mrf.mxu0
      %v4908 = vadd.f32 0.0, %v4907
      %v4909 = vpop.f32.mrf.mxu0
      %4910 = vmatprep.mubr.f32.mxu0 0.0
      %4911 = vmatmul.mubr.f32.gmra.mxu0 %v4745
      %v4912 = vpop.f32.mrf.mxu0
      %v4913 = vadd.f32 0.0, %v4912
      %v4914 = vpop.f32.mrf.mxu0
      %4915 = vmatprep.mubr.f32.mxu0 0.0
      %4916 = vmatmul.mubr.f32.gmra.mxu0 %v4746
      %v4917 = vpop.f32.mrf.mxu0
      %v4918 = vadd.f32 0.0, %v4917
      %v4919 = vpop.f32.mrf.mxu0
      %4920 = vmatprep.mubr.f32.mxu0 0.0
      %4921 = vmatmul.mubr.f32.gmra.mxu0 %v4747
      %v4922 = vpop.f32.mrf.mxu0
      %v4923 = vadd.f32 0.0, %v4922
      %v4924 = vpop.f32.mrf.mxu0
      %4925 = vmatprep.mubr.f32.mxu0 0.0
      %4926 = vmatmul.mubr.f32.gmra.mxu0 %v4748
      %v4927 = vpop.f32.mrf.mxu0
      %v4928 = vadd.f32 0.0, %v4927
      %v4929 = vpop.f32.mrf.mxu0
      %4930 = vmatprep.mubr.f32.mxu0 0.0
      %4931 = vmatmul.mubr.f32.gmra.mxu0 %v4749
      %v4932 = vpop.f32.mrf.mxu0
      %v4933 = vadd.f32 0.0, %v4932
      %v4934 = vpop.f32.mrf.mxu0
      %4935 = vmatprep.mubr.f32.mxu0 0.0
      %4936 = vmatmul.mubr.f32.gmra.mxu0 %v4750
      %v4937 = vpop.f32.mrf.mxu0
      %v4938 = vadd.f32 0.0, %v4937
      %v4939 = vpop.f32.mrf.mxu0
      %4940 = vmatprep.mubr.f32.mxu0 0.0
      %4941 = vmatmul.mubr.f32.gmra.mxu0 %v4751
      %v4942 = vpop.f32.mrf.mxu0
      %v4943 = vadd.f32 0.0, %v4942
      %v4944 = vpop.f32.mrf.mxu0
      %4945 = vmatprep.mubr.f32.mxu0 0.0
      %4946 = vmatmul.mubr.f32.gmra.mxu0 %v4752
      %v4947 = vpop.f32.mrf.mxu0
      %v4948 = vadd.f32 0.0, %v4947
      %v4949 = vpop.f32.mrf.mxu0
      %4950 = vmatprep.mubr.f32.mxu0 0.0
      %4951 = vmatmul.mubr.f32.gmra.mxu0 %v4753
      %v4952 = vpop.f32.mrf.mxu0
      %v4953 = vadd.f32 0.0, %v4952
      %v4954 = vpop.f32.mrf.mxu0
      %4955 = vmatprep.mubr.f32.mxu0 0.0
      %4956 = vmatmul.mubr.f32.gmra.mxu0 %v4754
      %v4957 = vpop.f32.mrf.mxu0
      %v4958 = vadd.f32 0.0, %v4957
      %v4959 = vpop.f32.mrf.mxu0
      %4960 = vmatprep.mubr.f32.mxu0 0.0
      %4961 = vmatmul.mubr.f32.gmra.mxu0 %v4755
      %v4962 = vpop.f32.mrf.mxu0
      %v4963 = vadd.f32 0.0, %v4962
      %v4964 = vpop.f32.mrf.mxu0
      %4965 = vmatprep.mubr.f32.mxu0 0.0
      %4966 = vmatmul.mubr.f32.gmra.mxu0 %v4756
      %v4967 = vpop.f32.mrf.mxu0
      %v4968 = vadd.f32 0.0, %v4967
      %v4969 = vpop.f32.mrf.mxu0
      %4970 = vmatprep.mubr.f32.mxu0 0.0
      %4971 = vmatmul.mubr.f32.gmra.mxu0 %v4757
      %v4972 = vpop.f32.mrf.mxu0
      %v4973 = vadd.f32 0.0, %v4972
      %v4974 = vpop.f32.mrf.mxu0
      %4975 = vmatprep.mubr.f32.mxu0 0.0
      %4976 = vmatmul.mubr.f32.gmra.mxu0 %v4758
      %v4977 = vpop.f32.mrf.mxu0
      %v4978 = vadd.f32 0.0, %v4977
      %v4979 = vpop.f32.mrf.mxu0
      %4980 = vmatprep.mubr.f32.mxu0 0.0
      %4981 = vmatmul.mubr.f32.gmra.mxu0 %v4759
      %v4982 = vpop.f32.mrf.mxu0
      %v4983 = vadd.f32 0.0, %v4982
      %v4984 = vpop.f32.mrf.mxu0
      %4985 = vmatprep.mubr.f32.mxu0 0.0
      %4986 = vmatmul.mubr.f32.gmra.mxu0 %v4760
      %v4987 = vpop.f32.mrf.mxu0
      %v4988 = vadd.f32 0.0, %v4987
      %v4989 = vpop.f32.mrf.mxu0
      %4990 = vmatprep.mubr.f32.mxu0 0.0
      %4991 = vmatmul.mubr.f32.gmra.mxu0 %v4761
      %v4992 = vpop.f32.mrf.mxu0
      %v4993 = vadd.f32 0.0, %v4992
      %v4994 = vpop.f32.mrf.mxu0
      %4995 = vmatprep.mubr.f32.mxu0 0.0
      %4996 = vmatmul.mubr.f32.gmra.mxu0 %v4762
      %v4997 = vpop.f32.mrf.mxu0
      %v4998 = vadd.f32 0.0, %v4997
      %v4999 = vpop.f32.mrf.mxu0
      %5000 = vmatprep.mubr.f32.mxu0 0.0
      %5001 = vmatmul.mubr.f32.gmra.mxu0 %v4763
      %v5002 = vpop.f32.mrf.mxu0
      %v5003 = vadd.f32 0.0, %v5002
      %v5004 = vpop.f32.mrf.mxu0
      %5005 = vdwg.mxu0
      %v5006 = vadd.f32 %v4700, %v4848
      %v5007 = vadd.f32 %v4701, %v4853
      %v5008 = vadd.f32 %v4702, %v4858
      %v5009 = vadd.f32 %v4703, %v4863
      %v5010 = vadd.f32 %v4704, %v4868
      %v5011 = vadd.f32 %v4705, %v4873
      %v5012 = vadd.f32 %v4706, %v4878
      %v5013 = vadd.f32 %v4707, %v4883
      %v5014 = vadd.f32 %v4708, %v4888
      %v5015 = vadd.f32 %v4709, %v4893
      %v5016 = vadd.f32 %v4710, %v4898
      %v5017 = vadd.f32 %v4711, %v4903
      %v5018 = vadd.f32 %v4712, %v4908
      %v5019 = vadd.f32 %v4713, %v4913
      %v5020 = vadd.f32 %v4714, %v4918
      %v5021 = vadd.f32 %v4715, %v4923
      %v5022 = vadd.f32 %v4716, %v4928
      %v5023 = vadd.f32 %v4717, %v4933
      %v5024 = vadd.f32 %v4718, %v4938
      %v5025 = vadd.f32 %v4719, %v4943
      %v5026 = vadd.f32 %v4720, %v4948
      %v5027 = vadd.f32 %v4721, %v4953
      %v5028 = vadd.f32 %v4722, %v4958
      %v5029 = vadd.f32 %v4723, %v4963
      %v5030 = vadd.f32 %v4724, %v4968
      %v5031 = vadd.f32 %v4725, %v4973
      %v5032 = vadd.f32 %v4726, %v4978
      %v5033 = vadd.f32 %v4727, %v4983
      %v5034 = vadd.f32 %v4728, %v4988
      %v5035 = vadd.f32 %v4729, %v4993
      %v5036 = vadd.f32 %v4730, %v4998
      %v5037 = vadd.f32 %v4731, %v5003
      %v5038 = vld [vmem:[%s536 + $0x1] sm:$0xff]
      %v5039 = vld [vmem:[%s536 + $0x9] sm:$0xff]
      %v5040 = vld [vmem:[%s536 + $0x19] sm:$0xff]
      %v5041 = vld [vmem:[%s536 + $0x21] sm:$0xff]
      %v5042 = vld [vmem:[%s536 + $0x31] sm:$0xff]
      %v5043 = vld [vmem:[%s536 + $0x39] sm:$0xff]
      %v5044 = vld [vmem:[%s536 + $0x49] sm:$0xff]
      %v5045 = vld [vmem:[%s536 + $0x51] sm:$0xff]
      %v5046 = vld [vmem:[%s536 + $0x61] sm:$0xff]
      %v5047 = vld [vmem:[%s536 + $0x69] sm:$0xff]
      %v5048 = vld [vmem:[%s536 + $0x79] sm:$0xff]
      %v5049 = vld [vmem:[%s536 + $0x81] sm:$0xff]
      %v5050 = vld [vmem:[%s536 + $0x91] sm:$0xff]
      %v5051 = vld [vmem:[%s536 + $0x99] sm:$0xff]
      %v5052 = vld [vmem:[%s536 + $0xa9] sm:$0xff]
      %v5053 = vld [vmem:[%s536 + $0xb1] sm:$0xff]
      %v5054 = vld [vmem:[%s536 + $0xc1] sm:$0xff]
      %v5055 = vld [vmem:[%s536 + $0xc9] sm:$0xff]
      %v5056 = vld [vmem:[%s536 + $0xd9] sm:$0xff]
      %v5057 = vld [vmem:[%s536 + $0xe1] sm:$0xff]
      %v5058 = vld [vmem:[%s536 + $0xf1] sm:$0xff]
      %v5059 = vld [vmem:[%s536 + $0xf9] sm:$0xff]
      %v5060 = vld [vmem:[%s536 + $0x109] sm:$0xff]
      %v5061 = vld [vmem:[%s536 + $0x111] sm:$0xff]
      %v5062 = vld [vmem:[%s536 + $0x121] sm:$0xff]
      %v5063 = vld [vmem:[%s536 + $0x129] sm:$0xff]
      %v5064 = vld [vmem:[%s536 + $0x139] sm:$0xff]
      %v5065 = vld [vmem:[%s536 + $0x141] sm:$0xff]
      %v5066 = vld [vmem:[%s536 + $0x151] sm:$0xff]
      %v5067 = vld [vmem:[%s536 + $0x159] sm:$0xff]
      %v5068 = vld [vmem:[%s536 + $0x169] sm:$0xff]
      %v5069 = vld [vmem:[%s536 + $0x171] sm:$0xff]
      %s5070 = scalar_lea.vmem %s4, 512
      %v5071 = vld [vmem:[%s5070] sm:$0xff]
      %v5072 = vld [vmem:[%s5070 + $0x8] sm:$0xff]
      %v5073 = vld [vmem:[%s5070 + $0x10] sm:$0xff]
      %v5074 = vld [vmem:[%s5070 + $0x18] sm:$0xff]
      %v5075 = vld [vmem:[%s5070 + $0x20] sm:$0xff]
      %v5076 = vld [vmem:[%s5070 + $0x28] sm:$0xff]
      %v5077 = vld [vmem:[%s5070 + $0x30] sm:$0xff]
      %v5078 = vld [vmem:[%s5070 + $0x38] sm:$0xff]
      %v5079 = vld [vmem:[%s5070 + $0x40] sm:$0xff]
      %v5080 = vld [vmem:[%s5070 + $0x48] sm:$0xff]
      %v5081 = vld [vmem:[%s5070 + $0x50] sm:$0xff]
      %v5082 = vld [vmem:[%s5070 + $0x58] sm:$0xff]
      %v5083 = vld [vmem:[%s5070 + $0x60] sm:$0xff]
      %v5084 = vld [vmem:[%s5070 + $0x68] sm:$0xff]
      %v5085 = vld [vmem:[%s5070 + $0x70] sm:$0xff]
      %v5086 = vld [vmem:[%s5070 + $0x78] sm:$0xff]
      %5087 = vmatprep.subr.mxu0 0.0
      %5088 = vmatpush1.msra.mxu0 %v5086
      %5089 = vmatprep.subr.mxu0 0.0
      %5090 = vmatpush1.msra.mxu0 %v5085
      %5091 = vmatprep.subr.mxu0 0.0
      %5092 = vmatpush1.msra.mxu0 %v5084
      %5093 = vmatprep.subr.mxu0 0.0
      %5094 = vmatpush1.msra.mxu0 %v5083
      %5095 = vmatprep.subr.mxu0 0.0
      %5096 = vmatpush1.msra.mxu0 %v5082
      %5097 = vmatprep.subr.mxu0 0.0
      %5098 = vmatpush1.msra.mxu0 %v5081
      %5099 = vmatprep.subr.mxu0 0.0
      %5100 = vmatpush1.msra.mxu0 %v5080
      %5101 = vmatprep.subr.mxu0 0.0
      %5102 = vmatpush1.msra.mxu0 %v5079
      %5103 = vmatprep.subr.mxu0 0.0
      %5104 = vmatpush1.msra.mxu0 %v5078
      %5105 = vmatprep.subr.mxu0 0.0
      %5106 = vmatpush1.msra.mxu0 %v5077
      %5107 = vmatprep.subr.mxu0 0.0
      %5108 = vmatpush1.msra.mxu0 %v5076
      %5109 = vmatprep.subr.mxu0 0.0
      %5110 = vmatpush1.msra.mxu0 %v5075
      %5111 = vmatprep.subr.mxu0 0.0
      %5112 = vmatpush1.msra.mxu0 %v5074
      %5113 = vmatprep.subr.mxu0 0.0
      %5114 = vmatpush1.msra.mxu0 %v5073
      %5115 = vmatprep.subr.mxu0 0.0
      %5116 = vmatpush1.msra.mxu0 %v5072
      %5117 = vmatprep.subr.mxu0 0.0
      %5118 = vmatpush1.msra.mxu0 %v5071
      %5119 = vmatprep.subr.mxu0 0.0
      %5120 = vmatpush2.msra.mxu0 0.0
      %5121 = vmatprep.subr.mxu0 0.0
      %5122 = vmatpush2.msra.mxu0 0.0
      %5123 = vmatprep.subr.mxu0 0.0
      %5124 = vmatpush2.msra.mxu0 0.0
      %5125 = vmatprep.subr.mxu0 0.0
      %5126 = vmatpush2.msra.mxu0 0.0
      %5127 = vmatprep.subr.mxu0 0.0
      %5128 = vmatpush2.msra.mxu0 0.0
      %5129 = vmatprep.subr.mxu0 0.0
      %5130 = vmatpush2.msra.mxu0 0.0
      %5131 = vmatprep.subr.mxu0 0.0
      %5132 = vmatpush2.msra.mxu0 0.0
      %5133 = vmatprep.subr.mxu0 0.0
      %5134 = vmatpush2.msra.mxu0 0.0
      %5135 = vmatprep.subr.mxu0 0.0
      %5136 = vmatpush2.msra.mxu0 0.0
      %5137 = vmatprep.subr.mxu0 0.0
      %5138 = vmatpush2.msra.mxu0 0.0
      %5139 = vmatprep.subr.mxu0 0.0
      %5140 = vmatpush2.msra.mxu0 0.0
      %5141 = vmatprep.subr.mxu0 0.0
      %5142 = vmatpush2.msra.mxu0 0.0
      %5143 = vmatprep.subr.mxu0 0.0
      %5144 = vmatpush2.msra.mxu0 0.0
      %5145 = vmatprep.subr.mxu0 0.0
      %5146 = vmatpush2.msra.mxu0 0.0
      %5147 = vmatprep.subr.mxu0 0.0
      %5148 = vmatpush2.msra.mxu0 0.0
      %5149 = vmatprep.subr.mxu0 0.0
      %5150 = vmatpush2.msra.mxu0 0.0
      %5151 = vmatprep.mubr.f32.mxu0 0.0
      %5152 = vmatmul.mubr.f32.gmra.mxu0 %v5038
      %v5153 = vpop.f32.mrf.mxu0
      %v5154 = vadd.f32 0.0, %v5153
      %v5155 = vpop.f32.mrf.mxu0
      %5156 = vmatprep.mubr.f32.mxu0 0.0
      %5157 = vmatmul.mubr.f32.gmra.mxu0 %v5039
      %v5158 = vpop.f32.mrf.mxu0
      %v5159 = vadd.f32 0.0, %v5158
      %v5160 = vpop.f32.mrf.mxu0
      %5161 = vmatprep.mubr.f32.mxu0 0.0
      %5162 = vmatmul.mubr.f32.gmra.mxu0 %v5040
      %v5163 = vpop.f32.mrf.mxu0
      %v5164 = vadd.f32 0.0, %v5163
      %v5165 = vpop.f32.mrf.mxu0
      %5166 = vmatprep.mubr.f32.mxu0 0.0
      %5167 = vmatmul.mubr.f32.gmra.mxu0 %v5041
      %v5168 = vpop.f32.mrf.mxu0
      %v5169 = vadd.f32 0.0, %v5168
      %v5170 = vpop.f32.mrf.mxu0
      %5171 = vmatprep.mubr.f32.mxu0 0.0
      %5172 = vmatmul.mubr.f32.gmra.mxu0 %v5042
      %v5173 = vpop.f32.mrf.mxu0
      %v5174 = vadd.f32 0.0, %v5173
      %v5175 = vpop.f32.mrf.mxu0
      %5176 = vmatprep.mubr.f32.mxu0 0.0
      %5177 = vmatmul.mubr.f32.gmra.mxu0 %v5043
      %v5178 = vpop.f32.mrf.mxu0
      %v5179 = vadd.f32 0.0, %v5178
      %v5180 = vpop.f32.mrf.mxu0
      %5181 = vmatprep.mubr.f32.mxu0 0.0
      %5182 = vmatmul.mubr.f32.gmra.mxu0 %v5044
      %v5183 = vpop.f32.mrf.mxu0
      %v5184 = vadd.f32 0.0, %v5183
      %v5185 = vpop.f32.mrf.mxu0
      %5186 = vmatprep.mubr.f32.mxu0 0.0
      %5187 = vmatmul.mubr.f32.gmra.mxu0 %v5045
      %v5188 = vpop.f32.mrf.mxu0
      %v5189 = vadd.f32 0.0, %v5188
      %v5190 = vpop.f32.mrf.mxu0
      %5191 = vmatprep.mubr.f32.mxu0 0.0
      %5192 = vmatmul.mubr.f32.gmra.mxu0 %v5046
      %v5193 = vpop.f32.mrf.mxu0
      %v5194 = vadd.f32 0.0, %v5193
      %v5195 = vpop.f32.mrf.mxu0
      %5196 = vmatprep.mubr.f32.mxu0 0.0
      %5197 = vmatmul.mubr.f32.gmra.mxu0 %v5047
      %v5198 = vpop.f32.mrf.mxu0
      %v5199 = vadd.f32 0.0, %v5198
      %v5200 = vpop.f32.mrf.mxu0
      %5201 = vmatprep.mubr.f32.mxu0 0.0
      %5202 = vmatmul.mubr.f32.gmra.mxu0 %v5048
      %v5203 = vpop.f32.mrf.mxu0
      %v5204 = vadd.f32 0.0, %v5203
      %v5205 = vpop.f32.mrf.mxu0
      %5206 = vmatprep.mubr.f32.mxu0 0.0
      %5207 = vmatmul.mubr.f32.gmra.mxu0 %v5049
      %v5208 = vpop.f32.mrf.mxu0
      %v5209 = vadd.f32 0.0, %v5208
      %v5210 = vpop.f32.mrf.mxu0
      %5211 = vmatprep.mubr.f32.mxu0 0.0
      %5212 = vmatmul.mubr.f32.gmra.mxu0 %v5050
      %v5213 = vpop.f32.mrf.mxu0
      %v5214 = vadd.f32 0.0, %v5213
      %v5215 = vpop.f32.mrf.mxu0
      %5216 = vmatprep.mubr.f32.mxu0 0.0
      %5217 = vmatmul.mubr.f32.gmra.mxu0 %v5051
      %v5218 = vpop.f32.mrf.mxu0
      %v5219 = vadd.f32 0.0, %v5218
      %v5220 = vpop.f32.mrf.mxu0
      %5221 = vmatprep.mubr.f32.mxu0 0.0
      %5222 = vmatmul.mubr.f32.gmra.mxu0 %v5052
      %v5223 = vpop.f32.mrf.mxu0
      %v5224 = vadd.f32 0.0, %v5223
      %v5225 = vpop.f32.mrf.mxu0
      %5226 = vmatprep.mubr.f32.mxu0 0.0
      %5227 = vmatmul.mubr.f32.gmra.mxu0 %v5053
      %v5228 = vpop.f32.mrf.mxu0
      %v5229 = vadd.f32 0.0, %v5228
      %v5230 = vpop.f32.mrf.mxu0
      %5231 = vmatprep.mubr.f32.mxu0 0.0
      %5232 = vmatmul.mubr.f32.gmra.mxu0 %v5054
      %v5233 = vpop.f32.mrf.mxu0
      %v5234 = vadd.f32 0.0, %v5233
      %v5235 = vpop.f32.mrf.mxu0
      %5236 = vmatprep.mubr.f32.mxu0 0.0
      %5237 = vmatmul.mubr.f32.gmra.mxu0 %v5055
      %v5238 = vpop.f32.mrf.mxu0
      %v5239 = vadd.f32 0.0, %v5238
      %v5240 = vpop.f32.mrf.mxu0
      %5241 = vmatprep.mubr.f32.mxu0 0.0
      %5242 = vmatmul.mubr.f32.gmra.mxu0 %v5056
      %v5243 = vpop.f32.mrf.mxu0
      %v5244 = vadd.f32 0.0, %v5243
      %v5245 = vpop.f32.mrf.mxu0
      %5246 = vmatprep.mubr.f32.mxu0 0.0
      %5247 = vmatmul.mubr.f32.gmra.mxu0 %v5057
      %v5248 = vpop.f32.mrf.mxu0
      %v5249 = vadd.f32 0.0, %v5248
      %v5250 = vpop.f32.mrf.mxu0
      %5251 = vmatprep.mubr.f32.mxu0 0.0
      %5252 = vmatmul.mubr.f32.gmra.mxu0 %v5058
      %v5253 = vpop.f32.mrf.mxu0
      %v5254 = vadd.f32 0.0, %v5253
      %v5255 = vpop.f32.mrf.mxu0
      %5256 = vmatprep.mubr.f32.mxu0 0.0
      %5257 = vmatmul.mubr.f32.gmra.mxu0 %v5059
      %v5258 = vpop.f32.mrf.mxu0
      %v5259 = vadd.f32 0.0, %v5258
      %v5260 = vpop.f32.mrf.mxu0
      %5261 = vmatprep.mubr.f32.mxu0 0.0
      %5262 = vmatmul.mubr.f32.gmra.mxu0 %v5060
      %v5263 = vpop.f32.mrf.mxu0
      %v5264 = vadd.f32 0.0, %v5263
      %v5265 = vpop.f32.mrf.mxu0
      %5266 = vmatprep.mubr.f32.mxu0 0.0
      %5267 = vmatmul.mubr.f32.gmra.mxu0 %v5061
      %v5268 = vpop.f32.mrf.mxu0
      %v5269 = vadd.f32 0.0, %v5268
      %v5270 = vpop.f32.mrf.mxu0
      %5271 = vmatprep.mubr.f32.mxu0 0.0
      %5272 = vmatmul.mubr.f32.gmra.mxu0 %v5062
      %v5273 = vpop.f32.mrf.mxu0
      %v5274 = vadd.f32 0.0, %v5273
      %v5275 = vpop.f32.mrf.mxu0
      %5276 = vmatprep.mubr.f32.mxu0 0.0
      %5277 = vmatmul.mubr.f32.gmra.mxu0 %v5063
      %v5278 = vpop.f32.mrf.mxu0
      %v5279 = vadd.f32 0.0, %v5278
      %v5280 = vpop.f32.mrf.mxu0
      %5281 = vmatprep.mubr.f32.mxu0 0.0
      %5282 = vmatmul.mubr.f32.gmra.mxu0 %v5064
      %v5283 = vpop.f32.mrf.mxu0
      %v5284 = vadd.f32 0.0, %v5283
      %v5285 = vpop.f32.mrf.mxu0
      %5286 = vmatprep.mubr.f32.mxu0 0.0
      %5287 = vmatmul.mubr.f32.gmra.mxu0 %v5065
      %v5288 = vpop.f32.mrf.mxu0
      %v5289 = vadd.f32 0.0, %v5288
      %v5290 = vpop.f32.mrf.mxu0
      %5291 = vmatprep.mubr.f32.mxu0 0.0
      %5292 = vmatmul.mubr.f32.gmra.mxu0 %v5066
      %v5293 = vpop.f32.mrf.mxu0
      %v5294 = vadd.f32 0.0, %v5293
      %v5295 = vpop.f32.mrf.mxu0
      %5296 = vmatprep.mubr.f32.mxu0 0.0
      %5297 = vmatmul.mubr.f32.gmra.mxu0 %v5067
      %v5298 = vpop.f32.mrf.mxu0
      %v5299 = vadd.f32 0.0, %v5298
      %v5300 = vpop.f32.mrf.mxu0
      %5301 = vmatprep.mubr.f32.mxu0 0.0
      %5302 = vmatmul.mubr.f32.gmra.mxu0 %v5068
      %v5303 = vpop.f32.mrf.mxu0
      %v5304 = vadd.f32 0.0, %v5303
      %v5305 = vpop.f32.mrf.mxu0
      %5306 = vmatprep.mubr.f32.mxu0 0.0
      %5307 = vmatmul.mubr.f32.gmra.mxu0 %v5069
      %v5308 = vpop.f32.mrf.mxu0
      %v5309 = vadd.f32 0.0, %v5308
      %v5310 = vpop.f32.mrf.mxu0
      %5311 = vdwg.mxu0
      %v5312 = vadd.f32 %v5006, %v5154
      %v5313 = vadd.f32 %v5007, %v5159
      %v5314 = vadd.f32 %v5008, %v5164
      %v5315 = vadd.f32 %v5009, %v5169
      %v5316 = vadd.f32 %v5010, %v5174
      %v5317 = vadd.f32 %v5011, %v5179
      %v5318 = vadd.f32 %v5012, %v5184
      %v5319 = vadd.f32 %v5013, %v5189
      %v5320 = vadd.f32 %v5014, %v5194
      %v5321 = vadd.f32 %v5015, %v5199
      %v5322 = vadd.f32 %v5016, %v5204
      %v5323 = vadd.f32 %v5017, %v5209
      %v5324 = vadd.f32 %v5018, %v5214
      %v5325 = vadd.f32 %v5019, %v5219
      %v5326 = vadd.f32 %v5020, %v5224
      %v5327 = vadd.f32 %v5021, %v5229
      %v5328 = vadd.f32 %v5022, %v5234
      %v5329 = vadd.f32 %v5023, %v5239
      %v5330 = vadd.f32 %v5024, %v5244
      %v5331 = vadd.f32 %v5025, %v5249
      %v5332 = vadd.f32 %v5026, %v5254
      %v5333 = vadd.f32 %v5027, %v5259
      %v5334 = vadd.f32 %v5028, %v5264
      %v5335 = vadd.f32 %v5029, %v5269
      %v5336 = vadd.f32 %v5030, %v5274
      %v5337 = vadd.f32 %v5031, %v5279
      %v5338 = vadd.f32 %v5032, %v5284
      %v5339 = vadd.f32 %v5033, %v5289
      %v5340 = vadd.f32 %v5034, %v5294
      %v5341 = vadd.f32 %v5035, %v5299
      %v5342 = vadd.f32 %v5036, %v5304
      %v5343 = vadd.f32 %v5037, %v5309
      %v5344 = vld [vmem:[%s536 + $0x2] sm:$0xff]
      %v5345 = vld [vmem:[%s536 + $0xa] sm:$0xff]
      %v5346 = vld [vmem:[%s536 + $0x1a] sm:$0xff]
      %v5347 = vld [vmem:[%s536 + $0x22] sm:$0xff]
      %v5348 = vld [vmem:[%s536 + $0x32] sm:$0xff]
      %v5349 = vld [vmem:[%s536 + $0x3a] sm:$0xff]
      %v5350 = vld [vmem:[%s536 + $0x4a] sm:$0xff]
      %v5351 = vld [vmem:[%s536 + $0x52] sm:$0xff]
      %v5352 = vld [vmem:[%s536 + $0x62] sm:$0xff]
      %v5353 = vld [vmem:[%s536 + $0x6a] sm:$0xff]
      %v5354 = vld [vmem:[%s536 + $0x7a] sm:$0xff]
      %v5355 = vld [vmem:[%s536 + $0x82] sm:$0xff]
      %v5356 = vld [vmem:[%s536 + $0x92] sm:$0xff]
      %v5357 = vld [vmem:[%s536 + $0x9a] sm:$0xff]
      %v5358 = vld [vmem:[%s536 + $0xaa] sm:$0xff]
      %v5359 = vld [vmem:[%s536 + $0xb2] sm:$0xff]
      %v5360 = vld [vmem:[%s536 + $0xc2] sm:$0xff]
      %v5361 = vld [vmem:[%s536 + $0xca] sm:$0xff]
      %v5362 = vld [vmem:[%s536 + $0xda] sm:$0xff]
      %v5363 = vld [vmem:[%s536 + $0xe2] sm:$0xff]
      %v5364 = vld [vmem:[%s536 + $0xf2] sm:$0xff]
      %v5365 = vld [vmem:[%s536 + $0xfa] sm:$0xff]
      %v5366 = vld [vmem:[%s536 + $0x10a] sm:$0xff]
      %v5367 = vld [vmem:[%s536 + $0x112] sm:$0xff]
      %v5368 = vld [vmem:[%s536 + $0x122] sm:$0xff]
      %v5369 = vld [vmem:[%s536 + $0x12a] sm:$0xff]
      %v5370 = vld [vmem:[%s536 + $0x13a] sm:$0xff]
      %v5371 = vld [vmem:[%s536 + $0x142] sm:$0xff]
      %v5372 = vld [vmem:[%s536 + $0x152] sm:$0xff]
      %v5373 = vld [vmem:[%s536 + $0x15a] sm:$0xff]
      %v5374 = vld [vmem:[%s536 + $0x16a] sm:$0xff]
      %v5375 = vld [vmem:[%s536 + $0x172] sm:$0xff]
      %s5376 = scalar_lea.vmem %s4, 640
      %v5377 = vld [vmem:[%s5376] sm:$0xff]
      %v5378 = vld [vmem:[%s5376 + $0x8] sm:$0xff]
      %v5379 = vld [vmem:[%s5376 + $0x10] sm:$0xff]
      %v5380 = vld [vmem:[%s5376 + $0x18] sm:$0xff]
      %v5381 = vld [vmem:[%s5376 + $0x20] sm:$0xff]
      %v5382 = vld [vmem:[%s5376 + $0x28] sm:$0xff]
      %v5383 = vld [vmem:[%s5376 + $0x30] sm:$0xff]
      %v5384 = vld [vmem:[%s5376 + $0x38] sm:$0xff]
      %v5385 = vld [vmem:[%s5376 + $0x40] sm:$0xff]
      %v5386 = vld [vmem:[%s5376 + $0x48] sm:$0xff]
      %v5387 = vld [vmem:[%s5376 + $0x50] sm:$0xff]
      %v5388 = vld [vmem:[%s5376 + $0x58] sm:$0xff]
      %v5389 = vld [vmem:[%s5376 + $0x60] sm:$0xff]
      %v5390 = vld [vmem:[%s5376 + $0x68] sm:$0xff]
      %v5391 = vld [vmem:[%s5376 + $0x70] sm:$0xff]
      %v5392 = vld [vmem:[%s5376 + $0x78] sm:$0xff]
      %5393 = vmatprep.subr.mxu0 0.0
      %5394 = vmatpush1.msra.mxu0 %v5392
      %5395 = vmatprep.subr.mxu0 0.0
      %5396 = vmatpush1.msra.mxu0 %v5391
      %5397 = vmatprep.subr.mxu0 0.0
      %5398 = vmatpush1.msra.mxu0 %v5390
      %5399 = vmatprep.subr.mxu0 0.0
      %5400 = vmatpush1.msra.mxu0 %v5389
      %5401 = vmatprep.subr.mxu0 0.0
      %5402 = vmatpush1.msra.mxu0 %v5388
      %5403 = vmatprep.subr.mxu0 0.0
      %5404 = vmatpush1.msra.mxu0 %v5387
      %5405 = vmatprep.subr.mxu0 0.0
      %5406 = vmatpush1.msra.mxu0 %v5386
      %5407 = vmatprep.subr.mxu0 0.0
      %5408 = vmatpush1.msra.mxu0 %v5385
      %5409 = vmatprep.subr.mxu0 0.0
      %5410 = vmatpush1.msra.mxu0 %v5384
      %5411 = vmatprep.subr.mxu0 0.0
      %5412 = vmatpush1.msra.mxu0 %v5383
      %5413 = vmatprep.subr.mxu0 0.0
      %5414 = vmatpush1.msra.mxu0 %v5382
      %5415 = vmatprep.subr.mxu0 0.0
      %5416 = vmatpush1.msra.mxu0 %v5381
      %5417 = vmatprep.subr.mxu0 0.0
      %5418 = vmatpush1.msra.mxu0 %v5380
      %5419 = vmatprep.subr.mxu0 0.0
      %5420 = vmatpush1.msra.mxu0 %v5379
      %5421 = vmatprep.subr.mxu0 0.0
      %5422 = vmatpush1.msra.mxu0 %v5378
      %5423 = vmatprep.subr.mxu0 0.0
      %5424 = vmatpush1.msra.mxu0 %v5377
      %5425 = vmatprep.subr.mxu0 0.0
      %5426 = vmatpush2.msra.mxu0 0.0
      %5427 = vmatprep.subr.mxu0 0.0
      %5428 = vmatpush2.msra.mxu0 0.0
      %5429 = vmatprep.subr.mxu0 0.0
      %5430 = vmatpush2.msra.mxu0 0.0
      %5431 = vmatprep.subr.mxu0 0.0
      %5432 = vmatpush2.msra.mxu0 0.0
      %5433 = vmatprep.subr.mxu0 0.0
      %5434 = vmatpush2.msra.mxu0 0.0
      %5435 = vmatprep.subr.mxu0 0.0
      %5436 = vmatpush2.msra.mxu0 0.0
      %5437 = vmatprep.subr.mxu0 0.0
      %5438 = vmatpush2.msra.mxu0 0.0
      %5439 = vmatprep.subr.mxu0 0.0
      %5440 = vmatpush2.msra.mxu0 0.0
      %5441 = vmatprep.subr.mxu0 0.0
      %5442 = vmatpush2.msra.mxu0 0.0
      %5443 = vmatprep.subr.mxu0 0.0
      %5444 = vmatpush2.msra.mxu0 0.0
      %5445 = vmatprep.subr.mxu0 0.0
      %5446 = vmatpush2.msra.mxu0 0.0
      %5447 = vmatprep.subr.mxu0 0.0
      %5448 = vmatpush2.msra.mxu0 0.0
      %5449 = vmatprep.subr.mxu0 0.0
      %5450 = vmatpush2.msra.mxu0 0.0
      %5451 = vmatprep.subr.mxu0 0.0
      %5452 = vmatpush2.msra.mxu0 0.0
      %5453 = vmatprep.subr.mxu0 0.0
      %5454 = vmatpush2.msra.mxu0 0.0
      %5455 = vmatprep.subr.mxu0 0.0
      %5456 = vmatpush2.msra.mxu0 0.0
      %5457 = vmatprep.mubr.f32.mxu0 0.0
      %5458 = vmatmul.mubr.f32.gmra.mxu0 %v5344
      %v5459 = vpop.f32.mrf.mxu0
      %v5460 = vadd.f32 0.0, %v5459
      %v5461 = vpop.f32.mrf.mxu0
      %5462 = vmatprep.mubr.f32.mxu0 0.0
      %5463 = vmatmul.mubr.f32.gmra.mxu0 %v5345
      %v5464 = vpop.f32.mrf.mxu0
      %v5465 = vadd.f32 0.0, %v5464
      %v5466 = vpop.f32.mrf.mxu0
      %5467 = vmatprep.mubr.f32.mxu0 0.0
      %5468 = vmatmul.mubr.f32.gmra.mxu0 %v5346
      %v5469 = vpop.f32.mrf.mxu0
      %v5470 = vadd.f32 0.0, %v5469
      %v5471 = vpop.f32.mrf.mxu0
      %5472 = vmatprep.mubr.f32.mxu0 0.0
      %5473 = vmatmul.mubr.f32.gmra.mxu0 %v5347
      %v5474 = vpop.f32.mrf.mxu0
      %v5475 = vadd.f32 0.0, %v5474
      %v5476 = vpop.f32.mrf.mxu0
      %5477 = vmatprep.mubr.f32.mxu0 0.0
      %5478 = vmatmul.mubr.f32.gmra.mxu0 %v5348
      %v5479 = vpop.f32.mrf.mxu0
      %v5480 = vadd.f32 0.0, %v5479
      %v5481 = vpop.f32.mrf.mxu0
      %5482 = vmatprep.mubr.f32.mxu0 0.0
      %5483 = vmatmul.mubr.f32.gmra.mxu0 %v5349
      %v5484 = vpop.f32.mrf.mxu0
      %v5485 = vadd.f32 0.0, %v5484
      %v5486 = vpop.f32.mrf.mxu0
      %5487 = vmatprep.mubr.f32.mxu0 0.0
      %5488 = vmatmul.mubr.f32.gmra.mxu0 %v5350
      %v5489 = vpop.f32.mrf.mxu0
      %v5490 = vadd.f32 0.0, %v5489
      %v5491 = vpop.f32.mrf.mxu0
      %5492 = vmatprep.mubr.f32.mxu0 0.0
      %5493 = vmatmul.mubr.f32.gmra.mxu0 %v5351
      %v5494 = vpop.f32.mrf.mxu0
      %v5495 = vadd.f32 0.0, %v5494
      %v5496 = vpop.f32.mrf.mxu0
      %5497 = vmatprep.mubr.f32.mxu0 0.0
      %5498 = vmatmul.mubr.f32.gmra.mxu0 %v5352
      %v5499 = vpop.f32.mrf.mxu0
      %v5500 = vadd.f32 0.0, %v5499
      %v5501 = vpop.f32.mrf.mxu0
      %5502 = vmatprep.mubr.f32.mxu0 0.0
      %5503 = vmatmul.mubr.f32.gmra.mxu0 %v5353
      %v5504 = vpop.f32.mrf.mxu0
      %v5505 = vadd.f32 0.0, %v5504
      %v5506 = vpop.f32.mrf.mxu0
      %5507 = vmatprep.mubr.f32.mxu0 0.0
      %5508 = vmatmul.mubr.f32.gmra.mxu0 %v5354
      %v5509 = vpop.f32.mrf.mxu0
      %v5510 = vadd.f32 0.0, %v5509
      %v5511 = vpop.f32.mrf.mxu0
      %5512 = vmatprep.mubr.f32.mxu0 0.0
      %5513 = vmatmul.mubr.f32.gmra.mxu0 %v5355
      %v5514 = vpop.f32.mrf.mxu0
      %v5515 = vadd.f32 0.0, %v5514
      %v5516 = vpop.f32.mrf.mxu0
      %5517 = vmatprep.mubr.f32.mxu0 0.0
      %5518 = vmatmul.mubr.f32.gmra.mxu0 %v5356
      %v5519 = vpop.f32.mrf.mxu0
      %v5520 = vadd.f32 0.0, %v5519
      %v5521 = vpop.f32.mrf.mxu0
      %5522 = vmatprep.mubr.f32.mxu0 0.0
      %5523 = vmatmul.mubr.f32.gmra.mxu0 %v5357
      %v5524 = vpop.f32.mrf.mxu0
      %v5525 = vadd.f32 0.0, %v5524
      %v5526 = vpop.f32.mrf.mxu0
      %5527 = vmatprep.mubr.f32.mxu0 0.0
      %5528 = vmatmul.mubr.f32.gmra.mxu0 %v5358
      %v5529 = vpop.f32.mrf.mxu0
      %v5530 = vadd.f32 0.0, %v5529
      %v5531 = vpop.f32.mrf.mxu0
      %5532 = vmatprep.mubr.f32.mxu0 0.0
      %5533 = vmatmul.mubr.f32.gmra.mxu0 %v5359
      %v5534 = vpop.f32.mrf.mxu0
      %v5535 = vadd.f32 0.0, %v5534
      %v5536 = vpop.f32.mrf.mxu0
      %5537 = vmatprep.mubr.f32.mxu0 0.0
      %5538 = vmatmul.mubr.f32.gmra.mxu0 %v5360
      %v5539 = vpop.f32.mrf.mxu0
      %v5540 = vadd.f32 0.0, %v5539
      %v5541 = vpop.f32.mrf.mxu0
      %5542 = vmatprep.mubr.f32.mxu0 0.0
      %5543 = vmatmul.mubr.f32.gmra.mxu0 %v5361
      %v5544 = vpop.f32.mrf.mxu0
      %v5545 = vadd.f32 0.0, %v5544
      %v5546 = vpop.f32.mrf.mxu0
      %5547 = vmatprep.mubr.f32.mxu0 0.0
      %5548 = vmatmul.mubr.f32.gmra.mxu0 %v5362
      %v5549 = vpop.f32.mrf.mxu0
      %v5550 = vadd.f32 0.0, %v5549
      %v5551 = vpop.f32.mrf.mxu0
      %5552 = vmatprep.mubr.f32.mxu0 0.0
      %5553 = vmatmul.mubr.f32.gmra.mxu0 %v5363
      %v5554 = vpop.f32.mrf.mxu0
      %v5555 = vadd.f32 0.0, %v5554
      %v5556 = vpop.f32.mrf.mxu0
      %5557 = vmatprep.mubr.f32.mxu0 0.0
      %5558 = vmatmul.mubr.f32.gmra.mxu0 %v5364
      %v5559 = vpop.f32.mrf.mxu0
      %v5560 = vadd.f32 0.0, %v5559
      %v5561 = vpop.f32.mrf.mxu0
      %5562 = vmatprep.mubr.f32.mxu0 0.0
      %5563 = vmatmul.mubr.f32.gmra.mxu0 %v5365
      %v5564 = vpop.f32.mrf.mxu0
      %v5565 = vadd.f32 0.0, %v5564
      %v5566 = vpop.f32.mrf.mxu0
      %5567 = vmatprep.mubr.f32.mxu0 0.0
      %5568 = vmatmul.mubr.f32.gmra.mxu0 %v5366
      %v5569 = vpop.f32.mrf.mxu0
      %v5570 = vadd.f32 0.0, %v5569
      %v5571 = vpop.f32.mrf.mxu0
      %5572 = vmatprep.mubr.f32.mxu0 0.0
      %5573 = vmatmul.mubr.f32.gmra.mxu0 %v5367
      %v5574 = vpop.f32.mrf.mxu0
      %v5575 = vadd.f32 0.0, %v5574
      %v5576 = vpop.f32.mrf.mxu0
      %5577 = vmatprep.mubr.f32.mxu0 0.0
      %5578 = vmatmul.mubr.f32.gmra.mxu0 %v5368
      %v5579 = vpop.f32.mrf.mxu0
      %v5580 = vadd.f32 0.0, %v5579
      %v5581 = vpop.f32.mrf.mxu0
      %5582 = vmatprep.mubr.f32.mxu0 0.0
      %5583 = vmatmul.mubr.f32.gmra.mxu0 %v5369
      %v5584 = vpop.f32.mrf.mxu0
      %v5585 = vadd.f32 0.0, %v5584
      %v5586 = vpop.f32.mrf.mxu0
      %5587 = vmatprep.mubr.f32.mxu0 0.0
      %5588 = vmatmul.mubr.f32.gmra.mxu0 %v5370
      %v5589 = vpop.f32.mrf.mxu0
      %v5590 = vadd.f32 0.0, %v5589
      %v5591 = vpop.f32.mrf.mxu0
      %5592 = vmatprep.mubr.f32.mxu0 0.0
      %5593 = vmatmul.mubr.f32.gmra.mxu0 %v5371
      %v5594 = vpop.f32.mrf.mxu0
      %v5595 = vadd.f32 0.0, %v5594
      %v5596 = vpop.f32.mrf.mxu0
      %5597 = vmatprep.mubr.f32.mxu0 0.0
      %5598 = vmatmul.mubr.f32.gmra.mxu0 %v5372
      %v5599 = vpop.f32.mrf.mxu0
      %v5600 = vadd.f32 0.0, %v5599
      %v5601 = vpop.f32.mrf.mxu0
      %5602 = vmatprep.mubr.f32.mxu0 0.0
      %5603 = vmatmul.mubr.f32.gmra.mxu0 %v5373
      %v5604 = vpop.f32.mrf.mxu0
      %v5605 = vadd.f32 0.0, %v5604
      %v5606 = vpop.f32.mrf.mxu0
      %5607 = vmatprep.mubr.f32.mxu0 0.0
      %5608 = vmatmul.mubr.f32.gmra.mxu0 %v5374
      %v5609 = vpop.f32.mrf.mxu0
      %v5610 = vadd.f32 0.0, %v5609
      %v5611 = vpop.f32.mrf.mxu0
      %5612 = vmatprep.mubr.f32.mxu0 0.0
      %5613 = vmatmul.mubr.f32.gmra.mxu0 %v5375
      %v5614 = vpop.f32.mrf.mxu0
      %v5615 = vadd.f32 0.0, %v5614
      %v5616 = vpop.f32.mrf.mxu0
      %5617 = vdwg.mxu0
      %v5618 = vadd.f32 %v5312, %v5460
      %v5619 = vadd.f32 %v5313, %v5465
      %v5620 = vadd.f32 %v5314, %v5470
      %v5621 = vadd.f32 %v5315, %v5475
      %v5622 = vadd.f32 %v5316, %v5480
      %v5623 = vadd.f32 %v5317, %v5485
      %v5624 = vadd.f32 %v5318, %v5490
      %v5625 = vadd.f32 %v5319, %v5495
      %v5626 = vadd.f32 %v5320, %v5500
      %v5627 = vadd.f32 %v5321, %v5505
      %v5628 = vadd.f32 %v5322, %v5510
      %v5629 = vadd.f32 %v5323, %v5515
      %v5630 = vadd.f32 %v5324, %v5520
      %v5631 = vadd.f32 %v5325, %v5525
      %v5632 = vadd.f32 %v5326, %v5530
      %v5633 = vadd.f32 %v5327, %v5535
      %v5634 = vadd.f32 %v5328, %v5540
      %v5635 = vadd.f32 %v5329, %v5545
      %v5636 = vadd.f32 %v5330, %v5550
      %v5637 = vadd.f32 %v5331, %v5555
      %v5638 = vadd.f32 %v5332, %v5560
      %v5639 = vadd.f32 %v5333, %v5565
      %v5640 = vadd.f32 %v5334, %v5570
      %v5641 = vadd.f32 %v5335, %v5575
      %v5642 = vadd.f32 %v5336, %v5580
      %v5643 = vadd.f32 %v5337, %v5585
      %v5644 = vadd.f32 %v5338, %v5590
      %v5645 = vadd.f32 %v5339, %v5595
      %v5646 = vadd.f32 %v5340, %v5600
      %v5647 = vadd.f32 %v5341, %v5605
      %v5648 = vadd.f32 %v5342, %v5610
      %v5649 = vadd.f32 %v5343, %v5615
      %v5650 = vld [vmem:[%s2363] sm:$0xff]
      %v5651 = vld [vmem:[%s2363 + $0x8] sm:$0xff]
      %v5652 = vld [vmem:[%s2363 + $0x18] sm:$0xff]
      %v5653 = vld [vmem:[%s2363 + $0x20] sm:$0xff]
      %v5654 = vld [vmem:[%s2363 + $0x30] sm:$0xff]
      %v5655 = vld [vmem:[%s2363 + $0x38] sm:$0xff]
      %v5656 = vld [vmem:[%s2363 + $0x48] sm:$0xff]
      %v5657 = vld [vmem:[%s2363 + $0x50] sm:$0xff]
      %v5658 = vld [vmem:[%s2363 + $0x60] sm:$0xff]
      %v5659 = vld [vmem:[%s2363 + $0x68] sm:$0xff]
      %v5660 = vld [vmem:[%s2363 + $0x78] sm:$0xff]
      %v5661 = vld [vmem:[%s2363 + $0x80] sm:$0xff]
      %v5662 = vld [vmem:[%s2363 + $0x90] sm:$0xff]
      %v5663 = vld [vmem:[%s2363 + $0x98] sm:$0xff]
      %v5664 = vld [vmem:[%s2363 + $0xa8] sm:$0xff]
      %v5665 = vld [vmem:[%s2363 + $0xb0] sm:$0xff]
      %v5666 = vld [vmem:[%s2363 + $0xc0] sm:$0xff]
      %v5667 = vld [vmem:[%s2363 + $0xc8] sm:$0xff]
      %v5668 = vld [vmem:[%s2363 + $0xd8] sm:$0xff]
      %v5669 = vld [vmem:[%s2363 + $0xe0] sm:$0xff]
      %v5670 = vld [vmem:[%s2363 + $0xf0] sm:$0xff]
      %v5671 = vld [vmem:[%s2363 + $0xf8] sm:$0xff]
      %v5672 = vld [vmem:[%s2363 + $0x108] sm:$0xff]
      %v5673 = vld [vmem:[%s2363 + $0x110] sm:$0xff]
      %v5674 = vld [vmem:[%s2363 + $0x120] sm:$0xff]
      %v5675 = vld [vmem:[%s2363 + $0x128] sm:$0xff]
      %v5676 = vld [vmem:[%s2363 + $0x138] sm:$0xff]
      %v5677 = vld [vmem:[%s2363 + $0x140] sm:$0xff]
      %v5678 = vld [vmem:[%s2363 + $0x150] sm:$0xff]
      %v5679 = vld [vmem:[%s2363 + $0x158] sm:$0xff]
      %v5680 = vld [vmem:[%s2363 + $0x168] sm:$0xff]
      %v5681 = vld [vmem:[%s2363 + $0x170] sm:$0xff]
      %s5682 = scalar_lea.vmem %s4, 768
      %v5683 = vld [vmem:[%s5682] sm:$0xff]
      %v5684 = vld [vmem:[%s5682 + $0x8] sm:$0xff]
      %v5685 = vld [vmem:[%s5682 + $0x10] sm:$0xff]
      %v5686 = vld [vmem:[%s5682 + $0x18] sm:$0xff]
      %v5687 = vld [vmem:[%s5682 + $0x20] sm:$0xff]
      %v5688 = vld [vmem:[%s5682 + $0x28] sm:$0xff]
      %v5689 = vld [vmem:[%s5682 + $0x30] sm:$0xff]
      %v5690 = vld [vmem:[%s5682 + $0x38] sm:$0xff]
      %v5691 = vld [vmem:[%s5682 + $0x40] sm:$0xff]
      %v5692 = vld [vmem:[%s5682 + $0x48] sm:$0xff]
      %v5693 = vld [vmem:[%s5682 + $0x50] sm:$0xff]
      %v5694 = vld [vmem:[%s5682 + $0x58] sm:$0xff]
      %v5695 = vld [vmem:[%s5682 + $0x60] sm:$0xff]
      %v5696 = vld [vmem:[%s5682 + $0x68] sm:$0xff]
      %v5697 = vld [vmem:[%s5682 + $0x70] sm:$0xff]
      %v5698 = vld [vmem:[%s5682 + $0x78] sm:$0xff]
      %5699 = vmatprep.subr.mxu0 0.0
      %5700 = vmatpush1.msra.mxu0 %v5698
      %5701 = vmatprep.subr.mxu0 0.0
      %5702 = vmatpush1.msra.mxu0 %v5697
      %5703 = vmatprep.subr.mxu0 0.0
      %5704 = vmatpush1.msra.mxu0 %v5696
      %5705 = vmatprep.subr.mxu0 0.0
      %5706 = vmatpush1.msra.mxu0 %v5695
      %5707 = vmatprep.subr.mxu0 0.0
      %5708 = vmatpush1.msra.mxu0 %v5694
      %5709 = vmatprep.subr.mxu0 0.0
      %5710 = vmatpush1.msra.mxu0 %v5693
      %5711 = vmatprep.subr.mxu0 0.0
      %5712 = vmatpush1.msra.mxu0 %v5692
      %5713 = vmatprep.subr.mxu0 0.0
      %5714 = vmatpush1.msra.mxu0 %v5691
      %5715 = vmatprep.subr.mxu0 0.0
      %5716 = vmatpush1.msra.mxu0 %v5690
      %5717 = vmatprep.subr.mxu0 0.0
      %5718 = vmatpush1.msra.mxu0 %v5689
      %5719 = vmatprep.subr.mxu0 0.0
      %5720 = vmatpush1.msra.mxu0 %v5688
      %5721 = vmatprep.subr.mxu0 0.0
      %5722 = vmatpush1.msra.mxu0 %v5687
      %5723 = vmatprep.subr.mxu0 0.0
      %5724 = vmatpush1.msra.mxu0 %v5686
      %5725 = vmatprep.subr.mxu0 0.0
      %5726 = vmatpush1.msra.mxu0 %v5685
      %5727 = vmatprep.subr.mxu0 0.0
      %5728 = vmatpush1.msra.mxu0 %v5684
      %5729 = vmatprep.subr.mxu0 0.0
      %5730 = vmatpush1.msra.mxu0 %v5683
      %5731 = vmatprep.subr.mxu0 0.0
      %5732 = vmatpush2.msra.mxu0 0.0
      %5733 = vmatprep.subr.mxu0 0.0
      %5734 = vmatpush2.msra.mxu0 0.0
      %5735 = vmatprep.subr.mxu0 0.0
      %5736 = vmatpush2.msra.mxu0 0.0
      %5737 = vmatprep.subr.mxu0 0.0
      %5738 = vmatpush2.msra.mxu0 0.0
      %5739 = vmatprep.subr.mxu0 0.0
      %5740 = vmatpush2.msra.mxu0 0.0
      %5741 = vmatprep.subr.mxu0 0.0
      %5742 = vmatpush2.msra.mxu0 0.0
      %5743 = vmatprep.subr.mxu0 0.0
      %5744 = vmatpush2.msra.mxu0 0.0
      %5745 = vmatprep.subr.mxu0 0.0
      %5746 = vmatpush2.msra.mxu0 0.0
      %5747 = vmatprep.subr.mxu0 0.0
      %5748 = vmatpush2.msra.mxu0 0.0
      %5749 = vmatprep.subr.mxu0 0.0
      %5750 = vmatpush2.msra.mxu0 0.0
      %5751 = vmatprep.subr.mxu0 0.0
      %5752 = vmatpush2.msra.mxu0 0.0
      %5753 = vmatprep.subr.mxu0 0.0
      %5754 = vmatpush2.msra.mxu0 0.0
      %5755 = vmatprep.subr.mxu0 0.0
      %5756 = vmatpush2.msra.mxu0 0.0
      %5757 = vmatprep.subr.mxu0 0.0
      %5758 = vmatpush2.msra.mxu0 0.0
      %5759 = vmatprep.subr.mxu0 0.0
      %5760 = vmatpush2.msra.mxu0 0.0
      %5761 = vmatprep.subr.mxu0 0.0
      %5762 = vmatpush2.msra.mxu0 0.0
      %5763 = vmatprep.mubr.f32.mxu0 0.0
      %5764 = vmatmul.mubr.f32.gmra.mxu0 %v5650
      %v5765 = vpop.f32.mrf.mxu0
      %v5766 = vadd.f32 0.0, %v5765
      %v5767 = vpop.f32.mrf.mxu0
      %5768 = vmatprep.mubr.f32.mxu0 0.0
      %5769 = vmatmul.mubr.f32.gmra.mxu0 %v5651
      %v5770 = vpop.f32.mrf.mxu0
      %v5771 = vadd.f32 0.0, %v5770
      %v5772 = vpop.f32.mrf.mxu0
      %5773 = vmatprep.mubr.f32.mxu0 0.0
      %5774 = vmatmul.mubr.f32.gmra.mxu0 %v5652
      %v5775 = vpop.f32.mrf.mxu0
      %v5776 = vadd.f32 0.0, %v5775
      %v5777 = vpop.f32.mrf.mxu0
      %5778 = vmatprep.mubr.f32.mxu0 0.0
      %5779 = vmatmul.mubr.f32.gmra.mxu0 %v5653
      %v5780 = vpop.f32.mrf.mxu0
      %v5781 = vadd.f32 0.0, %v5780
      %v5782 = vpop.f32.mrf.mxu0
      %5783 = vmatprep.mubr.f32.mxu0 0.0
      %5784 = vmatmul.mubr.f32.gmra.mxu0 %v5654
      %v5785 = vpop.f32.mrf.mxu0
      %v5786 = vadd.f32 0.0, %v5785
      %v5787 = vpop.f32.mrf.mxu0
      %5788 = vmatprep.mubr.f32.mxu0 0.0
      %5789 = vmatmul.mubr.f32.gmra.mxu0 %v5655
      %v5790 = vpop.f32.mrf.mxu0
      %v5791 = vadd.f32 0.0, %v5790
      %v5792 = vpop.f32.mrf.mxu0
      %5793 = vmatprep.mubr.f32.mxu0 0.0
      %5794 = vmatmul.mubr.f32.gmra.mxu0 %v5656
      %v5795 = vpop.f32.mrf.mxu0
      %v5796 = vadd.f32 0.0, %v5795
      %v5797 = vpop.f32.mrf.mxu0
      %5798 = vmatprep.mubr.f32.mxu0 0.0
      %5799 = vmatmul.mubr.f32.gmra.mxu0 %v5657
      %v5800 = vpop.f32.mrf.mxu0
      %v5801 = vadd.f32 0.0, %v5800
      %v5802 = vpop.f32.mrf.mxu0
      %5803 = vmatprep.mubr.f32.mxu0 0.0
      %5804 = vmatmul.mubr.f32.gmra.mxu0 %v5658
      %v5805 = vpop.f32.mrf.mxu0
      %v5806 = vadd.f32 0.0, %v5805
      %v5807 = vpop.f32.mrf.mxu0
      %5808 = vmatprep.mubr.f32.mxu0 0.0
      %5809 = vmatmul.mubr.f32.gmra.mxu0 %v5659
      %v5810 = vpop.f32.mrf.mxu0
      %v5811 = vadd.f32 0.0, %v5810
      %v5812 = vpop.f32.mrf.mxu0
      %5813 = vmatprep.mubr.f32.mxu0 0.0
      %5814 = vmatmul.mubr.f32.gmra.mxu0 %v5660
      %v5815 = vpop.f32.mrf.mxu0
      %v5816 = vadd.f32 0.0, %v5815
      %v5817 = vpop.f32.mrf.mxu0
      %5818 = vmatprep.mubr.f32.mxu0 0.0
      %5819 = vmatmul.mubr.f32.gmra.mxu0 %v5661
      %v5820 = vpop.f32.mrf.mxu0
      %v5821 = vadd.f32 0.0, %v5820
      %v5822 = vpop.f32.mrf.mxu0
      %5823 = vmatprep.mubr.f32.mxu0 0.0
      %5824 = vmatmul.mubr.f32.gmra.mxu0 %v5662
      %v5825 = vpop.f32.mrf.mxu0
      %v5826 = vadd.f32 0.0, %v5825
      %v5827 = vpop.f32.mrf.mxu0
      %5828 = vmatprep.mubr.f32.mxu0 0.0
      %5829 = vmatmul.mubr.f32.gmra.mxu0 %v5663
      %v5830 = vpop.f32.mrf.mxu0
      %v5831 = vadd.f32 0.0, %v5830
      %v5832 = vpop.f32.mrf.mxu0
      %5833 = vmatprep.mubr.f32.mxu0 0.0
      %5834 = vmatmul.mubr.f32.gmra.mxu0 %v5664
      %v5835 = vpop.f32.mrf.mxu0
      %v5836 = vadd.f32 0.0, %v5835
      %v5837 = vpop.f32.mrf.mxu0
      %5838 = vmatprep.mubr.f32.mxu0 0.0
      %5839 = vmatmul.mubr.f32.gmra.mxu0 %v5665
      %v5840 = vpop.f32.mrf.mxu0
      %v5841 = vadd.f32 0.0, %v5840
      %v5842 = vpop.f32.mrf.mxu0
      %5843 = vmatprep.mubr.f32.mxu0 0.0
      %5844 = vmatmul.mubr.f32.gmra.mxu0 %v5666
      %v5845 = vpop.f32.mrf.mxu0
      %v5846 = vadd.f32 0.0, %v5845
      %v5847 = vpop.f32.mrf.mxu0
      %5848 = vmatprep.mubr.f32.mxu0 0.0
      %5849 = vmatmul.mubr.f32.gmra.mxu0 %v5667
      %v5850 = vpop.f32.mrf.mxu0
      %v5851 = vadd.f32 0.0, %v5850
      %v5852 = vpop.f32.mrf.mxu0
      %5853 = vmatprep.mubr.f32.mxu0 0.0
      %5854 = vmatmul.mubr.f32.gmra.mxu0 %v5668
      %v5855 = vpop.f32.mrf.mxu0
      %v5856 = vadd.f32 0.0, %v5855
      %v5857 = vpop.f32.mrf.mxu0
      %5858 = vmatprep.mubr.f32.mxu0 0.0
      %5859 = vmatmul.mubr.f32.gmra.mxu0 %v5669
      %v5860 = vpop.f32.mrf.mxu0
      %v5861 = vadd.f32 0.0, %v5860
      %v5862 = vpop.f32.mrf.mxu0
      %5863 = vmatprep.mubr.f32.mxu0 0.0
      %5864 = vmatmul.mubr.f32.gmra.mxu0 %v5670
      %v5865 = vpop.f32.mrf.mxu0
      %v5866 = vadd.f32 0.0, %v5865
      %v5867 = vpop.f32.mrf.mxu0
      %5868 = vmatprep.mubr.f32.mxu0 0.0
      %5869 = vmatmul.mubr.f32.gmra.mxu0 %v5671
      %v5870 = vpop.f32.mrf.mxu0
      %v5871 = vadd.f32 0.0, %v5870
      %v5872 = vpop.f32.mrf.mxu0
      %5873 = vmatprep.mubr.f32.mxu0 0.0
      %5874 = vmatmul.mubr.f32.gmra.mxu0 %v5672
      %v5875 = vpop.f32.mrf.mxu0
      %v5876 = vadd.f32 0.0, %v5875
      %v5877 = vpop.f32.mrf.mxu0
      %5878 = vmatprep.mubr.f32.mxu0 0.0
      %5879 = vmatmul.mubr.f32.gmra.mxu0 %v5673
      %v5880 = vpop.f32.mrf.mxu0
      %v5881 = vadd.f32 0.0, %v5880
      %v5882 = vpop.f32.mrf.mxu0
      %5883 = vmatprep.mubr.f32.mxu0 0.0
      %5884 = vmatmul.mubr.f32.gmra.mxu0 %v5674
      %v5885 = vpop.f32.mrf.mxu0
      %v5886 = vadd.f32 0.0, %v5885
      %v5887 = vpop.f32.mrf.mxu0
      %5888 = vmatprep.mubr.f32.mxu0 0.0
      %5889 = vmatmul.mubr.f32.gmra.mxu0 %v5675
      %v5890 = vpop.f32.mrf.mxu0
      %v5891 = vadd.f32 0.0, %v5890
      %v5892 = vpop.f32.mrf.mxu0
      %5893 = vmatprep.mubr.f32.mxu0 0.0
      %5894 = vmatmul.mubr.f32.gmra.mxu0 %v5676
      %v5895 = vpop.f32.mrf.mxu0
      %v5896 = vadd.f32 0.0, %v5895
      %v5897 = vpop.f32.mrf.mxu0
      %5898 = vmatprep.mubr.f32.mxu0 0.0
      %5899 = vmatmul.mubr.f32.gmra.mxu0 %v5677
      %v5900 = vpop.f32.mrf.mxu0
      %v5901 = vadd.f32 0.0, %v5900
      %v5902 = vpop.f32.mrf.mxu0
      %5903 = vmatprep.mubr.f32.mxu0 0.0
      %5904 = vmatmul.mubr.f32.gmra.mxu0 %v5678
      %v5905 = vpop.f32.mrf.mxu0
      %v5906 = vadd.f32 0.0, %v5905
      %v5907 = vpop.f32.mrf.mxu0
      %5908 = vmatprep.mubr.f32.mxu0 0.0
      %5909 = vmatmul.mubr.f32.gmra.mxu0 %v5679
      %v5910 = vpop.f32.mrf.mxu0
      %v5911 = vadd.f32 0.0, %v5910
      %v5912 = vpop.f32.mrf.mxu0
      %5913 = vmatprep.mubr.f32.mxu0 0.0
      %5914 = vmatmul.mubr.f32.gmra.mxu0 %v5680
      %v5915 = vpop.f32.mrf.mxu0
      %v5916 = vadd.f32 0.0, %v5915
      %v5917 = vpop.f32.mrf.mxu0
      %5918 = vmatprep.mubr.f32.mxu0 0.0
      %5919 = vmatmul.mubr.f32.gmra.mxu0 %v5681
      %v5920 = vpop.f32.mrf.mxu0
      %v5921 = vadd.f32 0.0, %v5920
      %v5922 = vpop.f32.mrf.mxu0
      %5923 = vdwg.mxu0
      %v5924 = vadd.f32 %v5618, %v5766
      %v5925 = vadd.f32 %v5619, %v5771
      %v5926 = vadd.f32 %v5620, %v5776
      %v5927 = vadd.f32 %v5621, %v5781
      %v5928 = vadd.f32 %v5622, %v5786
      %v5929 = vadd.f32 %v5623, %v5791
      %v5930 = vadd.f32 %v5624, %v5796
      %v5931 = vadd.f32 %v5625, %v5801
      %v5932 = vadd.f32 %v5626, %v5806
      %v5933 = vadd.f32 %v5627, %v5811
      %v5934 = vadd.f32 %v5628, %v5816
      %v5935 = vadd.f32 %v5629, %v5821
      %v5936 = vadd.f32 %v5630, %v5826
      %v5937 = vadd.f32 %v5631, %v5831
      %v5938 = vadd.f32 %v5632, %v5836
      %v5939 = vadd.f32 %v5633, %v5841
      %v5940 = vadd.f32 %v5634, %v5846
      %v5941 = vadd.f32 %v5635, %v5851
      %v5942 = vadd.f32 %v5636, %v5856
      %v5943 = vadd.f32 %v5637, %v5861
      %v5944 = vadd.f32 %v5638, %v5866
      %v5945 = vadd.f32 %v5639, %v5871
      %v5946 = vadd.f32 %v5640, %v5876
      %v5947 = vadd.f32 %v5641, %v5881
      %v5948 = vadd.f32 %v5642, %v5886
      %v5949 = vadd.f32 %v5643, %v5891
      %v5950 = vadd.f32 %v5644, %v5896
      %v5951 = vadd.f32 %v5645, %v5901
      %v5952 = vadd.f32 %v5646, %v5906
      %v5953 = vadd.f32 %v5647, %v5911
      %v5954 = vadd.f32 %v5648, %v5916
      %v5955 = vadd.f32 %v5649, %v5921
      %v5956 = vld [vmem:[%s2363 + $0x1] sm:$0xff]
      %v5957 = vld [vmem:[%s2363 + $0x9] sm:$0xff]
      %v5958 = vld [vmem:[%s2363 + $0x19] sm:$0xff]
      %v5959 = vld [vmem:[%s2363 + $0x21] sm:$0xff]
      %v5960 = vld [vmem:[%s2363 + $0x31] sm:$0xff]
      %v5961 = vld [vmem:[%s2363 + $0x39] sm:$0xff]
      %v5962 = vld [vmem:[%s2363 + $0x49] sm:$0xff]
      %v5963 = vld [vmem:[%s2363 + $0x51] sm:$0xff]
      %v5964 = vld [vmem:[%s2363 + $0x61] sm:$0xff]
      %v5965 = vld [vmem:[%s2363 + $0x69] sm:$0xff]
      %v5966 = vld [vmem:[%s2363 + $0x79] sm:$0xff]
      %v5967 = vld [vmem:[%s2363 + $0x81] sm:$0xff]
      %v5968 = vld [vmem:[%s2363 + $0x91] sm:$0xff]
      %v5969 = vld [vmem:[%s2363 + $0x99] sm:$0xff]
      %v5970 = vld [vmem:[%s2363 + $0xa9] sm:$0xff]
      %v5971 = vld [vmem:[%s2363 + $0xb1] sm:$0xff]
      %v5972 = vld [vmem:[%s2363 + $0xc1] sm:$0xff]
      %v5973 = vld [vmem:[%s2363 + $0xc9] sm:$0xff]
      %v5974 = vld [vmem:[%s2363 + $0xd9] sm:$0xff]
      %v5975 = vld [vmem:[%s2363 + $0xe1] sm:$0xff]
      %v5976 = vld [vmem:[%s2363 + $0xf1] sm:$0xff]
      %v5977 = vld [vmem:[%s2363 + $0xf9] sm:$0xff]
      %v5978 = vld [vmem:[%s2363 + $0x109] sm:$0xff]
      %v5979 = vld [vmem:[%s2363 + $0x111] sm:$0xff]
      %v5980 = vld [vmem:[%s2363 + $0x121] sm:$0xff]
      %v5981 = vld [vmem:[%s2363 + $0x129] sm:$0xff]
      %v5982 = vld [vmem:[%s2363 + $0x139] sm:$0xff]
      %v5983 = vld [vmem:[%s2363 + $0x141] sm:$0xff]
      %v5984 = vld [vmem:[%s2363 + $0x151] sm:$0xff]
      %v5985 = vld [vmem:[%s2363 + $0x159] sm:$0xff]
      %v5986 = vld [vmem:[%s2363 + $0x169] sm:$0xff]
      %v5987 = vld [vmem:[%s2363 + $0x171] sm:$0xff]
      %s5988 = scalar_lea.vmem %s4, 896
      %v5989 = vld [vmem:[%s5988] sm:$0xff]
      %v5990 = vld [vmem:[%s5988 + $0x8] sm:$0xff]
      %v5991 = vld [vmem:[%s5988 + $0x10] sm:$0xff]
      %v5992 = vld [vmem:[%s5988 + $0x18] sm:$0xff]
      %v5993 = vld [vmem:[%s5988 + $0x20] sm:$0xff]
      %v5994 = vld [vmem:[%s5988 + $0x28] sm:$0xff]
      %v5995 = vld [vmem:[%s5988 + $0x30] sm:$0xff]
      %v5996 = vld [vmem:[%s5988 + $0x38] sm:$0xff]
      %v5997 = vld [vmem:[%s5988 + $0x40] sm:$0xff]
      %v5998 = vld [vmem:[%s5988 + $0x48] sm:$0xff]
      %v5999 = vld [vmem:[%s5988 + $0x50] sm:$0xff]
      %v6000 = vld [vmem:[%s5988 + $0x58] sm:$0xff]
      %v6001 = vld [vmem:[%s5988 + $0x60] sm:$0xff]
      %v6002 = vld [vmem:[%s5988 + $0x68] sm:$0xff]
      %v6003 = vld [vmem:[%s5988 + $0x70] sm:$0xff]
      %v6004 = vld [vmem:[%s5988 + $0x78] sm:$0xff]
      %6005 = vmatprep.subr.mxu0 0.0
      %6006 = vmatpush1.msra.mxu0 %v6004
      %6007 = vmatprep.subr.mxu0 0.0
      %6008 = vmatpush1.msra.mxu0 %v6003
      %6009 = vmatprep.subr.mxu0 0.0
      %6010 = vmatpush1.msra.mxu0 %v6002
      %6011 = vmatprep.subr.mxu0 0.0
      %6012 = vmatpush1.msra.mxu0 %v6001
      %6013 = vmatprep.subr.mxu0 0.0
      %6014 = vmatpush1.msra.mxu0 %v6000
      %6015 = vmatprep.subr.mxu0 0.0
      %6016 = vmatpush1.msra.mxu0 %v5999
      %6017 = vmatprep.subr.mxu0 0.0
      %6018 = vmatpush1.msra.mxu0 %v5998
      %6019 = vmatprep.subr.mxu0 0.0
      %6020 = vmatpush1.msra.mxu0 %v5997
      %6021 = vmatprep.subr.mxu0 0.0
      %6022 = vmatpush1.msra.mxu0 %v5996
      %6023 = vmatprep.subr.mxu0 0.0
      %6024 = vmatpush1.msra.mxu0 %v5995
      %6025 = vmatprep.subr.mxu0 0.0
      %6026 = vmatpush1.msra.mxu0 %v5994
      %6027 = vmatprep.subr.mxu0 0.0
      %6028 = vmatpush1.msra.mxu0 %v5993
      %6029 = vmatprep.subr.mxu0 0.0
      %6030 = vmatpush1.msra.mxu0 %v5992
      %6031 = vmatprep.subr.mxu0 0.0
      %6032 = vmatpush1.msra.mxu0 %v5991
      %6033 = vmatprep.subr.mxu0 0.0
      %6034 = vmatpush1.msra.mxu0 %v5990
      %6035 = vmatprep.subr.mxu0 0.0
      %6036 = vmatpush1.msra.mxu0 %v5989
      %6037 = vmatprep.subr.mxu0 0.0
      %6038 = vmatpush2.msra.mxu0 0.0
      %6039 = vmatprep.subr.mxu0 0.0
      %6040 = vmatpush2.msra.mxu0 0.0
      %6041 = vmatprep.subr.mxu0 0.0
      %6042 = vmatpush2.msra.mxu0 0.0
      %6043 = vmatprep.subr.mxu0 0.0
      %6044 = vmatpush2.msra.mxu0 0.0
      %6045 = vmatprep.subr.mxu0 0.0
      %6046 = vmatpush2.msra.mxu0 0.0
      %6047 = vmatprep.subr.mxu0 0.0
      %6048 = vmatpush2.msra.mxu0 0.0
      %6049 = vmatprep.subr.mxu0 0.0
      %6050 = vmatpush2.msra.mxu0 0.0
      %6051 = vmatprep.subr.mxu0 0.0
      %6052 = vmatpush2.msra.mxu0 0.0
      %6053 = vmatprep.subr.mxu0 0.0
      %6054 = vmatpush2.msra.mxu0 0.0
      %6055 = vmatprep.subr.mxu0 0.0
      %6056 = vmatpush2.msra.mxu0 0.0
      %6057 = vmatprep.subr.mxu0 0.0
      %6058 = vmatpush2.msra.mxu0 0.0
      %6059 = vmatprep.subr.mxu0 0.0
      %6060 = vmatpush2.msra.mxu0 0.0
      %6061 = vmatprep.subr.mxu0 0.0
      %6062 = vmatpush2.msra.mxu0 0.0
      %6063 = vmatprep.subr.mxu0 0.0
      %6064 = vmatpush2.msra.mxu0 0.0
      %6065 = vmatprep.subr.mxu0 0.0
      %6066 = vmatpush2.msra.mxu0 0.0
      %6067 = vmatprep.subr.mxu0 0.0
      %6068 = vmatpush2.msra.mxu0 0.0
      %6069 = vmatprep.mubr.f32.mxu0 0.0
      %6070 = vmatmul.mubr.f32.gmra.mxu0 %v5956
      %v6071 = vpop.f32.mrf.mxu0
      %v6072 = vadd.f32 0.0, %v6071
      %v6073 = vpop.f32.mrf.mxu0
      %6074 = vmatprep.mubr.f32.mxu0 0.0
      %6075 = vmatmul.mubr.f32.gmra.mxu0 %v5957
      %v6076 = vpop.f32.mrf.mxu0
      %v6077 = vadd.f32 0.0, %v6076
      %v6078 = vpop.f32.mrf.mxu0
      %6079 = vmatprep.mubr.f32.mxu0 0.0
      %6080 = vmatmul.mubr.f32.gmra.mxu0 %v5958
      %v6081 = vpop.f32.mrf.mxu0
      %v6082 = vadd.f32 0.0, %v6081
      %v6083 = vpop.f32.mrf.mxu0
      %6084 = vmatprep.mubr.f32.mxu0 0.0
      %6085 = vmatmul.mubr.f32.gmra.mxu0 %v5959
      %v6086 = vpop.f32.mrf.mxu0
      %v6087 = vadd.f32 0.0, %v6086
      %v6088 = vpop.f32.mrf.mxu0
      %6089 = vmatprep.mubr.f32.mxu0 0.0
      %6090 = vmatmul.mubr.f32.gmra.mxu0 %v5960
      %v6091 = vpop.f32.mrf.mxu0
      %v6092 = vadd.f32 0.0, %v6091
      %v6093 = vpop.f32.mrf.mxu0
      %6094 = vmatprep.mubr.f32.mxu0 0.0
      %6095 = vmatmul.mubr.f32.gmra.mxu0 %v5961
      %v6096 = vpop.f32.mrf.mxu0
      %v6097 = vadd.f32 0.0, %v6096
      %v6098 = vpop.f32.mrf.mxu0
      %6099 = vmatprep.mubr.f32.mxu0 0.0
      %6100 = vmatmul.mubr.f32.gmra.mxu0 %v5962
      %v6101 = vpop.f32.mrf.mxu0
      %v6102 = vadd.f32 0.0, %v6101
      %v6103 = vpop.f32.mrf.mxu0
      %6104 = vmatprep.mubr.f32.mxu0 0.0
      %6105 = vmatmul.mubr.f32.gmra.mxu0 %v5963
      %v6106 = vpop.f32.mrf.mxu0
      %v6107 = vadd.f32 0.0, %v6106
      %v6108 = vpop.f32.mrf.mxu0
      %6109 = vmatprep.mubr.f32.mxu0 0.0
      %6110 = vmatmul.mubr.f32.gmra.mxu0 %v5964
      %v6111 = vpop.f32.mrf.mxu0
      %v6112 = vadd.f32 0.0, %v6111
      %v6113 = vpop.f32.mrf.mxu0
      %6114 = vmatprep.mubr.f32.mxu0 0.0
      %6115 = vmatmul.mubr.f32.gmra.mxu0 %v5965
      %v6116 = vpop.f32.mrf.mxu0
      %v6117 = vadd.f32 0.0, %v6116
      %v6118 = vpop.f32.mrf.mxu0
      %6119 = vmatprep.mubr.f32.mxu0 0.0
      %6120 = vmatmul.mubr.f32.gmra.mxu0 %v5966
      %v6121 = vpop.f32.mrf.mxu0
      %v6122 = vadd.f32 0.0, %v6121
      %v6123 = vpop.f32.mrf.mxu0
      %6124 = vmatprep.mubr.f32.mxu0 0.0
      %6125 = vmatmul.mubr.f32.gmra.mxu0 %v5967
      %v6126 = vpop.f32.mrf.mxu0
      %v6127 = vadd.f32 0.0, %v6126
      %v6128 = vpop.f32.mrf.mxu0
      %6129 = vmatprep.mubr.f32.mxu0 0.0
      %6130 = vmatmul.mubr.f32.gmra.mxu0 %v5968
      %v6131 = vpop.f32.mrf.mxu0
      %v6132 = vadd.f32 0.0, %v6131
      %v6133 = vpop.f32.mrf.mxu0
      %6134 = vmatprep.mubr.f32.mxu0 0.0
      %6135 = vmatmul.mubr.f32.gmra.mxu0 %v5969
      %v6136 = vpop.f32.mrf.mxu0
      %v6137 = vadd.f32 0.0, %v6136
      %v6138 = vpop.f32.mrf.mxu0
      %6139 = vmatprep.mubr.f32.mxu0 0.0
      %6140 = vmatmul.mubr.f32.gmra.mxu0 %v5970
      %v6141 = vpop.f32.mrf.mxu0
      %v6142 = vadd.f32 0.0, %v6141
      %v6143 = vpop.f32.mrf.mxu0
      %6144 = vmatprep.mubr.f32.mxu0 0.0
      %6145 = vmatmul.mubr.f32.gmra.mxu0 %v5971
      %v6146 = vpop.f32.mrf.mxu0
      %v6147 = vadd.f32 0.0, %v6146
      %v6148 = vpop.f32.mrf.mxu0
      %6149 = vmatprep.mubr.f32.mxu0 0.0
      %6150 = vmatmul.mubr.f32.gmra.mxu0 %v5972
      %v6151 = vpop.f32.mrf.mxu0
      %v6152 = vadd.f32 0.0, %v6151
      %v6153 = vpop.f32.mrf.mxu0
      %6154 = vmatprep.mubr.f32.mxu0 0.0
      %6155 = vmatmul.mubr.f32.gmra.mxu0 %v5973
      %v6156 = vpop.f32.mrf.mxu0
      %v6157 = vadd.f32 0.0, %v6156
      %v6158 = vpop.f32.mrf.mxu0
      %6159 = vmatprep.mubr.f32.mxu0 0.0
      %6160 = vmatmul.mubr.f32.gmra.mxu0 %v5974
      %v6161 = vpop.f32.mrf.mxu0
      %v6162 = vadd.f32 0.0, %v6161
      %v6163 = vpop.f32.mrf.mxu0
      %6164 = vmatprep.mubr.f32.mxu0 0.0
      %6165 = vmatmul.mubr.f32.gmra.mxu0 %v5975
      %v6166 = vpop.f32.mrf.mxu0
      %v6167 = vadd.f32 0.0, %v6166
      %v6168 = vpop.f32.mrf.mxu0
      %6169 = vmatprep.mubr.f32.mxu0 0.0
      %6170 = vmatmul.mubr.f32.gmra.mxu0 %v5976
      %v6171 = vpop.f32.mrf.mxu0
      %v6172 = vadd.f32 0.0, %v6171
      %v6173 = vpop.f32.mrf.mxu0
      %6174 = vmatprep.mubr.f32.mxu0 0.0
      %6175 = vmatmul.mubr.f32.gmra.mxu0 %v5977
      %v6176 = vpop.f32.mrf.mxu0
      %v6177 = vadd.f32 0.0, %v6176
      %v6178 = vpop.f32.mrf.mxu0
      %6179 = vmatprep.mubr.f32.mxu0 0.0
      %6180 = vmatmul.mubr.f32.gmra.mxu0 %v5978
      %v6181 = vpop.f32.mrf.mxu0
      %v6182 = vadd.f32 0.0, %v6181
      %v6183 = vpop.f32.mrf.mxu0
      %6184 = vmatprep.mubr.f32.mxu0 0.0
      %6185 = vmatmul.mubr.f32.gmra.mxu0 %v5979
      %v6186 = vpop.f32.mrf.mxu0
      %v6187 = vadd.f32 0.0, %v6186
      %v6188 = vpop.f32.mrf.mxu0
      %6189 = vmatprep.mubr.f32.mxu0 0.0
      %6190 = vmatmul.mubr.f32.gmra.mxu0 %v5980
      %v6191 = vpop.f32.mrf.mxu0
      %v6192 = vadd.f32 0.0, %v6191
      %v6193 = vpop.f32.mrf.mxu0
      %6194 = vmatprep.mubr.f32.mxu0 0.0
      %6195 = vmatmul.mubr.f32.gmra.mxu0 %v5981
      %v6196 = vpop.f32.mrf.mxu0
      %v6197 = vadd.f32 0.0, %v6196
      %v6198 = vpop.f32.mrf.mxu0
      %6199 = vmatprep.mubr.f32.mxu0 0.0
      %6200 = vmatmul.mubr.f32.gmra.mxu0 %v5982
      %v6201 = vpop.f32.mrf.mxu0
      %v6202 = vadd.f32 0.0, %v6201
      %v6203 = vpop.f32.mrf.mxu0
      %6204 = vmatprep.mubr.f32.mxu0 0.0
      %6205 = vmatmul.mubr.f32.gmra.mxu0 %v5983
      %v6206 = vpop.f32.mrf.mxu0
      %v6207 = vadd.f32 0.0, %v6206
      %v6208 = vpop.f32.mrf.mxu0
      %6209 = vmatprep.mubr.f32.mxu0 0.0
      %6210 = vmatmul.mubr.f32.gmra.mxu0 %v5984
      %v6211 = vpop.f32.mrf.mxu0
      %v6212 = vadd.f32 0.0, %v6211
      %v6213 = vpop.f32.mrf.mxu0
      %6214 = vmatprep.mubr.f32.mxu0 0.0
      %6215 = vmatmul.mubr.f32.gmra.mxu0 %v5985
      %v6216 = vpop.f32.mrf.mxu0
      %v6217 = vadd.f32 0.0, %v6216
      %v6218 = vpop.f32.mrf.mxu0
      %6219 = vmatprep.mubr.f32.mxu0 0.0
      %6220 = vmatmul.mubr.f32.gmra.mxu0 %v5986
      %v6221 = vpop.f32.mrf.mxu0
      %v6222 = vadd.f32 0.0, %v6221
      %v6223 = vpop.f32.mrf.mxu0
      %6224 = vmatprep.mubr.f32.mxu0 0.0
      %6225 = vmatmul.mubr.f32.gmra.mxu0 %v5987
      %v6226 = vpop.f32.mrf.mxu0
      %v6227 = vadd.f32 0.0, %v6226
      %v6228 = vpop.f32.mrf.mxu0
      %6229 = vdwg.mxu0
      %v6230 = vadd.f32 %v5924, %v6072
      %v6231 = vadd.f32 %v5925, %v6077
      %v6232 = vadd.f32 %v5926, %v6082
      %v6233 = vadd.f32 %v5927, %v6087
      %v6234 = vadd.f32 %v5928, %v6092
      %v6235 = vadd.f32 %v5929, %v6097
      %v6236 = vadd.f32 %v5930, %v6102
      %v6237 = vadd.f32 %v5931, %v6107
      %v6238 = vadd.f32 %v5932, %v6112
      %v6239 = vadd.f32 %v5933, %v6117
      %v6240 = vadd.f32 %v5934, %v6122
      %v6241 = vadd.f32 %v5935, %v6127
      %v6242 = vadd.f32 %v5936, %v6132
      %v6243 = vadd.f32 %v5937, %v6137
      %v6244 = vadd.f32 %v5938, %v6142
      %v6245 = vadd.f32 %v5939, %v6147
      %v6246 = vadd.f32 %v5940, %v6152
      %v6247 = vadd.f32 %v5941, %v6157
      %v6248 = vadd.f32 %v5942, %v6162
      %v6249 = vadd.f32 %v5943, %v6167
      %v6250 = vadd.f32 %v5944, %v6172
      %v6251 = vadd.f32 %v5945, %v6177
      %v6252 = vadd.f32 %v5946, %v6182
      %v6253 = vadd.f32 %v5947, %v6187
      %v6254 = vadd.f32 %v5948, %v6192
      %v6255 = vadd.f32 %v5949, %v6197
      %v6256 = vadd.f32 %v5950, %v6202
      %v6257 = vadd.f32 %v5951, %v6207
      %v6258 = vadd.f32 %v5952, %v6212
      %v6259 = vadd.f32 %v5953, %v6217
      %v6260 = vadd.f32 %v5954, %v6222
      %v6261 = vadd.f32 %v5955, %v6227
      %v6262 = vld [vmem:[%s2363 + $0x2] sm:$0xff]
      %v6263 = vld [vmem:[%s2363 + $0xa] sm:$0xff]
      %v6264 = vld [vmem:[%s2363 + $0x1a] sm:$0xff]
      %v6265 = vld [vmem:[%s2363 + $0x22] sm:$0xff]
      %v6266 = vld [vmem:[%s2363 + $0x32] sm:$0xff]
      %v6267 = vld [vmem:[%s2363 + $0x3a] sm:$0xff]
      %v6268 = vld [vmem:[%s2363 + $0x4a] sm:$0xff]
      %v6269 = vld [vmem:[%s2363 + $0x52] sm:$0xff]
      %v6270 = vld [vmem:[%s2363 + $0x62] sm:$0xff]
      %v6271 = vld [vmem:[%s2363 + $0x6a] sm:$0xff]
      %v6272 = vld [vmem:[%s2363 + $0x7a] sm:$0xff]
      %v6273 = vld [vmem:[%s2363 + $0x82] sm:$0xff]
      %v6274 = vld [vmem:[%s2363 + $0x92] sm:$0xff]
      %v6275 = vld [vmem:[%s2363 + $0x9a] sm:$0xff]
      %v6276 = vld [vmem:[%s2363 + $0xaa] sm:$0xff]
      %v6277 = vld [vmem:[%s2363 + $0xb2] sm:$0xff]
      %v6278 = vld [vmem:[%s2363 + $0xc2] sm:$0xff]
      %v6279 = vld [vmem:[%s2363 + $0xca] sm:$0xff]
      %v6280 = vld [vmem:[%s2363 + $0xda] sm:$0xff]
      %v6281 = vld [vmem:[%s2363 + $0xe2] sm:$0xff]
      %v6282 = vld [vmem:[%s2363 + $0xf2] sm:$0xff]
      %v6283 = vld [vmem:[%s2363 + $0xfa] sm:$0xff]
      %v6284 = vld [vmem:[%s2363 + $0x10a] sm:$0xff]
      %v6285 = vld [vmem:[%s2363 + $0x112] sm:$0xff]
      %v6286 = vld [vmem:[%s2363 + $0x122] sm:$0xff]
      %v6287 = vld [vmem:[%s2363 + $0x12a] sm:$0xff]
      %v6288 = vld [vmem:[%s2363 + $0x13a] sm:$0xff]
      %v6289 = vld [vmem:[%s2363 + $0x142] sm:$0xff]
      %v6290 = vld [vmem:[%s2363 + $0x152] sm:$0xff]
      %v6291 = vld [vmem:[%s2363 + $0x15a] sm:$0xff]
      %v6292 = vld [vmem:[%s2363 + $0x16a] sm:$0xff]
      %v6293 = vld [vmem:[%s2363 + $0x172] sm:$0xff]
      %s6294 = scalar_lea.vmem %s4, 1024
      %v6295 = vld [vmem:[%s6294] sm:$0xff]
      %v6296 = vld [vmem:[%s6294 + $0x8] sm:$0xff]
      %v6297 = vld [vmem:[%s6294 + $0x10] sm:$0xff]
      %v6298 = vld [vmem:[%s6294 + $0x18] sm:$0xff]
      %v6299 = vld [vmem:[%s6294 + $0x20] sm:$0xff]
      %v6300 = vld [vmem:[%s6294 + $0x28] sm:$0xff]
      %v6301 = vld [vmem:[%s6294 + $0x30] sm:$0xff]
      %v6302 = vld [vmem:[%s6294 + $0x38] sm:$0xff]
      %v6303 = vld [vmem:[%s6294 + $0x40] sm:$0xff]
      %v6304 = vld [vmem:[%s6294 + $0x48] sm:$0xff]
      %v6305 = vld [vmem:[%s6294 + $0x50] sm:$0xff]
      %v6306 = vld [vmem:[%s6294 + $0x58] sm:$0xff]
      %v6307 = vld [vmem:[%s6294 + $0x60] sm:$0xff]
      %v6308 = vld [vmem:[%s6294 + $0x68] sm:$0xff]
      %v6309 = vld [vmem:[%s6294 + $0x70] sm:$0xff]
      %v6310 = vld [vmem:[%s6294 + $0x78] sm:$0xff]
      %6311 = vmatprep.subr.mxu0 0.0
      %6312 = vmatpush1.msra.mxu0 %v6310
      %6313 = vmatprep.subr.mxu0 0.0
      %6314 = vmatpush1.msra.mxu0 %v6309
      %6315 = vmatprep.subr.mxu0 0.0
      %6316 = vmatpush1.msra.mxu0 %v6308
      %6317 = vmatprep.subr.mxu0 0.0
      %6318 = vmatpush1.msra.mxu0 %v6307
      %6319 = vmatprep.subr.mxu0 0.0
      %6320 = vmatpush1.msra.mxu0 %v6306
      %6321 = vmatprep.subr.mxu0 0.0
      %6322 = vmatpush1.msra.mxu0 %v6305
      %6323 = vmatprep.subr.mxu0 0.0
      %6324 = vmatpush1.msra.mxu0 %v6304
      %6325 = vmatprep.subr.mxu0 0.0
      %6326 = vmatpush1.msra.mxu0 %v6303
      %6327 = vmatprep.subr.mxu0 0.0
      %6328 = vmatpush1.msra.mxu0 %v6302
      %6329 = vmatprep.subr.mxu0 0.0
      %6330 = vmatpush1.msra.mxu0 %v6301
      %6331 = vmatprep.subr.mxu0 0.0
      %6332 = vmatpush1.msra.mxu0 %v6300
      %6333 = vmatprep.subr.mxu0 0.0
      %6334 = vmatpush1.msra.mxu0 %v6299
      %6335 = vmatprep.subr.mxu0 0.0
      %6336 = vmatpush1.msra.mxu0 %v6298
      %6337 = vmatprep.subr.mxu0 0.0
      %6338 = vmatpush1.msra.mxu0 %v6297
      %6339 = vmatprep.subr.mxu0 0.0
      %6340 = vmatpush1.msra.mxu0 %v6296
      %6341 = vmatprep.subr.mxu0 0.0
      %6342 = vmatpush1.msra.mxu0 %v6295
      %6343 = vmatprep.subr.mxu0 0.0
      %6344 = vmatpush2.msra.mxu0 0.0
      %6345 = vmatprep.subr.mxu0 0.0
      %6346 = vmatpush2.msra.mxu0 0.0
      %6347 = vmatprep.subr.mxu0 0.0
      %6348 = vmatpush2.msra.mxu0 0.0
      %6349 = vmatprep.subr.mxu0 0.0
      %6350 = vmatpush2.msra.mxu0 0.0
      %6351 = vmatprep.subr.mxu0 0.0
      %6352 = vmatpush2.msra.mxu0 0.0
      %6353 = vmatprep.subr.mxu0 0.0
      %6354 = vmatpush2.msra.mxu0 0.0
      %6355 = vmatprep.subr.mxu0 0.0
      %6356 = vmatpush2.msra.mxu0 0.0
      %6357 = vmatprep.subr.mxu0 0.0
      %6358 = vmatpush2.msra.mxu0 0.0
      %6359 = vmatprep.subr.mxu0 0.0
      %6360 = vmatpush2.msra.mxu0 0.0
      %6361 = vmatprep.subr.mxu0 0.0
      %6362 = vmatpush2.msra.mxu0 0.0
      %6363 = vmatprep.subr.mxu0 0.0
      %6364 = vmatpush2.msra.mxu0 0.0
      %6365 = vmatprep.subr.mxu0 0.0
      %6366 = vmatpush2.msra.mxu0 0.0
      %6367 = vmatprep.subr.mxu0 0.0
      %6368 = vmatpush2.msra.mxu0 0.0
      %6369 = vmatprep.subr.mxu0 0.0
      %6370 = vmatpush2.msra.mxu0 0.0
      %6371 = vmatprep.subr.mxu0 0.0
      %6372 = vmatpush2.msra.mxu0 0.0
      %6373 = vmatprep.subr.mxu0 0.0
      %6374 = vmatpush2.msra.mxu0 0.0
      %6375 = vmatprep.mubr.f32.mxu0 0.0
      %6376 = vmatmul.mubr.f32.gmra.mxu0 %v6262
      %v6377 = vpop.f32.mrf.mxu0
      %v6378 = vadd.f32 0.0, %v6377
      %v6379 = vpop.f32.mrf.mxu0
      %6380 = vmatprep.mubr.f32.mxu0 0.0
      %6381 = vmatmul.mubr.f32.gmra.mxu0 %v6263
      %v6382 = vpop.f32.mrf.mxu0
      %v6383 = vadd.f32 0.0, %v6382
      %v6384 = vpop.f32.mrf.mxu0
      %6385 = vmatprep.mubr.f32.mxu0 0.0
      %6386 = vmatmul.mubr.f32.gmra.mxu0 %v6264
      %v6387 = vpop.f32.mrf.mxu0
      %v6388 = vadd.f32 0.0, %v6387
      %v6389 = vpop.f32.mrf.mxu0
      %6390 = vmatprep.mubr.f32.mxu0 0.0
      %6391 = vmatmul.mubr.f32.gmra.mxu0 %v6265
      %v6392 = vpop.f32.mrf.mxu0
      %v6393 = vadd.f32 0.0, %v6392
      %v6394 = vpop.f32.mrf.mxu0
      %6395 = vmatprep.mubr.f32.mxu0 0.0
      %6396 = vmatmul.mubr.f32.gmra.mxu0 %v6266
      %v6397 = vpop.f32.mrf.mxu0
      %v6398 = vadd.f32 0.0, %v6397
      %v6399 = vpop.f32.mrf.mxu0
      %6400 = vmatprep.mubr.f32.mxu0 0.0
      %6401 = vmatmul.mubr.f32.gmra.mxu0 %v6267
      %v6402 = vpop.f32.mrf.mxu0
      %v6403 = vadd.f32 0.0, %v6402
      %v6404 = vpop.f32.mrf.mxu0
      %6405 = vmatprep.mubr.f32.mxu0 0.0
      %6406 = vmatmul.mubr.f32.gmra.mxu0 %v6268
      %v6407 = vpop.f32.mrf.mxu0
      %v6408 = vadd.f32 0.0, %v6407
      %v6409 = vpop.f32.mrf.mxu0
      %6410 = vmatprep.mubr.f32.mxu0 0.0
      %6411 = vmatmul.mubr.f32.gmra.mxu0 %v6269
      %v6412 = vpop.f32.mrf.mxu0
      %v6413 = vadd.f32 0.0, %v6412
      %v6414 = vpop.f32.mrf.mxu0
      %6415 = vmatprep.mubr.f32.mxu0 0.0
      %6416 = vmatmul.mubr.f32.gmra.mxu0 %v6270
      %v6417 = vpop.f32.mrf.mxu0
      %v6418 = vadd.f32 0.0, %v6417
      %v6419 = vpop.f32.mrf.mxu0
      %6420 = vmatprep.mubr.f32.mxu0 0.0
      %6421 = vmatmul.mubr.f32.gmra.mxu0 %v6271
      %v6422 = vpop.f32.mrf.mxu0
      %v6423 = vadd.f32 0.0, %v6422
      %v6424 = vpop.f32.mrf.mxu0
      %6425 = vmatprep.mubr.f32.mxu0 0.0
      %6426 = vmatmul.mubr.f32.gmra.mxu0 %v6272
      %v6427 = vpop.f32.mrf.mxu0
      %v6428 = vadd.f32 0.0, %v6427
      %v6429 = vpop.f32.mrf.mxu0
      %6430 = vmatprep.mubr.f32.mxu0 0.0
      %6431 = vmatmul.mubr.f32.gmra.mxu0 %v6273
      %v6432 = vpop.f32.mrf.mxu0
      %v6433 = vadd.f32 0.0, %v6432
      %v6434 = vpop.f32.mrf.mxu0
      %6435 = vmatprep.mubr.f32.mxu0 0.0
      %6436 = vmatmul.mubr.f32.gmra.mxu0 %v6274
      %v6437 = vpop.f32.mrf.mxu0
      %v6438 = vadd.f32 0.0, %v6437
      %v6439 = vpop.f32.mrf.mxu0
      %6440 = vmatprep.mubr.f32.mxu0 0.0
      %6441 = vmatmul.mubr.f32.gmra.mxu0 %v6275
      %v6442 = vpop.f32.mrf.mxu0
      %v6443 = vadd.f32 0.0, %v6442
      %v6444 = vpop.f32.mrf.mxu0
      %6445 = vmatprep.mubr.f32.mxu0 0.0
      %6446 = vmatmul.mubr.f32.gmra.mxu0 %v6276
      %v6447 = vpop.f32.mrf.mxu0
      %v6448 = vadd.f32 0.0, %v6447
      %v6449 = vpop.f32.mrf.mxu0
      %6450 = vmatprep.mubr.f32.mxu0 0.0
      %6451 = vmatmul.mubr.f32.gmra.mxu0 %v6277
      %v6452 = vpop.f32.mrf.mxu0
      %v6453 = vadd.f32 0.0, %v6452
      %v6454 = vpop.f32.mrf.mxu0
      %6455 = vmatprep.mubr.f32.mxu0 0.0
      %6456 = vmatmul.mubr.f32.gmra.mxu0 %v6278
      %v6457 = vpop.f32.mrf.mxu0
      %v6458 = vadd.f32 0.0, %v6457
      %v6459 = vpop.f32.mrf.mxu0
      %6460 = vmatprep.mubr.f32.mxu0 0.0
      %6461 = vmatmul.mubr.f32.gmra.mxu0 %v6279
      %v6462 = vpop.f32.mrf.mxu0
      %v6463 = vadd.f32 0.0, %v6462
      %v6464 = vpop.f32.mrf.mxu0
      %6465 = vmatprep.mubr.f32.mxu0 0.0
      %6466 = vmatmul.mubr.f32.gmra.mxu0 %v6280
      %v6467 = vpop.f32.mrf.mxu0
      %v6468 = vadd.f32 0.0, %v6467
      %v6469 = vpop.f32.mrf.mxu0
      %6470 = vmatprep.mubr.f32.mxu0 0.0
      %6471 = vmatmul.mubr.f32.gmra.mxu0 %v6281
      %v6472 = vpop.f32.mrf.mxu0
      %v6473 = vadd.f32 0.0, %v6472
      %v6474 = vpop.f32.mrf.mxu0
      %6475 = vmatprep.mubr.f32.mxu0 0.0
      %6476 = vmatmul.mubr.f32.gmra.mxu0 %v6282
      %v6477 = vpop.f32.mrf.mxu0
      %v6478 = vadd.f32 0.0, %v6477
      %v6479 = vpop.f32.mrf.mxu0
      %6480 = vmatprep.mubr.f32.mxu0 0.0
      %6481 = vmatmul.mubr.f32.gmra.mxu0 %v6283
      %v6482 = vpop.f32.mrf.mxu0
      %v6483 = vadd.f32 0.0, %v6482
      %v6484 = vpop.f32.mrf.mxu0
      %6485 = vmatprep.mubr.f32.mxu0 0.0
      %6486 = vmatmul.mubr.f32.gmra.mxu0 %v6284
      %v6487 = vpop.f32.mrf.mxu0
      %v6488 = vadd.f32 0.0, %v6487
      %v6489 = vpop.f32.mrf.mxu0
      %6490 = vmatprep.mubr.f32.mxu0 0.0
      %6491 = vmatmul.mubr.f32.gmra.mxu0 %v6285
      %v6492 = vpop.f32.mrf.mxu0
      %v6493 = vadd.f32 0.0, %v6492
      %v6494 = vpop.f32.mrf.mxu0
      %6495 = vmatprep.mubr.f32.mxu0 0.0
      %6496 = vmatmul.mubr.f32.gmra.mxu0 %v6286
      %v6497 = vpop.f32.mrf.mxu0
      %v6498 = vadd.f32 0.0, %v6497
      %v6499 = vpop.f32.mrf.mxu0
      %6500 = vmatprep.mubr.f32.mxu0 0.0
      %6501 = vmatmul.mubr.f32.gmra.mxu0 %v6287
      %v6502 = vpop.f32.mrf.mxu0
      %v6503 = vadd.f32 0.0, %v6502
      %v6504 = vpop.f32.mrf.mxu0
      %6505 = vmatprep.mubr.f32.mxu0 0.0
      %6506 = vmatmul.mubr.f32.gmra.mxu0 %v6288
      %v6507 = vpop.f32.mrf.mxu0
      %v6508 = vadd.f32 0.0, %v6507
      %v6509 = vpop.f32.mrf.mxu0
      %6510 = vmatprep.mubr.f32.mxu0 0.0
      %6511 = vmatmul.mubr.f32.gmra.mxu0 %v6289
      %v6512 = vpop.f32.mrf.mxu0
      %v6513 = vadd.f32 0.0, %v6512
      %v6514 = vpop.f32.mrf.mxu0
      %6515 = vmatprep.mubr.f32.mxu0 0.0
      %6516 = vmatmul.mubr.f32.gmra.mxu0 %v6290
      %v6517 = vpop.f32.mrf.mxu0
      %v6518 = vadd.f32 0.0, %v6517
      %v6519 = vpop.f32.mrf.mxu0
      %6520 = vmatprep.mubr.f32.mxu0 0.0
      %6521 = vmatmul.mubr.f32.gmra.mxu0 %v6291
      %v6522 = vpop.f32.mrf.mxu0
      %v6523 = vadd.f32 0.0, %v6522
      %v6524 = vpop.f32.mrf.mxu0
      %6525 = vmatprep.mubr.f32.mxu0 0.0
      %6526 = vmatmul.mubr.f32.gmra.mxu0 %v6292
      %v6527 = vpop.f32.mrf.mxu0
      %v6528 = vadd.f32 0.0, %v6527
      %v6529 = vpop.f32.mrf.mxu0
      %6530 = vmatprep.mubr.f32.mxu0 0.0
      %6531 = vmatmul.mubr.f32.gmra.mxu0 %v6293
      %v6532 = vpop.f32.mrf.mxu0
      %v6533 = vadd.f32 0.0, %v6532
      %v6534 = vpop.f32.mrf.mxu0
      %6535 = vdwg.mxu0
      %v6536 = vadd.f32 %v6230, %v6378
      %v6537 = vadd.f32 %v6231, %v6383
      %v6538 = vadd.f32 %v6232, %v6388
      %v6539 = vadd.f32 %v6233, %v6393
      %v6540 = vadd.f32 %v6234, %v6398
      %v6541 = vadd.f32 %v6235, %v6403
      %v6542 = vadd.f32 %v6236, %v6408
      %v6543 = vadd.f32 %v6237, %v6413
      %v6544 = vadd.f32 %v6238, %v6418
      %v6545 = vadd.f32 %v6239, %v6423
      %v6546 = vadd.f32 %v6240, %v6428
      %v6547 = vadd.f32 %v6241, %v6433
      %v6548 = vadd.f32 %v6242, %v6438
      %v6549 = vadd.f32 %v6243, %v6443
      %v6550 = vadd.f32 %v6244, %v6448
      %v6551 = vadd.f32 %v6245, %v6453
      %v6552 = vadd.f32 %v6246, %v6458
      %v6553 = vadd.f32 %v6247, %v6463
      %v6554 = vadd.f32 %v6248, %v6468
      %v6555 = vadd.f32 %v6249, %v6473
      %v6556 = vadd.f32 %v6250, %v6478
      %v6557 = vadd.f32 %v6251, %v6483
      %v6558 = vadd.f32 %v6252, %v6488
      %v6559 = vadd.f32 %v6253, %v6493
      %v6560 = vadd.f32 %v6254, %v6498
      %v6561 = vadd.f32 %v6255, %v6503
      %v6562 = vadd.f32 %v6256, %v6508
      %v6563 = vadd.f32 %v6257, %v6513
      %v6564 = vadd.f32 %v6258, %v6518
      %v6565 = vadd.f32 %v6259, %v6523
      %v6566 = vadd.f32 %v6260, %v6528
      %v6567 = vadd.f32 %v6261, %v6533
      %6568 = vst [vmem:[#allocation3] sm:$0xff] %v6536
      %6569 = vst [vmem:[#allocation3 + $0x8] sm:$0xff] %v6537
      %6570 = vst [vmem:[#allocation3 + $0x10] sm:$0xff] %v6538
      %6571 = vst [vmem:[#allocation3 + $0x18] sm:$0xff] %v6539
      %6572 = vst [vmem:[#allocation3 + $0x20] sm:$0xff] %v6540
      %6573 = vst [vmem:[#allocation3 + $0x28] sm:$0xff] %v6541
      %6574 = vst [vmem:[#allocation3 + $0x30] sm:$0xff] %v6542
      %6575 = vst [vmem:[#allocation3 + $0x38] sm:$0xff] %v6543
      %6576 = vst [vmem:[#allocation3 + $0x40] sm:$0xff] %v6544
      %6577 = vst [vmem:[#allocation3 + $0x48] sm:$0xff] %v6545
      %6578 = vst [vmem:[#allocation3 + $0x50] sm:$0xff] %v6546
      %6579 = vst [vmem:[#allocation3 + $0x58] sm:$0xff] %v6547
      %6580 = vst [vmem:[#allocation3 + $0x60] sm:$0xff] %v6548
      %6581 = vst [vmem:[#allocation3 + $0x68] sm:$0xff] %v6549
      %6582 = vst [vmem:[#allocation3 + $0x70] sm:$0xff] %v6550
      %6583 = vst [vmem:[#allocation3 + $0x78] sm:$0xff] %v6551
      %6584 = vst [vmem:[#allocation3 + $0x80] sm:$0xff] %v6552
      %6585 = vst [vmem:[#allocation3 + $0x88] sm:$0xff] %v6553
      %6586 = vst [vmem:[#allocation3 + $0x90] sm:$0xff] %v6554
      %6587 = vst [vmem:[#allocation3 + $0x98] sm:$0xff] %v6555
      %6588 = vst [vmem:[#allocation3 + $0xa0] sm:$0xff] %v6556
      %6589 = vst [vmem:[#allocation3 + $0xa8] sm:$0xff] %v6557
      %6590 = vst [vmem:[#allocation3 + $0xb0] sm:$0xff] %v6558
      %6591 = vst [vmem:[#allocation3 + $0xb8] sm:$0xff] %v6559
      %6592 = vst [vmem:[#allocation3 + $0xc0] sm:$0xff] %v6560
      %6593 = vst [vmem:[#allocation3 + $0xc8] sm:$0xff] %v6561
      %6594 = vst [vmem:[#allocation3 + $0xd0] sm:$0xff] %v6562
      %6595 = vst [vmem:[#allocation3 + $0xd8] sm:$0xff] %v6563
      %6596 = vst [vmem:[#allocation3 + $0xe0] sm:$0xff] %v6564
      %6597 = vst [vmem:[#allocation3 + $0xe8] sm:$0xff] %v6565
      %6598 = vst [vmem:[#allocation3 + $0xf0] sm:$0xff] %v6566
      %6599 = vst [vmem:[#allocation3 + $0xf8] sm:$0xff] %v6567
      %v6600 = vld [vmem:[%s5] sm:$0x1]
      %v6601 = vld [vmem:[%s6] sm:$0x1]
      %v6602 = vld [vmem:[#allocation3] sm:$0xff]
      %v6603 = vld [vmem:[#allocation3 + $0x8] sm:$0xff]
      %v6604 = vld [vmem:[#allocation3 + $0x10] sm:$0xff]
      %v6605 = vld [vmem:[#allocation3 + $0x18] sm:$0xff]
      %v6606 = vld [vmem:[#allocation3 + $0x20] sm:$0xff]
      %v6607 = vld [vmem:[#allocation3 + $0x28] sm:$0xff]
      %v6608 = vld [vmem:[#allocation3 + $0x30] sm:$0xff]
      %v6609 = vld [vmem:[#allocation3 + $0x38] sm:$0xff]
      %v6610 = vld [vmem:[#allocation3 + $0x40] sm:$0xff]
      %v6611 = vld [vmem:[#allocation3 + $0x48] sm:$0xff]
      %v6612 = vld [vmem:[#allocation3 + $0x50] sm:$0xff]
      %v6613 = vld [vmem:[#allocation3 + $0x58] sm:$0xff]
      %v6614 = vld [vmem:[#allocation3 + $0x60] sm:$0xff]
      %v6615 = vld [vmem:[#allocation3 + $0x68] sm:$0xff]
      %v6616 = vld [vmem:[#allocation3 + $0x70] sm:$0xff]
      %v6617 = vld [vmem:[#allocation3 + $0x78] sm:$0xff]
      %v6618 = vld [vmem:[#allocation3 + $0x80] sm:$0xff]
      %v6619 = vld [vmem:[#allocation3 + $0x88] sm:$0xff]
      %v6620 = vld [vmem:[#allocation3 + $0x90] sm:$0xff]
      %v6621 = vld [vmem:[#allocation3 + $0x98] sm:$0xff]
      %v6622 = vld [vmem:[#allocation3 + $0xa0] sm:$0xff]
      %v6623 = vld [vmem:[#allocation3 + $0xa8] sm:$0xff]
      %v6624 = vld [vmem:[#allocation3 + $0xb0] sm:$0xff]
      %v6625 = vld [vmem:[#allocation3 + $0xb8] sm:$0xff]
      %v6626 = vld [vmem:[#allocation3 + $0xc0] sm:$0xff]
      %v6627 = vld [vmem:[#allocation3 + $0xc8] sm:$0xff]
      %v6628 = vld [vmem:[#allocation3 + $0xd0] sm:$0xff]
      %v6629 = vld [vmem:[#allocation3 + $0xd8] sm:$0xff]
      %v6630 = vld [vmem:[#allocation3 + $0xe0] sm:$0xff]
      %v6631 = vld [vmem:[#allocation3 + $0xe8] sm:$0xff]
      %v6632 = vld [vmem:[#allocation3 + $0xf0] sm:$0xff]
      %v6633 = vld [vmem:[#allocation3 + $0xf8] sm:$0xff]
      %v6634 = vadd.f32 %v6602, %v6603
      %v6635 = vadd.f32 %v6634, %v6604
      %v6636 = vadd.f32 %v6635, %v6605
      %v6637 = vadd.f32 %v6636, %v6606
      %v6638 = vadd.f32 %v6637, %v6607
      %v6639 = vadd.f32 %v6638, %v6608
      %v6640 = vadd.f32 %v6639, %v6609
      %v6641 = vadd.f32 %v6640, %v6610
      %v6642 = vadd.f32 %v6641, %v6611
      %v6643 = vadd.f32 %v6642, %v6612
      %v6644 = vadd.f32 %v6643, %v6613
      %v6645 = vadd.f32 %v6644, %v6614
      %v6646 = vadd.f32 %v6645, %v6615
      %v6647 = vadd.f32 %v6646, %v6616
      %v6648 = vadd.f32 %v6647, %v6617
      %v6649 = vadd.f32 %v6648, %v6618
      %v6650 = vadd.f32 %v6649, %v6619
      %v6651 = vadd.f32 %v6650, %v6620
      %v6652 = vadd.f32 %v6651, %v6621
      %v6653 = vadd.f32 %v6652, %v6622
      %v6654 = vadd.f32 %v6653, %v6623
      %v6655 = vadd.f32 %v6654, %v6624
      %v6656 = vadd.f32 %v6655, %v6625
      %v6657 = vadd.f32 %v6656, %v6626
      %v6658 = vadd.f32 %v6657, %v6627
      %v6659 = vadd.f32 %v6658, %v6628
      %v6660 = vadd.f32 %v6659, %v6629
      %v6661 = vadd.f32 %v6660, %v6630
      %v6662 = vadd.f32 %v6661, %v6631
      %v6663 = vadd.f32 %v6662, %v6632
      %v6664 = vadd.f32 %v6663, %v6633
      %v6665 = vrot.slane %v6664, 4
      %v6666 = vadd.f32 %v6664, %v6665
      %v6667 = vrot.slane %v6666, 2
      %v6668 = vadd.f32 %v6666, %v6667
      %v6669 = vrot.slane %v6668, 1
      %v6670 = vadd.f32 %v6668, %v6669
      %v6671 = vmul.f32 %v6670, 0.00390625
      %v6672 = vsub.f32 %v6602, %v6671
      %v6673 = vsub.f32 %v6603, %v6671
      %v6674 = vsub.f32 %v6604, %v6671
      %v6675 = vsub.f32 %v6605, %v6671
      %v6676 = vsub.f32 %v6606, %v6671
      %v6677 = vsub.f32 %v6607, %v6671
      %v6678 = vsub.f32 %v6608, %v6671
      %v6679 = vsub.f32 %v6609, %v6671
      %v6680 = vsub.f32 %v6610, %v6671
      %v6681 = vsub.f32 %v6611, %v6671
      %v6682 = vsub.f32 %v6612, %v6671
      %v6683 = vsub.f32 %v6613, %v6671
      %v6684 = vsub.f32 %v6614, %v6671
      %v6685 = vsub.f32 %v6615, %v6671
      %v6686 = vsub.f32 %v6616, %v6671
      %v6687 = vsub.f32 %v6617, %v6671
      %v6688 = vsub.f32 %v6618, %v6671
      %v6689 = vsub.f32 %v6619, %v6671
      %v6690 = vsub.f32 %v6620, %v6671
      %v6691 = vsub.f32 %v6621, %v6671
      %v6692 = vsub.f32 %v6622, %v6671
      %v6693 = vsub.f32 %v6623, %v6671
      %v6694 = vsub.f32 %v6624, %v6671
      %v6695 = vsub.f32 %v6625, %v6671
      %v6696 = vsub.f32 %v6626, %v6671
      %v6697 = vsub.f32 %v6627, %v6671
      %v6698 = vsub.f32 %v6628, %v6671
      %v6699 = vsub.f32 %v6629, %v6671
      %v6700 = vsub.f32 %v6630, %v6671
      %v6701 = vsub.f32 %v6631, %v6671
      %v6702 = vsub.f32 %v6632, %v6671
      %v6703 = vsub.f32 %v6633, %v6671
      %v6704 = vmul.f32 %v6672, %v6672
      %v6705 = vmul.f32 %v6673, %v6673
      %v6706 = vmul.f32 %v6674, %v6674
      %v6707 = vmul.f32 %v6675, %v6675
      %v6708 = vmul.f32 %v6676, %v6676
      %v6709 = vmul.f32 %v6677, %v6677
      %v6710 = vmul.f32 %v6678, %v6678
      %v6711 = vmul.f32 %v6679, %v6679
      %v6712 = vmul.f32 %v6680, %v6680
      %v6713 = vmul.f32 %v6681, %v6681
      %v6714 = vmul.f32 %v6682, %v6682
      %v6715 = vmul.f32 %v6683, %v6683
      %v6716 = vmul.f32 %v6684, %v6684
      %v6717 = vmul.f32 %v6685, %v6685
      %v6718 = vmul.f32 %v6686, %v6686
      %v6719 = vmul.f32 %v6687, %v6687
      %v6720 = vmul.f32 %v6688, %v6688
      %v6721 = vmul.f32 %v6689, %v6689
      %v6722 = vmul.f32 %v6690, %v6690
      %v6723 = vmul.f32 %v6691, %v6691
      %v6724 = vmul.f32 %v6692, %v6692
      %v6725 = vmul.f32 %v6693, %v6693
      %v6726 = vmul.f32 %v6694, %v6694
      %v6727 = vmul.f32 %v6695, %v6695
      %v6728 = vmul.f32 %v6696, %v6696
      %v6729 = vmul.f32 %v6697, %v6697
      %v6730 = vmul.f32 %v6698, %v6698
      %v6731 = vmul.f32 %v6699, %v6699
      %v6732 = vmul.f32 %v6700, %v6700
      %v6733 = vmul.f32 %v6701, %v6701
      %v6734 = vmul.f32 %v6702, %v6702
      %v6735 = vmul.f32 %v6703, %v6703
      %v6736 = vadd.f32 %v6704, %v6705
      %v6737 = vadd.f32 %v6736, %v6706
      %v6738 = vadd.f32 %v6737, %v6707
      %v6739 = vadd.f32 %v6738, %v6708
      %v6740 = vadd.f32 %v6739, %v6709
      %v6741 = vadd.f32 %v6740, %v6710
      %v6742 = vadd.f32 %v6741, %v6711
      %v6743 = vadd.f32 %v6742, %v6712
      %v6744 = vadd.f32 %v6743, %v6713
      %v6745 = vadd.f32 %v6744, %v6714
      %v6746 = vadd.f32 %v6745, %v6715
      %v6747 = vadd.f32 %v6746, %v6716
      %v6748 = vadd.f32 %v6747, %v6717
      %v6749 = vadd.f32 %v6748, %v6718
      %v6750 = vadd.f32 %v6749, %v6719
      %v6751 = vadd.f32 %v6750, %v6720
      %v6752 = vadd.f32 %v6751, %v6721
      %v6753 = vadd.f32 %v6752, %v6722
      %v6754 = vadd.f32 %v6753, %v6723
      %v6755 = vadd.f32 %v6754, %v6724
      %v6756 = vadd.f32 %v6755, %v6725
      %v6757 = vadd.f32 %v6756, %v6726
      %v6758 = vadd.f32 %v6757, %v6727
      %v6759 = vadd.f32 %v6758, %v6728
      %v6760 = vadd.f32 %v6759, %v6729
      %v6761 = vadd.f32 %v6760, %v6730
      %v6762 = vadd.f32 %v6761, %v6731
      %v6763 = vadd.f32 %v6762, %v6732
      %v6764 = vadd.f32 %v6763, %v6733
      %v6765 = vadd.f32 %v6764, %v6734
      %v6766 = vadd.f32 %v6765, %v6735
      %v6767 = vrot.slane %v6766, 4
      %v6768 = vadd.f32 %v6766, %v6767
      %v6769 = vrot.slane %v6768, 2
      %v6770 = vadd.f32 %v6768, %v6769
      %v6771 = vrot.slane %v6770, 1
      %v6772 = vadd.f32 %v6770, %v6771
      %v6773 = vmul.f32 %v6772, 0.00390625
      %v6774 = vadd.f32 %v6773, 1e-05
      %v6775 = vrsqrt.pop %v6774
      %v6776 = vmul.f32 %v6600, %v6775
      %v6777 = vmul.f32 %v6671, %v6776
      %v6778 = vsub.f32 %v6601, %v6777
      %v6780 = vlaneseq
      %v6781 = vshrl.u32 %v6780, 7
      %v6782 = vsub.s32 0, %v6781
      %v6783 = vrot.slane %v6776, %v6782
      %v6785 = vmul.f32 %v6602, %v6783
      %v6786 = vmul.f32 %v6603, %v6783
      %v6787 = vmul.f32 %v6604, %v6783
      %v6788 = vmul.f32 %v6605, %v6783
      %v6789 = vmul.f32 %v6606, %v6783
      %v6790 = vmul.f32 %v6607, %v6783
      %v6791 = vmul.f32 %v6608, %v6783
      %v6792 = vmul.f32 %v6609, %v6783
      %v6793 = vmul.f32 %v6610, %v6783
      %v6794 = vmul.f32 %v6611, %v6783
      %v6795 = vmul.f32 %v6612, %v6783
      %v6796 = vmul.f32 %v6613, %v6783
      %v6797 = vmul.f32 %v6614, %v6783
      %v6798 = vmul.f32 %v6615, %v6783
      %v6799 = vmul.f32 %v6616, %v6783
      %v6800 = vmul.f32 %v6617, %v6783
      %v6801 = vmul.f32 %v6618, %v6783
      %v6802 = vmul.f32 %v6619, %v6783
      %v6803 = vmul.f32 %v6620, %v6783
      %v6804 = vmul.f32 %v6621, %v6783
      %v6805 = vmul.f32 %v6622, %v6783
      %v6806 = vmul.f32 %v6623, %v6783
      %v6807 = vmul.f32 %v6624, %v6783
      %v6808 = vmul.f32 %v6625, %v6783
      %v6809 = vmul.f32 %v6626, %v6783
      %v6810 = vmul.f32 %v6627, %v6783
      %v6811 = vmul.f32 %v6628, %v6783
      %v6812 = vmul.f32 %v6629, %v6783
      %v6813 = vmul.f32 %v6630, %v6783
      %v6814 = vmul.f32 %v6631, %v6783
      %v6815 = vmul.f32 %v6632, %v6783
      %v6816 = vmul.f32 %v6633, %v6783
      %v6818 = vlaneseq
      %v6819 = vshrl.u32 %v6818, 7
      %v6820 = vsub.s32 0, %v6819
      %v6821 = vrot.slane %v6778, %v6820
      %v6823 = vadd.f32 %v6785, %v6821
      %v6824 = vadd.f32 %v6786, %v6821
      %v6825 = vadd.f32 %v6787, %v6821
      %v6826 = vadd.f32 %v6788, %v6821
      %v6827 = vadd.f32 %v6789, %v6821
      %v6828 = vadd.f32 %v6790, %v6821
      %v6829 = vadd.f32 %v6791, %v6821
      %v6830 = vadd.f32 %v6792, %v6821
      %v6831 = vadd.f32 %v6793, %v6821
      %v6832 = vadd.f32 %v6794, %v6821
      %v6833 = vadd.f32 %v6795, %v6821
      %v6834 = vadd.f32 %v6796, %v6821
      %v6835 = vadd.f32 %v6797, %v6821
      %v6836 = vadd.f32 %v6798, %v6821
      %v6837 = vadd.f32 %v6799, %v6821
      %v6838 = vadd.f32 %v6800, %v6821
      %v6839 = vadd.f32 %v6801, %v6821
      %v6840 = vadd.f32 %v6802, %v6821
      %v6841 = vadd.f32 %v6803, %v6821
      %v6842 = vadd.f32 %v6804, %v6821
      %v6843 = vadd.f32 %v6805, %v6821
      %v6844 = vadd.f32 %v6806, %v6821
      %v6845 = vadd.f32 %v6807, %v6821
      %v6846 = vadd.f32 %v6808, %v6821
      %v6847 = vadd.f32 %v6809, %v6821
      %v6848 = vadd.f32 %v6810, %v6821
      %v6849 = vadd.f32 %v6811, %v6821
      %v6850 = vadd.f32 %v6812, %v6821
      %v6851 = vadd.f32 %v6813, %v6821
      %v6852 = vadd.f32 %v6814, %v6821
      %v6853 = vadd.f32 %v6815, %v6821
      %v6854 = vadd.f32 %v6816, %v6821
      %v6855 = vld [vmem:[%s273] sm:$0xff]
      %v6856 = vld [vmem:[%s273 + $0x8] sm:$0xff]
      %v6857 = vld [vmem:[%s273 + $0x10] sm:$0xff]
      %v6858 = vld [vmem:[%s273 + $0x18] sm:$0xff]
      %v6859 = vld [vmem:[%s273 + $0x20] sm:$0xff]
      %v6860 = vld [vmem:[%s273 + $0x28] sm:$0xff]
      %v6861 = vld [vmem:[%s273 + $0x30] sm:$0xff]
      %v6862 = vld [vmem:[%s273 + $0x38] sm:$0xff]
      %v6863 = vld [vmem:[%s273 + $0x40] sm:$0xff]
      %v6864 = vld [vmem:[%s273 + $0x48] sm:$0xff]
      %v6865 = vld [vmem:[%s273 + $0x50] sm:$0xff]
      %v6866 = vld [vmem:[%s273 + $0x58] sm:$0xff]
      %v6867 = vld [vmem:[%s273 + $0x60] sm:$0xff]
      %v6868 = vld [vmem:[%s273 + $0x68] sm:$0xff]
      %v6869 = vld [vmem:[%s273 + $0x70] sm:$0xff]
      %v6870 = vld [vmem:[%s273 + $0x78] sm:$0xff]
      %v6871 = vld [vmem:[%s273 + $0x80] sm:$0xff]
      %v6872 = vld [vmem:[%s273 + $0x88] sm:$0xff]
      %v6873 = vld [vmem:[%s273 + $0x90] sm:$0xff]
      %v6874 = vld [vmem:[%s273 + $0x98] sm:$0xff]
      %v6875 = vld [vmem:[%s273 + $0xa0] sm:$0xff]
      %v6876 = vld [vmem:[%s273 + $0xa8] sm:$0xff]
      %v6877 = vld [vmem:[%s273 + $0xb0] sm:$0xff]
      %v6878 = vld [vmem:[%s273 + $0xb8] sm:$0xff]
      %v6879 = vld [vmem:[%s273 + $0xc0] sm:$0xff]
      %v6880 = vld [vmem:[%s273 + $0xc8] sm:$0xff]
      %v6881 = vld [vmem:[%s273 + $0xd0] sm:$0xff]
      %v6882 = vld [vmem:[%s273 + $0xd8] sm:$0xff]
      %v6883 = vld [vmem:[%s273 + $0xe0] sm:$0xff]
      %v6884 = vld [vmem:[%s273 + $0xe8] sm:$0xff]
      %v6885 = vld [vmem:[%s273 + $0xf0] sm:$0xff]
      %v6886 = vld [vmem:[%s273 + $0xf8] sm:$0xff]
      %v6887 = vadd.f32 %v6823, %v6855
      %v6888 = vadd.f32 %v6824, %v6856
      %v6889 = vadd.f32 %v6825, %v6857
      %v6890 = vadd.f32 %v6826, %v6858
      %v6891 = vadd.f32 %v6827, %v6859
      %v6892 = vadd.f32 %v6828, %v6860
      %v6893 = vadd.f32 %v6829, %v6861
      %v6894 = vadd.f32 %v6830, %v6862
      %v6895 = vadd.f32 %v6831, %v6863
      %v6896 = vadd.f32 %v6832, %v6864
      %v6897 = vadd.f32 %v6833, %v6865
      %v6898 = vadd.f32 %v6834, %v6866
      %v6899 = vadd.f32 %v6835, %v6867
      %v6900 = vadd.f32 %v6836, %v6868
      %v6901 = vadd.f32 %v6837, %v6869
      %v6902 = vadd.f32 %v6838, %v6870
      %v6903 = vadd.f32 %v6839, %v6871
      %v6904 = vadd.f32 %v6840, %v6872
      %v6905 = vadd.f32 %v6841, %v6873
      %v6906 = vadd.f32 %v6842, %v6874
      %v6907 = vadd.f32 %v6843, %v6875
      %v6908 = vadd.f32 %v6844, %v6876
      %v6909 = vadd.f32 %v6845, %v6877
      %v6910 = vadd.f32 %v6846, %v6878
      %v6911 = vadd.f32 %v6847, %v6879
      %v6912 = vadd.f32 %v6848, %v6880
      %v6913 = vadd.f32 %v6849, %v6881
      %v6914 = vadd.f32 %v6850, %v6882
      %v6915 = vadd.f32 %v6851, %v6883
      %v6916 = vadd.f32 %v6852, %v6884
      %v6917 = vadd.f32 %v6853, %v6885
      %v6918 = vadd.f32 %v6854, %v6886
      %6919 = vst [vmem:[%s278] sm:$0xff] %v6887
      %6920 = vst [vmem:[%s278 + $0x8] sm:$0xff] %v6888
      %6921 = vst [vmem:[%s278 + $0x10] sm:$0xff] %v6889
      %6922 = vst [vmem:[%s278 + $0x18] sm:$0xff] %v6890
      %6923 = vst [vmem:[%s278 + $0x20] sm:$0xff] %v6891
      %6924 = vst [vmem:[%s278 + $0x28] sm:$0xff] %v6892
      %6925 = vst [vmem:[%s278 + $0x30] sm:$0xff] %v6893
      %6926 = vst [vmem:[%s278 + $0x38] sm:$0xff] %v6894
      %6927 = vst [vmem:[%s278 + $0x40] sm:$0xff] %v6895
      %6928 = vst [vmem:[%s278 + $0x48] sm:$0xff] %v6896
      %6929 = vst [vmem:[%s278 + $0x50] sm:$0xff] %v6897
      %6930 = vst [vmem:[%s278 + $0x58] sm:$0xff] %v6898
      %6931 = vst [vmem:[%s278 + $0x60] sm:$0xff] %v6899
      %6932 = vst [vmem:[%s278 + $0x68] sm:$0xff] %v6900
      %6933 = vst [vmem:[%s278 + $0x70] sm:$0xff] %v6901
      %6934 = vst [vmem:[%s278 + $0x78] sm:$0xff] %v6902
      %6935 = vst [vmem:[%s278 + $0x80] sm:$0xff] %v6903
      %6936 = vst [vmem:[%s278 + $0x88] sm:$0xff] %v6904
      %6937 = vst [vmem:[%s278 + $0x90] sm:$0xff] %v6905
      %6938 = vst [vmem:[%s278 + $0x98] sm:$0xff] %v6906
      %6939 = vst [vmem:[%s278 + $0xa0] sm:$0xff] %v6907
      %6940 = vst [vmem:[%s278 + $0xa8] sm:$0xff] %v6908
      %6941 = vst [vmem:[%s278 + $0xb0] sm:$0xff] %v6909
      %6942 = vst [vmem:[%s278 + $0xb8] sm:$0xff] %v6910
      %6943 = vst [vmem:[%s278 + $0xc0] sm:$0xff] %v6911
      %6944 = vst [vmem:[%s278 + $0xc8] sm:$0xff] %v6912
      %6945 = vst [vmem:[%s278 + $0xd0] sm:$0xff] %v6913
      %6946 = vst [vmem:[%s278 + $0xd8] sm:$0xff] %v6914
      %6947 = vst [vmem:[%s278 + $0xe0] sm:$0xff] %v6915
      %6948 = vst [vmem:[%s278 + $0xe8] sm:$0xff] %v6916
      %6949 = vst [vmem:[%s278 + $0xf0] sm:$0xff] %v6917
      %6950 = vst [vmem:[%s278 + $0xf8] sm:$0xff] %v6918
      %p6951 = scmp.lt.s32.totalorder %s18, 1
      %s6952 = scalar_select %p6951, %s18, 1
      %s6953 = smul.addr %s6952, 32
      %s6954 = smul.addr %s6953, 8
      %s6955 = scalar_lea.vmem %s7, %s6954
      // Predicated region
      $region49: #{residual_block.1} parent=47 // pred_check
        %p6956 = pneg %p188
      $region50: #{residual_block.1} parent=47 // pred_check_branch
        %6958 = sbr.rel (%p6956) target = $region52
      $region51: #{residual_block.1} parent=47 // pred_region
        _
      $region52: #{residual_block.1} parent=47 // pred_fallthru
        _
    $region48: #{residual_block.1} parent=5 // pred_fallthru
      _
    %p6959 = scmp.le.s32.totalorder 2, %s13
    // Predicated region
    $region53: #{residual_block.1} parent=5 // pred_check
      %p6960 = pneg %p6959
    $region54: #{residual_block.1} parent=5 // pred_check_branch
      %6962 = sbr.rel (%p6960) target = $region56
    $region55: #{residual_block.1} parent=5 // pred_region
      %s6963 = ssub.s32 %s13, 2
      // Predicated region
      $region57: #{residual_block.1} parent=55 // pred_check
        %p6964 = pneg %p194
      $region58: #{residual_block.1} parent=55 // pred_check_branch
        %6966 = sbr.rel (%p6964) target = $region60
      $region59: #{residual_block.1} parent=55 // pred_region
        %p6967 = scmp.lt.s32.totalorder %s19, 1
        %s6968 = scalar_select %p6967, %s19, 1
        %s6969 = smul.addr %s6968, 32
        %s6970 = smul.addr %s6969, 8
        %s6971 = scalar_lea.vmem %s7, %s6970
      $region60: #{residual_block.1} parent=55 // pred_fallthru
        _
    $region56: #{residual_block.1} parent=5 // pred_fallthru
      _
  $region6: #{residual_block.1} parent=0 // loop_footer
    %s17 = sadd.s32 1, %s13
  $region7: #{residual_block.1} parent=0 // loop_footer_branch
    %12 = sbr.rel target = $region3
  $region8: #{residual_block.1} parent=0 // loop_exit
    _

</llo_original>
